<compile_context>
chip_gen: v7x
topology: tpu7x:2x2x1
jax: 0.10.0
libtpu: 0.0.40
codegen_flags: <defaults>
</compile_context>

<pallas_src>
import functools

import jax
import jax.numpy as jnp
import numpy as np
from jax import lax
from jax.experimental import pallas as pl
from jax.experimental.pallas import tpu as pltpu


def _encoder_kernel(x_ref, h0_ref, c0_ref, wih_ref, whh_ref, b_ref,
                    h_out_ref, c_out_ref, xbuf, xproj,
                    *, unroll, mm_precision):
    """Fused multi-layer LSTM. Grid axis 0 = layer (sequential).

    x_ref   : (S*B, P)   time-major flattened, feature-padded input (mm dtype)
    h0_ref  : (1, B, H)  this layer's initial hidden state (f32)
    c0_ref  : (1, B, H)  this layer's initial cell state (f32)
    wih_ref : (1, P, 4H) W_ih^T, zero-padded to P input rows (mm dtype)
    whh_ref : (1, H, 4H) W_hh^T (mm dtype)
    b_ref   : (1, 1, 4H) b_ih + b_hh (f32)
    h_out_ref, c_out_ref : (1, B, H) final states for this layer (f32)
    xbuf    : (S*B, H)  VMEM scratch — layer l writes its output sequence
              here so layer l+1 reads it without an HBM round-trip.
    xproj   : (S*B, 4H) f32 VMEM — hoisted, time-parallel input projection.
    """
    layer = pl.program_id(0)
    _, B, H = h0_ref.shape
    SB = xproj.shape[0]
    S = SB // B

    # Hoisted input projection: one big MXU matmul per layer instead of S tiny
    # K=4/K=H matmuls on the recurrent critical path. Layer 0 reads the
    # pipelined input directly (no staging copy); layers >= 1 read xbuf.
    @pl.when(layer == 0)
    def _():
        xproj[...] = jnp.dot(x_ref[...], wih_ref[0],
                             preferred_element_type=jnp.float32,
                             precision=mm_precision) + b_ref[0]

    @pl.when(layer > 0)
    def _():
        xproj[...] = jnp.dot(xbuf[...], wih_ref[0, 0:H, :],
                             preferred_element_type=jnp.float32,
                             precision=mm_precision) + b_ref[0]

    whh_t = whh_ref[0]                              # (H, 4H), matmul dtype
    mm_dtype = whh_t.dtype
    h0 = h0_ref[0].astype(jnp.float32)
    c0 = c0_ref[0].astype(jnp.float32)

    def step(t, carry):
        h_prev, c_prev = carry
        base = pl.multiple_of(t * B, B)             # B is a multiple of 8
        gates = xproj[pl.ds(base, B), :] + jnp.dot(
            h_prev.astype(mm_dtype), whh_t,
            preferred_element_type=jnp.float32, precision=mm_precision)
        # Full-vreg activations (EUP slot, otherwise idle), then slice the
        # activated values: 3 EUP pushes/step instead of 5 partial ones.
        sig = jax.nn.sigmoid(gates)                 # (B, 4H)
        th = jnp.tanh(gates)                        # (B, 4H)
        i_g = sig[:, 0 * H:1 * H]
        f_g = sig[:, 1 * H:2 * H]
        g_g = th[:, 2 * H:3 * H]
        o_g = sig[:, 3 * H:4 * H]
        c_new = f_g * c_prev + i_g * g_g
        h_new = o_g * jnp.tanh(c_new)
        # Stash this layer's output as the next layer's input (full-row store).
        xbuf[pl.ds(base, B), :] = h_new.astype(xbuf.dtype)
        return (h_new, c_new)

    h_n, c_n = lax.fori_loop(0, S, step, (h0, c0), unroll=unroll)

    # Final states written exactly once per layer.
    h_out_ref[0] = h_n.astype(h_out_ref.dtype)
    c_out_ref[0] = c_n.astype(c_out_ref.dtype)


def encoder_forward(input_seq, params, h0_all, c0_all, *,
                    matmul_dtype=jnp.float32, unroll=8):
    """Mirror of Encoder.forward: returns (h, c), each (num_layers, B, H).

    input_seq: (B, S, input_size) batch_first, like PyTorch.
    matmul_dtype: jnp.float32 (exact parity) or jnp.bfloat16 (faster MXU feed
      on v6e/v7x; element-wise math stays in f32).
    """
    B, S, I = input_seq.shape
    L = len(params)
    H = h0_all.shape[-1]
    P = max(I, H)
    Bp = ((B + 7) // 8) * 8                          # sublane-pad the batch
    f32 = jnp.float32
    is_f32_mm = jnp.dtype(matmul_dtype) == jnp.dtype(jnp.float32)
    mm_prec = (jax.lax.Precision.HIGHEST if is_f32_mm
               else jax.lax.Precision.DEFAULT)

    # (B, S, I) -> (S, B, I) -> pad batch -> (S*Bp, I) -> pad features to P.
    x = jnp.transpose(input_seq, (1, 0, 2)).astype(f32)
    x = jnp.pad(x, ((0, 0), (0, Bp - B), (0, 0)))
    x = x.reshape(S * Bp, I)
    if P > I:
        x = jnp.pad(x, ((0, 0), (0, P - I)))
    x = x.astype(matmul_dtype)

    h0 = jnp.pad(h0_all.astype(f32), ((0, 0), (0, Bp - B), (0, 0)))
    c0 = jnp.pad(c0_all.astype(f32), ((0, 0), (0, Bp - B), (0, 0)))

    wih_t_list, whh_t_list, bias_list = [], [], []
    for p in params:
        in_sz = p["w_ih"].shape[1]
        wih_t = jnp.transpose(p["w_ih"]).astype(f32)          # (in_sz, 4H)
        if P > in_sz:
            wih_t = jnp.pad(wih_t, ((0, P - in_sz), (0, 0)))  # zero rows
        wih_t_list.append(wih_t.astype(matmul_dtype))
        whh_t_list.append(jnp.transpose(p["w_hh"]).astype(matmul_dtype))
        bias_list.append((p["b_ih"] + p["b_hh"]).reshape(1, 4 * H).astype(f32))
    wih_all = jnp.stack(wih_t_list, 0)               # (L, P, 4H)
    whh_all = jnp.stack(whh_t_list, 0)               # (L, H, 4H)
    b_all = jnp.stack(bias_list, 0)                  # (L, 1, 4H)

    mm_item = jnp.dtype(matmul_dtype).itemsize
    vmem_need = (S * Bp * P * mm_item                # x (single-buffered)
                 + S * Bp * H * mm_item              # xbuf scratch
                 + S * Bp * 4 * H * 4                # xproj scratch
                 + 2 * (P + H) * 4 * H * mm_item     # weights (double-buffered)
                 + 2 * (2 * Bp * H + 4 * H) * 4      # h0/c0/bias
                 + 2 * 2 * Bp * H * 4)               # outputs
    vmem_limit = int(min(max(2 * vmem_need + (4 << 20), 32 << 20), 120 << 20))

    cost = pl.CostEstimate(
        flops=2 * L * S * Bp * 4 * H * (P + H),
        transcendentals=L * S * Bp * 9 * H,
        bytes_accessed=int(x.size * mm_item
                           + (wih_all.size + whh_all.size) * mm_item
                           + (h0.size + c0.size + b_all.size) * 4
                           + 2 * L * Bp * H * 4))

    kernel = functools.partial(_encoder_kernel,
                               unroll=int(min(unroll, S)),
                               mm_precision=mm_prec)

    grid_spec = pltpu.PrefetchScalarGridSpec(
        num_scalar_prefetch=0,
        grid=(L,),
        in_specs=[
            # Constant block index across the layer grid -> fetched once;
            # single-buffer it (double-buffering only wasted VMEM).
            pl.BlockSpec((S * Bp, P), lambda l: (0, 0),
                         pipeline_mode=pl.Buffered(1)),
            pl.BlockSpec((1, Bp, H), lambda l: (l, 0, 0)),       # h0 / layer
            pl.BlockSpec((1, Bp, H), lambda l: (l, 0, 0)),       # c0 / layer
            pl.BlockSpec((1, P, 4 * H), lambda l: (l, 0, 0)),    # W_ih^T
            pl.BlockSpec((1, H, 4 * H), lambda l: (l, 0, 0)),    # W_hh^T
            pl.BlockSpec((1, 1, 4 * H), lambda l: (l, 0, 0)),    # bias
        ],
        out_specs=[
            pl.BlockSpec((1, Bp, H), lambda l: (l, 0, 0)),       # h_n / layer
            pl.BlockSpec((1, Bp, H), lambda l: (l, 0, 0)),       # c_n / layer
        ],
        scratch_shapes=[
            pltpu.VMEM((S * Bp, H), matmul_dtype),               # layer outputs
            pltpu.VMEM((S * Bp, 4 * H), jnp.float32),            # hoisted x-proj
        ],
    )

    h_n, c_n = pl.pallas_call(
        kernel,
        out_shape=(
            jax.ShapeDtypeStruct((L, Bp, H), jnp.float32),
            jax.ShapeDtypeStruct((L, Bp, H), jnp.float32),
        ),
        grid_spec=grid_spec,
        compiler_params=pltpu.CompilerParams(
            dimension_semantics=("arbitrary",),      # layers are sequential
            vmem_limit_bytes=vmem_limit),
        cost_estimate=cost,
    )(x, h0, c0, wih_all, whh_all, b_all)

    return h_n[:, :B, :], c_n[:, :B, :]


def _reference_lstm(input_seq, params, h0_all, c0_all):
    """Pure-JAX reference (same math as PyTorch nn.LSTM cell), f32."""
    prec = jax.lax.Precision.HIGHEST
    x = jnp.transpose(input_seq, (1, 0, 2))  # (S, B, I)
    h_finals, c_finals = [], []
    for layer, p in enumerate(params):
        H = p["w_hh"].shape[1]

        def step(carry, x_t, p=p, H=H):
            h, c = carry
            gates = (jnp.dot(x_t, p["w_ih"].T, precision=prec)
                     + jnp.dot(h, p["w_hh"].T, precision=prec)
                     + p["b_ih"] + p["b_hh"])
            i = jax.nn.sigmoid(gates[:, :H])
            f = jax.nn.sigmoid(gates[:, H:2 * H])
            g = jnp.tanh(gates[:, 2 * H:3 * H])
            o = jax.nn.sigmoid(gates[:, 3 * H:])
            c = f * c + i * g
            h = o * jnp.tanh(c)
            return (h, c), h

        (h_n, c_n), y = jax.lax.scan(step, (h0_all[layer], c0_all[layer]), x)
        h_finals.append(h_n)
        c_finals.append(c_n)
        x = y
    return jnp.stack(h_finals, 0), jnp.stack(c_finals, 0)


def init_params(key, input_size, hidden_size, num_layers):
    """Deterministic LSTM weights, PyTorch-style uniform(-1/sqrt(H), 1/sqrt(H))."""
    params = []
    bound = 1.0 / np.sqrt(hidden_size)
    for layer in range(num_layers):
        in_sz = input_size if layer == 0 else hidden_size
        key, k1, k2, k3, k4 = jax.random.split(key, 5)
        params.append({
            "w_ih": jax.random.uniform(k1, (4 * hidden_size, in_sz),
                                       jnp.float32, -bound, bound),
            "w_hh": jax.random.uniform(k2, (4 * hidden_size, hidden_size),
                                       jnp.float32, -bound, bound),
            "b_ih": jax.random.uniform(k3, (4 * hidden_size,),
                                       jnp.float32, -bound, bound),
            "b_hh": jax.random.uniform(k4, (4 * hidden_size,),
                                       jnp.float32, -bound, bound),
        })
    return params


if __name__ == "__main__":
    INPUT_SIZE = 4
    HIDDEN_SIZE = 32
    NUM_LAYERS = 2
    BATCH = 2
    SEQ = 8

    key = jax.random.PRNGKey(0)
    k_in, k_h0, k_c0, k_par = jax.random.split(key, 4)

    input_seq = jax.random.normal(k_in, (BATCH, SEQ, INPUT_SIZE), jnp.float32)
    # torch.randn h_0/c_0 in forward -> deterministic normal draws here.
    h0_all = jax.random.normal(k_h0, (NUM_LAYERS, BATCH, HIDDEN_SIZE), jnp.float32)
    c0_all = jax.random.normal(k_c0, (NUM_LAYERS, BATCH, HIDDEN_SIZE), jnp.float32)
    params = init_params(k_par, INPUT_SIZE, HIDDEN_SIZE, NUM_LAYERS)

    h_ref, c_ref = _reference_lstm(input_seq, params, h0_all, c0_all)

    # f32 MXU path: exact parity with the f32 reference.
    h, c = encoder_forward(input_seq, params, h0_all, c0_all,
                           matmul_dtype=jnp.float32)
    jax.block_until_ready((h, c))
    np.testing.assert_allclose(np.asarray(h), np.asarray(h_ref), atol=1e-4, rtol=1e-4)
    np.testing.assert_allclose(np.asarray(c), np.asarray(c_ref), atol=1e-4, rtol=1e-4)
    assert h.shape == (NUM_LAYERS, BATCH, HIDDEN_SIZE)
    assert c.shape == (NUM_LAYERS, BATCH, HIDDEN_SIZE)

    # bf16 MXU-feed path (v6e/v7x optimization); looser sanity tolerance.
    h_bf, c_bf = encoder_forward(input_seq, params, h0_all, c0_all,
                                 matmul_dtype=jnp.bfloat16)
    jax.block_until_ready((h_bf, c_bf))
    np.testing.assert_allclose(np.asarray(h_bf), np.asarray(h_ref), atol=0.1, rtol=0.1)
    np.testing.assert_allclose(np.asarray(c_bf), np.asarray(c_ref), atol=0.1, rtol=0.1)

    print("KERNEL_OK")
</pallas_src>

<mosaic_0001>
module attributes {stable_mosaic.version = 11 : i64} {
  func.func @_encoder_kernel(%arg0: i32, %arg1: memref<64x32xf32, #tpu.memory_space<vmem>>, %arg2: memref<1x8x32xf32, #tpu.memory_space<vmem>>, %arg3: memref<1x8x32xf32, #tpu.memory_space<vmem>>, %arg4: memref<1x32x128xf32, #tpu.memory_space<vmem>>, %arg5: memref<1x32x128xf32, #tpu.memory_space<vmem>>, %arg6: memref<1x1x128xf32, #tpu.memory_space<vmem>>, %arg7: memref<1x8x32xf32, #tpu.memory_space<vmem>>, %arg8: memref<1x8x32xf32, #tpu.memory_space<vmem>>, %arg9: memref<64x32xf32, #tpu.memory_space<vmem>>, %arg10: memref<64x128xf32, #tpu.memory_space<vmem>>) attributes {dimension_semantics = [#tpu.dimension_semantics<arbitrary>], iteration_bounds = array<i64: 2>, scalar_prefetch = 0 : i64, scratch_operands = 2 : i64, tpu.core_type = #tpu.core_type<tc>, window_params = [{pipeline_mode = #tpu.pipeline_mode<synchronous>, transform_indices = @transform_0, window_bounds = array<i64: 64, 32>}, {transform_indices = @transform_1, window_bounds = array<i64: 1, 8, 32>}, {transform_indices = @transform_2, window_bounds = array<i64: 1, 8, 32>}, {transform_indices = @transform_3, window_bounds = array<i64: 1, 32, 128>}, {transform_indices = @transform_4, window_bounds = array<i64: 1, 32, 128>}, {transform_indices = @transform_5, window_bounds = array<i64: 1, 1, 128>}, {transform_indices = @transform_6, window_bounds = array<i64: 1, 8, 32>}, {transform_indices = @transform_7, window_bounds = array<i64: 1, 8, 32>}]} {
    %c0_i32 = arith.constant 0 : i32
    %0 = arith.cmpi eq, %arg0, %c0_i32 : i32
    %1 = arith.extui %0 : i1 to i32
    %c0_i32_0 = arith.constant 0 : i32
    %2 = arith.cmpi ne, %1, %c0_i32_0 : i32
    scf.if %2 {
      %c0_57 = arith.constant 0 : index
      %c0_58 = arith.constant 0 : index
      %202 = vector.load %arg1[%c0_57, %c0_58] : memref<64x32xf32, #tpu.memory_space<vmem>>, vector<64x32xf32>
      %c0_59 = arith.constant 0 : index
      %c0_60 = arith.constant 0 : index
      %c0_61 = arith.constant 0 : index
      %203 = vector.load %arg4[%c0_59, %c0_60, %c0_61] : memref<1x32x128xf32, #tpu.memory_space<vmem>>, vector<1x32x128xf32>
      %204 = vector.shape_cast %203 : vector<1x32x128xf32> to vector<32x128xf32>
      %cst_62 = arith.constant dense<0.000000e+00> : vector<64x128xf32>
      %205 = tpu.matmul %202, %204, %cst_62 {dimension_numbers = #tpu.dot_dimension_numbers<[1], [0], [0], [1], [0, 0, 1, 1], [], []>, precision = #tpu.contract_precision<fp32>} : vector<64x32xf32>, vector<32x128xf32>, vector<64x128xf32> -> vector<64x128xf32>
      %c0_63 = arith.constant 0 : index
      %c0_64 = arith.constant 0 : index
      %c0_65 = arith.constant 0 : index
      %206 = vector.load %arg6[%c0_63, %c0_64, %c0_65] : memref<1x1x128xf32, #tpu.memory_space<vmem>>, vector<1x1x128xf32>
      %207 = vector.shape_cast %206 : vector<1x1x128xf32> to vector<1x128xf32>
      %208 = vector.broadcast %207 : vector<1x128xf32> to vector<64x128xf32>
      %209 = arith.addf %205, %208 : vector<64x128xf32>
      %c0_66 = arith.constant 0 : index
      %c0_67 = arith.constant 0 : index
      %210 = vector.load %arg10[%c0_66, %c0_67] : memref<64x128xf32, #tpu.memory_space<vmem>>, vector<64x128xf32>
      tpu.vector_store %arg10[%c0_66, %c0_67], %209 {strides = array<i32>} : memref<64x128xf32, #tpu.memory_space<vmem>>, vector<64x128xf32>,
    } else {
    }
    %c0_i32_1 = arith.constant 0 : i32
    %3 = arith.cmpi sgt, %arg0, %c0_i32_1 : i32
    %4 = arith.extui %3 : i1 to i32
    %c0_i32_2 = arith.constant 0 : i32
    %5 = arith.cmpi ne, %4, %c0_i32_2 : i32
    scf.if %5 {
      %c0_57 = arith.constant 0 : index
      %c0_58 = arith.constant 0 : index
      %202 = vector.load %arg9[%c0_57, %c0_58] : memref<64x32xf32, #tpu.memory_space<vmem>>, vector<64x32xf32>
      %c0_59 = arith.constant 0 : index
      %c0_60 = arith.constant 0 : index
      %c0_61 = arith.constant 0 : index
      %203 = vector.load %arg4[%c0_59, %c0_60, %c0_61] : memref<1x32x128xf32, #tpu.memory_space<vmem>>, vector<1x32x128xf32>
      %204 = vector.shape_cast %203 : vector<1x32x128xf32> to vector<32x128xf32>
      %cst_62 = arith.constant dense<0.000000e+00> : vector<64x128xf32>
      %205 = tpu.matmul %202, %204, %cst_62 {dimension_numbers = #tpu.dot_dimension_numbers<[1], [0], [0], [1], [0, 0, 1, 1], [], []>, precision = #tpu.contract_precision<fp32>} : vector<64x32xf32>, vector<32x128xf32>, vector<64x128xf32> -> vector<64x128xf32>
      %c0_63 = arith.constant 0 : index
      %c0_64 = arith.constant 0 : index
      %c0_65 = arith.constant 0 : index
      %206 = vector.load %arg6[%c0_63, %c0_64, %c0_65] : memref<1x1x128xf32, #tpu.memory_space<vmem>>, vector<1x1x128xf32>
      %207 = vector.shape_cast %206 : vector<1x1x128xf32> to vector<1x128xf32>
      %208 = vector.broadcast %207 : vector<1x128xf32> to vector<64x128xf32>
      %209 = arith.addf %205, %208 : vector<64x128xf32>
      %c0_66 = arith.constant 0 : index
      %c0_67 = arith.constant 0 : index
      %210 = vector.load %arg10[%c0_66, %c0_67] : memref<64x128xf32, #tpu.memory_space<vmem>>, vector<64x128xf32>
      tpu.vector_store %arg10[%c0_66, %c0_67], %209 {strides = array<i32>} : memref<64x128xf32, #tpu.memory_space<vmem>>, vector<64x128xf32>,
    } else {
    }
    %c0 = arith.constant 0 : index
    %c0_3 = arith.constant 0 : index
    %c0_4 = arith.constant 0 : index
    %6 = vector.load %arg5[%c0, %c0_3, %c0_4] : memref<1x32x128xf32, #tpu.memory_space<vmem>>, vector<1x32x128xf32>
    %7 = vector.shape_cast %6 : vector<1x32x128xf32> to vector<32x128xf32>
    %c0_5 = arith.constant 0 : index
    %c0_6 = arith.constant 0 : index
    %c0_7 = arith.constant 0 : index
    %8 = vector.load %arg2[%c0_5, %c0_6, %c0_7] : memref<1x8x32xf32, #tpu.memory_space<vmem>>, vector<1x8x32xf32>
    %9 = vector.shape_cast %8 : vector<1x8x32xf32> to vector<8x32xf32>
    %c0_8 = arith.constant 0 : index
    %c0_9 = arith.constant 0 : index
    %c0_10 = arith.constant 0 : index
    %10 = vector.load %arg3[%c0_8, %c0_9, %c0_10] : memref<1x8x32xf32, #tpu.memory_space<vmem>>, vector<1x8x32xf32>
    %11 = vector.shape_cast %10 : vector<1x8x32xf32> to vector<8x32xf32>
    %c0_i32_11 = arith.constant 0 : i32
    %c8_i32 = arith.constant 8 : i32
    %12 = arith.muli %c0_i32_11, %c8_i32 : i32
    %13 = tpu.assume_multiple %12, 8 : i32
    %14 = arith.index_cast %13 : i32 to index
    %c0_12 = arith.constant 0 : index
    %15 = vector.load %arg10[%14, %c0_12] : memref<64x128xf32, #tpu.memory_space<vmem>>, vector<8x128xf32>
    %cst = arith.constant dense<0.000000e+00> : vector<8x128xf32>
    %16 = tpu.matmul %9, %7, %cst {dimension_numbers = #tpu.dot_dimension_numbers<[1], [0], [0], [1], [0, 0, 1, 1], [], []>, precision = #tpu.contract_precision<fp32>} : vector<8x32xf32>, vector<32x128xf32>, vector<8x128xf32> -> vector<8x128xf32>
    %17 = arith.addf %15, %16 : vector<8x128xf32>
    %18 = arith.negf %17 : vector<8x128xf32>
    %19 = math.exp %18 : vector<8x128xf32>
    %cst_13 = arith.constant 1.000000e+00 : f32
    %20 = vector.broadcast %cst_13 : f32 to vector<8x128xf32>
    %21 = arith.addf %20, %19 : vector<8x128xf32>
    %22 = arith.divf %20, %21 : vector<8x128xf32>
    %23 = math.tanh %17 : vector<8x128xf32>
    %24 = vector.extract_strided_slice %22 {offsets = [0, 0], sizes = [8, 32], strides = [1, 1]} : vector<8x128xf32> to vector<8x32xf32>
    %25 = vector.extract_strided_slice %22 {offsets = [0, 32], sizes = [8, 32], strides = [1, 1]} : vector<8x128xf32> to vector<8x32xf32>
    %26 = vector.extract_strided_slice %23 {offsets = [0, 64], sizes = [8, 32], strides = [1, 1]} : vector<8x128xf32> to vector<8x32xf32>
    %27 = vector.extract_strided_slice %22 {offsets = [0, 96], sizes = [8, 32], strides = [1, 1]} : vector<8x128xf32> to vector<8x32xf32>
    %28 = arith.mulf %25, %11 : vector<8x32xf32>
    %29 = arith.mulf %24, %26 : vector<8x32xf32>
    %30 = arith.addf %28, %29 : vector<8x32xf32>
    %31 = math.tanh %30 : vector<8x32xf32>
    %32 = arith.mulf %27, %31 : vector<8x32xf32>
    %33 = arith.index_cast %13 : i32 to index
    %c0_14 = arith.constant 0 : index
    %34 = vector.load %arg9[%33, %c0_14] : memref<64x32xf32, #tpu.memory_space<vmem>>, vector<8x32xf32>
    tpu.vector_store %arg9[%33, %c0_14], %32 {strides = array<i32>} : memref<64x32xf32, #tpu.memory_space<vmem>>, vector<8x32xf32>,
    %c1_i32 = arith.constant 1 : i32
    %c8_i32_15 = arith.constant 8 : i32
    %35 = arith.muli %c1_i32, %c8_i32_15 : i32
    %36 = tpu.assume_multiple %35, 8 : i32
    %37 = arith.index_cast %36 : i32 to index
    %c0_16 = arith.constant 0 : index
    %38 = vector.load %arg10[%37, %c0_16] : memref<64x128xf32, #tpu.memory_space<vmem>>, vector<8x128xf32>
    %cst_17 = arith.constant dense<0.000000e+00> : vector<8x128xf32>
    %39 = tpu.matmul %32, %7, %cst_17 {dimension_numbers = #tpu.dot_dimension_numbers<[1], [0], [0], [1], [0, 0, 1, 1], [], []>, precision = #tpu.contract_precision<fp32>} : vector<8x32xf32>, vector<32x128xf32>, vector<8x128xf32> -> vector<8x128xf32>
    %40 = arith.addf %38, %39 : vector<8x128xf32>
    %41 = arith.negf %40 : vector<8x128xf32>
    %42 = math.exp %41 : vector<8x128xf32>
    %cst_18 = arith.constant 1.000000e+00 : f32
    %43 = vector.broadcast %cst_18 : f32 to vector<8x128xf32>
    %44 = arith.addf %43, %42 : vector<8x128xf32>
    %45 = arith.divf %43, %44 : vector<8x128xf32>
    %46 = math.tanh %40 : vector<8x128xf32>
    %47 = vector.extract_strided_slice %45 {offsets = [0, 0], sizes = [8, 32], strides = [1, 1]} : vector<8x128xf32> to vector<8x32xf32>
    %48 = vector.extract_strided_slice %45 {offsets = [0, 32], sizes = [8, 32], strides = [1, 1]} : vector<8x128xf32> to vector<8x32xf32>
    %49 = vector.extract_strided_slice %46 {offsets = [0, 64], sizes = [8, 32], strides = [1, 1]} : vector<8x128xf32> to vector<8x32xf32>
    %50 = vector.extract_strided_slice %45 {offsets = [0, 96], sizes = [8, 32], strides = [1, 1]} : vector<8x128xf32> to vector<8x32xf32>
    %51 = arith.mulf %48, %30 : vector<8x32xf32>
    %52 = arith.mulf %47, %49 : vector<8x32xf32>
    %53 = arith.addf %51, %52 : vector<8x32xf32>
    %54 = math.tanh %53 : vector<8x32xf32>
    %55 = arith.mulf %50, %54 : vector<8x32xf32>
    %56 = arith.index_cast %36 : i32 to index
    %c0_19 = arith.constant 0 : index
    %57 = vector.load %arg9[%56, %c0_19] : memref<64x32xf32, #tpu.memory_space<vmem>>, vector<8x32xf32>
    tpu.vector_store %arg9[%56, %c0_19], %55 {strides = array<i32>} : memref<64x32xf32, #tpu.memory_space<vmem>>, vector<8x32xf32>,
    %c2_i32 = arith.constant 2 : i32
    %c8_i32_20 = arith.constant 8 : i32
    %58 = arith.muli %c2_i32, %c8_i32_20 : i32
    %59 = tpu.assume_multiple %58, 8 : i32
    %60 = arith.index_cast %59 : i32 to index
    %c0_21 = arith.constant 0 : index
    %61 = vector.load %arg10[%60, %c0_21] : memref<64x128xf32, #tpu.memory_space<vmem>>, vector<8x128xf32>
    %cst_22 = arith.constant dense<0.000000e+00> : vector<8x128xf32>
    %62 = tpu.matmul %55, %7, %cst_22 {dimension_numbers = #tpu.dot_dimension_numbers<[1], [0], [0], [1], [0, 0, 1, 1], [], []>, precision = #tpu.contract_precision<fp32>} : vector<8x32xf32>, vector<32x128xf32>, vector<8x128xf32> -> vector<8x128xf32>
    %63 = arith.addf %61, %62 : vector<8x128xf32>
    %64 = arith.negf %63 : vector<8x128xf32>
    %65 = math.exp %64 : vector<8x128xf32>
    %cst_23 = arith.constant 1.000000e+00 : f32
    %66 = vector.broadcast %cst_23 : f32 to vector<8x128xf32>
    %67 = arith.addf %66, %65 : vector<8x128xf32>
    %68 = arith.divf %66, %67 : vector<8x128xf32>
    %69 = math.tanh %63 : vector<8x128xf32>
    %70 = vector.extract_strided_slice %68 {offsets = [0, 0], sizes = [8, 32], strides = [1, 1]} : vector<8x128xf32> to vector<8x32xf32>
    %71 = vector.extract_strided_slice %68 {offsets = [0, 32], sizes = [8, 32], strides = [1, 1]} : vector<8x128xf32> to vector<8x32xf32>
    %72 = vector.extract_strided_slice %69 {offsets = [0, 64], sizes = [8, 32], strides = [1, 1]} : vector<8x128xf32> to vector<8x32xf32>
    %73 = vector.extract_strided_slice %68 {offsets = [0, 96], sizes = [8, 32], strides = [1, 1]} : vector<8x128xf32> to vector<8x32xf32>
    %74 = arith.mulf %71, %53 : vector<8x32xf32>
    %75 = arith.mulf %70, %72 : vector<8x32xf32>
    %76 = arith.addf %74, %75 : vector<8x32xf32>
    %77 = math.tanh %76 : vector<8x32xf32>
    %78 = arith.mulf %73, %77 : vector<8x32xf32>
    %79 = arith.index_cast %59 : i32 to index
    %c0_24 = arith.constant 0 : index
    %80 = vector.load %arg9[%79, %c0_24] : memref<64x32xf32, #tpu.memory_space<vmem>>, vector<8x32xf32>
    tpu.vector_store %arg9[%79, %c0_24], %78 {strides = array<i32>} : memref<64x32xf32, #tpu.memory_space<vmem>>, vector<8x32xf32>,
    %c3_i32 = arith.constant 3 : i32
    %c8_i32_25 = arith.constant 8 : i32
    %81 = arith.muli %c3_i32, %c8_i32_25 : i32
    %82 = tpu.assume_multiple %81, 8 : i32
    %83 = arith.index_cast %82 : i32 to index
    %c0_26 = arith.constant 0 : index
    %84 = vector.load %arg10[%83, %c0_26] : memref<64x128xf32, #tpu.memory_space<vmem>>, vector<8x128xf32>
    %cst_27 = arith.constant dense<0.000000e+00> : vector<8x128xf32>
    %85 = tpu.matmul %78, %7, %cst_27 {dimension_numbers = #tpu.dot_dimension_numbers<[1], [0], [0], [1], [0, 0, 1, 1], [], []>, precision = #tpu.contract_precision<fp32>} : vector<8x32xf32>, vector<32x128xf32>, vector<8x128xf32> -> vector<8x128xf32>
    %86 = arith.addf %84, %85 : vector<8x128xf32>
    %87 = arith.negf %86 : vector<8x128xf32>
    %88 = math.exp %87 : vector<8x128xf32>
    %cst_28 = arith.constant 1.000000e+00 : f32
    %89 = vector.broadcast %cst_28 : f32 to vector<8x128xf32>
    %90 = arith.addf %89, %88 : vector<8x128xf32>
    %91 = arith.divf %89, %90 : vector<8x128xf32>
    %92 = math.tanh %86 : vector<8x128xf32>
    %93 = vector.extract_strided_slice %91 {offsets = [0, 0], sizes = [8, 32], strides = [1, 1]} : vector<8x128xf32> to vector<8x32xf32>
    %94 = vector.extract_strided_slice %91 {offsets = [0, 32], sizes = [8, 32], strides = [1, 1]} : vector<8x128xf32> to vector<8x32xf32>
    %95 = vector.extract_strided_slice %92 {offsets = [0, 64], sizes = [8, 32], strides = [1, 1]} : vector<8x128xf32> to vector<8x32xf32>
    %96 = vector.extract_strided_slice %91 {offsets = [0, 96], sizes = [8, 32], strides = [1, 1]} : vector<8x128xf32> to vector<8x32xf32>
    %97 = arith.mulf %94, %76 : vector<8x32xf32>
    %98 = arith.mulf %93, %95 : vector<8x32xf32>
    %99 = arith.addf %97, %98 : vector<8x32xf32>
    %100 = math.tanh %99 : vector<8x32xf32>
    %101 = arith.mulf %96, %100 : vector<8x32xf32>
    %102 = arith.index_cast %82 : i32 to index
    %c0_29 = arith.constant 0 : index
    %103 = vector.load %arg9[%102, %c0_29] : memref<64x32xf32, #tpu.memory_space<vmem>>, vector<8x32xf32>
    tpu.vector_store %arg9[%102, %c0_29], %101 {strides = array<i32>} : memref<64x32xf32, #tpu.memory_space<vmem>>, vector<8x32xf32>,
    %c4_i32 = arith.constant 4 : i32
    %c8_i32_30 = arith.constant 8 : i32
    %104 = arith.muli %c4_i32, %c8_i32_30 : i32
    %105 = tpu.assume_multiple %104, 8 : i32
    %106 = arith.index_cast %105 : i32 to index
    %c0_31 = arith.constant 0 : index
    %107 = vector.load %arg10[%106, %c0_31] : memref<64x128xf32, #tpu.memory_space<vmem>>, vector<8x128xf32>
    %cst_32 = arith.constant dense<0.000000e+00> : vector<8x128xf32>
    %108 = tpu.matmul %101, %7, %cst_32 {dimension_numbers = #tpu.dot_dimension_numbers<[1], [0], [0], [1], [0, 0, 1, 1], [], []>, precision = #tpu.contract_precision<fp32>} : vector<8x32xf32>, vector<32x128xf32>, vector<8x128xf32> -> vector<8x128xf32>
    %109 = arith.addf %107, %108 : vector<8x128xf32>
    %110 = arith.negf %109 : vector<8x128xf32>
    %111 = math.exp %110 : vector<8x128xf32>
    %cst_33 = arith.constant 1.000000e+00 : f32
    %112 = vector.broadcast %cst_33 : f32 to vector<8x128xf32>
    %113 = arith.addf %112, %111 : vector<8x128xf32>
    %114 = arith.divf %112, %113 : vector<8x128xf32>
    %115 = math.tanh %109 : vector<8x128xf32>
    %116 = vector.extract_strided_slice %114 {offsets = [0, 0], sizes = [8, 32], strides = [1, 1]} : vector<8x128xf32> to vector<8x32xf32>
    %117 = vector.extract_strided_slice %114 {offsets = [0, 32], sizes = [8, 32], strides = [1, 1]} : vector<8x128xf32> to vector<8x32xf32>
    %118 = vector.extract_strided_slice %115 {offsets = [0, 64], sizes = [8, 32], strides = [1, 1]} : vector<8x128xf32> to vector<8x32xf32>
    %119 = vector.extract_strided_slice %114 {offsets = [0, 96], sizes = [8, 32], strides = [1, 1]} : vector<8x128xf32> to vector<8x32xf32>
    %120 = arith.mulf %117, %99 : vector<8x32xf32>
    %121 = arith.mulf %116, %118 : vector<8x32xf32>
    %122 = arith.addf %120, %121 : vector<8x32xf32>
    %123 = math.tanh %122 : vector<8x32xf32>
    %124 = arith.mulf %119, %123 : vector<8x32xf32>
    %125 = arith.index_cast %105 : i32 to index
    %c0_34 = arith.constant 0 : index
    %126 = vector.load %arg9[%125, %c0_34] : memref<64x32xf32, #tpu.memory_space<vmem>>, vector<8x32xf32>
    tpu.vector_store %arg9[%125, %c0_34], %124 {strides = array<i32>} : memref<64x32xf32, #tpu.memory_space<vmem>>, vector<8x32xf32>,
    %c5_i32 = arith.constant 5 : i32
    %c8_i32_35 = arith.constant 8 : i32
    %127 = arith.muli %c5_i32, %c8_i32_35 : i32
    %128 = tpu.assume_multiple %127, 8 : i32
    %129 = arith.index_cast %128 : i32 to index
    %c0_36 = arith.constant 0 : index
    %130 = vector.load %arg10[%129, %c0_36] : memref<64x128xf32, #tpu.memory_space<vmem>>, vector<8x128xf32>
    %cst_37 = arith.constant dense<0.000000e+00> : vector<8x128xf32>
    %131 = tpu.matmul %124, %7, %cst_37 {dimension_numbers = #tpu.dot_dimension_numbers<[1], [0], [0], [1], [0, 0, 1, 1], [], []>, precision = #tpu.contract_precision<fp32>} : vector<8x32xf32>, vector<32x128xf32>, vector<8x128xf32> -> vector<8x128xf32>
    %132 = arith.addf %130, %131 : vector<8x128xf32>
    %133 = arith.negf %132 : vector<8x128xf32>
    %134 = math.exp %133 : vector<8x128xf32>
    %cst_38 = arith.constant 1.000000e+00 : f32
    %135 = vector.broadcast %cst_38 : f32 to vector<8x128xf32>
    %136 = arith.addf %135, %134 : vector<8x128xf32>
    %137 = arith.divf %135, %136 : vector<8x128xf32>
    %138 = math.tanh %132 : vector<8x128xf32>
    %139 = vector.extract_strided_slice %137 {offsets = [0, 0], sizes = [8, 32], strides = [1, 1]} : vector<8x128xf32> to vector<8x32xf32>
    %140 = vector.extract_strided_slice %137 {offsets = [0, 32], sizes = [8, 32], strides = [1, 1]} : vector<8x128xf32> to vector<8x32xf32>
    %141 = vector.extract_strided_slice %138 {offsets = [0, 64], sizes = [8, 32], strides = [1, 1]} : vector<8x128xf32> to vector<8x32xf32>
    %142 = vector.extract_strided_slice %137 {offsets = [0, 96], sizes = [8, 32], strides = [1, 1]} : vector<8x128xf32> to vector<8x32xf32>
    %143 = arith.mulf %140, %122 : vector<8x32xf32>
    %144 = arith.mulf %139, %141 : vector<8x32xf32>
    %145 = arith.addf %143, %144 : vector<8x32xf32>
    %146 = math.tanh %145 : vector<8x32xf32>
    %147 = arith.mulf %142, %146 : vector<8x32xf32>
    %148 = arith.index_cast %128 : i32 to index
    %c0_39 = arith.constant 0 : index
    %149 = vector.load %arg9[%148, %c0_39] : memref<64x32xf32, #tpu.memory_space<vmem>>, vector<8x32xf32>
    tpu.vector_store %arg9[%148, %c0_39], %147 {strides = array<i32>} : memref<64x32xf32, #tpu.memory_space<vmem>>, vector<8x32xf32>,
    %c6_i32 = arith.constant 6 : i32
    %c8_i32_40 = arith.constant 8 : i32
    %150 = arith.muli %c6_i32, %c8_i32_40 : i32
    %151 = tpu.assume_multiple %150, 8 : i32
    %152 = arith.index_cast %151 : i32 to index
    %c0_41 = arith.constant 0 : index
    %153 = vector.load %arg10[%152, %c0_41] : memref<64x128xf32, #tpu.memory_space<vmem>>, vector<8x128xf32>
    %cst_42 = arith.constant dense<0.000000e+00> : vector<8x128xf32>
    %154 = tpu.matmul %147, %7, %cst_42 {dimension_numbers = #tpu.dot_dimension_numbers<[1], [0], [0], [1], [0, 0, 1, 1], [], []>, precision = #tpu.contract_precision<fp32>} : vector<8x32xf32>, vector<32x128xf32>, vector<8x128xf32> -> vector<8x128xf32>
    %155 = arith.addf %153, %154 : vector<8x128xf32>
    %156 = arith.negf %155 : vector<8x128xf32>
    %157 = math.exp %156 : vector<8x128xf32>
    %cst_43 = arith.constant 1.000000e+00 : f32
    %158 = vector.broadcast %cst_43 : f32 to vector<8x128xf32>
    %159 = arith.addf %158, %157 : vector<8x128xf32>
    %160 = arith.divf %158, %159 : vector<8x128xf32>
    %161 = math.tanh %155 : vector<8x128xf32>
    %162 = vector.extract_strided_slice %160 {offsets = [0, 0], sizes = [8, 32], strides = [1, 1]} : vector<8x128xf32> to vector<8x32xf32>
    %163 = vector.extract_strided_slice %160 {offsets = [0, 32], sizes = [8, 32], strides = [1, 1]} : vector<8x128xf32> to vector<8x32xf32>
    %164 = vector.extract_strided_slice %161 {offsets = [0, 64], sizes = [8, 32], strides = [1, 1]} : vector<8x128xf32> to vector<8x32xf32>
    %165 = vector.extract_strided_slice %160 {offsets = [0, 96], sizes = [8, 32], strides = [1, 1]} : vector<8x128xf32> to vector<8x32xf32>
    %166 = arith.mulf %163, %145 : vector<8x32xf32>
    %167 = arith.mulf %162, %164 : vector<8x32xf32>
    %168 = arith.addf %166, %167 : vector<8x32xf32>
    %169 = math.tanh %168 : vector<8x32xf32>
    %170 = arith.mulf %165, %169 : vector<8x32xf32>
    %171 = arith.index_cast %151 : i32 to index
    %c0_44 = arith.constant 0 : index
    %172 = vector.load %arg9[%171, %c0_44] : memref<64x32xf32, #tpu.memory_space<vmem>>, vector<8x32xf32>
    tpu.vector_store %arg9[%171, %c0_44], %170 {strides = array<i32>} : memref<64x32xf32, #tpu.memory_space<vmem>>, vector<8x32xf32>,
    %c7_i32 = arith.constant 7 : i32
    %c8_i32_45 = arith.constant 8 : i32
    %173 = arith.muli %c7_i32, %c8_i32_45 : i32
    %174 = tpu.assume_multiple %173, 8 : i32
    %175 = arith.index_cast %174 : i32 to index
    %c0_46 = arith.constant 0 : index
    %176 = vector.load %arg10[%175, %c0_46] : memref<64x128xf32, #tpu.memory_space<vmem>>, vector<8x128xf32>
    %cst_47 = arith.constant dense<0.000000e+00> : vector<8x128xf32>
    %177 = tpu.matmul %170, %7, %cst_47 {dimension_numbers = #tpu.dot_dimension_numbers<[1], [0], [0], [1], [0, 0, 1, 1], [], []>, precision = #tpu.contract_precision<fp32>} : vector<8x32xf32>, vector<32x128xf32>, vector<8x128xf32> -> vector<8x128xf32>
    %178 = arith.addf %176, %177 : vector<8x128xf32>
    %179 = arith.negf %178 : vector<8x128xf32>
    %180 = math.exp %179 : vector<8x128xf32>
    %cst_48 = arith.constant 1.000000e+00 : f32
    %181 = vector.broadcast %cst_48 : f32 to vector<8x128xf32>
    %182 = arith.addf %181, %180 : vector<8x128xf32>
    %183 = arith.divf %181, %182 : vector<8x128xf32>
    %184 = math.tanh %178 : vector<8x128xf32>
    %185 = vector.extract_strided_slice %183 {offsets = [0, 0], sizes = [8, 32], strides = [1, 1]} : vector<8x128xf32> to vector<8x32xf32>
    %186 = vector.extract_strided_slice %183 {offsets = [0, 32], sizes = [8, 32], strides = [1, 1]} : vector<8x128xf32> to vector<8x32xf32>
    %187 = vector.extract_strided_slice %184 {offsets = [0, 64], sizes = [8, 32], strides = [1, 1]} : vector<8x128xf32> to vector<8x32xf32>
    %188 = vector.extract_strided_slice %183 {offsets = [0, 96], sizes = [8, 32], strides = [1, 1]} : vector<8x128xf32> to vector<8x32xf32>
    %189 = arith.mulf %186, %168 : vector<8x32xf32>
    %190 = arith.mulf %185, %187 : vector<8x32xf32>
    %191 = arith.addf %189, %190 : vector<8x32xf32>
    %192 = math.tanh %191 : vector<8x32xf32>
    %193 = arith.mulf %188, %192 : vector<8x32xf32>
    %194 = arith.index_cast %174 : i32 to index
    %c0_49 = arith.constant 0 : index
    %195 = vector.load %arg9[%194, %c0_49] : memref<64x32xf32, #tpu.memory_space<vmem>>, vector<8x32xf32>
    tpu.vector_store %arg9[%194, %c0_49], %193 {strides = array<i32>} : memref<64x32xf32, #tpu.memory_space<vmem>>, vector<8x32xf32>,
    %c8_i32_50 = arith.constant 8 : i32
    %c0_51 = arith.constant 0 : index
    %c0_52 = arith.constant 0 : index
    %c0_53 = arith.constant 0 : index
    %196 = vector.load %arg7[%c0_51, %c0_52, %c0_53] : memref<1x8x32xf32, #tpu.memory_space<vmem>>, vector<1x8x32xf32>
    %197 = vector.shape_cast %196 : vector<1x8x32xf32> to vector<8x32xf32>
    %198 = vector.shape_cast %193 : vector<8x32xf32> to vector<1x8x32xf32>
    tpu.vector_store %arg7[%c0_51, %c0_52, %c0_53], %198 {strides = array<i32>} : memref<1x8x32xf32, #tpu.memory_space<vmem>>, vector<1x8x32xf32>,
    %c0_54 = arith.constant 0 : index
    %c0_55 = arith.constant 0 : index
    %c0_56 = arith.constant 0 : index
    %199 = vector.load %arg8[%c0_54, %c0_55, %c0_56] : memref<1x8x32xf32, #tpu.memory_space<vmem>>, vector<1x8x32xf32>
    %200 = vector.shape_cast %199 : vector<1x8x32xf32> to vector<8x32xf32>
    %201 = vector.shape_cast %191 : vector<8x32xf32> to vector<1x8x32xf32>
    tpu.vector_store %arg8[%c0_54, %c0_55, %c0_56], %201 {strides = array<i32>} : memref<1x8x32xf32, #tpu.memory_space<vmem>>, vector<1x8x32xf32>,
    return
  }
  func.func @transform_0(%arg0: i32) -> (i32, i32) {
    %c0_i32 = arith.constant 0 : i32
    %c0_i32_0 = arith.constant 0 : i32
    %c0_i32_1 = arith.constant 0 : i32
    return %c0_i32, %c0_i32_0 : i32, i32
  }
  func.func @transform_1(%arg0: i32) -> (i32, i32, i32) {
    %c0_i32 = arith.constant 0 : i32
    %c0_i32_0 = arith.constant 0 : i32
    %c0_i32_1 = arith.constant 0 : i32
    return %arg0, %c0_i32, %c0_i32_0 : i32, i32, i32
  }
  func.func @transform_2(%arg0: i32) -> (i32, i32, i32) {
    %c0_i32 = arith.constant 0 : i32
    %c0_i32_0 = arith.constant 0 : i32
    %c0_i32_1 = arith.constant 0 : i32
    return %arg0, %c0_i32, %c0_i32_0 : i32, i32, i32
  }
  func.func @transform_3(%arg0: i32) -> (i32, i32, i32) {
    %c0_i32 = arith.constant 0 : i32
    %c0_i32_0 = arith.constant 0 : i32
    %c0_i32_1 = arith.constant 0 : i32
    return %arg0, %c0_i32, %c0_i32_0 : i32, i32, i32
  }
  func.func @transform_4(%arg0: i32) -> (i32, i32, i32) {
    %c0_i32 = arith.constant 0 : i32
    %c0_i32_0 = arith.constant 0 : i32
    %c0_i32_1 = arith.constant 0 : i32
    return %arg0, %c0_i32, %c0_i32_0 : i32, i32, i32
  }
  func.func @transform_5(%arg0: i32) -> (i32, i32, i32) {
    %c0_i32 = arith.constant 0 : i32
    %c0_i32_0 = arith.constant 0 : i32
    %c0_i32_1 = arith.constant 0 : i32
    return %arg0, %c0_i32, %c0_i32_0 : i32, i32, i32
  }
  func.func @transform_6(%arg0: i32) -> (i32, i32, i32) {
    %c0_i32 = arith.constant 0 : i32
    %c0_i32_0 = arith.constant 0 : i32
    %c0_i32_1 = arith.constant 0 : i32
    return %arg0, %c0_i32, %c0_i32_0 : i32, i32, i32
  }
  func.func @transform_7(%arg0: i32) -> (i32, i32, i32) {
    %c0_i32 = arith.constant 0 : i32
    %c0_i32_0 = arith.constant 0 : i32
    %c0_i32_1 = arith.constant 0 : i32
    return %arg0, %c0_i32, %c0_i32_0 : i32, i32, i32
  }
}

</mosaic_0001>

<llo_original>
// kernel: tpu_custom_call.1
$region0: #{tpu_custom_call.1}
  #allocation0 [shape = 'u32[]', space=smem, size = 0x4, offset = 0x4, fixed_abs, tag = 'smem constant byte address 0x4 - core index']
  #allocation1 [shape = 'u32[144,128]{1,0:T(1,128)}', space=vmem, size = 0x12000, scoped, tag = 'internal scratch']
  #allocation2 [shape = 'f32[64,32]{1,0:T(8,128)}', space=vmem, size = 0x8000, scoped, tag = 'scratch operand']
  #allocation3 [shape = 'f32[64,128]{1,0:T(8,128)}', space=vmem, size = 0x8000, scoped, tag = 'scratch operand']
  %s0 = inlined_call_operand.vmem [shape: f32[64,32], index: 0, kind: input, shape index: {}]
  %s1 = inlined_call_operand.vmem [shape: f32[2,8,32], index: 1, kind: input, shape index: {}]
  %s2 = inlined_call_operand.vmem [shape: f32[2,8,32], index: 2, kind: input, shape index: {}]
  %s3 = inlined_call_operand.vmem [shape: f32[2,32,128], index: 3, kind: input, shape index: {}]
  %s4 = inlined_call_operand.hbm [shape: f32[2,32,128], index: 4, kind: input, shape index: {}]
  %s5 = inlined_call_operand.vmem [shape: f32[2,1,128], index: 5, kind: input, shape index: {}]
  %s6 = inlined_call_operand.hbm [shape: f32[2,8,32], index: 6, kind: output, shape index: {0}]
  %s7 = inlined_call_operand.hbm [shape: f32[2,8,32], index: 7, kind: output, shape index: {1}]
  %8 = xla_tuple %s6, %s7
  %s9 = sld [smem:[#allocation0]]
  $region77: #{tpu_custom_call.1} parent=0
    _
  %s11 = ssub.s32 1, %s9
  %s12 = scalar_select 0, %s11, %s9
  $region1: #{tpu_custom_call.1} parent=0
    #allocation4 [shape = 'u8[32768]{0}', space=vmem, size = 0x8000, scoped, tag = 'input window, operand 4']
    #allocation5 [shape = 's32[2]{0}', space=sflag, size = 0x8, scoped, tag = 'scoped memory for tpu_custom_call.1']
    #allocation6 [shape = 's32[2]{0}', space=sflag, size = 0x8, scoped, tag = 'scoped memory for tpu_custom_call.1']
    #allocation7 [shape = 'u8[8192]{0}', space=vmem, size = 0x2000, scoped, tag = 'output window, operand 0']
    #allocation8 [shape = 'u8[8192]{0}', space=vmem, size = 0x2000, scoped, tag = 'output window, operand 1']
    #allocation9 [shape = 's32[2]{0}', space=sflag, size = 0x8, scoped, tag = 'scoped memory for tpu_custom_call.1']
    %13 = vsyncpa [#allocation5], 0
    %s14 = scalar_lea.sflag [#allocation5], 1
    %15 = vsyncpa %s14, 0
    %16 = vsyncpa [#allocation6], 0
    %s17 = scalar_lea.sflag [#allocation6], 1
    %18 = vsyncpa %s17, 0
    %19 = vsyncpa [#allocation9], 0
    %s20 = scalar_lea.sflag [#allocation9], 1
    %21 = vsyncpa %s20, 0
    loop: start=0, step=1, limit=4
    $region2: #{tpu_custom_call.1} parent=1 // loop_pre_header
      _
    $region3: #{tpu_custom_call.1} parent=1 // loop_header
      %s23 = sphi 0, %s27
      %p24 = scmp.ge.s32.totalorder %s23, 4
      %s31 = sphi 0, %s31
      %s33 = sphi 0, %s31
      %s34 = sphi 0, %s33
      %s48 = sphi 0, %s34
      %s54 = sphi 0, %s56
      %s57 = sphi 0, %s54
      %s58 = sphi 0, %s57
      %s74 = sphi 0, %s58
      %s80 = sphi 0, %s82
      %s83 = sphi 0, %s80
      %s84 = sphi 0, %s83
      %s100 = sphi 0, %s84
      %s106 = sphi 0, %s108
      %s109 = sphi 0, %s106
      %s110 = sphi 0, %s109
      %s126 = sphi 0, %s110
      %s132 = sphi 0, %s134
      %s135 = sphi 0, %s132
      %s136 = sphi 0, %s135
      %s152 = sphi 0, %s136
      %s158 = sphi 0, %s160
      %s161 = sphi 0, %s158
      %s162 = sphi 0, %s161
      %s178 = sphi 0, %s162
      %s184 = sphi 0, %s186
      %s187 = sphi 0, %s184
      %s188 = sphi 0, %s187
      %s204 = sphi 0, %s188
      %s210 = sphi 0, %s212
      %s213 = sphi 0, %s210
      %s214 = sphi 0, %s213
      %s230 = sphi 0, %s214
    $region4: #{tpu_custom_call.1} parent=1 // loop_header_branch
      %26 = sbr.rel (%p24) target = $region8
    $region5: #{tpu_custom_call.1} parent=1 // loop_body
      %s28 = ssub.s32 %s23, 1
      %s29 = ssub.s32 %s23, 2
      %s30 = sadd.s32 %s23, 1
      %s32 = sadd.s32 %s31, 1
      %p35 = scmp.eq.s32.totalorder %s23, 1
      %p36 = scmp.ne.s32.totalorder %s31, %s33
      %p37 = scmp.eq.s32.totalorder %s23, 0
      %p38 = por %p36, %p37
      %p39 = scmp.ne.s32.totalorder %s31, %s33
      %p40 = scmp.eq.s32.totalorder %s28, 1
      %p41 = por %p39, %p40
      %p42 = scmp.ne.s32.totalorder %s33, %s34
      %p43 = scmp.eq.s32.totalorder %s28, 0
      %p44 = por %p42, %p43
      %p45 = scmp.ne.s32.totalorder %s33, %s34
      %p46 = scmp.eq.s32.totalorder %s29, 1
      %p47 = por %p45, %p46
      %p49 = scmp.ne.s32.totalorder %s34, %s48
      %p50 = scmp.eq.s32.totalorder %s29, 0
      %p51 = por %p49, %p50
      %s52 = ssub.s32 %s23, %s30
      %p53 = scmp.eq.s32.totalorder %s52, 0
      %s55 = sadd.s32 %s54, 1
      %s56 = scalar_select %p53, %s54, %s55
      %p59 = pneg %p53
      %p60 = scmp.eq.s32.totalorder %s23, 1
      %p61 = por %p59, %p60
      %p62 = scmp.ne.s32.totalorder %s54, %s57
      %p63 = scmp.eq.s32.totalorder %s23, 0
      %p64 = por %p62, %p63
      %p65 = scmp.ne.s32.totalorder %s54, %s57
      %p66 = scmp.eq.s32.totalorder %s28, 1
      %p67 = por %p65, %p66
      %p68 = scmp.ne.s32.totalorder %s57, %s58
      %p69 = scmp.eq.s32.totalorder %s28, 0
      %p70 = por %p68, %p69
      %p71 = scmp.ne.s32.totalorder %s57, %s58
      %p72 = scmp.eq.s32.totalorder %s29, 1
      %p73 = por %p71, %p72
      %p75 = scmp.ne.s32.totalorder %s58, %s74
      %p76 = scmp.eq.s32.totalorder %s29, 0
      %p77 = por %p75, %p76
      %s78 = ssub.s32 %s23, %s30
      %p79 = scmp.eq.s32.totalorder %s78, 0
      %s81 = sadd.s32 %s80, 1
      %s82 = scalar_select %p79, %s80, %s81
      %p85 = pneg %p79
      %p86 = scmp.eq.s32.totalorder %s23, 1
      %p87 = por %p85, %p86
      %p88 = scmp.ne.s32.totalorder %s80, %s83
      %p89 = scmp.eq.s32.totalorder %s23, 0
      %p90 = por %p88, %p89
      %p91 = scmp.ne.s32.totalorder %s80, %s83
      %p92 = scmp.eq.s32.totalorder %s28, 1
      %p93 = por %p91, %p92
      %p94 = scmp.ne.s32.totalorder %s83, %s84
      %p95 = scmp.eq.s32.totalorder %s28, 0
      %p96 = por %p94, %p95
      %p97 = scmp.ne.s32.totalorder %s83, %s84
      %p98 = scmp.eq.s32.totalorder %s29, 1
      %p99 = por %p97, %p98
      %p101 = scmp.ne.s32.totalorder %s84, %s100
      %p102 = scmp.eq.s32.totalorder %s29, 0
      %p103 = por %p101, %p102
      %s104 = ssub.s32 %s23, %s30
      %p105 = scmp.eq.s32.totalorder %s104, 0
      %s107 = sadd.s32 %s106, 1
      %s108 = scalar_select %p105, %s106, %s107
      %p111 = pneg %p105
      %p112 = scmp.eq.s32.totalorder %s23, 1
      %p113 = por %p111, %p112
      %p114 = scmp.ne.s32.totalorder %s106, %s109
      %p115 = scmp.eq.s32.totalorder %s23, 0
      %p116 = por %p114, %p115
      %p117 = scmp.ne.s32.totalorder %s106, %s109
      %p118 = scmp.eq.s32.totalorder %s28, 1
      %p119 = por %p117, %p118
      %p120 = scmp.ne.s32.totalorder %s109, %s110
      %p121 = scmp.eq.s32.totalorder %s28, 0
      %p122 = por %p120, %p121
      %p123 = scmp.ne.s32.totalorder %s109, %s110
      %p124 = scmp.eq.s32.totalorder %s29, 1
      %p125 = por %p123, %p124
      %p127 = scmp.ne.s32.totalorder %s110, %s126
      %p128 = scmp.eq.s32.totalorder %s29, 0
      %p129 = por %p127, %p128
      %s130 = ssub.s32 %s23, %s30
      %p131 = scmp.eq.s32.totalorder %s130, 0
      %s133 = sadd.s32 %s132, 1
      %s134 = scalar_select %p131, %s132, %s133
      %p137 = pneg %p131
      %p138 = scmp.eq.s32.totalorder %s23, 1
      %p139 = por %p137, %p138
      %p140 = scmp.ne.s32.totalorder %s132, %s135
      %p141 = scmp.eq.s32.totalorder %s23, 0
      %p142 = por %p140, %p141
      %p143 = scmp.ne.s32.totalorder %s132, %s135
      %p144 = scmp.eq.s32.totalorder %s28, 1
      %p145 = por %p143, %p144
      %p146 = scmp.ne.s32.totalorder %s135, %s136
      %p147 = scmp.eq.s32.totalorder %s28, 0
      %p148 = por %p146, %p147
      %p149 = scmp.ne.s32.totalorder %s135, %s136
      %p150 = scmp.eq.s32.totalorder %s29, 1
      %p151 = por %p149, %p150
      %p153 = scmp.ne.s32.totalorder %s136, %s152
      %p154 = scmp.eq.s32.totalorder %s29, 0
      %p155 = por %p153, %p154
      %s156 = ssub.s32 %s23, %s30
      %p157 = scmp.eq.s32.totalorder %s156, 0
      %s159 = sadd.s32 %s158, 1
      %s160 = scalar_select %p157, %s158, %s159
      %p163 = pneg %p157
      %p164 = scmp.eq.s32.totalorder %s23, 1
      %p165 = por %p163, %p164
      %p166 = scmp.ne.s32.totalorder %s158, %s161
      %p167 = scmp.eq.s32.totalorder %s23, 0
      %p168 = por %p166, %p167
      %p169 = scmp.ne.s32.totalorder %s158, %s161
      %p170 = scmp.eq.s32.totalorder %s28, 1
      %p171 = por %p169, %p170
      %p172 = scmp.ne.s32.totalorder %s161, %s162
      %p173 = scmp.eq.s32.totalorder %s28, 0
      %p174 = por %p172, %p173
      %p175 = scmp.ne.s32.totalorder %s161, %s162
      %p176 = scmp.eq.s32.totalorder %s29, 1
      %p177 = por %p175, %p176
      %p179 = scmp.ne.s32.totalorder %s162, %s178
      %p180 = scmp.eq.s32.totalorder %s29, 0
      %p181 = por %p179, %p180
      %s182 = ssub.s32 %s23, %s30
      %p183 = scmp.eq.s32.totalorder %s182, 0
      %s185 = sadd.s32 %s184, 1
      %s186 = scalar_select %p183, %s184, %s185
      %p189 = pneg %p183
      %p190 = scmp.eq.s32.totalorder %s23, 1
      %p191 = por %p189, %p190
      %p192 = scmp.ne.s32.totalorder %s184, %s187
      %p193 = scmp.eq.s32.totalorder %s23, 0
      %p194 = por %p192, %p193
      %p195 = scmp.ne.s32.totalorder %s184, %s187
      %p196 = scmp.eq.s32.totalorder %s28, 1
      %p197 = por %p195, %p196
      %p198 = scmp.ne.s32.totalorder %s187, %s188
      %p199 = scmp.eq.s32.totalorder %s28, 0
      %p200 = por %p198, %p199
      %p201 = scmp.ne.s32.totalorder %s187, %s188
      %p202 = scmp.eq.s32.totalorder %s29, 1
      %p203 = por %p201, %p202
      %p205 = scmp.ne.s32.totalorder %s188, %s204
      %p206 = scmp.eq.s32.totalorder %s29, 0
      %p207 = por %p205, %p206
      %s208 = ssub.s32 %s23, %s30
      %p209 = scmp.eq.s32.totalorder %s208, 0
      %s211 = sadd.s32 %s210, 1
      %s212 = scalar_select %p209, %s210, %s211
      %p215 = pneg %p209
      %p216 = scmp.eq.s32.totalorder %s23, 1
      %p217 = por %p215, %p216
      %p218 = scmp.ne.s32.totalorder %s210, %s213
      %p219 = scmp.eq.s32.totalorder %s23, 0
      %p220 = por %p218, %p219
      %p221 = scmp.ne.s32.totalorder %s210, %s213
      %p222 = scmp.eq.s32.totalorder %s28, 1
      %p223 = por %p221, %p222
      %p224 = scmp.ne.s32.totalorder %s213, %s214
      %p225 = scmp.eq.s32.totalorder %s28, 0
      %p226 = por %p224, %p225
      %p227 = scmp.ne.s32.totalorder %s213, %s214
      %p228 = scmp.eq.s32.totalorder %s29, 1
      %p229 = por %p227, %p228
      %p231 = scmp.ne.s32.totalorder %s214, %s230
      %p232 = scmp.eq.s32.totalorder %s29, 0
      %p233 = por %p231, %p232
      %p234 = scmp.le.s32.totalorder 1, %s23
      %p235 = scmp.lt.s32.totalorder %s23, 3
      %p236 = pnand %p234, %p235
      %p237 = pneg %p236
      // Predicated region
      $region9: #{tpu_custom_call.1} parent=5 // pred_check
        _
      $region10: #{tpu_custom_call.1} parent=5 // pred_check_branch
        %239 = sbr.rel (%p236) target = $region12
      $region11: #{tpu_custom_call.1} parent=5 // pred_region
        %s240 = ssub.s32 %s23, 1
        // Predicated region
        $region13: #{tpu_custom_call.1} parent=11 // pred_check
          %p241 = pneg %p44
        $region14: #{tpu_custom_call.1} parent=11 // pred_check_branch
          %243 = sbr.rel (%p241) target = $region16
        $region15: #{tpu_custom_call.1} parent=11 // pred_region
          _
        $region16: #{tpu_custom_call.1} parent=11 // pred_fallthru
          _
      $region12: #{tpu_custom_call.1} parent=5 // pred_fallthru
        _
      %p244 = scmp.lt.s32.totalorder %s23, 2
      // Predicated region
      $region17: #{tpu_custom_call.1} parent=5 // pred_check
        %p245 = pneg %p244
      $region18: #{tpu_custom_call.1} parent=5 // pred_check_branch
        %247 = sbr.rel (%p245) target = $region20
      $region19: #{tpu_custom_call.1} parent=5 // pred_region
        // Predicated region
        $region21: #{tpu_custom_call.1} parent=19 // pred_check
          %p248 = pneg %p64
        $region22: #{tpu_custom_call.1} parent=19 // pred_check_branch
          %250 = sbr.rel (%p248) target = $region24
        $region23: #{tpu_custom_call.1} parent=19 // pred_region
          %p251 = scmp.lt.s32.totalorder %s23, 1
          %s252 = scalar_select %p251, %s23, 1
          %s253 = smul.addr %s252, 8
          %s254 = scalar_lea.vmem %s1, %s253
        $region24: #{tpu_custom_call.1} parent=19 // pred_fallthru
          _
        // Predicated region
        $region25: #{tpu_custom_call.1} parent=19 // pred_check
          %p255 = pneg %p90
        $region26: #{tpu_custom_call.1} parent=19 // pred_check_branch
          %257 = sbr.rel (%p255) target = $region28
        $region27: #{tpu_custom_call.1} parent=19 // pred_region
          %p258 = scmp.lt.s32.totalorder %s23, 1
          %s259 = scalar_select %p258, %s23, 1
          %s260 = smul.addr %s259, 8
          %s261 = scalar_lea.vmem %s2, %s260
        $region28: #{tpu_custom_call.1} parent=19 // pred_fallthru
          _
        // Predicated region
        $region29: #{tpu_custom_call.1} parent=19 // pred_check
          %p262 = pneg %p116
        $region30: #{tpu_custom_call.1} parent=19 // pred_check_branch
          %264 = sbr.rel (%p262) target = $region32
        $region31: #{tpu_custom_call.1} parent=19 // pred_region
          %p265 = scmp.lt.s32.totalorder %s23, 1
          %s266 = scalar_select %p265, %s23, 1
          %s267 = smul.addr %s266, 4
          %s268 = smul.addr %s267, 8
          %s269 = scalar_lea.vmem %s3, %s268
        $region32: #{tpu_custom_call.1} parent=19 // pred_fallthru
          _
        // Predicated region
        $region33: #{tpu_custom_call.1} parent=19 // pred_check
          %p270 = pneg %p142
        $region34: #{tpu_custom_call.1} parent=19 // pred_check_branch
          %272 = sbr.rel (%p270) target = $region36
        $region35: #{tpu_custom_call.1} parent=19 // pred_region
          %s273 = sand.u32 %s132, 1
          %s274 = scalar_lea.sflag [#allocation5], %s273
          %s275 = sand.u32 %s132, 1
          %s276 = smul.addr %s275, 32
          %s277 = scalar_lea.vmem [#allocation4], %s276
          %s279 = ssub.s32 512, 512
          %280 = vsyncadd %s274, %s279
          %s281 = smul.addr %s23, 4
          %s282 = smul.addr %s281, 128
          %s283 = scalar_lea.hbm %s4, %s282
          %s284 = sshll.u32 %s277, 4
          %s285 = int_to_ptr.vmem [resolvable:$true] %s284
          %290 = dma.hbm_to_vmem [thread:$0]  %s283, 512, %s285, %s274, 128, 128, 8
        $region36: #{tpu_custom_call.1} parent=19 // pred_fallthru
          _
        // Predicated region
        $region37: #{tpu_custom_call.1} parent=19 // pred_check
          %p291 = pneg %p168
        $region38: #{tpu_custom_call.1} parent=19 // pred_check_branch
          %293 = sbr.rel (%p291) target = $region40
        $region39: #{tpu_custom_call.1} parent=19 // pred_region
          %p294 = scmp.lt.s32.totalorder %s23, 1
          %s295 = scalar_select %p294, %s23, 1
          %s296 = scalar_lea.vmem %s5, %s295
        $region40: #{tpu_custom_call.1} parent=19 // pred_fallthru
          _
      $region20: #{tpu_custom_call.1} parent=5 // pred_fallthru
        _
      %p297 = scmp.le.s32.totalorder 1, %s23
      %p298 = scmp.lt.s32.totalorder %s23, 3
      %p299 = pnand %p297, %p298
      %p300 = pneg %p299
      // Predicated region
      $region41: #{tpu_custom_call.1} parent=5 // pred_check
        _
      $region42: #{tpu_custom_call.1} parent=5 // pred_check_branch
        %302 = sbr.rel (%p299) target = $region44
      $region43: #{tpu_custom_call.1} parent=5 // pred_region
        %s303 = ssub.s32 %s23, 1
        %s304 = sand.u32 %s135, 1
        %s305 = scalar_lea.sflag [#allocation5], %s304
        %s306 = sand.u32 %s135, 1
        %s307 = smul.addr %s306, 32
        %s308 = scalar_lea.vmem [#allocation4], %s307
        // Predicated region
        $region45: #{tpu_custom_call.1} parent=43 // pred_check
          %p309 = pneg %p148
        $region46: #{tpu_custom_call.1} parent=43 // pred_check_branch
          %311 = sbr.rel (%p309) target = $region48
        $region47: #{tpu_custom_call.1} parent=43 // pred_region
          %312 = dma.done %s305, 512
        $region48: #{tpu_custom_call.1} parent=43 // pred_fallthru
          _
        %p313 = pneg %p44
        %p314 = pneg %p41
        %p315 = scmp.lt.s32.totalorder %s28, 1
        %s316 = scalar_select %p315, %s28, 1
        %s317 = smul.addr %s316, 8
        %s318 = scalar_lea.vmem %s1, %s317
        %p319 = pneg %p70
        %p320 = pneg %p67
        %p321 = scmp.lt.s32.totalorder %s28, 1
        %s322 = scalar_select %p321, %s28, 1
        %s323 = smul.addr %s322, 8
        %s324 = scalar_lea.vmem %s2, %s323
        %p325 = pneg %p96
        %p326 = pneg %p93
        %p327 = scmp.lt.s32.totalorder %s28, 1
        %s328 = scalar_select %p327, %s28, 1
        %s329 = smul.addr %s328, 4
        %s330 = smul.addr %s329, 8
        %s331 = scalar_lea.vmem %s3, %s330
        %p332 = pneg %p122
        %p333 = pneg %p119
        %s334 = sand.u32 %s135, 1
        %s335 = scalar_lea.sflag [#allocation5], %s334
        %s336 = sand.u32 %s135, 1
        %s337 = smul.addr %s336, 32
        %s338 = scalar_lea.vmem [#allocation4], %s337
        %p339 = pneg %p148
        %p340 = pneg %p145
        %p341 = scmp.lt.s32.totalorder %s28, 1
        %s342 = scalar_select %p341, %s28, 1
        %s343 = scalar_lea.vmem %s5, %s342
        %p344 = pneg %p174
        %p345 = pneg %p171
        %p346 = pneg %p200
        %p347 = pneg %p197
        %s348 = sand.u32 %s187, 1
        %s349 = scalar_lea.sflag [#allocation6], %s348
        %s350 = sand.u32 %s187, 1
        %s351 = smul.addr %s350, 8
        %s352 = scalar_lea.vmem [#allocation7], %s351
        %p353 = pneg %p226
        %p354 = pneg %p223
        %s355 = sand.u32 %s213, 1
        %s356 = scalar_lea.sflag [#allocation9], %s355
        %s357 = sand.u32 %s213, 1
        %s358 = smul.addr %s357, 8
        %s359 = scalar_lea.vmem [#allocation8], %s358
        %p360 = scmp.lt.s32.totalorder %s28, 1
        %s361 = scalar_select %p360, %s28, 1
        %s362 = smul.addr %s361, 8
        %s363 = scalar_lea.vmem %s1, %s362
        %p364 = scmp.lt.s32.totalorder %s28, 1
        %s365 = scalar_select %p364, %s28, 1
        %s366 = smul.addr %s365, 8
        %s367 = scalar_lea.vmem %s2, %s366
        %p368 = scmp.lt.s32.totalorder %s28, 1
        %s369 = scalar_select %p368, %s28, 1
        %s370 = smul.addr %s369, 4
        %s371 = smul.addr %s370, 8
        %s372 = scalar_lea.vmem %s3, %s371
        %p373 = scmp.lt.s32.totalorder %s28, 1
        %s374 = scalar_select %p373, %s28, 1
        %s375 = scalar_lea.vmem %s5, %s374
        %p376 = scmp.eq.s32.totalorder %s28, 0
        // Predicated region
        $region49: #{tpu_custom_call.1} parent=43 // pred_check
          %p377 = pneg %p376
        $region50: #{tpu_custom_call.1} parent=43 // pred_check_branch
          %379 = sbr.rel (%p377) target = $region52
        $region51: #{tpu_custom_call.1} parent=43 // pred_region
          %v380 = vld [vmem:[%s0] sm:$0xff]
          %v381 = vld [vmem:[%s0 + $0x8] sm:$0xff]
          %v382 = vld [vmem:[%s0 + $0x10] sm:$0xff]
          %v383 = vld [vmem:[%s0 + $0x18] sm:$0xff]
          %v384 = vld [vmem:[%s0 + $0x20] sm:$0xff]
          %v385 = vld [vmem:[%s0 + $0x28] sm:$0xff]
          %v386 = vld [vmem:[%s0 + $0x30] sm:$0xff]
          %v387 = vld [vmem:[%s0 + $0x38] sm:$0xff]
          %v388 = vld [vmem:[%s372] sm:$0xff]
          %v389 = vld [vmem:[%s372 + $0x8] sm:$0xff]
          %v390 = vld [vmem:[%s372 + $0x10] sm:$0xff]
          %v391 = vld [vmem:[%s372 + $0x18] sm:$0xff]
          %v392 = vld [vmem:[%s375] sm:$0x1]
          %v394 = vlaneseq
          %v395 = vshrl.u32 %v394, 7
          %v396 = vsub.s32 0, %v395
          %v397 = vrot.slane %v392, %v396
          %vm399 = vcmask 261120
          %v401 = vsel %vm399, %v380, 0
          %v404 = vsel %vm399, %v381, 0
          %v407 = vsel %vm399, %v382, 0
          %v410 = vsel %vm399, %v383, 0
          %v413 = vsel %vm399, %v384, 0
          %v416 = vsel %vm399, %v385, 0
          %v419 = vsel %vm399, %v386, 0
          %v422 = vsel %vm399, %v387, 0
          %424 = vmatprep.subr.mxu0 0.0
          %v425 = vand.u32 %v388, 4294901760
          %426 = vmatpush1.msra.mxu0 %v425
          %427 = vmatprep.subr.mxu0 0.0
          %v428 = vand.u32 %v389, 4294901760
          %429 = vmatpush1.msra.mxu0 %v428
          %430 = vmatprep.subr.mxu0 0.0
          %v431 = vand.u32 %v390, 4294901760
          %432 = vmatpush1.msra.mxu0 %v431
          %433 = vmatprep.subr.mxu0 0.0
          %v434 = vand.u32 %v391, 4294901760
          %435 = vmatpush1.msra.mxu0 %v434
          %436 = vmatprep.subr.mxu0 0.0
          %437 = vmatpush1.msra.mxu0 0.0
          %438 = vmatprep.subr.mxu0 0.0
          %439 = vmatpush1.msra.mxu0 0.0
          %440 = vmatprep.subr.mxu0 0.0
          %441 = vmatpush1.msra.mxu0 0.0
          %442 = vmatprep.subr.mxu0 0.0
          %443 = vmatpush1.msra.mxu0 0.0
          %444 = vmatprep.subr.mxu0 0.0
          %445 = vmatpush1.msra.mxu0 0.0
          %446 = vmatprep.subr.mxu0 0.0
          %447 = vmatpush1.msra.mxu0 0.0
          %448 = vmatprep.subr.mxu0 0.0
          %449 = vmatpush1.msra.mxu0 0.0
          %450 = vmatprep.subr.mxu0 0.0
          %451 = vmatpush1.msra.mxu0 0.0
          %452 = vmatprep.subr.mxu0 0.0
          %453 = vmatpush1.msra.mxu0 0.0
          %454 = vmatprep.subr.mxu0 0.0
          %455 = vmatpush1.msra.mxu0 0.0
          %456 = vmatprep.subr.mxu0 0.0
          %457 = vmatpush1.msra.mxu0 0.0
          %458 = vmatprep.subr.mxu0 0.0
          %459 = vmatpush1.msra.mxu0 0.0
          %460 = vmatprep.subr.mxu0 0.0
          %461 = vmatpush1.msra.mxu0 0.0
          %462 = vmatprep.subr.mxu0 0.0
          %463 = vmatpush1.msra.mxu0 0.0
          %464 = vmatprep.subr.mxu0 0.0
          %465 = vmatpush1.msra.mxu0 0.0
          %466 = vmatprep.subr.mxu0 0.0
          %467 = vmatpush1.msra.mxu0 0.0
          %468 = vmatprep.subr.mxu0 0.0
          %469 = vmatpush1.msra.mxu0 0.0
          %470 = vmatprep.subr.mxu0 0.0
          %471 = vmatpush1.msra.mxu0 0.0
          %472 = vmatprep.subr.mxu0 0.0
          %473 = vmatpush1.msra.mxu0 0.0
          %474 = vmatprep.subr.mxu0 0.0
          %475 = vmatpush1.msra.mxu0 0.0
          %476 = vmatprep.subr.mxu0 0.0
          %477 = vmatpush1.msra.mxu0 0.0
          %478 = vmatprep.subr.mxu0 0.0
          %479 = vmatpush1.msra.mxu0 0.0
          %480 = vmatprep.subr.mxu0 0.0
          %481 = vmatpush1.msra.mxu0 0.0
          %482 = vmatprep.subr.mxu0 0.0
          %483 = vmatpush1.msra.mxu0 0.0
          %484 = vmatprep.subr.mxu0 0.0
          %485 = vmatpush1.msra.mxu0 0.0
          %486 = vmatprep.subr.mxu0 0.0
          %487 = vmatpush1.msra.mxu0 0.0
          %488 = vmatprep.subr.mxu0 0.0
          %489 = vmatpush1.msra.mxu0 0.0
          %490 = vmatprep.subr.mxu0 0.0
          %491 = vmatpush1.msra.mxu0 0.0
          %492 = vmatprep.mubr.f32.mxu0 0.0
          %v493 = vand.u32 %v401, 4294901760
          %v494 = vsub.f32 %v401, %v493
          %v495 = vand.u32 %v494, 4294901760
          %v496 = vsub.f32 %v494, %v495
          %v497 = vand.u32 %v496, 4294901760
          %498 = vmatmul.mubr.f32.gmra.mrb[0].mxu0 %v497
          %v499 = vpop.f32.mrb[0].mxu0
          %v500 = vadd.f32 %v397, %v499
          %v501 = vpop.f32.mrb[0].mxu0
          %502 = vmatprep.mubr.f32.mxu0 0.0
          %v503 = vand.u32 %v404, 4294901760
          %v504 = vsub.f32 %v404, %v503
          %v505 = vand.u32 %v504, 4294901760
          %v506 = vsub.f32 %v504, %v505
          %v507 = vand.u32 %v506, 4294901760
          %508 = vmatmul.mubr.f32.gmra.mrb[0].mxu0 %v507
          %v509 = vpop.f32.mrb[0].mxu0
          %v510 = vadd.f32 %v397, %v509
          %v511 = vpop.f32.mrb[0].mxu0
          %512 = vmatprep.mubr.f32.mxu0 0.0
          %v513 = vand.u32 %v407, 4294901760
          %v514 = vsub.f32 %v407, %v513
          %v515 = vand.u32 %v514, 4294901760
          %v516 = vsub.f32 %v514, %v515
          %v517 = vand.u32 %v516, 4294901760
          %518 = vmatmul.mubr.f32.gmra.mrb[0].mxu0 %v517
          %v519 = vpop.f32.mrb[0].mxu0
          %v520 = vadd.f32 %v397, %v519
          %v521 = vpop.f32.mrb[0].mxu0
          %522 = vmatprep.mubr.f32.mxu0 0.0
          %v523 = vand.u32 %v410, 4294901760
          %v524 = vsub.f32 %v410, %v523
          %v525 = vand.u32 %v524, 4294901760
          %v526 = vsub.f32 %v524, %v525
          %v527 = vand.u32 %v526, 4294901760
          %528 = vmatmul.mubr.f32.gmra.mrb[0].mxu0 %v527
          %v529 = vpop.f32.mrb[0].mxu0
          %v530 = vadd.f32 %v397, %v529
          %v531 = vpop.f32.mrb[0].mxu0
          %532 = vmatprep.mubr.f32.mxu0 0.0
          %v533 = vand.u32 %v413, 4294901760
          %v534 = vsub.f32 %v413, %v533
          %v535 = vand.u32 %v534, 4294901760
          %v536 = vsub.f32 %v534, %v535
          %v537 = vand.u32 %v536, 4294901760
          %538 = vmatmul.mubr.f32.gmra.mrb[0].mxu0 %v537
          %v539 = vpop.f32.mrb[0].mxu0
          %v540 = vadd.f32 %v397, %v539
          %v541 = vpop.f32.mrb[0].mxu0
          %542 = vmatprep.mubr.f32.mxu0 0.0
          %v543 = vand.u32 %v416, 4294901760
          %v544 = vsub.f32 %v416, %v543
          %v545 = vand.u32 %v544, 4294901760
          %v546 = vsub.f32 %v544, %v545
          %v547 = vand.u32 %v546, 4294901760
          %548 = vmatmul.mubr.f32.gmra.mrb[0].mxu0 %v547
          %v549 = vpop.f32.mrb[0].mxu0
          %v550 = vadd.f32 %v397, %v549
          %v551 = vpop.f32.mrb[0].mxu0
          %552 = vmatprep.mubr.f32.mxu0 0.0
          %v553 = vand.u32 %v419, 4294901760
          %v554 = vsub.f32 %v419, %v553
          %v555 = vand.u32 %v554, 4294901760
          %v556 = vsub.f32 %v554, %v555
          %v557 = vand.u32 %v556, 4294901760
          %558 = vmatmul.mubr.f32.gmra.mrb[0].mxu0 %v557
          %v559 = vpop.f32.mrb[0].mxu0
          %v560 = vadd.f32 %v397, %v559
          %v561 = vpop.f32.mrb[0].mxu0
          %562 = vmatprep.mubr.f32.mxu0 0.0
          %v563 = vand.u32 %v422, 4294901760
          %v564 = vsub.f32 %v422, %v563
          %v565 = vand.u32 %v564, 4294901760
          %v566 = vsub.f32 %v564, %v565
          %v567 = vand.u32 %v566, 4294901760
          %568 = vmatmul.mubr.f32.gmra.mrb[0].mxu0 %v567
          %v569 = vpop.f32.mrb[0].mxu0
          %v570 = vadd.f32 %v397, %v569
          %v571 = vpop.f32.mrb[0].mxu0
          %572 = vdwg.mxu0
          %573 = vmatprep.subr.mxu0 0.0
          %v574 = vand.u32 %v388, 4294901760
          %v575 = vsub.f32 %v388, %v574
          %v576 = vand.u32 %v575, 4294901760
          %v577 = vsub.f32 %v575, %v576
          %v578 = vand.u32 %v577, 4294901760
          %579 = vmatpush1.msra.mxu0 %v578
          %580 = vmatprep.subr.mxu0 0.0
          %v581 = vand.u32 %v389, 4294901760
          %v582 = vsub.f32 %v389, %v581
          %v583 = vand.u32 %v582, 4294901760
          %v584 = vsub.f32 %v582, %v583
          %v585 = vand.u32 %v584, 4294901760
          %586 = vmatpush1.msra.mxu0 %v585
          %587 = vmatprep.subr.mxu0 0.0
          %v588 = vand.u32 %v390, 4294901760
          %v589 = vsub.f32 %v390, %v588
          %v590 = vand.u32 %v589, 4294901760
          %v591 = vsub.f32 %v589, %v590
          %v592 = vand.u32 %v591, 4294901760
          %593 = vmatpush1.msra.mxu0 %v592
          %594 = vmatprep.subr.mxu0 0.0
          %v595 = vand.u32 %v391, 4294901760
          %v596 = vsub.f32 %v391, %v595
          %v597 = vand.u32 %v596, 4294901760
          %v598 = vsub.f32 %v596, %v597
          %v599 = vand.u32 %v598, 4294901760
          %600 = vmatpush1.msra.mxu0 %v599
          %601 = vmatprep.subr.mxu0 0.0
          %602 = vmatpush1.msra.mxu0 0.0
          %603 = vmatprep.subr.mxu0 0.0
          %604 = vmatpush1.msra.mxu0 0.0
          %605 = vmatprep.subr.mxu0 0.0
          %606 = vmatpush1.msra.mxu0 0.0
          %607 = vmatprep.subr.mxu0 0.0
          %608 = vmatpush1.msra.mxu0 0.0
          %609 = vmatprep.subr.mxu0 0.0
          %610 = vmatpush1.msra.mxu0 0.0
          %611 = vmatprep.subr.mxu0 0.0
          %612 = vmatpush1.msra.mxu0 0.0
          %613 = vmatprep.subr.mxu0 0.0
          %614 = vmatpush1.msra.mxu0 0.0
          %615 = vmatprep.subr.mxu0 0.0
          %616 = vmatpush1.msra.mxu0 0.0
          %617 = vmatprep.subr.mxu0 0.0
          %618 = vmatpush1.msra.mxu0 0.0
          %619 = vmatprep.subr.mxu0 0.0
          %620 = vmatpush1.msra.mxu0 0.0
          %621 = vmatprep.subr.mxu0 0.0
          %622 = vmatpush1.msra.mxu0 0.0
          %623 = vmatprep.subr.mxu0 0.0
          %624 = vmatpush1.msra.mxu0 0.0
          %625 = vmatprep.subr.mxu0 0.0
          %626 = vmatpush1.msra.mxu0 0.0
          %627 = vmatprep.subr.mxu0 0.0
          %628 = vmatpush1.msra.mxu0 0.0
          %629 = vmatprep.subr.mxu0 0.0
          %630 = vmatpush1.msra.mxu0 0.0
          %631 = vmatprep.subr.mxu0 0.0
          %632 = vmatpush1.msra.mxu0 0.0
          %633 = vmatprep.subr.mxu0 0.0
          %634 = vmatpush1.msra.mxu0 0.0
          %635 = vmatprep.subr.mxu0 0.0
          %636 = vmatpush1.msra.mxu0 0.0
          %637 = vmatprep.subr.mxu0 0.0
          %638 = vmatpush1.msra.mxu0 0.0
          %639 = vmatprep.subr.mxu0 0.0
          %640 = vmatpush1.msra.mxu0 0.0
          %641 = vmatprep.subr.mxu0 0.0
          %642 = vmatpush1.msra.mxu0 0.0
          %643 = vmatprep.subr.mxu0 0.0
          %644 = vmatpush1.msra.mxu0 0.0
          %645 = vmatprep.subr.mxu0 0.0
          %646 = vmatpush1.msra.mxu0 0.0
          %647 = vmatprep.subr.mxu0 0.0
          %648 = vmatpush1.msra.mxu0 0.0
          %649 = vmatprep.subr.mxu0 0.0
          %650 = vmatpush1.msra.mxu0 0.0
          %651 = vmatprep.subr.mxu0 0.0
          %652 = vmatpush1.msra.mxu0 0.0
          %653 = vmatprep.subr.mxu0 0.0
          %654 = vmatpush1.msra.mxu0 0.0
          %655 = vmatprep.subr.mxu0 0.0
          %656 = vmatpush1.msra.mxu0 0.0
          %657 = vmatprep.mubr.f32.mxu0 0.0
          %v658 = vand.u32 %v401, 4294901760
          %659 = vmatmul.mubr.f32.gmra.mrb[0].mxu0 %v658
          %v660 = vpop.f32.mrb[0].mxu0
          %v661 = vadd.f32 %v500, %v660
          %v662 = vpop.f32.mrb[0].mxu0
          %663 = vmatprep.mubr.f32.mxu0 0.0
          %v664 = vand.u32 %v404, 4294901760
          %665 = vmatmul.mubr.f32.gmra.mrb[0].mxu0 %v664
          %v666 = vpop.f32.mrb[0].mxu0
          %v667 = vadd.f32 %v510, %v666
          %v668 = vpop.f32.mrb[0].mxu0
          %669 = vmatprep.mubr.f32.mxu0 0.0
          %v670 = vand.u32 %v407, 4294901760
          %671 = vmatmul.mubr.f32.gmra.mrb[0].mxu0 %v670
          %v672 = vpop.f32.mrb[0].mxu0
          %v673 = vadd.f32 %v520, %v672
          %v674 = vpop.f32.mrb[0].mxu0
          %675 = vmatprep.mubr.f32.mxu0 0.0
          %v676 = vand.u32 %v410, 4294901760
          %677 = vmatmul.mubr.f32.gmra.mrb[0].mxu0 %v676
          %v678 = vpop.f32.mrb[0].mxu0
          %v679 = vadd.f32 %v530, %v678
          %v680 = vpop.f32.mrb[0].mxu0
          %681 = vmatprep.mubr.f32.mxu0 0.0
          %v682 = vand.u32 %v413, 4294901760
          %683 = vmatmul.mubr.f32.gmra.mrb[0].mxu0 %v682
          %v684 = vpop.f32.mrb[0].mxu0
          %v685 = vadd.f32 %v540, %v684
          %v686 = vpop.f32.mrb[0].mxu0
          %687 = vmatprep.mubr.f32.mxu0 0.0
          %v688 = vand.u32 %v416, 4294901760
          %689 = vmatmul.mubr.f32.gmra.mrb[0].mxu0 %v688
          %v690 = vpop.f32.mrb[0].mxu0
          %v691 = vadd.f32 %v550, %v690
          %v692 = vpop.f32.mrb[0].mxu0
          %693 = vmatprep.mubr.f32.mxu0 0.0
          %v694 = vand.u32 %v419, 4294901760
          %695 = vmatmul.mubr.f32.gmra.mrb[0].mxu0 %v694
          %v696 = vpop.f32.mrb[0].mxu0
          %v697 = vadd.f32 %v560, %v696
          %v698 = vpop.f32.mrb[0].mxu0
          %699 = vmatprep.mubr.f32.mxu0 0.0
          %v700 = vand.u32 %v422, 4294901760
          %701 = vmatmul.mubr.f32.gmra.mrb[0].mxu0 %v700
          %v702 = vpop.f32.mrb[0].mxu0
          %v703 = vadd.f32 %v570, %v702
          %v704 = vpop.f32.mrb[0].mxu0
          %705 = vdwg.mxu0
          %706 = vmatprep.subr.mxu0 0.0
          %v707 = vand.u32 %v388, 4294901760
          %v708 = vsub.f32 %v388, %v707
          %709 = vmatpush1.msra.mxu0 %v708
          %710 = vmatprep.subr.mxu0 0.0
          %v711 = vand.u32 %v389, 4294901760
          %v712 = vsub.f32 %v389, %v711
          %713 = vmatpush1.msra.mxu0 %v712
          %714 = vmatprep.subr.mxu0 0.0
          %v715 = vand.u32 %v390, 4294901760
          %v716 = vsub.f32 %v390, %v715
          %717 = vmatpush1.msra.mxu0 %v716
          %718 = vmatprep.subr.mxu0 0.0
          %v719 = vand.u32 %v391, 4294901760
          %v720 = vsub.f32 %v391, %v719
          %721 = vmatpush1.msra.mxu0 %v720
          %722 = vmatprep.subr.mxu0 0.0
          %723 = vmatpush1.msra.mxu0 0.0
          %724 = vmatprep.subr.mxu0 0.0
          %725 = vmatpush1.msra.mxu0 0.0
          %726 = vmatprep.subr.mxu0 0.0
          %727 = vmatpush1.msra.mxu0 0.0
          %728 = vmatprep.subr.mxu0 0.0
          %729 = vmatpush1.msra.mxu0 0.0
          %730 = vmatprep.subr.mxu0 0.0
          %731 = vmatpush1.msra.mxu0 0.0
          %732 = vmatprep.subr.mxu0 0.0
          %733 = vmatpush1.msra.mxu0 0.0
          %734 = vmatprep.subr.mxu0 0.0
          %735 = vmatpush1.msra.mxu0 0.0
          %736 = vmatprep.subr.mxu0 0.0
          %737 = vmatpush1.msra.mxu0 0.0
          %738 = vmatprep.subr.mxu0 0.0
          %739 = vmatpush1.msra.mxu0 0.0
          %740 = vmatprep.subr.mxu0 0.0
          %741 = vmatpush1.msra.mxu0 0.0
          %742 = vmatprep.subr.mxu0 0.0
          %743 = vmatpush1.msra.mxu0 0.0
          %744 = vmatprep.subr.mxu0 0.0
          %745 = vmatpush1.msra.mxu0 0.0
          %746 = vmatprep.subr.mxu0 0.0
          %747 = vmatpush1.msra.mxu0 0.0
          %748 = vmatprep.subr.mxu0 0.0
          %749 = vmatpush1.msra.mxu0 0.0
          %750 = vmatprep.subr.mxu0 0.0
          %751 = vmatpush1.msra.mxu0 0.0
          %752 = vmatprep.subr.mxu0 0.0
          %753 = vmatpush1.msra.mxu0 0.0
          %754 = vmatprep.subr.mxu0 0.0
          %755 = vmatpush1.msra.mxu0 0.0
          %756 = vmatprep.subr.mxu0 0.0
          %757 = vmatpush1.msra.mxu0 0.0
          %758 = vmatprep.subr.mxu0 0.0
          %759 = vmatpush1.msra.mxu0 0.0
          %760 = vmatprep.subr.mxu0 0.0
          %761 = vmatpush1.msra.mxu0 0.0
          %762 = vmatprep.subr.mxu0 0.0
          %763 = vmatpush1.msra.mxu0 0.0
          %764 = vmatprep.subr.mxu0 0.0
          %765 = vmatpush1.msra.mxu0 0.0
          %766 = vmatprep.subr.mxu0 0.0
          %767 = vmatpush1.msra.mxu0 0.0
          %768 = vmatprep.subr.mxu0 0.0
          %769 = vmatpush1.msra.mxu0 0.0
          %770 = vmatprep.subr.mxu0 0.0
          %771 = vmatpush1.msra.mxu0 0.0
          %772 = vmatprep.subr.mxu0 0.0
          %773 = vmatpush1.msra.mxu0 0.0
          %774 = vmatprep.subr.mxu0 0.0
          %775 = vmatpush1.msra.mxu0 0.0
          %776 = vmatprep.subr.mxu0 0.0
          %777 = vmatpush1.msra.mxu0 0.0
          %778 = vmatprep.mubr.f32.mxu0 0.0
          %v779 = vand.u32 %v401, 4294901760
          %v780 = vsub.f32 %v401, %v779
          %781 = vmatmul.mubr.f32.gmra.mrb[0].mxu0 %v780
          %v782 = vpop.f32.mrb[0].mxu0
          %v783 = vadd.f32 %v661, %v782
          %v784 = vpop.f32.mrb[0].mxu0
          %785 = vmatprep.mubr.f32.mxu0 0.0
          %v786 = vand.u32 %v404, 4294901760
          %v787 = vsub.f32 %v404, %v786
          %788 = vmatmul.mubr.f32.gmra.mrb[0].mxu0 %v787
          %v789 = vpop.f32.mrb[0].mxu0
          %v790 = vadd.f32 %v667, %v789
          %v791 = vpop.f32.mrb[0].mxu0
          %792 = vmatprep.mubr.f32.mxu0 0.0
          %v793 = vand.u32 %v407, 4294901760
          %v794 = vsub.f32 %v407, %v793
          %795 = vmatmul.mubr.f32.gmra.mrb[0].mxu0 %v794
          %v796 = vpop.f32.mrb[0].mxu0
          %v797 = vadd.f32 %v673, %v796
          %v798 = vpop.f32.mrb[0].mxu0
          %799 = vmatprep.mubr.f32.mxu0 0.0
          %v800 = vand.u32 %v410, 4294901760
          %v801 = vsub.f32 %v410, %v800
          %802 = vmatmul.mubr.f32.gmra.mrb[0].mxu0 %v801
          %v803 = vpop.f32.mrb[0].mxu0
          %v804 = vadd.f32 %v679, %v803
          %v805 = vpop.f32.mrb[0].mxu0
          %806 = vmatprep.mubr.f32.mxu0 0.0
          %v807 = vand.u32 %v413, 4294901760
          %v808 = vsub.f32 %v413, %v807
          %809 = vmatmul.mubr.f32.gmra.mrb[0].mxu0 %v808
          %v810 = vpop.f32.mrb[0].mxu0
          %v811 = vadd.f32 %v685, %v810
          %v812 = vpop.f32.mrb[0].mxu0
          %813 = vmatprep.mubr.f32.mxu0 0.0
          %v814 = vand.u32 %v416, 4294901760
          %v815 = vsub.f32 %v416, %v814
          %816 = vmatmul.mubr.f32.gmra.mrb[0].mxu0 %v815
          %v817 = vpop.f32.mrb[0].mxu0
          %v818 = vadd.f32 %v691, %v817
          %v819 = vpop.f32.mrb[0].mxu0
          %820 = vmatprep.mubr.f32.mxu0 0.0
          %v821 = vand.u32 %v419, 4294901760
          %v822 = vsub.f32 %v419, %v821
          %823 = vmatmul.mubr.f32.gmra.mrb[0].mxu0 %v822
          %v824 = vpop.f32.mrb[0].mxu0
          %v825 = vadd.f32 %v697, %v824
          %v826 = vpop.f32.mrb[0].mxu0
          %827 = vmatprep.mubr.f32.mxu0 0.0
          %v828 = vand.u32 %v422, 4294901760
          %v829 = vsub.f32 %v422, %v828
          %830 = vmatmul.mubr.f32.gmra.mrb[0].mxu0 %v829
          %v831 = vpop.f32.mrb[0].mxu0
          %v832 = vadd.f32 %v703, %v831
          %v833 = vpop.f32.mrb[0].mxu0
          %834 = vdwg.mxu0
          %835 = vmatprep.subr.mxu0 0.0
          %v836 = vand.u32 %v388, 4294901760
          %837 = vmatpush1.msra.mxu0 %v836
          %838 = vmatprep.subr.mxu0 0.0
          %v839 = vand.u32 %v389, 4294901760
          %840 = vmatpush1.msra.mxu0 %v839
          %841 = vmatprep.subr.mxu0 0.0
          %v842 = vand.u32 %v390, 4294901760
          %843 = vmatpush1.msra.mxu0 %v842
          %844 = vmatprep.subr.mxu0 0.0
          %v845 = vand.u32 %v391, 4294901760
          %846 = vmatpush1.msra.mxu0 %v845
          %847 = vmatprep.subr.mxu0 0.0
          %848 = vmatpush1.msra.mxu0 0.0
          %849 = vmatprep.subr.mxu0 0.0
          %850 = vmatpush1.msra.mxu0 0.0
          %851 = vmatprep.subr.mxu0 0.0
          %852 = vmatpush1.msra.mxu0 0.0
          %853 = vmatprep.subr.mxu0 0.0
          %854 = vmatpush1.msra.mxu0 0.0
          %855 = vmatprep.subr.mxu0 0.0
          %856 = vmatpush1.msra.mxu0 0.0
          %857 = vmatprep.subr.mxu0 0.0
          %858 = vmatpush1.msra.mxu0 0.0
          %859 = vmatprep.subr.mxu0 0.0
          %860 = vmatpush1.msra.mxu0 0.0
          %861 = vmatprep.subr.mxu0 0.0
          %862 = vmatpush1.msra.mxu0 0.0
          %863 = vmatprep.subr.mxu0 0.0
          %864 = vmatpush1.msra.mxu0 0.0
          %865 = vmatprep.subr.mxu0 0.0
          %866 = vmatpush1.msra.mxu0 0.0
          %867 = vmatprep.subr.mxu0 0.0
          %868 = vmatpush1.msra.mxu0 0.0
          %869 = vmatprep.subr.mxu0 0.0
          %870 = vmatpush1.msra.mxu0 0.0
          %871 = vmatprep.subr.mxu0 0.0
          %872 = vmatpush1.msra.mxu0 0.0
          %873 = vmatprep.subr.mxu0 0.0
          %874 = vmatpush1.msra.mxu0 0.0
          %875 = vmatprep.subr.mxu0 0.0
          %876 = vmatpush1.msra.mxu0 0.0
          %877 = vmatprep.subr.mxu0 0.0
          %878 = vmatpush1.msra.mxu0 0.0
          %879 = vmatprep.subr.mxu0 0.0
          %880 = vmatpush1.msra.mxu0 0.0
          %881 = vmatprep.subr.mxu0 0.0
          %882 = vmatpush1.msra.mxu0 0.0
          %883 = vmatprep.subr.mxu0 0.0
          %884 = vmatpush1.msra.mxu0 0.0
          %885 = vmatprep.subr.mxu0 0.0
          %886 = vmatpush1.msra.mxu0 0.0
          %887 = vmatprep.subr.mxu0 0.0
          %888 = vmatpush1.msra.mxu0 0.0
          %889 = vmatprep.subr.mxu0 0.0
          %890 = vmatpush1.msra.mxu0 0.0
          %891 = vmatprep.subr.mxu0 0.0
          %892 = vmatpush1.msra.mxu0 0.0
          %893 = vmatprep.subr.mxu0 0.0
          %894 = vmatpush1.msra.mxu0 0.0
          %895 = vmatprep.subr.mxu0 0.0
          %896 = vmatpush1.msra.mxu0 0.0
          %897 = vmatprep.subr.mxu0 0.0
          %898 = vmatpush1.msra.mxu0 0.0
          %899 = vmatprep.subr.mxu0 0.0
          %900 = vmatpush1.msra.mxu0 0.0
          %901 = vmatprep.subr.mxu0 0.0
          %902 = vmatpush1.msra.mxu0 0.0
          %903 = vmatprep.mubr.f32.mxu0 0.0
          %v904 = vand.u32 %v401, 4294901760
          %v905 = vsub.f32 %v401, %v904
          %v906 = vand.u32 %v905, 4294901760
          %907 = vmatmul.mubr.f32.gmra.mrb[0].mxu0 %v906
          %v908 = vpop.f32.mrb[0].mxu0
          %v909 = vadd.f32 %v783, %v908
          %v910 = vpop.f32.mrb[0].mxu0
          %911 = vmatprep.mubr.f32.mxu0 0.0
          %v912 = vand.u32 %v404, 4294901760
          %v913 = vsub.f32 %v404, %v912
          %v914 = vand.u32 %v913, 4294901760
          %915 = vmatmul.mubr.f32.gmra.mrb[0].mxu0 %v914
          %v916 = vpop.f32.mrb[0].mxu0
          %v917 = vadd.f32 %v790, %v916
          %v918 = vpop.f32.mrb[0].mxu0
          %919 = vmatprep.mubr.f32.mxu0 0.0
          %v920 = vand.u32 %v407, 4294901760
          %v921 = vsub.f32 %v407, %v920
          %v922 = vand.u32 %v921, 4294901760
          %923 = vmatmul.mubr.f32.gmra.mrb[0].mxu0 %v922
          %v924 = vpop.f32.mrb[0].mxu0
          %v925 = vadd.f32 %v797, %v924
          %v926 = vpop.f32.mrb[0].mxu0
          %927 = vmatprep.mubr.f32.mxu0 0.0
          %v928 = vand.u32 %v410, 4294901760
          %v929 = vsub.f32 %v410, %v928
          %v930 = vand.u32 %v929, 4294901760
          %931 = vmatmul.mubr.f32.gmra.mrb[0].mxu0 %v930
          %v932 = vpop.f32.mrb[0].mxu0
          %v933 = vadd.f32 %v804, %v932
          %v934 = vpop.f32.mrb[0].mxu0
          %935 = vmatprep.mubr.f32.mxu0 0.0
          %v936 = vand.u32 %v413, 4294901760
          %v937 = vsub.f32 %v413, %v936
          %v938 = vand.u32 %v937, 4294901760
          %939 = vmatmul.mubr.f32.gmra.mrb[0].mxu0 %v938
          %v940 = vpop.f32.mrb[0].mxu0
          %v941 = vadd.f32 %v811, %v940
          %v942 = vpop.f32.mrb[0].mxu0
          %943 = vmatprep.mubr.f32.mxu0 0.0
          %v944 = vand.u32 %v416, 4294901760
          %v945 = vsub.f32 %v416, %v944
          %v946 = vand.u32 %v945, 4294901760
          %947 = vmatmul.mubr.f32.gmra.mrb[0].mxu0 %v946
          %v948 = vpop.f32.mrb[0].mxu0
          %v949 = vadd.f32 %v818, %v948
          %v950 = vpop.f32.mrb[0].mxu0
          %951 = vmatprep.mubr.f32.mxu0 0.0
          %v952 = vand.u32 %v419, 4294901760
          %v953 = vsub.f32 %v419, %v952
          %v954 = vand.u32 %v953, 4294901760
          %955 = vmatmul.mubr.f32.gmra.mrb[0].mxu0 %v954
          %v956 = vpop.f32.mrb[0].mxu0
          %v957 = vadd.f32 %v825, %v956
          %v958 = vpop.f32.mrb[0].mxu0
          %959 = vmatprep.mubr.f32.mxu0 0.0
          %v960 = vand.u32 %v422, 4294901760
          %v961 = vsub.f32 %v422, %v960
          %v962 = vand.u32 %v961, 4294901760
          %963 = vmatmul.mubr.f32.gmra.mrb[0].mxu0 %v962
          %v964 = vpop.f32.mrb[0].mxu0
          %v965 = vadd.f32 %v832, %v964
          %v966 = vpop.f32.mrb[0].mxu0
          %967 = vdwg.mxu0
          %968 = vmatprep.subr.mxu0 0.0
          %v969 = vand.u32 %v388, 4294901760
          %v970 = vsub.f32 %v388, %v969
          %v971 = vand.u32 %v970, 4294901760
          %972 = vmatpush1.msra.mxu0 %v971
          %973 = vmatprep.subr.mxu0 0.0
          %v974 = vand.u32 %v389, 4294901760
          %v975 = vsub.f32 %v389, %v974
          %v976 = vand.u32 %v975, 4294901760
          %977 = vmatpush1.msra.mxu0 %v976
          %978 = vmatprep.subr.mxu0 0.0
          %v979 = vand.u32 %v390, 4294901760
          %v980 = vsub.f32 %v390, %v979
          %v981 = vand.u32 %v980, 4294901760
          %982 = vmatpush1.msra.mxu0 %v981
          %983 = vmatprep.subr.mxu0 0.0
          %v984 = vand.u32 %v391, 4294901760
          %v985 = vsub.f32 %v391, %v984
          %v986 = vand.u32 %v985, 4294901760
          %987 = vmatpush1.msra.mxu0 %v986
          %988 = vmatprep.subr.mxu0 0.0
          %989 = vmatpush1.msra.mxu0 0.0
          %990 = vmatprep.subr.mxu0 0.0
          %991 = vmatpush1.msra.mxu0 0.0
          %992 = vmatprep.subr.mxu0 0.0
          %993 = vmatpush1.msra.mxu0 0.0
          %994 = vmatprep.subr.mxu0 0.0
          %995 = vmatpush1.msra.mxu0 0.0
          %996 = vmatprep.subr.mxu0 0.0
          %997 = vmatpush1.msra.mxu0 0.0
          %998 = vmatprep.subr.mxu0 0.0
          %999 = vmatpush1.msra.mxu0 0.0
          %1000 = vmatprep.subr.mxu0 0.0
          %1001 = vmatpush1.msra.mxu0 0.0
          %1002 = vmatprep.subr.mxu0 0.0
          %1003 = vmatpush1.msra.mxu0 0.0
          %1004 = vmatprep.subr.mxu0 0.0
          %1005 = vmatpush1.msra.mxu0 0.0
          %1006 = vmatprep.subr.mxu0 0.0
          %1007 = vmatpush1.msra.mxu0 0.0
          %1008 = vmatprep.subr.mxu0 0.0
          %1009 = vmatpush1.msra.mxu0 0.0
          %1010 = vmatprep.subr.mxu0 0.0
          %1011 = vmatpush1.msra.mxu0 0.0
          %1012 = vmatprep.subr.mxu0 0.0
          %1013 = vmatpush1.msra.mxu0 0.0
          %1014 = vmatprep.subr.mxu0 0.0
          %1015 = vmatpush1.msra.mxu0 0.0
          %1016 = vmatprep.subr.mxu0 0.0
          %1017 = vmatpush1.msra.mxu0 0.0
          %1018 = vmatprep.subr.mxu0 0.0
          %1019 = vmatpush1.msra.mxu0 0.0
          %1020 = vmatprep.subr.mxu0 0.0
          %1021 = vmatpush1.msra.mxu0 0.0
          %1022 = vmatprep.subr.mxu0 0.0
          %1023 = vmatpush1.msra.mxu0 0.0
          %1024 = vmatprep.subr.mxu0 0.0
          %1025 = vmatpush1.msra.mxu0 0.0
          %1026 = vmatprep.subr.mxu0 0.0
          %1027 = vmatpush1.msra.mxu0 0.0
          %1028 = vmatprep.subr.mxu0 0.0
          %1029 = vmatpush1.msra.mxu0 0.0
          %1030 = vmatprep.subr.mxu0 0.0
          %1031 = vmatpush1.msra.mxu0 0.0
          %1032 = vmatprep.subr.mxu0 0.0
          %1033 = vmatpush1.msra.mxu0 0.0
          %1034 = vmatprep.subr.mxu0 0.0
          %1035 = vmatpush1.msra.mxu0 0.0
          %1036 = vmatprep.subr.mxu0 0.0
          %1037 = vmatpush1.msra.mxu0 0.0
          %1038 = vmatprep.subr.mxu0 0.0
          %1039 = vmatpush1.msra.mxu0 0.0
          %1040 = vmatprep.subr.mxu0 0.0
          %1041 = vmatpush1.msra.mxu0 0.0
          %1042 = vmatprep.subr.mxu0 0.0
          %1043 = vmatpush1.msra.mxu0 0.0
          %1044 = vmatprep.mubr.f32.mxu0 0.0
          %v1045 = vand.u32 %v401, 4294901760
          %1046 = vmatmul.mubr.f32.gmra.mrb[0].mxu0 %v1045
          %v1047 = vpop.f32.mrb[0].mxu0
          %v1048 = vadd.f32 %v909, %v1047
          %v1049 = vpop.f32.mrb[0].mxu0
          %1050 = vmatprep.mubr.f32.mxu0 0.0
          %v1051 = vand.u32 %v404, 4294901760
          %1052 = vmatmul.mubr.f32.gmra.mrb[0].mxu0 %v1051
          %v1053 = vpop.f32.mrb[0].mxu0
          %v1054 = vadd.f32 %v917, %v1053
          %v1055 = vpop.f32.mrb[0].mxu0
          %1056 = vmatprep.mubr.f32.mxu0 0.0
          %v1057 = vand.u32 %v407, 4294901760
          %1058 = vmatmul.mubr.f32.gmra.mrb[0].mxu0 %v1057
          %v1059 = vpop.f32.mrb[0].mxu0
          %v1060 = vadd.f32 %v925, %v1059
          %v1061 = vpop.f32.mrb[0].mxu0
          %1062 = vmatprep.mubr.f32.mxu0 0.0
          %v1063 = vand.u32 %v410, 4294901760
          %1064 = vmatmul.mubr.f32.gmra.mrb[0].mxu0 %v1063
          %v1065 = vpop.f32.mrb[0].mxu0
          %v1066 = vadd.f32 %v933, %v1065
          %v1067 = vpop.f32.mrb[0].mxu0
          %1068 = vmatprep.mubr.f32.mxu0 0.0
          %v1069 = vand.u32 %v413, 4294901760
          %1070 = vmatmul.mubr.f32.gmra.mrb[0].mxu0 %v1069
          %v1071 = vpop.f32.mrb[0].mxu0
          %v1072 = vadd.f32 %v941, %v1071
          %v1073 = vpop.f32.mrb[0].mxu0
          %1074 = vmatprep.mubr.f32.mxu0 0.0
          %v1075 = vand.u32 %v416, 4294901760
          %1076 = vmatmul.mubr.f32.gmra.mrb[0].mxu0 %v1075
          %v1077 = vpop.f32.mrb[0].mxu0
          %v1078 = vadd.f32 %v949, %v1077
          %v1079 = vpop.f32.mrb[0].mxu0
          %1080 = vmatprep.mubr.f32.mxu0 0.0
          %v1081 = vand.u32 %v419, 4294901760
          %1082 = vmatmul.mubr.f32.gmra.mrb[0].mxu0 %v1081
          %v1083 = vpop.f32.mrb[0].mxu0
          %v1084 = vadd.f32 %v957, %v1083
          %v1085 = vpop.f32.mrb[0].mxu0
          %1086 = vmatprep.mubr.f32.mxu0 0.0
          %v1087 = vand.u32 %v422, 4294901760
          %1088 = vmatmul.mubr.f32.gmra.mrb[0].mxu0 %v1087
          %v1089 = vpop.f32.mrb[0].mxu0
          %v1090 = vadd.f32 %v965, %v1089
          %v1091 = vpop.f32.mrb[0].mxu0
          %1092 = vdwg.mxu0
          %1093 = vmatprep.subr.mxu0 0.0
          %v1094 = vand.u32 %v388, 4294901760
          %1095 = vmatpush1.msra.mxu0 %v1094
          %1096 = vmatprep.subr.mxu0 0.0
          %v1097 = vand.u32 %v389, 4294901760
          %1098 = vmatpush1.msra.mxu0 %v1097
          %1099 = vmatprep.subr.mxu0 0.0
          %v1100 = vand.u32 %v390, 4294901760
          %1101 = vmatpush1.msra.mxu0 %v1100
          %1102 = vmatprep.subr.mxu0 0.0
          %v1103 = vand.u32 %v391, 4294901760
          %1104 = vmatpush1.msra.mxu0 %v1103
          %1105 = vmatprep.subr.mxu0 0.0
          %1106 = vmatpush1.msra.mxu0 0.0
          %1107 = vmatprep.subr.mxu0 0.0
          %1108 = vmatpush1.msra.mxu0 0.0
          %1109 = vmatprep.subr.mxu0 0.0
          %1110 = vmatpush1.msra.mxu0 0.0
          %1111 = vmatprep.subr.mxu0 0.0
          %1112 = vmatpush1.msra.mxu0 0.0
          %1113 = vmatprep.subr.mxu0 0.0
          %1114 = vmatpush1.msra.mxu0 0.0
          %1115 = vmatprep.subr.mxu0 0.0
          %1116 = vmatpush1.msra.mxu0 0.0
          %1117 = vmatprep.subr.mxu0 0.0
          %1118 = vmatpush1.msra.mxu0 0.0
          %1119 = vmatprep.subr.mxu0 0.0
          %1120 = vmatpush1.msra.mxu0 0.0
          %1121 = vmatprep.subr.mxu0 0.0
          %1122 = vmatpush1.msra.mxu0 0.0
          %1123 = vmatprep.subr.mxu0 0.0
          %1124 = vmatpush1.msra.mxu0 0.0
          %1125 = vmatprep.subr.mxu0 0.0
          %1126 = vmatpush1.msra.mxu0 0.0
          %1127 = vmatprep.subr.mxu0 0.0
          %1128 = vmatpush1.msra.mxu0 0.0
          %1129 = vmatprep.subr.mxu0 0.0
          %1130 = vmatpush1.msra.mxu0 0.0
          %1131 = vmatprep.subr.mxu0 0.0
          %1132 = vmatpush1.msra.mxu0 0.0
          %1133 = vmatprep.subr.mxu0 0.0
          %1134 = vmatpush1.msra.mxu0 0.0
          %1135 = vmatprep.subr.mxu0 0.0
          %1136 = vmatpush1.msra.mxu0 0.0
          %1137 = vmatprep.subr.mxu0 0.0
          %1138 = vmatpush1.msra.mxu0 0.0
          %1139 = vmatprep.subr.mxu0 0.0
          %1140 = vmatpush1.msra.mxu0 0.0
          %1141 = vmatprep.subr.mxu0 0.0
          %1142 = vmatpush1.msra.mxu0 0.0
          %1143 = vmatprep.subr.mxu0 0.0
          %1144 = vmatpush1.msra.mxu0 0.0
          %1145 = vmatprep.subr.mxu0 0.0
          %1146 = vmatpush1.msra.mxu0 0.0
          %1147 = vmatprep.subr.mxu0 0.0
          %1148 = vmatpush1.msra.mxu0 0.0
          %1149 = vmatprep.subr.mxu0 0.0
          %1150 = vmatpush1.msra.mxu0 0.0
          %1151 = vmatprep.subr.mxu0 0.0
          %1152 = vmatpush1.msra.mxu0 0.0
          %1153 = vmatprep.subr.mxu0 0.0
          %1154 = vmatpush1.msra.mxu0 0.0
          %1155 = vmatprep.subr.mxu0 0.0
          %1156 = vmatpush1.msra.mxu0 0.0
          %1157 = vmatprep.subr.mxu0 0.0
          %1158 = vmatpush1.msra.mxu0 0.0
          %1159 = vmatprep.subr.mxu0 0.0
          %1160 = vmatpush1.msra.mxu0 0.0
          %1161 = vmatprep.mubr.f32.mxu0 0.0
          %v1162 = vand.u32 %v401, 4294901760
          %1163 = vmatmul.mubr.f32.gmra.mrb[0].mxu0 %v1162
          %v1164 = vpop.f32.mrb[0].mxu0
          %v1165 = vadd.f32 %v1048, %v1164
          %v1166 = vpop.f32.mrb[0].mxu0
          %1167 = vmatprep.mubr.f32.mxu0 0.0
          %v1168 = vand.u32 %v404, 4294901760
          %1169 = vmatmul.mubr.f32.gmra.mrb[0].mxu0 %v1168
          %v1170 = vpop.f32.mrb[0].mxu0
          %v1171 = vadd.f32 %v1054, %v1170
          %v1172 = vpop.f32.mrb[0].mxu0
          %1173 = vmatprep.mubr.f32.mxu0 0.0
          %v1174 = vand.u32 %v407, 4294901760
          %1175 = vmatmul.mubr.f32.gmra.mrb[0].mxu0 %v1174
          %v1176 = vpop.f32.mrb[0].mxu0
          %v1177 = vadd.f32 %v1060, %v1176
          %v1178 = vpop.f32.mrb[0].mxu0
          %1179 = vmatprep.mubr.f32.mxu0 0.0
          %v1180 = vand.u32 %v410, 4294901760
          %1181 = vmatmul.mubr.f32.gmra.mrb[0].mxu0 %v1180
          %v1182 = vpop.f32.mrb[0].mxu0
          %v1183 = vadd.f32 %v1066, %v1182
          %v1184 = vpop.f32.mrb[0].mxu0
          %1185 = vmatprep.mubr.f32.mxu0 0.0
          %v1186 = vand.u32 %v413, 4294901760
          %1187 = vmatmul.mubr.f32.gmra.mrb[0].mxu0 %v1186
          %v1188 = vpop.f32.mrb[0].mxu0
          %v1189 = vadd.f32 %v1072, %v1188
          %v1190 = vpop.f32.mrb[0].mxu0
          %1191 = vmatprep.mubr.f32.mxu0 0.0
          %v1192 = vand.u32 %v416, 4294901760
          %1193 = vmatmul.mubr.f32.gmra.mrb[0].mxu0 %v1192
          %v1194 = vpop.f32.mrb[0].mxu0
          %v1195 = vadd.f32 %v1078, %v1194
          %v1196 = vpop.f32.mrb[0].mxu0
          %1197 = vmatprep.mubr.f32.mxu0 0.0
          %v1198 = vand.u32 %v419, 4294901760
          %1199 = vmatmul.mubr.f32.gmra.mrb[0].mxu0 %v1198
          %v1200 = vpop.f32.mrb[0].mxu0
          %v1201 = vadd.f32 %v1084, %v1200
          %v1202 = vpop.f32.mrb[0].mxu0
          %1203 = vmatprep.mubr.f32.mxu0 0.0
          %v1204 = vand.u32 %v422, 4294901760
          %1205 = vmatmul.mubr.f32.gmra.mrb[0].mxu0 %v1204
          %v1206 = vpop.f32.mrb[0].mxu0
          %v1207 = vadd.f32 %v1090, %v1206
          %v1208 = vpop.f32.mrb[0].mxu0
          %1209 = vdwg.mxu0
          %1210 = vst [vmem:[#allocation3] sm:$0xff] %v1165
          %1211 = vst [vmem:[#allocation3 + $0x8] sm:$0xff] %v1171
          %1212 = vst [vmem:[#allocation3 + $0x10] sm:$0xff] %v1177
          %1213 = vst [vmem:[#allocation3 + $0x18] sm:$0xff] %v1183
          %1214 = vst [vmem:[#allocation3 + $0x20] sm:$0xff] %v1189
          %1215 = vst [vmem:[#allocation3 + $0x28] sm:$0xff] %v1195
          %1216 = vst [vmem:[#allocation3 + $0x30] sm:$0xff] %v1201
          %1217 = vst [vmem:[#allocation3 + $0x38] sm:$0xff] %v1207
        $region52: #{tpu_custom_call.1} parent=43 // pred_fallthru
          _
        %p1218 = scmp.gt.s32.totalorder %s28, 0
        // Predicated region
        $region53: #{tpu_custom_call.1} parent=43 // pred_check
          %p1219 = pneg %p1218
        $region54: #{tpu_custom_call.1} parent=43 // pred_check_branch
          %1221 = sbr.rel (%p1219) target = $region56
        $region55: #{tpu_custom_call.1} parent=43 // pred_region
          %v1222 = vld [vmem:[#allocation2] sm:$0xff]
          %v1223 = vld [vmem:[#allocation2 + $0x8] sm:$0xff]
          %v1224 = vld [vmem:[#allocation2 + $0x10] sm:$0xff]
          %v1225 = vld [vmem:[#allocation2 + $0x18] sm:$0xff]
          %v1226 = vld [vmem:[#allocation2 + $0x20] sm:$0xff]
          %v1227 = vld [vmem:[#allocation2 + $0x28] sm:$0xff]
          %v1228 = vld [vmem:[#allocation2 + $0x30] sm:$0xff]
          %v1229 = vld [vmem:[#allocation2 + $0x38] sm:$0xff]
          %v1230 = vld [vmem:[%s372] sm:$0xff]
          %v1231 = vld [vmem:[%s372 + $0x8] sm:$0xff]
          %v1232 = vld [vmem:[%s372 + $0x10] sm:$0xff]
          %v1233 = vld [vmem:[%s372 + $0x18] sm:$0xff]
          %v1234 = vld [vmem:[%s375] sm:$0x1]
          %v1236 = vlaneseq
          %v1237 = vshrl.u32 %v1236, 7
          %v1238 = vsub.s32 0, %v1237
          %v1239 = vrot.slane %v1234, %v1238
          %vm1241 = vcmask 261120
          %v1243 = vsel %vm1241, %v1222, 0
          %v1246 = vsel %vm1241, %v1223, 0
          %v1249 = vsel %vm1241, %v1224, 0
          %v1252 = vsel %vm1241, %v1225, 0
          %v1255 = vsel %vm1241, %v1226, 0
          %v1258 = vsel %vm1241, %v1227, 0
          %v1261 = vsel %vm1241, %v1228, 0
          %v1264 = vsel %vm1241, %v1229, 0
          %1266 = vmatprep.subr.mxu0 0.0
          %v1267 = vand.u32 %v1230, 4294901760
          %1268 = vmatpush1.msra.mxu0 %v1267
          %1269 = vmatprep.subr.mxu0 0.0
          %v1270 = vand.u32 %v1231, 4294901760
          %1271 = vmatpush1.msra.mxu0 %v1270
          %1272 = vmatprep.subr.mxu0 0.0
          %v1273 = vand.u32 %v1232, 4294901760
          %1274 = vmatpush1.msra.mxu0 %v1273
          %1275 = vmatprep.subr.mxu0 0.0
          %v1276 = vand.u32 %v1233, 4294901760
          %1277 = vmatpush1.msra.mxu0 %v1276
          %1278 = vmatprep.subr.mxu0 0.0
          %1279 = vmatpush1.msra.mxu0 0.0
          %1280 = vmatprep.subr.mxu0 0.0
          %1281 = vmatpush1.msra.mxu0 0.0
          %1282 = vmatprep.subr.mxu0 0.0
          %1283 = vmatpush1.msra.mxu0 0.0
          %1284 = vmatprep.subr.mxu0 0.0
          %1285 = vmatpush1.msra.mxu0 0.0
          %1286 = vmatprep.subr.mxu0 0.0
          %1287 = vmatpush1.msra.mxu0 0.0
          %1288 = vmatprep.subr.mxu0 0.0
          %1289 = vmatpush1.msra.mxu0 0.0
          %1290 = vmatprep.subr.mxu0 0.0
          %1291 = vmatpush1.msra.mxu0 0.0
          %1292 = vmatprep.subr.mxu0 0.0
          %1293 = vmatpush1.msra.mxu0 0.0
          %1294 = vmatprep.subr.mxu0 0.0
          %1295 = vmatpush1.msra.mxu0 0.0
          %1296 = vmatprep.subr.mxu0 0.0
          %1297 = vmatpush1.msra.mxu0 0.0
          %1298 = vmatprep.subr.mxu0 0.0
          %1299 = vmatpush1.msra.mxu0 0.0
          %1300 = vmatprep.subr.mxu0 0.0
          %1301 = vmatpush1.msra.mxu0 0.0
          %1302 = vmatprep.subr.mxu0 0.0
          %1303 = vmatpush1.msra.mxu0 0.0
          %1304 = vmatprep.subr.mxu0 0.0
          %1305 = vmatpush1.msra.mxu0 0.0
          %1306 = vmatprep.subr.mxu0 0.0
          %1307 = vmatpush1.msra.mxu0 0.0
          %1308 = vmatprep.subr.mxu0 0.0
          %1309 = vmatpush1.msra.mxu0 0.0
          %1310 = vmatprep.subr.mxu0 0.0
          %1311 = vmatpush1.msra.mxu0 0.0
          %1312 = vmatprep.subr.mxu0 0.0
          %1313 = vmatpush1.msra.mxu0 0.0
          %1314 = vmatprep.subr.mxu0 0.0
          %1315 = vmatpush1.msra.mxu0 0.0
          %1316 = vmatprep.subr.mxu0 0.0
          %1317 = vmatpush1.msra.mxu0 0.0
          %1318 = vmatprep.subr.mxu0 0.0
          %1319 = vmatpush1.msra.mxu0 0.0
          %1320 = vmatprep.subr.mxu0 0.0
          %1321 = vmatpush1.msra.mxu0 0.0
          %1322 = vmatprep.subr.mxu0 0.0
          %1323 = vmatpush1.msra.mxu0 0.0
          %1324 = vmatprep.subr.mxu0 0.0
          %1325 = vmatpush1.msra.mxu0 0.0
          %1326 = vmatprep.subr.mxu0 0.0
          %1327 = vmatpush1.msra.mxu0 0.0
          %1328 = vmatprep.subr.mxu0 0.0
          %1329 = vmatpush1.msra.mxu0 0.0
          %1330 = vmatprep.subr.mxu0 0.0
          %1331 = vmatpush1.msra.mxu0 0.0
          %1332 = vmatprep.subr.mxu0 0.0
          %1333 = vmatpush1.msra.mxu0 0.0
          %1334 = vmatprep.mubr.f32.mxu0 0.0
          %v1335 = vand.u32 %v1243, 4294901760
          %v1336 = vsub.f32 %v1243, %v1335
          %v1337 = vand.u32 %v1336, 4294901760
          %v1338 = vsub.f32 %v1336, %v1337
          %v1339 = vand.u32 %v1338, 4294901760
          %1340 = vmatmul.mubr.f32.gmra.mrb[0].mxu0 %v1339
          %v1341 = vpop.f32.mrb[0].mxu0
          %v1342 = vadd.f32 %v1239, %v1341
          %v1343 = vpop.f32.mrb[0].mxu0
          %1344 = vmatprep.mubr.f32.mxu0 0.0
          %v1345 = vand.u32 %v1246, 4294901760
          %v1346 = vsub.f32 %v1246, %v1345
          %v1347 = vand.u32 %v1346, 4294901760
          %v1348 = vsub.f32 %v1346, %v1347
          %v1349 = vand.u32 %v1348, 4294901760
          %1350 = vmatmul.mubr.f32.gmra.mrb[0].mxu0 %v1349
          %v1351 = vpop.f32.mrb[0].mxu0
          %v1352 = vadd.f32 %v1239, %v1351
          %v1353 = vpop.f32.mrb[0].mxu0
          %1354 = vmatprep.mubr.f32.mxu0 0.0
          %v1355 = vand.u32 %v1249, 4294901760
          %v1356 = vsub.f32 %v1249, %v1355
          %v1357 = vand.u32 %v1356, 4294901760
          %v1358 = vsub.f32 %v1356, %v1357
          %v1359 = vand.u32 %v1358, 4294901760
          %1360 = vmatmul.mubr.f32.gmra.mrb[0].mxu0 %v1359
          %v1361 = vpop.f32.mrb[0].mxu0
          %v1362 = vadd.f32 %v1239, %v1361
          %v1363 = vpop.f32.mrb[0].mxu0
          %1364 = vmatprep.mubr.f32.mxu0 0.0
          %v1365 = vand.u32 %v1252, 4294901760
          %v1366 = vsub.f32 %v1252, %v1365
          %v1367 = vand.u32 %v1366, 4294901760
          %v1368 = vsub.f32 %v1366, %v1367
          %v1369 = vand.u32 %v1368, 4294901760
          %1370 = vmatmul.mubr.f32.gmra.mrb[0].mxu0 %v1369
          %v1371 = vpop.f32.mrb[0].mxu0
          %v1372 = vadd.f32 %v1239, %v1371
          %v1373 = vpop.f32.mrb[0].mxu0
          %1374 = vmatprep.mubr.f32.mxu0 0.0
          %v1375 = vand.u32 %v1255, 4294901760
          %v1376 = vsub.f32 %v1255, %v1375
          %v1377 = vand.u32 %v1376, 4294901760
          %v1378 = vsub.f32 %v1376, %v1377
          %v1379 = vand.u32 %v1378, 4294901760
          %1380 = vmatmul.mubr.f32.gmra.mrb[0].mxu0 %v1379
          %v1381 = vpop.f32.mrb[0].mxu0
          %v1382 = vadd.f32 %v1239, %v1381
          %v1383 = vpop.f32.mrb[0].mxu0
          %1384 = vmatprep.mubr.f32.mxu0 0.0
          %v1385 = vand.u32 %v1258, 4294901760
          %v1386 = vsub.f32 %v1258, %v1385
          %v1387 = vand.u32 %v1386, 4294901760
          %v1388 = vsub.f32 %v1386, %v1387
          %v1389 = vand.u32 %v1388, 4294901760
          %1390 = vmatmul.mubr.f32.gmra.mrb[0].mxu0 %v1389
          %v1391 = vpop.f32.mrb[0].mxu0
          %v1392 = vadd.f32 %v1239, %v1391
          %v1393 = vpop.f32.mrb[0].mxu0
          %1394 = vmatprep.mubr.f32.mxu0 0.0
          %v1395 = vand.u32 %v1261, 4294901760
          %v1396 = vsub.f32 %v1261, %v1395
          %v1397 = vand.u32 %v1396, 4294901760
          %v1398 = vsub.f32 %v1396, %v1397
          %v1399 = vand.u32 %v1398, 4294901760
          %1400 = vmatmul.mubr.f32.gmra.mrb[0].mxu0 %v1399
          %v1401 = vpop.f32.mrb[0].mxu0
          %v1402 = vadd.f32 %v1239, %v1401
          %v1403 = vpop.f32.mrb[0].mxu0
          %1404 = vmatprep.mubr.f32.mxu0 0.0
          %v1405 = vand.u32 %v1264, 4294901760
          %v1406 = vsub.f32 %v1264, %v1405
          %v1407 = vand.u32 %v1406, 4294901760
          %v1408 = vsub.f32 %v1406, %v1407
          %v1409 = vand.u32 %v1408, 4294901760
          %1410 = vmatmul.mubr.f32.gmra.mrb[0].mxu0 %v1409
          %v1411 = vpop.f32.mrb[0].mxu0
          %v1412 = vadd.f32 %v1239, %v1411
          %v1413 = vpop.f32.mrb[0].mxu0
          %1414 = vdwg.mxu0
          %1415 = vmatprep.subr.mxu0 0.0
          %v1416 = vand.u32 %v1230, 4294901760
          %v1417 = vsub.f32 %v1230, %v1416
          %v1418 = vand.u32 %v1417, 4294901760
          %v1419 = vsub.f32 %v1417, %v1418
          %v1420 = vand.u32 %v1419, 4294901760
          %1421 = vmatpush1.msra.mxu0 %v1420
          %1422 = vmatprep.subr.mxu0 0.0
          %v1423 = vand.u32 %v1231, 4294901760
          %v1424 = vsub.f32 %v1231, %v1423
          %v1425 = vand.u32 %v1424, 4294901760
          %v1426 = vsub.f32 %v1424, %v1425
          %v1427 = vand.u32 %v1426, 4294901760
          %1428 = vmatpush1.msra.mxu0 %v1427
          %1429 = vmatprep.subr.mxu0 0.0
          %v1430 = vand.u32 %v1232, 4294901760
          %v1431 = vsub.f32 %v1232, %v1430
          %v1432 = vand.u32 %v1431, 4294901760
          %v1433 = vsub.f32 %v1431, %v1432
          %v1434 = vand.u32 %v1433, 4294901760
          %1435 = vmatpush1.msra.mxu0 %v1434
          %1436 = vmatprep.subr.mxu0 0.0
          %v1437 = vand.u32 %v1233, 4294901760
          %v1438 = vsub.f32 %v1233, %v1437
          %v1439 = vand.u32 %v1438, 4294901760
          %v1440 = vsub.f32 %v1438, %v1439
          %v1441 = vand.u32 %v1440, 4294901760
          %1442 = vmatpush1.msra.mxu0 %v1441
          %1443 = vmatprep.subr.mxu0 0.0
          %1444 = vmatpush1.msra.mxu0 0.0
          %1445 = vmatprep.subr.mxu0 0.0
          %1446 = vmatpush1.msra.mxu0 0.0
          %1447 = vmatprep.subr.mxu0 0.0
          %1448 = vmatpush1.msra.mxu0 0.0
          %1449 = vmatprep.subr.mxu0 0.0
          %1450 = vmatpush1.msra.mxu0 0.0
          %1451 = vmatprep.subr.mxu0 0.0
          %1452 = vmatpush1.msra.mxu0 0.0
          %1453 = vmatprep.subr.mxu0 0.0
          %1454 = vmatpush1.msra.mxu0 0.0
          %1455 = vmatprep.subr.mxu0 0.0
          %1456 = vmatpush1.msra.mxu0 0.0
          %1457 = vmatprep.subr.mxu0 0.0
          %1458 = vmatpush1.msra.mxu0 0.0
          %1459 = vmatprep.subr.mxu0 0.0
          %1460 = vmatpush1.msra.mxu0 0.0
          %1461 = vmatprep.subr.mxu0 0.0
          %1462 = vmatpush1.msra.mxu0 0.0
          %1463 = vmatprep.subr.mxu0 0.0
          %1464 = vmatpush1.msra.mxu0 0.0
          %1465 = vmatprep.subr.mxu0 0.0
          %1466 = vmatpush1.msra.mxu0 0.0
          %1467 = vmatprep.subr.mxu0 0.0
          %1468 = vmatpush1.msra.mxu0 0.0
          %1469 = vmatprep.subr.mxu0 0.0
          %1470 = vmatpush1.msra.mxu0 0.0
          %1471 = vmatprep.subr.mxu0 0.0
          %1472 = vmatpush1.msra.mxu0 0.0
          %1473 = vmatprep.subr.mxu0 0.0
          %1474 = vmatpush1.msra.mxu0 0.0
          %1475 = vmatprep.subr.mxu0 0.0
          %1476 = vmatpush1.msra.mxu0 0.0
          %1477 = vmatprep.subr.mxu0 0.0
          %1478 = vmatpush1.msra.mxu0 0.0
          %1479 = vmatprep.subr.mxu0 0.0
          %1480 = vmatpush1.msra.mxu0 0.0
          %1481 = vmatprep.subr.mxu0 0.0
          %1482 = vmatpush1.msra.mxu0 0.0
          %1483 = vmatprep.subr.mxu0 0.0
          %1484 = vmatpush1.msra.mxu0 0.0
          %1485 = vmatprep.subr.mxu0 0.0
          %1486 = vmatpush1.msra.mxu0 0.0
          %1487 = vmatprep.subr.mxu0 0.0
          %1488 = vmatpush1.msra.mxu0 0.0
          %1489 = vmatprep.subr.mxu0 0.0
          %1490 = vmatpush1.msra.mxu0 0.0
          %1491 = vmatprep.subr.mxu0 0.0
          %1492 = vmatpush1.msra.mxu0 0.0
          %1493 = vmatprep.subr.mxu0 0.0
          %1494 = vmatpush1.msra.mxu0 0.0
          %1495 = vmatprep.subr.mxu0 0.0
          %1496 = vmatpush1.msra.mxu0 0.0
          %1497 = vmatprep.subr.mxu0 0.0
          %1498 = vmatpush1.msra.mxu0 0.0
          %1499 = vmatprep.mubr.f32.mxu0 0.0
          %v1500 = vand.u32 %v1243, 4294901760
          %1501 = vmatmul.mubr.f32.gmra.mrb[0].mxu0 %v1500
          %v1502 = vpop.f32.mrb[0].mxu0
          %v1503 = vadd.f32 %v1342, %v1502
          %v1504 = vpop.f32.mrb[0].mxu0
          %1505 = vmatprep.mubr.f32.mxu0 0.0
          %v1506 = vand.u32 %v1246, 4294901760
          %1507 = vmatmul.mubr.f32.gmra.mrb[0].mxu0 %v1506
          %v1508 = vpop.f32.mrb[0].mxu0
          %v1509 = vadd.f32 %v1352, %v1508
          %v1510 = vpop.f32.mrb[0].mxu0
          %1511 = vmatprep.mubr.f32.mxu0 0.0
          %v1512 = vand.u32 %v1249, 4294901760
          %1513 = vmatmul.mubr.f32.gmra.mrb[0].mxu0 %v1512
          %v1514 = vpop.f32.mrb[0].mxu0
          %v1515 = vadd.f32 %v1362, %v1514
          %v1516 = vpop.f32.mrb[0].mxu0
          %1517 = vmatprep.mubr.f32.mxu0 0.0
          %v1518 = vand.u32 %v1252, 4294901760
          %1519 = vmatmul.mubr.f32.gmra.mrb[0].mxu0 %v1518
          %v1520 = vpop.f32.mrb[0].mxu0
          %v1521 = vadd.f32 %v1372, %v1520
          %v1522 = vpop.f32.mrb[0].mxu0
          %1523 = vmatprep.mubr.f32.mxu0 0.0
          %v1524 = vand.u32 %v1255, 4294901760
          %1525 = vmatmul.mubr.f32.gmra.mrb[0].mxu0 %v1524
          %v1526 = vpop.f32.mrb[0].mxu0
          %v1527 = vadd.f32 %v1382, %v1526
          %v1528 = vpop.f32.mrb[0].mxu0
          %1529 = vmatprep.mubr.f32.mxu0 0.0
          %v1530 = vand.u32 %v1258, 4294901760
          %1531 = vmatmul.mubr.f32.gmra.mrb[0].mxu0 %v1530
          %v1532 = vpop.f32.mrb[0].mxu0
          %v1533 = vadd.f32 %v1392, %v1532
          %v1534 = vpop.f32.mrb[0].mxu0
          %1535 = vmatprep.mubr.f32.mxu0 0.0
          %v1536 = vand.u32 %v1261, 4294901760
          %1537 = vmatmul.mubr.f32.gmra.mrb[0].mxu0 %v1536
          %v1538 = vpop.f32.mrb[0].mxu0
          %v1539 = vadd.f32 %v1402, %v1538
          %v1540 = vpop.f32.mrb[0].mxu0
          %1541 = vmatprep.mubr.f32.mxu0 0.0
          %v1542 = vand.u32 %v1264, 4294901760
          %1543 = vmatmul.mubr.f32.gmra.mrb[0].mxu0 %v1542
          %v1544 = vpop.f32.mrb[0].mxu0
          %v1545 = vadd.f32 %v1412, %v1544
          %v1546 = vpop.f32.mrb[0].mxu0
          %1547 = vdwg.mxu0
          %1548 = vmatprep.subr.mxu0 0.0
          %v1549 = vand.u32 %v1230, 4294901760
          %v1550 = vsub.f32 %v1230, %v1549
          %1551 = vmatpush1.msra.mxu0 %v1550
          %1552 = vmatprep.subr.mxu0 0.0
          %v1553 = vand.u32 %v1231, 4294901760
          %v1554 = vsub.f32 %v1231, %v1553
          %1555 = vmatpush1.msra.mxu0 %v1554
          %1556 = vmatprep.subr.mxu0 0.0
          %v1557 = vand.u32 %v1232, 4294901760
          %v1558 = vsub.f32 %v1232, %v1557
          %1559 = vmatpush1.msra.mxu0 %v1558
          %1560 = vmatprep.subr.mxu0 0.0
          %v1561 = vand.u32 %v1233, 4294901760
          %v1562 = vsub.f32 %v1233, %v1561
          %1563 = vmatpush1.msra.mxu0 %v1562
          %1564 = vmatprep.subr.mxu0 0.0
          %1565 = vmatpush1.msra.mxu0 0.0
          %1566 = vmatprep.subr.mxu0 0.0
          %1567 = vmatpush1.msra.mxu0 0.0
          %1568 = vmatprep.subr.mxu0 0.0
          %1569 = vmatpush1.msra.mxu0 0.0
          %1570 = vmatprep.subr.mxu0 0.0
          %1571 = vmatpush1.msra.mxu0 0.0
          %1572 = vmatprep.subr.mxu0 0.0
          %1573 = vmatpush1.msra.mxu0 0.0
          %1574 = vmatprep.subr.mxu0 0.0
          %1575 = vmatpush1.msra.mxu0 0.0
          %1576 = vmatprep.subr.mxu0 0.0
          %1577 = vmatpush1.msra.mxu0 0.0
          %1578 = vmatprep.subr.mxu0 0.0
          %1579 = vmatpush1.msra.mxu0 0.0
          %1580 = vmatprep.subr.mxu0 0.0
          %1581 = vmatpush1.msra.mxu0 0.0
          %1582 = vmatprep.subr.mxu0 0.0
          %1583 = vmatpush1.msra.mxu0 0.0
          %1584 = vmatprep.subr.mxu0 0.0
          %1585 = vmatpush1.msra.mxu0 0.0
          %1586 = vmatprep.subr.mxu0 0.0
          %1587 = vmatpush1.msra.mxu0 0.0
          %1588 = vmatprep.subr.mxu0 0.0
          %1589 = vmatpush1.msra.mxu0 0.0
          %1590 = vmatprep.subr.mxu0 0.0
          %1591 = vmatpush1.msra.mxu0 0.0
          %1592 = vmatprep.subr.mxu0 0.0
          %1593 = vmatpush1.msra.mxu0 0.0
          %1594 = vmatprep.subr.mxu0 0.0
          %1595 = vmatpush1.msra.mxu0 0.0
          %1596 = vmatprep.subr.mxu0 0.0
          %1597 = vmatpush1.msra.mxu0 0.0
          %1598 = vmatprep.subr.mxu0 0.0
          %1599 = vmatpush1.msra.mxu0 0.0
          %1600 = vmatprep.subr.mxu0 0.0
          %1601 = vmatpush1.msra.mxu0 0.0
          %1602 = vmatprep.subr.mxu0 0.0
          %1603 = vmatpush1.msra.mxu0 0.0
          %1604 = vmatprep.subr.mxu0 0.0
          %1605 = vmatpush1.msra.mxu0 0.0
          %1606 = vmatprep.subr.mxu0 0.0
          %1607 = vmatpush1.msra.mxu0 0.0
          %1608 = vmatprep.subr.mxu0 0.0
          %1609 = vmatpush1.msra.mxu0 0.0
          %1610 = vmatprep.subr.mxu0 0.0
          %1611 = vmatpush1.msra.mxu0 0.0
          %1612 = vmatprep.subr.mxu0 0.0
          %1613 = vmatpush1.msra.mxu0 0.0
          %1614 = vmatprep.subr.mxu0 0.0
          %1615 = vmatpush1.msra.mxu0 0.0
          %1616 = vmatprep.subr.mxu0 0.0
          %1617 = vmatpush1.msra.mxu0 0.0
          %1618 = vmatprep.subr.mxu0 0.0
          %1619 = vmatpush1.msra.mxu0 0.0
          %1620 = vmatprep.mubr.f32.mxu0 0.0
          %v1621 = vand.u32 %v1243, 4294901760
          %v1622 = vsub.f32 %v1243, %v1621
          %1623 = vmatmul.mubr.f32.gmra.mrb[0].mxu0 %v1622
          %v1624 = vpop.f32.mrb[0].mxu0
          %v1625 = vadd.f32 %v1503, %v1624
          %v1626 = vpop.f32.mrb[0].mxu0
          %1627 = vmatprep.mubr.f32.mxu0 0.0
          %v1628 = vand.u32 %v1246, 4294901760
          %v1629 = vsub.f32 %v1246, %v1628
          %1630 = vmatmul.mubr.f32.gmra.mrb[0].mxu0 %v1629
          %v1631 = vpop.f32.mrb[0].mxu0
          %v1632 = vadd.f32 %v1509, %v1631
          %v1633 = vpop.f32.mrb[0].mxu0
          %1634 = vmatprep.mubr.f32.mxu0 0.0
          %v1635 = vand.u32 %v1249, 4294901760
          %v1636 = vsub.f32 %v1249, %v1635
          %1637 = vmatmul.mubr.f32.gmra.mrb[0].mxu0 %v1636
          %v1638 = vpop.f32.mrb[0].mxu0
          %v1639 = vadd.f32 %v1515, %v1638
          %v1640 = vpop.f32.mrb[0].mxu0
          %1641 = vmatprep.mubr.f32.mxu0 0.0
          %v1642 = vand.u32 %v1252, 4294901760
          %v1643 = vsub.f32 %v1252, %v1642
          %1644 = vmatmul.mubr.f32.gmra.mrb[0].mxu0 %v1643
          %v1645 = vpop.f32.mrb[0].mxu0
          %v1646 = vadd.f32 %v1521, %v1645
          %v1647 = vpop.f32.mrb[0].mxu0
          %1648 = vmatprep.mubr.f32.mxu0 0.0
          %v1649 = vand.u32 %v1255, 4294901760
          %v1650 = vsub.f32 %v1255, %v1649
          %1651 = vmatmul.mubr.f32.gmra.mrb[0].mxu0 %v1650
          %v1652 = vpop.f32.mrb[0].mxu0
          %v1653 = vadd.f32 %v1527, %v1652
          %v1654 = vpop.f32.mrb[0].mxu0
          %1655 = vmatprep.mubr.f32.mxu0 0.0
          %v1656 = vand.u32 %v1258, 4294901760
          %v1657 = vsub.f32 %v1258, %v1656
          %1658 = vmatmul.mubr.f32.gmra.mrb[0].mxu0 %v1657
          %v1659 = vpop.f32.mrb[0].mxu0
          %v1660 = vadd.f32 %v1533, %v1659
          %v1661 = vpop.f32.mrb[0].mxu0
          %1662 = vmatprep.mubr.f32.mxu0 0.0
          %v1663 = vand.u32 %v1261, 4294901760
          %v1664 = vsub.f32 %v1261, %v1663
          %1665 = vmatmul.mubr.f32.gmra.mrb[0].mxu0 %v1664
          %v1666 = vpop.f32.mrb[0].mxu0
          %v1667 = vadd.f32 %v1539, %v1666
          %v1668 = vpop.f32.mrb[0].mxu0
          %1669 = vmatprep.mubr.f32.mxu0 0.0
          %v1670 = vand.u32 %v1264, 4294901760
          %v1671 = vsub.f32 %v1264, %v1670
          %1672 = vmatmul.mubr.f32.gmra.mrb[0].mxu0 %v1671
          %v1673 = vpop.f32.mrb[0].mxu0
          %v1674 = vadd.f32 %v1545, %v1673
          %v1675 = vpop.f32.mrb[0].mxu0
          %1676 = vdwg.mxu0
          %1677 = vmatprep.subr.mxu0 0.0
          %v1678 = vand.u32 %v1230, 4294901760
          %1679 = vmatpush1.msra.mxu0 %v1678
          %1680 = vmatprep.subr.mxu0 0.0
          %v1681 = vand.u32 %v1231, 4294901760
          %1682 = vmatpush1.msra.mxu0 %v1681
          %1683 = vmatprep.subr.mxu0 0.0
          %v1684 = vand.u32 %v1232, 4294901760
          %1685 = vmatpush1.msra.mxu0 %v1684
          %1686 = vmatprep.subr.mxu0 0.0
          %v1687 = vand.u32 %v1233, 4294901760
          %1688 = vmatpush1.msra.mxu0 %v1687
          %1689 = vmatprep.subr.mxu0 0.0
          %1690 = vmatpush1.msra.mxu0 0.0
          %1691 = vmatprep.subr.mxu0 0.0
          %1692 = vmatpush1.msra.mxu0 0.0
          %1693 = vmatprep.subr.mxu0 0.0
          %1694 = vmatpush1.msra.mxu0 0.0
          %1695 = vmatprep.subr.mxu0 0.0
          %1696 = vmatpush1.msra.mxu0 0.0
          %1697 = vmatprep.subr.mxu0 0.0
          %1698 = vmatpush1.msra.mxu0 0.0
          %1699 = vmatprep.subr.mxu0 0.0
          %1700 = vmatpush1.msra.mxu0 0.0
          %1701 = vmatprep.subr.mxu0 0.0
          %1702 = vmatpush1.msra.mxu0 0.0
          %1703 = vmatprep.subr.mxu0 0.0
          %1704 = vmatpush1.msra.mxu0 0.0
          %1705 = vmatprep.subr.mxu0 0.0
          %1706 = vmatpush1.msra.mxu0 0.0
          %1707 = vmatprep.subr.mxu0 0.0
          %1708 = vmatpush1.msra.mxu0 0.0
          %1709 = vmatprep.subr.mxu0 0.0
          %1710 = vmatpush1.msra.mxu0 0.0
          %1711 = vmatprep.subr.mxu0 0.0
          %1712 = vmatpush1.msra.mxu0 0.0
          %1713 = vmatprep.subr.mxu0 0.0
          %1714 = vmatpush1.msra.mxu0 0.0
          %1715 = vmatprep.subr.mxu0 0.0
          %1716 = vmatpush1.msra.mxu0 0.0
          %1717 = vmatprep.subr.mxu0 0.0
          %1718 = vmatpush1.msra.mxu0 0.0
          %1719 = vmatprep.subr.mxu0 0.0
          %1720 = vmatpush1.msra.mxu0 0.0
          %1721 = vmatprep.subr.mxu0 0.0
          %1722 = vmatpush1.msra.mxu0 0.0
          %1723 = vmatprep.subr.mxu0 0.0
          %1724 = vmatpush1.msra.mxu0 0.0
          %1725 = vmatprep.subr.mxu0 0.0
          %1726 = vmatpush1.msra.mxu0 0.0
          %1727 = vmatprep.subr.mxu0 0.0
          %1728 = vmatpush1.msra.mxu0 0.0
          %1729 = vmatprep.subr.mxu0 0.0
          %1730 = vmatpush1.msra.mxu0 0.0
          %1731 = vmatprep.subr.mxu0 0.0
          %1732 = vmatpush1.msra.mxu0 0.0
          %1733 = vmatprep.subr.mxu0 0.0
          %1734 = vmatpush1.msra.mxu0 0.0
          %1735 = vmatprep.subr.mxu0 0.0
          %1736 = vmatpush1.msra.mxu0 0.0
          %1737 = vmatprep.subr.mxu0 0.0
          %1738 = vmatpush1.msra.mxu0 0.0
          %1739 = vmatprep.subr.mxu0 0.0
          %1740 = vmatpush1.msra.mxu0 0.0
          %1741 = vmatprep.subr.mxu0 0.0
          %1742 = vmatpush1.msra.mxu0 0.0
          %1743 = vmatprep.subr.mxu0 0.0
          %1744 = vmatpush1.msra.mxu0 0.0
          %1745 = vmatprep.mubr.f32.mxu0 0.0
          %v1746 = vand.u32 %v1243, 4294901760
          %v1747 = vsub.f32 %v1243, %v1746
          %v1748 = vand.u32 %v1747, 4294901760
          %1749 = vmatmul.mubr.f32.gmra.mrb[0].mxu0 %v1748
          %v1750 = vpop.f32.mrb[0].mxu0
          %v1751 = vadd.f32 %v1625, %v1750
          %v1752 = vpop.f32.mrb[0].mxu0
          %1753 = vmatprep.mubr.f32.mxu0 0.0
          %v1754 = vand.u32 %v1246, 4294901760
          %v1755 = vsub.f32 %v1246, %v1754
          %v1756 = vand.u32 %v1755, 4294901760
          %1757 = vmatmul.mubr.f32.gmra.mrb[0].mxu0 %v1756
          %v1758 = vpop.f32.mrb[0].mxu0
          %v1759 = vadd.f32 %v1632, %v1758
          %v1760 = vpop.f32.mrb[0].mxu0
          %1761 = vmatprep.mubr.f32.mxu0 0.0
          %v1762 = vand.u32 %v1249, 4294901760
          %v1763 = vsub.f32 %v1249, %v1762
          %v1764 = vand.u32 %v1763, 4294901760
          %1765 = vmatmul.mubr.f32.gmra.mrb[0].mxu0 %v1764
          %v1766 = vpop.f32.mrb[0].mxu0
          %v1767 = vadd.f32 %v1639, %v1766
          %v1768 = vpop.f32.mrb[0].mxu0
          %1769 = vmatprep.mubr.f32.mxu0 0.0
          %v1770 = vand.u32 %v1252, 4294901760
          %v1771 = vsub.f32 %v1252, %v1770
          %v1772 = vand.u32 %v1771, 4294901760
          %1773 = vmatmul.mubr.f32.gmra.mrb[0].mxu0 %v1772
          %v1774 = vpop.f32.mrb[0].mxu0
          %v1775 = vadd.f32 %v1646, %v1774
          %v1776 = vpop.f32.mrb[0].mxu0
          %1777 = vmatprep.mubr.f32.mxu0 0.0
          %v1778 = vand.u32 %v1255, 4294901760
          %v1779 = vsub.f32 %v1255, %v1778
          %v1780 = vand.u32 %v1779, 4294901760
          %1781 = vmatmul.mubr.f32.gmra.mrb[0].mxu0 %v1780
          %v1782 = vpop.f32.mrb[0].mxu0
          %v1783 = vadd.f32 %v1653, %v1782
          %v1784 = vpop.f32.mrb[0].mxu0
          %1785 = vmatprep.mubr.f32.mxu0 0.0
          %v1786 = vand.u32 %v1258, 4294901760
          %v1787 = vsub.f32 %v1258, %v1786
          %v1788 = vand.u32 %v1787, 4294901760
          %1789 = vmatmul.mubr.f32.gmra.mrb[0].mxu0 %v1788
          %v1790 = vpop.f32.mrb[0].mxu0
          %v1791 = vadd.f32 %v1660, %v1790
          %v1792 = vpop.f32.mrb[0].mxu0
          %1793 = vmatprep.mubr.f32.mxu0 0.0
          %v1794 = vand.u32 %v1261, 4294901760
          %v1795 = vsub.f32 %v1261, %v1794
          %v1796 = vand.u32 %v1795, 4294901760
          %1797 = vmatmul.mubr.f32.gmra.mrb[0].mxu0 %v1796
          %v1798 = vpop.f32.mrb[0].mxu0
          %v1799 = vadd.f32 %v1667, %v1798
          %v1800 = vpop.f32.mrb[0].mxu0
          %1801 = vmatprep.mubr.f32.mxu0 0.0
          %v1802 = vand.u32 %v1264, 4294901760
          %v1803 = vsub.f32 %v1264, %v1802
          %v1804 = vand.u32 %v1803, 4294901760
          %1805 = vmatmul.mubr.f32.gmra.mrb[0].mxu0 %v1804
          %v1806 = vpop.f32.mrb[0].mxu0
          %v1807 = vadd.f32 %v1674, %v1806
          %v1808 = vpop.f32.mrb[0].mxu0
          %1809 = vdwg.mxu0
          %1810 = vmatprep.subr.mxu0 0.0
          %v1811 = vand.u32 %v1230, 4294901760
          %v1812 = vsub.f32 %v1230, %v1811
          %v1813 = vand.u32 %v1812, 4294901760
          %1814 = vmatpush1.msra.mxu0 %v1813
          %1815 = vmatprep.subr.mxu0 0.0
          %v1816 = vand.u32 %v1231, 4294901760
          %v1817 = vsub.f32 %v1231, %v1816
          %v1818 = vand.u32 %v1817, 4294901760
          %1819 = vmatpush1.msra.mxu0 %v1818
          %1820 = vmatprep.subr.mxu0 0.0
          %v1821 = vand.u32 %v1232, 4294901760
          %v1822 = vsub.f32 %v1232, %v1821
          %v1823 = vand.u32 %v1822, 4294901760
          %1824 = vmatpush1.msra.mxu0 %v1823
          %1825 = vmatprep.subr.mxu0 0.0
          %v1826 = vand.u32 %v1233, 4294901760
          %v1827 = vsub.f32 %v1233, %v1826
          %v1828 = vand.u32 %v1827, 4294901760
          %1829 = vmatpush1.msra.mxu0 %v1828
          %1830 = vmatprep.subr.mxu0 0.0
          %1831 = vmatpush1.msra.mxu0 0.0
          %1832 = vmatprep.subr.mxu0 0.0
          %1833 = vmatpush1.msra.mxu0 0.0
          %1834 = vmatprep.subr.mxu0 0.0
          %1835 = vmatpush1.msra.mxu0 0.0
          %1836 = vmatprep.subr.mxu0 0.0
          %1837 = vmatpush1.msra.mxu0 0.0
          %1838 = vmatprep.subr.mxu0 0.0
          %1839 = vmatpush1.msra.mxu0 0.0
          %1840 = vmatprep.subr.mxu0 0.0
          %1841 = vmatpush1.msra.mxu0 0.0
          %1842 = vmatprep.subr.mxu0 0.0
          %1843 = vmatpush1.msra.mxu0 0.0
          %1844 = vmatprep.subr.mxu0 0.0
          %1845 = vmatpush1.msra.mxu0 0.0
          %1846 = vmatprep.subr.mxu0 0.0
          %1847 = vmatpush1.msra.mxu0 0.0
          %1848 = vmatprep.subr.mxu0 0.0
          %1849 = vmatpush1.msra.mxu0 0.0
          %1850 = vmatprep.subr.mxu0 0.0
          %1851 = vmatpush1.msra.mxu0 0.0
          %1852 = vmatprep.subr.mxu0 0.0
          %1853 = vmatpush1.msra.mxu0 0.0
          %1854 = vmatprep.subr.mxu0 0.0
          %1855 = vmatpush1.msra.mxu0 0.0
          %1856 = vmatprep.subr.mxu0 0.0
          %1857 = vmatpush1.msra.mxu0 0.0
          %1858 = vmatprep.subr.mxu0 0.0
          %1859 = vmatpush1.msra.mxu0 0.0
          %1860 = vmatprep.subr.mxu0 0.0
          %1861 = vmatpush1.msra.mxu0 0.0
          %1862 = vmatprep.subr.mxu0 0.0
          %1863 = vmatpush1.msra.mxu0 0.0
          %1864 = vmatprep.subr.mxu0 0.0
          %1865 = vmatpush1.msra.mxu0 0.0
          %1866 = vmatprep.subr.mxu0 0.0
          %1867 = vmatpush1.msra.mxu0 0.0
          %1868 = vmatprep.subr.mxu0 0.0
          %1869 = vmatpush1.msra.mxu0 0.0
          %1870 = vmatprep.subr.mxu0 0.0
          %1871 = vmatpush1.msra.mxu0 0.0
          %1872 = vmatprep.subr.mxu0 0.0
          %1873 = vmatpush1.msra.mxu0 0.0
          %1874 = vmatprep.subr.mxu0 0.0
          %1875 = vmatpush1.msra.mxu0 0.0
          %1876 = vmatprep.subr.mxu0 0.0
          %1877 = vmatpush1.msra.mxu0 0.0
          %1878 = vmatprep.subr.mxu0 0.0
          %1879 = vmatpush1.msra.mxu0 0.0
          %1880 = vmatprep.subr.mxu0 0.0
          %1881 = vmatpush1.msra.mxu0 0.0
          %1882 = vmatprep.subr.mxu0 0.0
          %1883 = vmatpush1.msra.mxu0 0.0
          %1884 = vmatprep.subr.mxu0 0.0
          %1885 = vmatpush1.msra.mxu0 0.0
          %1886 = vmatprep.mubr.f32.mxu0 0.0
          %v1887 = vand.u32 %v1243, 4294901760
          %1888 = vmatmul.mubr.f32.gmra.mrb[0].mxu0 %v1887
          %v1889 = vpop.f32.mrb[0].mxu0
          %v1890 = vadd.f32 %v1751, %v1889
          %v1891 = vpop.f32.mrb[0].mxu0
          %1892 = vmatprep.mubr.f32.mxu0 0.0
          %v1893 = vand.u32 %v1246, 4294901760
          %1894 = vmatmul.mubr.f32.gmra.mrb[0].mxu0 %v1893
          %v1895 = vpop.f32.mrb[0].mxu0
          %v1896 = vadd.f32 %v1759, %v1895
          %v1897 = vpop.f32.mrb[0].mxu0
          %1898 = vmatprep.mubr.f32.mxu0 0.0
          %v1899 = vand.u32 %v1249, 4294901760
          %1900 = vmatmul.mubr.f32.gmra.mrb[0].mxu0 %v1899
          %v1901 = vpop.f32.mrb[0].mxu0
          %v1902 = vadd.f32 %v1767, %v1901
          %v1903 = vpop.f32.mrb[0].mxu0
          %1904 = vmatprep.mubr.f32.mxu0 0.0
          %v1905 = vand.u32 %v1252, 4294901760
          %1906 = vmatmul.mubr.f32.gmra.mrb[0].mxu0 %v1905
          %v1907 = vpop.f32.mrb[0].mxu0
          %v1908 = vadd.f32 %v1775, %v1907
          %v1909 = vpop.f32.mrb[0].mxu0
          %1910 = vmatprep.mubr.f32.mxu0 0.0
          %v1911 = vand.u32 %v1255, 4294901760
          %1912 = vmatmul.mubr.f32.gmra.mrb[0].mxu0 %v1911
          %v1913 = vpop.f32.mrb[0].mxu0
          %v1914 = vadd.f32 %v1783, %v1913
          %v1915 = vpop.f32.mrb[0].mxu0
          %1916 = vmatprep.mubr.f32.mxu0 0.0
          %v1917 = vand.u32 %v1258, 4294901760
          %1918 = vmatmul.mubr.f32.gmra.mrb[0].mxu0 %v1917
          %v1919 = vpop.f32.mrb[0].mxu0
          %v1920 = vadd.f32 %v1791, %v1919
          %v1921 = vpop.f32.mrb[0].mxu0
          %1922 = vmatprep.mubr.f32.mxu0 0.0
          %v1923 = vand.u32 %v1261, 4294901760
          %1924 = vmatmul.mubr.f32.gmra.mrb[0].mxu0 %v1923
          %v1925 = vpop.f32.mrb[0].mxu0
          %v1926 = vadd.f32 %v1799, %v1925
          %v1927 = vpop.f32.mrb[0].mxu0
          %1928 = vmatprep.mubr.f32.mxu0 0.0
          %v1929 = vand.u32 %v1264, 4294901760
          %1930 = vmatmul.mubr.f32.gmra.mrb[0].mxu0 %v1929
          %v1931 = vpop.f32.mrb[0].mxu0
          %v1932 = vadd.f32 %v1807, %v1931
          %v1933 = vpop.f32.mrb[0].mxu0
          %1934 = vdwg.mxu0
          %1935 = vmatprep.subr.mxu0 0.0
          %v1936 = vand.u32 %v1230, 4294901760
          %1937 = vmatpush1.msra.mxu0 %v1936
          %1938 = vmatprep.subr.mxu0 0.0
          %v1939 = vand.u32 %v1231, 4294901760
          %1940 = vmatpush1.msra.mxu0 %v1939
          %1941 = vmatprep.subr.mxu0 0.0
          %v1942 = vand.u32 %v1232, 4294901760
          %1943 = vmatpush1.msra.mxu0 %v1942
          %1944 = vmatprep.subr.mxu0 0.0
          %v1945 = vand.u32 %v1233, 4294901760
          %1946 = vmatpush1.msra.mxu0 %v1945
          %1947 = vmatprep.subr.mxu0 0.0
          %1948 = vmatpush1.msra.mxu0 0.0
          %1949 = vmatprep.subr.mxu0 0.0
          %1950 = vmatpush1.msra.mxu0 0.0
          %1951 = vmatprep.subr.mxu0 0.0
          %1952 = vmatpush1.msra.mxu0 0.0
          %1953 = vmatprep.subr.mxu0 0.0
          %1954 = vmatpush1.msra.mxu0 0.0
          %1955 = vmatprep.subr.mxu0 0.0
          %1956 = vmatpush1.msra.mxu0 0.0
          %1957 = vmatprep.subr.mxu0 0.0
          %1958 = vmatpush1.msra.mxu0 0.0
          %1959 = vmatprep.subr.mxu0 0.0
          %1960 = vmatpush1.msra.mxu0 0.0
          %1961 = vmatprep.subr.mxu0 0.0
          %1962 = vmatpush1.msra.mxu0 0.0
          %1963 = vmatprep.subr.mxu0 0.0
          %1964 = vmatpush1.msra.mxu0 0.0
          %1965 = vmatprep.subr.mxu0 0.0
          %1966 = vmatpush1.msra.mxu0 0.0
          %1967 = vmatprep.subr.mxu0 0.0
          %1968 = vmatpush1.msra.mxu0 0.0
          %1969 = vmatprep.subr.mxu0 0.0
          %1970 = vmatpush1.msra.mxu0 0.0
          %1971 = vmatprep.subr.mxu0 0.0
          %1972 = vmatpush1.msra.mxu0 0.0
          %1973 = vmatprep.subr.mxu0 0.0
          %1974 = vmatpush1.msra.mxu0 0.0
          %1975 = vmatprep.subr.mxu0 0.0
          %1976 = vmatpush1.msra.mxu0 0.0
          %1977 = vmatprep.subr.mxu0 0.0
          %1978 = vmatpush1.msra.mxu0 0.0
          %1979 = vmatprep.subr.mxu0 0.0
          %1980 = vmatpush1.msra.mxu0 0.0
          %1981 = vmatprep.subr.mxu0 0.0
          %1982 = vmatpush1.msra.mxu0 0.0
          %1983 = vmatprep.subr.mxu0 0.0
          %1984 = vmatpush1.msra.mxu0 0.0
          %1985 = vmatprep.subr.mxu0 0.0
          %1986 = vmatpush1.msra.mxu0 0.0
          %1987 = vmatprep.subr.mxu0 0.0
          %1988 = vmatpush1.msra.mxu0 0.0
          %1989 = vmatprep.subr.mxu0 0.0
          %1990 = vmatpush1.msra.mxu0 0.0
          %1991 = vmatprep.subr.mxu0 0.0
          %1992 = vmatpush1.msra.mxu0 0.0
          %1993 = vmatprep.subr.mxu0 0.0
          %1994 = vmatpush1.msra.mxu0 0.0
          %1995 = vmatprep.subr.mxu0 0.0
          %1996 = vmatpush1.msra.mxu0 0.0
          %1997 = vmatprep.subr.mxu0 0.0
          %1998 = vmatpush1.msra.mxu0 0.0
          %1999 = vmatprep.subr.mxu0 0.0
          %2000 = vmatpush1.msra.mxu0 0.0
          %2001 = vmatprep.subr.mxu0 0.0
          %2002 = vmatpush1.msra.mxu0 0.0
          %2003 = vmatprep.mubr.f32.mxu0 0.0
          %v2004 = vand.u32 %v1243, 4294901760
          %2005 = vmatmul.mubr.f32.gmra.mrb[0].mxu0 %v2004
          %v2006 = vpop.f32.mrb[0].mxu0
          %v2007 = vadd.f32 %v1890, %v2006
          %v2008 = vpop.f32.mrb[0].mxu0
          %2009 = vmatprep.mubr.f32.mxu0 0.0
          %v2010 = vand.u32 %v1246, 4294901760
          %2011 = vmatmul.mubr.f32.gmra.mrb[0].mxu0 %v2010
          %v2012 = vpop.f32.mrb[0].mxu0
          %v2013 = vadd.f32 %v1896, %v2012
          %v2014 = vpop.f32.mrb[0].mxu0
          %2015 = vmatprep.mubr.f32.mxu0 0.0
          %v2016 = vand.u32 %v1249, 4294901760
          %2017 = vmatmul.mubr.f32.gmra.mrb[0].mxu0 %v2016
          %v2018 = vpop.f32.mrb[0].mxu0
          %v2019 = vadd.f32 %v1902, %v2018
          %v2020 = vpop.f32.mrb[0].mxu0
          %2021 = vmatprep.mubr.f32.mxu0 0.0
          %v2022 = vand.u32 %v1252, 4294901760
          %2023 = vmatmul.mubr.f32.gmra.mrb[0].mxu0 %v2022
          %v2024 = vpop.f32.mrb[0].mxu0
          %v2025 = vadd.f32 %v1908, %v2024
          %v2026 = vpop.f32.mrb[0].mxu0
          %2027 = vmatprep.mubr.f32.mxu0 0.0
          %v2028 = vand.u32 %v1255, 4294901760
          %2029 = vmatmul.mubr.f32.gmra.mrb[0].mxu0 %v2028
          %v2030 = vpop.f32.mrb[0].mxu0
          %v2031 = vadd.f32 %v1914, %v2030
          %v2032 = vpop.f32.mrb[0].mxu0
          %2033 = vmatprep.mubr.f32.mxu0 0.0
          %v2034 = vand.u32 %v1258, 4294901760
          %2035 = vmatmul.mubr.f32.gmra.mrb[0].mxu0 %v2034
          %v2036 = vpop.f32.mrb[0].mxu0
          %v2037 = vadd.f32 %v1920, %v2036
          %v2038 = vpop.f32.mrb[0].mxu0
          %2039 = vmatprep.mubr.f32.mxu0 0.0
          %v2040 = vand.u32 %v1261, 4294901760
          %2041 = vmatmul.mubr.f32.gmra.mrb[0].mxu0 %v2040
          %v2042 = vpop.f32.mrb[0].mxu0
          %v2043 = vadd.f32 %v1926, %v2042
          %v2044 = vpop.f32.mrb[0].mxu0
          %2045 = vmatprep.mubr.f32.mxu0 0.0
          %v2046 = vand.u32 %v1264, 4294901760
          %2047 = vmatmul.mubr.f32.gmra.mrb[0].mxu0 %v2046
          %v2048 = vpop.f32.mrb[0].mxu0
          %v2049 = vadd.f32 %v1932, %v2048
          %v2050 = vpop.f32.mrb[0].mxu0
          %2051 = vdwg.mxu0
          %2052 = vst [vmem:[#allocation3] sm:$0xff] %v2007
          %2053 = vst [vmem:[#allocation3 + $0x8] sm:$0xff] %v2013
          %2054 = vst [vmem:[#allocation3 + $0x10] sm:$0xff] %v2019
          %2055 = vst [vmem:[#allocation3 + $0x18] sm:$0xff] %v2025
          %2056 = vst [vmem:[#allocation3 + $0x20] sm:$0xff] %v2031
          %2057 = vst [vmem:[#allocation3 + $0x28] sm:$0xff] %v2037
          %2058 = vst [vmem:[#allocation3 + $0x30] sm:$0xff] %v2043
          %2059 = vst [vmem:[#allocation3 + $0x38] sm:$0xff] %v2049
        $region56: #{tpu_custom_call.1} parent=43 // pred_fallthru
          _
        %v2060 = vld [vmem:[%s308] sm:$0xff]
        %v2061 = vld [vmem:[%s308 + $0x8] sm:$0xff]
        %v2062 = vld [vmem:[%s308 + $0x10] sm:$0xff]
        %v2063 = vld [vmem:[%s308 + $0x18] sm:$0xff]
        %v2064 = vld [vmem:[%s363] sm:$0xff]
        %v2065 = vld [vmem:[%s367] sm:$0xff]
        %v2066 = vld [vmem:[#allocation3] sm:$0xff]
        %vm2067 = vcmask 261120
        %v2069 = vsel %vm2067, %v2064, 0
        %2071 = vmatprep.subr.mxu0 0.0
        %v2072 = vand.u32 %v2060, 4294901760
        %2073 = vmatpush1.msra.mxu0 %v2072
        %2074 = vmatprep.subr.mxu0 0.0
        %v2075 = vand.u32 %v2061, 4294901760
        %2076 = vmatpush1.msra.mxu0 %v2075
        %2077 = vmatprep.subr.mxu0 0.0
        %v2078 = vand.u32 %v2062, 4294901760
        %2079 = vmatpush1.msra.mxu0 %v2078
        %2080 = vmatprep.subr.mxu0 0.0
        %v2081 = vand.u32 %v2063, 4294901760
        %2082 = vmatpush1.msra.mxu0 %v2081
        %2083 = vmatprep.subr.mxu0 0.0
        %2084 = vmatpush1.msra.mxu0 0.0
        %2085 = vmatprep.subr.mxu0 0.0
        %2086 = vmatpush1.msra.mxu0 0.0
        %2087 = vmatprep.subr.mxu0 0.0
        %2088 = vmatpush1.msra.mxu0 0.0
        %2089 = vmatprep.subr.mxu0 0.0
        %2090 = vmatpush1.msra.mxu0 0.0
        %2091 = vmatprep.subr.mxu0 0.0
        %2092 = vmatpush1.msra.mxu0 0.0
        %2093 = vmatprep.subr.mxu0 0.0
        %2094 = vmatpush1.msra.mxu0 0.0
        %2095 = vmatprep.subr.mxu0 0.0
        %2096 = vmatpush1.msra.mxu0 0.0
        %2097 = vmatprep.subr.mxu0 0.0
        %2098 = vmatpush1.msra.mxu0 0.0
        %2099 = vmatprep.subr.mxu0 0.0
        %2100 = vmatpush1.msra.mxu0 0.0
        %2101 = vmatprep.subr.mxu0 0.0
        %2102 = vmatpush1.msra.mxu0 0.0
        %2103 = vmatprep.subr.mxu0 0.0
        %2104 = vmatpush1.msra.mxu0 0.0
        %2105 = vmatprep.subr.mxu0 0.0
        %2106 = vmatpush1.msra.mxu0 0.0
        %2107 = vmatprep.subr.mxu0 0.0
        %2108 = vmatpush1.msra.mxu0 0.0
        %2109 = vmatprep.subr.mxu0 0.0
        %2110 = vmatpush1.msra.mxu0 0.0
        %2111 = vmatprep.subr.mxu0 0.0
        %2112 = vmatpush1.msra.mxu0 0.0
        %2113 = vmatprep.subr.mxu0 0.0
        %2114 = vmatpush1.msra.mxu0 0.0
        %2115 = vmatprep.subr.mxu0 0.0
        %2116 = vmatpush1.msra.mxu0 0.0
        %2117 = vmatprep.subr.mxu0 0.0
        %2118 = vmatpush1.msra.mxu0 0.0
        %2119 = vmatprep.subr.mxu0 0.0
        %2120 = vmatpush1.msra.mxu0 0.0
        %2121 = vmatprep.subr.mxu0 0.0
        %2122 = vmatpush1.msra.mxu0 0.0
        %2123 = vmatprep.subr.mxu0 0.0
        %2124 = vmatpush1.msra.mxu0 0.0
        %2125 = vmatprep.subr.mxu0 0.0
        %2126 = vmatpush1.msra.mxu0 0.0
        %2127 = vmatprep.subr.mxu0 0.0
        %2128 = vmatpush1.msra.mxu0 0.0
        %2129 = vmatprep.subr.mxu0 0.0
        %2130 = vmatpush1.msra.mxu0 0.0
        %2131 = vmatprep.subr.mxu0 0.0
        %2132 = vmatpush1.msra.mxu0 0.0
        %2133 = vmatprep.subr.mxu0 0.0
        %2134 = vmatpush1.msra.mxu0 0.0
        %2135 = vmatprep.subr.mxu0 0.0
        %2136 = vmatpush1.msra.mxu0 0.0
        %2137 = vmatprep.subr.mxu0 0.0
        %2138 = vmatpush1.msra.mxu0 0.0
        %2139 = vmatprep.mubr.f32.mxu0 0.0
        %v2140 = vand.u32 %v2069, 4294901760
        %v2141 = vsub.f32 %v2069, %v2140
        %v2142 = vand.u32 %v2141, 4294901760
        %v2143 = vsub.f32 %v2141, %v2142
        %v2144 = vand.u32 %v2143, 4294901760
        %2145 = vmatmul.mubr.f32.gmra.mrb[0].mxu0 %v2144
        %v2146 = vpop.f32.mrb[0].mxu0
        %v2147 = vadd.f32 0.0, %v2146
        %v2148 = vpop.f32.mrb[0].mxu0
        %2149 = vdwg.mxu0
        %2150 = vmatprep.subr.mxu0 0.0
        %v2151 = vand.u32 %v2060, 4294901760
        %v2152 = vsub.f32 %v2060, %v2151
        %v2153 = vand.u32 %v2152, 4294901760
        %v2154 = vsub.f32 %v2152, %v2153
        %v2155 = vand.u32 %v2154, 4294901760
        %2156 = vmatpush1.msra.mxu0 %v2155
        %2157 = vmatprep.subr.mxu0 0.0
        %v2158 = vand.u32 %v2061, 4294901760
        %v2159 = vsub.f32 %v2061, %v2158
        %v2160 = vand.u32 %v2159, 4294901760
        %v2161 = vsub.f32 %v2159, %v2160
        %v2162 = vand.u32 %v2161, 4294901760
        %2163 = vmatpush1.msra.mxu0 %v2162
        %2164 = vmatprep.subr.mxu0 0.0
        %v2165 = vand.u32 %v2062, 4294901760
        %v2166 = vsub.f32 %v2062, %v2165
        %v2167 = vand.u32 %v2166, 4294901760
        %v2168 = vsub.f32 %v2166, %v2167
        %v2169 = vand.u32 %v2168, 4294901760
        %2170 = vmatpush1.msra.mxu0 %v2169
        %2171 = vmatprep.subr.mxu0 0.0
        %v2172 = vand.u32 %v2063, 4294901760
        %v2173 = vsub.f32 %v2063, %v2172
        %v2174 = vand.u32 %v2173, 4294901760
        %v2175 = vsub.f32 %v2173, %v2174
        %v2176 = vand.u32 %v2175, 4294901760
        %2177 = vmatpush1.msra.mxu0 %v2176
        %2178 = vmatprep.subr.mxu0 0.0
        %2179 = vmatpush1.msra.mxu0 0.0
        %2180 = vmatprep.subr.mxu0 0.0
        %2181 = vmatpush1.msra.mxu0 0.0
        %2182 = vmatprep.subr.mxu0 0.0
        %2183 = vmatpush1.msra.mxu0 0.0
        %2184 = vmatprep.subr.mxu0 0.0
        %2185 = vmatpush1.msra.mxu0 0.0
        %2186 = vmatprep.subr.mxu0 0.0
        %2187 = vmatpush1.msra.mxu0 0.0
        %2188 = vmatprep.subr.mxu0 0.0
        %2189 = vmatpush1.msra.mxu0 0.0
        %2190 = vmatprep.subr.mxu0 0.0
        %2191 = vmatpush1.msra.mxu0 0.0
        %2192 = vmatprep.subr.mxu0 0.0
        %2193 = vmatpush1.msra.mxu0 0.0
        %2194 = vmatprep.subr.mxu0 0.0
        %2195 = vmatpush1.msra.mxu0 0.0
        %2196 = vmatprep.subr.mxu0 0.0
        %2197 = vmatpush1.msra.mxu0 0.0
        %2198 = vmatprep.subr.mxu0 0.0
        %2199 = vmatpush1.msra.mxu0 0.0
        %2200 = vmatprep.subr.mxu0 0.0
        %2201 = vmatpush1.msra.mxu0 0.0
        %2202 = vmatprep.subr.mxu0 0.0
        %2203 = vmatpush1.msra.mxu0 0.0
        %2204 = vmatprep.subr.mxu0 0.0
        %2205 = vmatpush1.msra.mxu0 0.0
        %2206 = vmatprep.subr.mxu0 0.0
        %2207 = vmatpush1.msra.mxu0 0.0
        %2208 = vmatprep.subr.mxu0 0.0
        %2209 = vmatpush1.msra.mxu0 0.0
        %2210 = vmatprep.subr.mxu0 0.0
        %2211 = vmatpush1.msra.mxu0 0.0
        %2212 = vmatprep.subr.mxu0 0.0
        %2213 = vmatpush1.msra.mxu0 0.0
        %2214 = vmatprep.subr.mxu0 0.0
        %2215 = vmatpush1.msra.mxu0 0.0
        %2216 = vmatprep.subr.mxu0 0.0
        %2217 = vmatpush1.msra.mxu0 0.0
        %2218 = vmatprep.subr.mxu0 0.0
        %2219 = vmatpush1.msra.mxu0 0.0
        %2220 = vmatprep.subr.mxu0 0.0
        %2221 = vmatpush1.msra.mxu0 0.0
        %2222 = vmatprep.subr.mxu0 0.0
        %2223 = vmatpush1.msra.mxu0 0.0
        %2224 = vmatprep.subr.mxu0 0.0
        %2225 = vmatpush1.msra.mxu0 0.0
        %2226 = vmatprep.subr.mxu0 0.0
        %2227 = vmatpush1.msra.mxu0 0.0
        %2228 = vmatprep.subr.mxu0 0.0
        %2229 = vmatpush1.msra.mxu0 0.0
        %2230 = vmatprep.subr.mxu0 0.0
        %2231 = vmatpush1.msra.mxu0 0.0
        %2232 = vmatprep.subr.mxu0 0.0
        %2233 = vmatpush1.msra.mxu0 0.0
        %2234 = vmatprep.mubr.f32.mxu0 0.0
        %v2235 = vand.u32 %v2069, 4294901760
        %2236 = vmatmul.mubr.f32.gmra.mrb[0].mxu0 %v2235
        %v2237 = vpop.f32.mrb[0].mxu0
        %v2238 = vadd.f32 %v2147, %v2237
        %v2239 = vpop.f32.mrb[0].mxu0
        %2240 = vdwg.mxu0
        %2241 = vmatprep.subr.mxu0 0.0
        %v2242 = vand.u32 %v2060, 4294901760
        %v2243 = vsub.f32 %v2060, %v2242
        %2244 = vmatpush1.msra.mxu0 %v2243
        %2245 = vmatprep.subr.mxu0 0.0
        %v2246 = vand.u32 %v2061, 4294901760
        %v2247 = vsub.f32 %v2061, %v2246
        %2248 = vmatpush1.msra.mxu0 %v2247
        %2249 = vmatprep.subr.mxu0 0.0
        %v2250 = vand.u32 %v2062, 4294901760
        %v2251 = vsub.f32 %v2062, %v2250
        %2252 = vmatpush1.msra.mxu0 %v2251
        %2253 = vmatprep.subr.mxu0 0.0
        %v2254 = vand.u32 %v2063, 4294901760
        %v2255 = vsub.f32 %v2063, %v2254
        %2256 = vmatpush1.msra.mxu0 %v2255
        %2257 = vmatprep.subr.mxu0 0.0
        %2258 = vmatpush1.msra.mxu0 0.0
        %2259 = vmatprep.subr.mxu0 0.0
        %2260 = vmatpush1.msra.mxu0 0.0
        %2261 = vmatprep.subr.mxu0 0.0
        %2262 = vmatpush1.msra.mxu0 0.0
        %2263 = vmatprep.subr.mxu0 0.0
        %2264 = vmatpush1.msra.mxu0 0.0
        %2265 = vmatprep.subr.mxu0 0.0
        %2266 = vmatpush1.msra.mxu0 0.0
        %2267 = vmatprep.subr.mxu0 0.0
        %2268 = vmatpush1.msra.mxu0 0.0
        %2269 = vmatprep.subr.mxu0 0.0
        %2270 = vmatpush1.msra.mxu0 0.0
        %2271 = vmatprep.subr.mxu0 0.0
        %2272 = vmatpush1.msra.mxu0 0.0
        %2273 = vmatprep.subr.mxu0 0.0
        %2274 = vmatpush1.msra.mxu0 0.0
        %2275 = vmatprep.subr.mxu0 0.0
        %2276 = vmatpush1.msra.mxu0 0.0
        %2277 = vmatprep.subr.mxu0 0.0
        %2278 = vmatpush1.msra.mxu0 0.0
        %2279 = vmatprep.subr.mxu0 0.0
        %2280 = vmatpush1.msra.mxu0 0.0
        %2281 = vmatprep.subr.mxu0 0.0
        %2282 = vmatpush1.msra.mxu0 0.0
        %2283 = vmatprep.subr.mxu0 0.0
        %2284 = vmatpush1.msra.mxu0 0.0
        %2285 = vmatprep.subr.mxu0 0.0
        %2286 = vmatpush1.msra.mxu0 0.0
        %2287 = vmatprep.subr.mxu0 0.0
        %2288 = vmatpush1.msra.mxu0 0.0
        %2289 = vmatprep.subr.mxu0 0.0
        %2290 = vmatpush1.msra.mxu0 0.0
        %2291 = vmatprep.subr.mxu0 0.0
        %2292 = vmatpush1.msra.mxu0 0.0
        %2293 = vmatprep.subr.mxu0 0.0
        %2294 = vmatpush1.msra.mxu0 0.0
        %2295 = vmatprep.subr.mxu0 0.0
        %2296 = vmatpush1.msra.mxu0 0.0
        %2297 = vmatprep.subr.mxu0 0.0
        %2298 = vmatpush1.msra.mxu0 0.0
        %2299 = vmatprep.subr.mxu0 0.0
        %2300 = vmatpush1.msra.mxu0 0.0
        %2301 = vmatprep.subr.mxu0 0.0
        %2302 = vmatpush1.msra.mxu0 0.0
        %2303 = vmatprep.subr.mxu0 0.0
        %2304 = vmatpush1.msra.mxu0 0.0
        %2305 = vmatprep.subr.mxu0 0.0
        %2306 = vmatpush1.msra.mxu0 0.0
        %2307 = vmatprep.subr.mxu0 0.0
        %2308 = vmatpush1.msra.mxu0 0.0
        %2309 = vmatprep.subr.mxu0 0.0
        %2310 = vmatpush1.msra.mxu0 0.0
        %2311 = vmatprep.subr.mxu0 0.0
        %2312 = vmatpush1.msra.mxu0 0.0
        %2313 = vmatprep.mubr.f32.mxu0 0.0
        %v2314 = vand.u32 %v2069, 4294901760
        %v2315 = vsub.f32 %v2069, %v2314
        %2316 = vmatmul.mubr.f32.gmra.mrb[0].mxu0 %v2315
        %v2317 = vpop.f32.mrb[0].mxu0
        %v2318 = vadd.f32 %v2238, %v2317
        %v2319 = vpop.f32.mrb[0].mxu0
        %2320 = vdwg.mxu0
        %2321 = vmatprep.subr.mxu0 0.0
        %v2322 = vand.u32 %v2060, 4294901760
        %2323 = vmatpush1.msra.mxu0 %v2322
        %2324 = vmatprep.subr.mxu0 0.0
        %v2325 = vand.u32 %v2061, 4294901760
        %2326 = vmatpush1.msra.mxu0 %v2325
        %2327 = vmatprep.subr.mxu0 0.0
        %v2328 = vand.u32 %v2062, 4294901760
        %2329 = vmatpush1.msra.mxu0 %v2328
        %2330 = vmatprep.subr.mxu0 0.0
        %v2331 = vand.u32 %v2063, 4294901760
        %2332 = vmatpush1.msra.mxu0 %v2331
        %2333 = vmatprep.subr.mxu0 0.0
        %2334 = vmatpush1.msra.mxu0 0.0
        %2335 = vmatprep.subr.mxu0 0.0
        %2336 = vmatpush1.msra.mxu0 0.0
        %2337 = vmatprep.subr.mxu0 0.0
        %2338 = vmatpush1.msra.mxu0 0.0
        %2339 = vmatprep.subr.mxu0 0.0
        %2340 = vmatpush1.msra.mxu0 0.0
        %2341 = vmatprep.subr.mxu0 0.0
        %2342 = vmatpush1.msra.mxu0 0.0
        %2343 = vmatprep.subr.mxu0 0.0
        %2344 = vmatpush1.msra.mxu0 0.0
        %2345 = vmatprep.subr.mxu0 0.0
        %2346 = vmatpush1.msra.mxu0 0.0
        %2347 = vmatprep.subr.mxu0 0.0
        %2348 = vmatpush1.msra.mxu0 0.0
        %2349 = vmatprep.subr.mxu0 0.0
        %2350 = vmatpush1.msra.mxu0 0.0
        %2351 = vmatprep.subr.mxu0 0.0
        %2352 = vmatpush1.msra.mxu0 0.0
        %2353 = vmatprep.subr.mxu0 0.0
        %2354 = vmatpush1.msra.mxu0 0.0
        %2355 = vmatprep.subr.mxu0 0.0
        %2356 = vmatpush1.msra.mxu0 0.0
        %2357 = vmatprep.subr.mxu0 0.0
        %2358 = vmatpush1.msra.mxu0 0.0
        %2359 = vmatprep.subr.mxu0 0.0
        %2360 = vmatpush1.msra.mxu0 0.0
        %2361 = vmatprep.subr.mxu0 0.0
        %2362 = vmatpush1.msra.mxu0 0.0
        %2363 = vmatprep.subr.mxu0 0.0
        %2364 = vmatpush1.msra.mxu0 0.0
        %2365 = vmatprep.subr.mxu0 0.0
        %2366 = vmatpush1.msra.mxu0 0.0
        %2367 = vmatprep.subr.mxu0 0.0
        %2368 = vmatpush1.msra.mxu0 0.0
        %2369 = vmatprep.subr.mxu0 0.0
        %2370 = vmatpush1.msra.mxu0 0.0
        %2371 = vmatprep.subr.mxu0 0.0
        %2372 = vmatpush1.msra.mxu0 0.0
        %2373 = vmatprep.subr.mxu0 0.0
        %2374 = vmatpush1.msra.mxu0 0.0
        %2375 = vmatprep.subr.mxu0 0.0
        %2376 = vmatpush1.msra.mxu0 0.0
        %2377 = vmatprep.subr.mxu0 0.0
        %2378 = vmatpush1.msra.mxu0 0.0
        %2379 = vmatprep.subr.mxu0 0.0
        %2380 = vmatpush1.msra.mxu0 0.0
        %2381 = vmatprep.subr.mxu0 0.0
        %2382 = vmatpush1.msra.mxu0 0.0
        %2383 = vmatprep.subr.mxu0 0.0
        %2384 = vmatpush1.msra.mxu0 0.0
        %2385 = vmatprep.subr.mxu0 0.0
        %2386 = vmatpush1.msra.mxu0 0.0
        %2387 = vmatprep.subr.mxu0 0.0
        %2388 = vmatpush1.msra.mxu0 0.0
        %2389 = vmatprep.mubr.f32.mxu0 0.0
        %v2390 = vand.u32 %v2069, 4294901760
        %v2391 = vsub.f32 %v2069, %v2390
        %v2392 = vand.u32 %v2391, 4294901760
        %2393 = vmatmul.mubr.f32.gmra.mrb[0].mxu0 %v2392
        %v2394 = vpop.f32.mrb[0].mxu0
        %v2395 = vadd.f32 %v2318, %v2394
        %v2396 = vpop.f32.mrb[0].mxu0
        %2397 = vdwg.mxu0
        %2398 = vmatprep.subr.mxu0 0.0
        %v2399 = vand.u32 %v2060, 4294901760
        %v2400 = vsub.f32 %v2060, %v2399
        %v2401 = vand.u32 %v2400, 4294901760
        %2402 = vmatpush1.msra.mxu0 %v2401
        %2403 = vmatprep.subr.mxu0 0.0
        %v2404 = vand.u32 %v2061, 4294901760
        %v2405 = vsub.f32 %v2061, %v2404
        %v2406 = vand.u32 %v2405, 4294901760
        %2407 = vmatpush1.msra.mxu0 %v2406
        %2408 = vmatprep.subr.mxu0 0.0
        %v2409 = vand.u32 %v2062, 4294901760
        %v2410 = vsub.f32 %v2062, %v2409
        %v2411 = vand.u32 %v2410, 4294901760
        %2412 = vmatpush1.msra.mxu0 %v2411
        %2413 = vmatprep.subr.mxu0 0.0
        %v2414 = vand.u32 %v2063, 4294901760
        %v2415 = vsub.f32 %v2063, %v2414
        %v2416 = vand.u32 %v2415, 4294901760
        %2417 = vmatpush1.msra.mxu0 %v2416
        %2418 = vmatprep.subr.mxu0 0.0
        %2419 = vmatpush1.msra.mxu0 0.0
        %2420 = vmatprep.subr.mxu0 0.0
        %2421 = vmatpush1.msra.mxu0 0.0
        %2422 = vmatprep.subr.mxu0 0.0
        %2423 = vmatpush1.msra.mxu0 0.0
        %2424 = vmatprep.subr.mxu0 0.0
        %2425 = vmatpush1.msra.mxu0 0.0
        %2426 = vmatprep.subr.mxu0 0.0
        %2427 = vmatpush1.msra.mxu0 0.0
        %2428 = vmatprep.subr.mxu0 0.0
        %2429 = vmatpush1.msra.mxu0 0.0
        %2430 = vmatprep.subr.mxu0 0.0
        %2431 = vmatpush1.msra.mxu0 0.0
        %2432 = vmatprep.subr.mxu0 0.0
        %2433 = vmatpush1.msra.mxu0 0.0
        %2434 = vmatprep.subr.mxu0 0.0
        %2435 = vmatpush1.msra.mxu0 0.0
        %2436 = vmatprep.subr.mxu0 0.0
        %2437 = vmatpush1.msra.mxu0 0.0
        %2438 = vmatprep.subr.mxu0 0.0
        %2439 = vmatpush1.msra.mxu0 0.0
        %2440 = vmatprep.subr.mxu0 0.0
        %2441 = vmatpush1.msra.mxu0 0.0
        %2442 = vmatprep.subr.mxu0 0.0
        %2443 = vmatpush1.msra.mxu0 0.0
        %2444 = vmatprep.subr.mxu0 0.0
        %2445 = vmatpush1.msra.mxu0 0.0
        %2446 = vmatprep.subr.mxu0 0.0
        %2447 = vmatpush1.msra.mxu0 0.0
        %2448 = vmatprep.subr.mxu0 0.0
        %2449 = vmatpush1.msra.mxu0 0.0
        %2450 = vmatprep.subr.mxu0 0.0
        %2451 = vmatpush1.msra.mxu0 0.0
        %2452 = vmatprep.subr.mxu0 0.0
        %2453 = vmatpush1.msra.mxu0 0.0
        %2454 = vmatprep.subr.mxu0 0.0
        %2455 = vmatpush1.msra.mxu0 0.0
        %2456 = vmatprep.subr.mxu0 0.0
        %2457 = vmatpush1.msra.mxu0 0.0
        %2458 = vmatprep.subr.mxu0 0.0
        %2459 = vmatpush1.msra.mxu0 0.0
        %2460 = vmatprep.subr.mxu0 0.0
        %2461 = vmatpush1.msra.mxu0 0.0
        %2462 = vmatprep.subr.mxu0 0.0
        %2463 = vmatpush1.msra.mxu0 0.0
        %2464 = vmatprep.subr.mxu0 0.0
        %2465 = vmatpush1.msra.mxu0 0.0
        %2466 = vmatprep.subr.mxu0 0.0
        %2467 = vmatpush1.msra.mxu0 0.0
        %2468 = vmatprep.subr.mxu0 0.0
        %2469 = vmatpush1.msra.mxu0 0.0
        %2470 = vmatprep.subr.mxu0 0.0
        %2471 = vmatpush1.msra.mxu0 0.0
        %2472 = vmatprep.subr.mxu0 0.0
        %2473 = vmatpush1.msra.mxu0 0.0
        %2474 = vmatprep.mubr.f32.mxu0 0.0
        %v2475 = vand.u32 %v2069, 4294901760
        %2476 = vmatmul.mubr.f32.gmra.mrb[0].mxu0 %v2475
        %v2477 = vpop.f32.mrb[0].mxu0
        %v2478 = vadd.f32 %v2395, %v2477
        %v2479 = vpop.f32.mrb[0].mxu0
        %2480 = vdwg.mxu0
        %2481 = vmatprep.subr.mxu0 0.0
        %v2482 = vand.u32 %v2060, 4294901760
        %2483 = vmatpush1.msra.mxu0 %v2482
        %2484 = vmatprep.subr.mxu0 0.0
        %v2485 = vand.u32 %v2061, 4294901760
        %2486 = vmatpush1.msra.mxu0 %v2485
        %2487 = vmatprep.subr.mxu0 0.0
        %v2488 = vand.u32 %v2062, 4294901760
        %2489 = vmatpush1.msra.mxu0 %v2488
        %2490 = vmatprep.subr.mxu0 0.0
        %v2491 = vand.u32 %v2063, 4294901760
        %2492 = vmatpush1.msra.mxu0 %v2491
        %2493 = vmatprep.subr.mxu0 0.0
        %2494 = vmatpush1.msra.mxu0 0.0
        %2495 = vmatprep.subr.mxu0 0.0
        %2496 = vmatpush1.msra.mxu0 0.0
        %2497 = vmatprep.subr.mxu0 0.0
        %2498 = vmatpush1.msra.mxu0 0.0
        %2499 = vmatprep.subr.mxu0 0.0
        %2500 = vmatpush1.msra.mxu0 0.0
        %2501 = vmatprep.subr.mxu0 0.0
        %2502 = vmatpush1.msra.mxu0 0.0
        %2503 = vmatprep.subr.mxu0 0.0
        %2504 = vmatpush1.msra.mxu0 0.0
        %2505 = vmatprep.subr.mxu0 0.0
        %2506 = vmatpush1.msra.mxu0 0.0
        %2507 = vmatprep.subr.mxu0 0.0
        %2508 = vmatpush1.msra.mxu0 0.0
        %2509 = vmatprep.subr.mxu0 0.0
        %2510 = vmatpush1.msra.mxu0 0.0
        %2511 = vmatprep.subr.mxu0 0.0
        %2512 = vmatpush1.msra.mxu0 0.0
        %2513 = vmatprep.subr.mxu0 0.0
        %2514 = vmatpush1.msra.mxu0 0.0
        %2515 = vmatprep.subr.mxu0 0.0
        %2516 = vmatpush1.msra.mxu0 0.0
        %2517 = vmatprep.subr.mxu0 0.0
        %2518 = vmatpush1.msra.mxu0 0.0
        %2519 = vmatprep.subr.mxu0 0.0
        %2520 = vmatpush1.msra.mxu0 0.0
        %2521 = vmatprep.subr.mxu0 0.0
        %2522 = vmatpush1.msra.mxu0 0.0
        %2523 = vmatprep.subr.mxu0 0.0
        %2524 = vmatpush1.msra.mxu0 0.0
        %2525 = vmatprep.subr.mxu0 0.0
        %2526 = vmatpush1.msra.mxu0 0.0
        %2527 = vmatprep.subr.mxu0 0.0
        %2528 = vmatpush1.msra.mxu0 0.0
        %2529 = vmatprep.subr.mxu0 0.0
        %2530 = vmatpush1.msra.mxu0 0.0
        %2531 = vmatprep.subr.mxu0 0.0
        %2532 = vmatpush1.msra.mxu0 0.0
        %2533 = vmatprep.subr.mxu0 0.0
        %2534 = vmatpush1.msra.mxu0 0.0
        %2535 = vmatprep.subr.mxu0 0.0
        %2536 = vmatpush1.msra.mxu0 0.0
        %2537 = vmatprep.subr.mxu0 0.0
        %2538 = vmatpush1.msra.mxu0 0.0
        %2539 = vmatprep.subr.mxu0 0.0
        %2540 = vmatpush1.msra.mxu0 0.0
        %2541 = vmatprep.subr.mxu0 0.0
        %2542 = vmatpush1.msra.mxu0 0.0
        %2543 = vmatprep.subr.mxu0 0.0
        %2544 = vmatpush1.msra.mxu0 0.0
        %2545 = vmatprep.subr.mxu0 0.0
        %2546 = vmatpush1.msra.mxu0 0.0
        %2547 = vmatprep.subr.mxu0 0.0
        %2548 = vmatpush1.msra.mxu0 0.0
        %2549 = vmatprep.mubr.f32.mxu0 0.0
        %v2550 = vand.u32 %v2069, 4294901760
        %2551 = vmatmul.mubr.f32.gmra.mrb[0].mxu0 %v2550
        %v2552 = vpop.f32.mrb[0].mxu0
        %v2553 = vadd.f32 %v2478, %v2552
        %v2554 = vpop.f32.mrb[0].mxu0
        %2555 = vdwg.mxu0
        %v2556 = vadd.f32 %v2066, %v2553
        %v2557 = vxor.u32 %v2556, 2147483648
        %v2558 = vmul.f32 %v2557, 1.442695
        %v2559 = vpow.pop %v2558
        %v2560 = vadd.f32 %v2559, 1.0
        %v2561 = vrcp.pop %v2560
        %v2562 = vmul.f32 1.0, %v2561
        %v2563 = vtanh.pop %v2556
        %2565 = vrot.lane.b32.xlu0 %v2065, 32
        %v2566 = vpop.permute.xlu0 %2565
        %v2568 = vmul.f32 %v2562, %v2566
        %2570 = vrot.lane.b32.xlu0 %v2563, 64
        %v2571 = vpop.permute.xlu0 %2570
        %v2573 = vmul.f32 %v2562, %v2571
        %2575 = vrot.lane.b32.xlu0 %v2573, 32
        %v2576 = vpop.permute.xlu0 %2575
        %v2578 = vadd.f32 %v2568, %v2576
        %v2579 = vtanh.pop %v2578
        %2581 = vrot.lane.b32.xlu0 %v2579, 64
        %v2582 = vpop.permute.xlu0 %2581
        %v2584 = vmul.f32 %v2562, %v2582
        %2586 = vrot.lane.b32.xlu0 %v2584, 32
        %v2587 = vpop.permute.xlu0 %2586
        %2589 = vst.msk [vmem:[#allocation2] sm:$0xff] %vm2067, %v2587
        %s2590 = scalar_lea.vmem [#allocation3], 8
        %v2591 = vld [vmem:[%s2590] sm:$0xff]
        %v2592 = vsel %vm2067, %v2587, 0
        %2594 = vmatprep.subr.mxu0 0.0
        %v2595 = vand.u32 %v2060, 4294901760
        %2596 = vmatpush1.msra.mxu0 %v2595
        %2597 = vmatprep.subr.mxu0 0.0
        %v2598 = vand.u32 %v2061, 4294901760
        %2599 = vmatpush1.msra.mxu0 %v2598
        %2600 = vmatprep.subr.mxu0 0.0
        %v2601 = vand.u32 %v2062, 4294901760
        %2602 = vmatpush1.msra.mxu0 %v2601
        %2603 = vmatprep.subr.mxu0 0.0
        %v2604 = vand.u32 %v2063, 4294901760
        %2605 = vmatpush1.msra.mxu0 %v2604
        %2606 = vmatprep.subr.mxu0 0.0
        %2607 = vmatpush1.msra.mxu0 0.0
        %2608 = vmatprep.subr.mxu0 0.0
        %2609 = vmatpush1.msra.mxu0 0.0
        %2610 = vmatprep.subr.mxu0 0.0
        %2611 = vmatpush1.msra.mxu0 0.0
        %2612 = vmatprep.subr.mxu0 0.0
        %2613 = vmatpush1.msra.mxu0 0.0
        %2614 = vmatprep.subr.mxu0 0.0
        %2615 = vmatpush1.msra.mxu0 0.0
        %2616 = vmatprep.subr.mxu0 0.0
        %2617 = vmatpush1.msra.mxu0 0.0
        %2618 = vmatprep.subr.mxu0 0.0
        %2619 = vmatpush1.msra.mxu0 0.0
        %2620 = vmatprep.subr.mxu0 0.0
        %2621 = vmatpush1.msra.mxu0 0.0
        %2622 = vmatprep.subr.mxu0 0.0
        %2623 = vmatpush1.msra.mxu0 0.0
        %2624 = vmatprep.subr.mxu0 0.0
        %2625 = vmatpush1.msra.mxu0 0.0
        %2626 = vmatprep.subr.mxu0 0.0
        %2627 = vmatpush1.msra.mxu0 0.0
        %2628 = vmatprep.subr.mxu0 0.0
        %2629 = vmatpush1.msra.mxu0 0.0
        %2630 = vmatprep.subr.mxu0 0.0
        %2631 = vmatpush1.msra.mxu0 0.0
        %2632 = vmatprep.subr.mxu0 0.0
        %2633 = vmatpush1.msra.mxu0 0.0
        %2634 = vmatprep.subr.mxu0 0.0
        %2635 = vmatpush1.msra.mxu0 0.0
        %2636 = vmatprep.subr.mxu0 0.0
        %2637 = vmatpush1.msra.mxu0 0.0
        %2638 = vmatprep.subr.mxu0 0.0
        %2639 = vmatpush1.msra.mxu0 0.0
        %2640 = vmatprep.subr.mxu0 0.0
        %2641 = vmatpush1.msra.mxu0 0.0
        %2642 = vmatprep.subr.mxu0 0.0
        %2643 = vmatpush1.msra.mxu0 0.0
        %2644 = vmatprep.subr.mxu0 0.0
        %2645 = vmatpush1.msra.mxu0 0.0
        %2646 = vmatprep.subr.mxu0 0.0
        %2647 = vmatpush1.msra.mxu0 0.0
        %2648 = vmatprep.subr.mxu0 0.0
        %2649 = vmatpush1.msra.mxu0 0.0
        %2650 = vmatprep.subr.mxu0 0.0
        %2651 = vmatpush1.msra.mxu0 0.0
        %2652 = vmatprep.subr.mxu0 0.0
        %2653 = vmatpush1.msra.mxu0 0.0
        %2654 = vmatprep.subr.mxu0 0.0
        %2655 = vmatpush1.msra.mxu0 0.0
        %2656 = vmatprep.subr.mxu0 0.0
        %2657 = vmatpush1.msra.mxu0 0.0
        %2658 = vmatprep.subr.mxu0 0.0
        %2659 = vmatpush1.msra.mxu0 0.0
        %2660 = vmatprep.subr.mxu0 0.0
        %2661 = vmatpush1.msra.mxu0 0.0
        %2662 = vmatprep.mubr.f32.mxu0 0.0
        %v2663 = vand.u32 %v2592, 4294901760
        %v2664 = vsub.f32 %v2592, %v2663
        %v2665 = vand.u32 %v2664, 4294901760
        %v2666 = vsub.f32 %v2664, %v2665
        %v2667 = vand.u32 %v2666, 4294901760
        %2668 = vmatmul.mubr.f32.gmra.mrb[0].mxu0 %v2667
        %v2669 = vpop.f32.mrb[0].mxu0
        %v2670 = vadd.f32 0.0, %v2669
        %v2671 = vpop.f32.mrb[0].mxu0
        %2672 = vdwg.mxu0
        %2673 = vmatprep.subr.mxu0 0.0
        %v2674 = vand.u32 %v2060, 4294901760
        %v2675 = vsub.f32 %v2060, %v2674
        %v2676 = vand.u32 %v2675, 4294901760
        %v2677 = vsub.f32 %v2675, %v2676
        %v2678 = vand.u32 %v2677, 4294901760
        %2679 = vmatpush1.msra.mxu0 %v2678
        %2680 = vmatprep.subr.mxu0 0.0
        %v2681 = vand.u32 %v2061, 4294901760
        %v2682 = vsub.f32 %v2061, %v2681
        %v2683 = vand.u32 %v2682, 4294901760
        %v2684 = vsub.f32 %v2682, %v2683
        %v2685 = vand.u32 %v2684, 4294901760
        %2686 = vmatpush1.msra.mxu0 %v2685
        %2687 = vmatprep.subr.mxu0 0.0
        %v2688 = vand.u32 %v2062, 4294901760
        %v2689 = vsub.f32 %v2062, %v2688
        %v2690 = vand.u32 %v2689, 4294901760
        %v2691 = vsub.f32 %v2689, %v2690
        %v2692 = vand.u32 %v2691, 4294901760
        %2693 = vmatpush1.msra.mxu0 %v2692
        %2694 = vmatprep.subr.mxu0 0.0
        %v2695 = vand.u32 %v2063, 4294901760
        %v2696 = vsub.f32 %v2063, %v2695
        %v2697 = vand.u32 %v2696, 4294901760
        %v2698 = vsub.f32 %v2696, %v2697
        %v2699 = vand.u32 %v2698, 4294901760
        %2700 = vmatpush1.msra.mxu0 %v2699
        %2701 = vmatprep.subr.mxu0 0.0
        %2702 = vmatpush1.msra.mxu0 0.0
        %2703 = vmatprep.subr.mxu0 0.0
        %2704 = vmatpush1.msra.mxu0 0.0
        %2705 = vmatprep.subr.mxu0 0.0
        %2706 = vmatpush1.msra.mxu0 0.0
        %2707 = vmatprep.subr.mxu0 0.0
        %2708 = vmatpush1.msra.mxu0 0.0
        %2709 = vmatprep.subr.mxu0 0.0
        %2710 = vmatpush1.msra.mxu0 0.0
        %2711 = vmatprep.subr.mxu0 0.0
        %2712 = vmatpush1.msra.mxu0 0.0
        %2713 = vmatprep.subr.mxu0 0.0
        %2714 = vmatpush1.msra.mxu0 0.0
        %2715 = vmatprep.subr.mxu0 0.0
        %2716 = vmatpush1.msra.mxu0 0.0
        %2717 = vmatprep.subr.mxu0 0.0
        %2718 = vmatpush1.msra.mxu0 0.0
        %2719 = vmatprep.subr.mxu0 0.0
        %2720 = vmatpush1.msra.mxu0 0.0
        %2721 = vmatprep.subr.mxu0 0.0
        %2722 = vmatpush1.msra.mxu0 0.0
        %2723 = vmatprep.subr.mxu0 0.0
        %2724 = vmatpush1.msra.mxu0 0.0
        %2725 = vmatprep.subr.mxu0 0.0
        %2726 = vmatpush1.msra.mxu0 0.0
        %2727 = vmatprep.subr.mxu0 0.0
        %2728 = vmatpush1.msra.mxu0 0.0
        %2729 = vmatprep.subr.mxu0 0.0
        %2730 = vmatpush1.msra.mxu0 0.0
        %2731 = vmatprep.subr.mxu0 0.0
        %2732 = vmatpush1.msra.mxu0 0.0
        %2733 = vmatprep.subr.mxu0 0.0
        %2734 = vmatpush1.msra.mxu0 0.0
        %2735 = vmatprep.subr.mxu0 0.0
        %2736 = vmatpush1.msra.mxu0 0.0
        %2737 = vmatprep.subr.mxu0 0.0
        %2738 = vmatpush1.msra.mxu0 0.0
        %2739 = vmatprep.subr.mxu0 0.0
        %2740 = vmatpush1.msra.mxu0 0.0
        %2741 = vmatprep.subr.mxu0 0.0
        %2742 = vmatpush1.msra.mxu0 0.0
        %2743 = vmatprep.subr.mxu0 0.0
        %2744 = vmatpush1.msra.mxu0 0.0
        %2745 = vmatprep.subr.mxu0 0.0
        %2746 = vmatpush1.msra.mxu0 0.0
        %2747 = vmatprep.subr.mxu0 0.0
        %2748 = vmatpush1.msra.mxu0 0.0
        %2749 = vmatprep.subr.mxu0 0.0
        %2750 = vmatpush1.msra.mxu0 0.0
        %2751 = vmatprep.subr.mxu0 0.0
        %2752 = vmatpush1.msra.mxu0 0.0
        %2753 = vmatprep.subr.mxu0 0.0
        %2754 = vmatpush1.msra.mxu0 0.0
        %2755 = vmatprep.subr.mxu0 0.0
        %2756 = vmatpush1.msra.mxu0 0.0
        %2757 = vmatprep.mubr.f32.mxu0 0.0
        %v2758 = vand.u32 %v2592, 4294901760
        %2759 = vmatmul.mubr.f32.gmra.mrb[0].mxu0 %v2758
        %v2760 = vpop.f32.mrb[0].mxu0
        %v2761 = vadd.f32 %v2670, %v2760
        %v2762 = vpop.f32.mrb[0].mxu0
        %2763 = vdwg.mxu0
        %2764 = vmatprep.subr.mxu0 0.0
        %v2765 = vand.u32 %v2060, 4294901760
        %v2766 = vsub.f32 %v2060, %v2765
        %2767 = vmatpush1.msra.mxu0 %v2766
        %2768 = vmatprep.subr.mxu0 0.0
        %v2769 = vand.u32 %v2061, 4294901760
        %v2770 = vsub.f32 %v2061, %v2769
        %2771 = vmatpush1.msra.mxu0 %v2770
        %2772 = vmatprep.subr.mxu0 0.0
        %v2773 = vand.u32 %v2062, 4294901760
        %v2774 = vsub.f32 %v2062, %v2773
        %2775 = vmatpush1.msra.mxu0 %v2774
        %2776 = vmatprep.subr.mxu0 0.0
        %v2777 = vand.u32 %v2063, 4294901760
        %v2778 = vsub.f32 %v2063, %v2777
        %2779 = vmatpush1.msra.mxu0 %v2778
        %2780 = vmatprep.subr.mxu0 0.0
        %2781 = vmatpush1.msra.mxu0 0.0
        %2782 = vmatprep.subr.mxu0 0.0
        %2783 = vmatpush1.msra.mxu0 0.0
        %2784 = vmatprep.subr.mxu0 0.0
        %2785 = vmatpush1.msra.mxu0 0.0
        %2786 = vmatprep.subr.mxu0 0.0
        %2787 = vmatpush1.msra.mxu0 0.0
        %2788 = vmatprep.subr.mxu0 0.0
        %2789 = vmatpush1.msra.mxu0 0.0
        %2790 = vmatprep.subr.mxu0 0.0
        %2791 = vmatpush1.msra.mxu0 0.0
        %2792 = vmatprep.subr.mxu0 0.0
        %2793 = vmatpush1.msra.mxu0 0.0
        %2794 = vmatprep.subr.mxu0 0.0
        %2795 = vmatpush1.msra.mxu0 0.0
        %2796 = vmatprep.subr.mxu0 0.0
        %2797 = vmatpush1.msra.mxu0 0.0
        %2798 = vmatprep.subr.mxu0 0.0
        %2799 = vmatpush1.msra.mxu0 0.0
        %2800 = vmatprep.subr.mxu0 0.0
        %2801 = vmatpush1.msra.mxu0 0.0
        %2802 = vmatprep.subr.mxu0 0.0
        %2803 = vmatpush1.msra.mxu0 0.0
        %2804 = vmatprep.subr.mxu0 0.0
        %2805 = vmatpush1.msra.mxu0 0.0
        %2806 = vmatprep.subr.mxu0 0.0
        %2807 = vmatpush1.msra.mxu0 0.0
        %2808 = vmatprep.subr.mxu0 0.0
        %2809 = vmatpush1.msra.mxu0 0.0
        %2810 = vmatprep.subr.mxu0 0.0
        %2811 = vmatpush1.msra.mxu0 0.0
        %2812 = vmatprep.subr.mxu0 0.0
        %2813 = vmatpush1.msra.mxu0 0.0
        %2814 = vmatprep.subr.mxu0 0.0
        %2815 = vmatpush1.msra.mxu0 0.0
        %2816 = vmatprep.subr.mxu0 0.0
        %2817 = vmatpush1.msra.mxu0 0.0
        %2818 = vmatprep.subr.mxu0 0.0
        %2819 = vmatpush1.msra.mxu0 0.0
        %2820 = vmatprep.subr.mxu0 0.0
        %2821 = vmatpush1.msra.mxu0 0.0
        %2822 = vmatprep.subr.mxu0 0.0
        %2823 = vmatpush1.msra.mxu0 0.0
        %2824 = vmatprep.subr.mxu0 0.0
        %2825 = vmatpush1.msra.mxu0 0.0
        %2826 = vmatprep.subr.mxu0 0.0
        %2827 = vmatpush1.msra.mxu0 0.0
        %2828 = vmatprep.subr.mxu0 0.0
        %2829 = vmatpush1.msra.mxu0 0.0
        %2830 = vmatprep.subr.mxu0 0.0
        %2831 = vmatpush1.msra.mxu0 0.0
        %2832 = vmatprep.subr.mxu0 0.0
        %2833 = vmatpush1.msra.mxu0 0.0
        %2834 = vmatprep.subr.mxu0 0.0
        %2835 = vmatpush1.msra.mxu0 0.0
        %2836 = vmatprep.mubr.f32.mxu0 0.0
        %v2837 = vand.u32 %v2592, 4294901760
        %v2838 = vsub.f32 %v2592, %v2837
        %2839 = vmatmul.mubr.f32.gmra.mrb[0].mxu0 %v2838
        %v2840 = vpop.f32.mrb[0].mxu0
        %v2841 = vadd.f32 %v2761, %v2840
        %v2842 = vpop.f32.mrb[0].mxu0
        %2843 = vdwg.mxu0
        %2844 = vmatprep.subr.mxu0 0.0
        %v2845 = vand.u32 %v2060, 4294901760
        %2846 = vmatpush1.msra.mxu0 %v2845
        %2847 = vmatprep.subr.mxu0 0.0
        %v2848 = vand.u32 %v2061, 4294901760
        %2849 = vmatpush1.msra.mxu0 %v2848
        %2850 = vmatprep.subr.mxu0 0.0
        %v2851 = vand.u32 %v2062, 4294901760
        %2852 = vmatpush1.msra.mxu0 %v2851
        %2853 = vmatprep.subr.mxu0 0.0
        %v2854 = vand.u32 %v2063, 4294901760
        %2855 = vmatpush1.msra.mxu0 %v2854
        %2856 = vmatprep.subr.mxu0 0.0
        %2857 = vmatpush1.msra.mxu0 0.0
        %2858 = vmatprep.subr.mxu0 0.0
        %2859 = vmatpush1.msra.mxu0 0.0
        %2860 = vmatprep.subr.mxu0 0.0
        %2861 = vmatpush1.msra.mxu0 0.0
        %2862 = vmatprep.subr.mxu0 0.0
        %2863 = vmatpush1.msra.mxu0 0.0
        %2864 = vmatprep.subr.mxu0 0.0
        %2865 = vmatpush1.msra.mxu0 0.0
        %2866 = vmatprep.subr.mxu0 0.0
        %2867 = vmatpush1.msra.mxu0 0.0
        %2868 = vmatprep.subr.mxu0 0.0
        %2869 = vmatpush1.msra.mxu0 0.0
        %2870 = vmatprep.subr.mxu0 0.0
        %2871 = vmatpush1.msra.mxu0 0.0
        %2872 = vmatprep.subr.mxu0 0.0
        %2873 = vmatpush1.msra.mxu0 0.0
        %2874 = vmatprep.subr.mxu0 0.0
        %2875 = vmatpush1.msra.mxu0 0.0
        %2876 = vmatprep.subr.mxu0 0.0
        %2877 = vmatpush1.msra.mxu0 0.0
        %2878 = vmatprep.subr.mxu0 0.0
        %2879 = vmatpush1.msra.mxu0 0.0
        %2880 = vmatprep.subr.mxu0 0.0
        %2881 = vmatpush1.msra.mxu0 0.0
        %2882 = vmatprep.subr.mxu0 0.0
        %2883 = vmatpush1.msra.mxu0 0.0
        %2884 = vmatprep.subr.mxu0 0.0
        %2885 = vmatpush1.msra.mxu0 0.0
        %2886 = vmatprep.subr.mxu0 0.0
        %2887 = vmatpush1.msra.mxu0 0.0
        %2888 = vmatprep.subr.mxu0 0.0
        %2889 = vmatpush1.msra.mxu0 0.0
        %2890 = vmatprep.subr.mxu0 0.0
        %2891 = vmatpush1.msra.mxu0 0.0
        %2892 = vmatprep.subr.mxu0 0.0
        %2893 = vmatpush1.msra.mxu0 0.0
        %2894 = vmatprep.subr.mxu0 0.0
        %2895 = vmatpush1.msra.mxu0 0.0
        %2896 = vmatprep.subr.mxu0 0.0
        %2897 = vmatpush1.msra.mxu0 0.0
        %2898 = vmatprep.subr.mxu0 0.0
        %2899 = vmatpush1.msra.mxu0 0.0
        %2900 = vmatprep.subr.mxu0 0.0
        %2901 = vmatpush1.msra.mxu0 0.0
        %2902 = vmatprep.subr.mxu0 0.0
        %2903 = vmatpush1.msra.mxu0 0.0
        %2904 = vmatprep.subr.mxu0 0.0
        %2905 = vmatpush1.msra.mxu0 0.0
        %2906 = vmatprep.subr.mxu0 0.0
        %2907 = vmatpush1.msra.mxu0 0.0
        %2908 = vmatprep.subr.mxu0 0.0
        %2909 = vmatpush1.msra.mxu0 0.0
        %2910 = vmatprep.subr.mxu0 0.0
        %2911 = vmatpush1.msra.mxu0 0.0
        %2912 = vmatprep.mubr.f32.mxu0 0.0
        %v2913 = vand.u32 %v2592, 4294901760
        %v2914 = vsub.f32 %v2592, %v2913
        %v2915 = vand.u32 %v2914, 4294901760
        %2916 = vmatmul.mubr.f32.gmra.mrb[0].mxu0 %v2915
        %v2917 = vpop.f32.mrb[0].mxu0
        %v2918 = vadd.f32 %v2841, %v2917
        %v2919 = vpop.f32.mrb[0].mxu0
        %2920 = vdwg.mxu0
        %2921 = vmatprep.subr.mxu0 0.0
        %v2922 = vand.u32 %v2060, 4294901760
        %v2923 = vsub.f32 %v2060, %v2922
        %v2924 = vand.u32 %v2923, 4294901760
        %2925 = vmatpush1.msra.mxu0 %v2924
        %2926 = vmatprep.subr.mxu0 0.0
        %v2927 = vand.u32 %v2061, 4294901760
        %v2928 = vsub.f32 %v2061, %v2927
        %v2929 = vand.u32 %v2928, 4294901760
        %2930 = vmatpush1.msra.mxu0 %v2929
        %2931 = vmatprep.subr.mxu0 0.0
        %v2932 = vand.u32 %v2062, 4294901760
        %v2933 = vsub.f32 %v2062, %v2932
        %v2934 = vand.u32 %v2933, 4294901760
        %2935 = vmatpush1.msra.mxu0 %v2934
        %2936 = vmatprep.subr.mxu0 0.0
        %v2937 = vand.u32 %v2063, 4294901760
        %v2938 = vsub.f32 %v2063, %v2937
        %v2939 = vand.u32 %v2938, 4294901760
        %2940 = vmatpush1.msra.mxu0 %v2939
        %2941 = vmatprep.subr.mxu0 0.0
        %2942 = vmatpush1.msra.mxu0 0.0
        %2943 = vmatprep.subr.mxu0 0.0
        %2944 = vmatpush1.msra.mxu0 0.0
        %2945 = vmatprep.subr.mxu0 0.0
        %2946 = vmatpush1.msra.mxu0 0.0
        %2947 = vmatprep.subr.mxu0 0.0
        %2948 = vmatpush1.msra.mxu0 0.0
        %2949 = vmatprep.subr.mxu0 0.0
        %2950 = vmatpush1.msra.mxu0 0.0
        %2951 = vmatprep.subr.mxu0 0.0
        %2952 = vmatpush1.msra.mxu0 0.0
        %2953 = vmatprep.subr.mxu0 0.0
        %2954 = vmatpush1.msra.mxu0 0.0
        %2955 = vmatprep.subr.mxu0 0.0
        %2956 = vmatpush1.msra.mxu0 0.0
        %2957 = vmatprep.subr.mxu0 0.0
        %2958 = vmatpush1.msra.mxu0 0.0
        %2959 = vmatprep.subr.mxu0 0.0
        %2960 = vmatpush1.msra.mxu0 0.0
        %2961 = vmatprep.subr.mxu0 0.0
        %2962 = vmatpush1.msra.mxu0 0.0
        %2963 = vmatprep.subr.mxu0 0.0
        %2964 = vmatpush1.msra.mxu0 0.0
        %2965 = vmatprep.subr.mxu0 0.0
        %2966 = vmatpush1.msra.mxu0 0.0
        %2967 = vmatprep.subr.mxu0 0.0
        %2968 = vmatpush1.msra.mxu0 0.0
        %2969 = vmatprep.subr.mxu0 0.0
        %2970 = vmatpush1.msra.mxu0 0.0
        %2971 = vmatprep.subr.mxu0 0.0
        %2972 = vmatpush1.msra.mxu0 0.0
        %2973 = vmatprep.subr.mxu0 0.0
        %2974 = vmatpush1.msra.mxu0 0.0
        %2975 = vmatprep.subr.mxu0 0.0
        %2976 = vmatpush1.msra.mxu0 0.0
        %2977 = vmatprep.subr.mxu0 0.0
        %2978 = vmatpush1.msra.mxu0 0.0
        %2979 = vmatprep.subr.mxu0 0.0
        %2980 = vmatpush1.msra.mxu0 0.0
        %2981 = vmatprep.subr.mxu0 0.0
        %2982 = vmatpush1.msra.mxu0 0.0
        %2983 = vmatprep.subr.mxu0 0.0
        %2984 = vmatpush1.msra.mxu0 0.0
        %2985 = vmatprep.subr.mxu0 0.0
        %2986 = vmatpush1.msra.mxu0 0.0
        %2987 = vmatprep.subr.mxu0 0.0
        %2988 = vmatpush1.msra.mxu0 0.0
        %2989 = vmatprep.subr.mxu0 0.0
        %2990 = vmatpush1.msra.mxu0 0.0
        %2991 = vmatprep.subr.mxu0 0.0
        %2992 = vmatpush1.msra.mxu0 0.0
        %2993 = vmatprep.subr.mxu0 0.0
        %2994 = vmatpush1.msra.mxu0 0.0
        %2995 = vmatprep.subr.mxu0 0.0
        %2996 = vmatpush1.msra.mxu0 0.0
        %2997 = vmatprep.mubr.f32.mxu0 0.0
        %v2998 = vand.u32 %v2592, 4294901760
        %2999 = vmatmul.mubr.f32.gmra.mrb[0].mxu0 %v2998
        %v3000 = vpop.f32.mrb[0].mxu0
        %v3001 = vadd.f32 %v2918, %v3000
        %v3002 = vpop.f32.mrb[0].mxu0
        %3003 = vdwg.mxu0
        %3004 = vmatprep.subr.mxu0 0.0
        %v3005 = vand.u32 %v2060, 4294901760
        %3006 = vmatpush1.msra.mxu0 %v3005
        %3007 = vmatprep.subr.mxu0 0.0
        %v3008 = vand.u32 %v2061, 4294901760
        %3009 = vmatpush1.msra.mxu0 %v3008
        %3010 = vmatprep.subr.mxu0 0.0
        %v3011 = vand.u32 %v2062, 4294901760
        %3012 = vmatpush1.msra.mxu0 %v3011
        %3013 = vmatprep.subr.mxu0 0.0
        %v3014 = vand.u32 %v2063, 4294901760
        %3015 = vmatpush1.msra.mxu0 %v3014
        %3016 = vmatprep.subr.mxu0 0.0
        %3017 = vmatpush1.msra.mxu0 0.0
        %3018 = vmatprep.subr.mxu0 0.0
        %3019 = vmatpush1.msra.mxu0 0.0
        %3020 = vmatprep.subr.mxu0 0.0
        %3021 = vmatpush1.msra.mxu0 0.0
        %3022 = vmatprep.subr.mxu0 0.0
        %3023 = vmatpush1.msra.mxu0 0.0
        %3024 = vmatprep.subr.mxu0 0.0
        %3025 = vmatpush1.msra.mxu0 0.0
        %3026 = vmatprep.subr.mxu0 0.0
        %3027 = vmatpush1.msra.mxu0 0.0
        %3028 = vmatprep.subr.mxu0 0.0
        %3029 = vmatpush1.msra.mxu0 0.0
        %3030 = vmatprep.subr.mxu0 0.0
        %3031 = vmatpush1.msra.mxu0 0.0
        %3032 = vmatprep.subr.mxu0 0.0
        %3033 = vmatpush1.msra.mxu0 0.0
        %3034 = vmatprep.subr.mxu0 0.0
        %3035 = vmatpush1.msra.mxu0 0.0
        %3036 = vmatprep.subr.mxu0 0.0
        %3037 = vmatpush1.msra.mxu0 0.0
        %3038 = vmatprep.subr.mxu0 0.0
        %3039 = vmatpush1.msra.mxu0 0.0
        %3040 = vmatprep.subr.mxu0 0.0
        %3041 = vmatpush1.msra.mxu0 0.0
        %3042 = vmatprep.subr.mxu0 0.0
        %3043 = vmatpush1.msra.mxu0 0.0
        %3044 = vmatprep.subr.mxu0 0.0
        %3045 = vmatpush1.msra.mxu0 0.0
        %3046 = vmatprep.subr.mxu0 0.0
        %3047 = vmatpush1.msra.mxu0 0.0
        %3048 = vmatprep.subr.mxu0 0.0
        %3049 = vmatpush1.msra.mxu0 0.0
        %3050 = vmatprep.subr.mxu0 0.0
        %3051 = vmatpush1.msra.mxu0 0.0
        %3052 = vmatprep.subr.mxu0 0.0
        %3053 = vmatpush1.msra.mxu0 0.0
        %3054 = vmatprep.subr.mxu0 0.0
        %3055 = vmatpush1.msra.mxu0 0.0
        %3056 = vmatprep.subr.mxu0 0.0
        %3057 = vmatpush1.msra.mxu0 0.0
        %3058 = vmatprep.subr.mxu0 0.0
        %3059 = vmatpush1.msra.mxu0 0.0
        %3060 = vmatprep.subr.mxu0 0.0
        %3061 = vmatpush1.msra.mxu0 0.0
        %3062 = vmatprep.subr.mxu0 0.0
        %3063 = vmatpush1.msra.mxu0 0.0
        %3064 = vmatprep.subr.mxu0 0.0
        %3065 = vmatpush1.msra.mxu0 0.0
        %3066 = vmatprep.subr.mxu0 0.0
        %3067 = vmatpush1.msra.mxu0 0.0
        %3068 = vmatprep.subr.mxu0 0.0
        %3069 = vmatpush1.msra.mxu0 0.0
        %3070 = vmatprep.subr.mxu0 0.0
        %3071 = vmatpush1.msra.mxu0 0.0
        %3072 = vmatprep.mubr.f32.mxu0 0.0
        %v3073 = vand.u32 %v2592, 4294901760
        %3074 = vmatmul.mubr.f32.gmra.mrb[0].mxu0 %v3073
        %v3075 = vpop.f32.mrb[0].mxu0
        %v3076 = vadd.f32 %v3001, %v3075
        %v3077 = vpop.f32.mrb[0].mxu0
        %3078 = vdwg.mxu0
        %v3079 = vadd.f32 %v2591, %v3076
        %v3080 = vxor.u32 %v3079, 2147483648
        %v3081 = vmul.f32 %v3080, 1.442695
        %v3082 = vpow.pop %v3081
        %v3083 = vadd.f32 %v3082, 1.0
        %v3084 = vrcp.pop %v3083
        %v3085 = vmul.f32 1.0, %v3084
        %v3086 = vtanh.pop %v3079
        %v3087 = vmul.f32 %v3085, %v2578
        %3089 = vrot.lane.b32.xlu0 %v3086, 64
        %v3090 = vpop.permute.xlu0 %3089
        %v3092 = vmul.f32 %v3085, %v3090
        %3094 = vrot.lane.b32.xlu0 %v3092, 32
        %v3095 = vpop.permute.xlu0 %3094
        %v3097 = vadd.f32 %v3087, %v3095
        %v3098 = vtanh.pop %v3097
        %3100 = vrot.lane.b32.xlu0 %v3098, 64
        %v3101 = vpop.permute.xlu0 %3100
        %v3103 = vmul.f32 %v3085, %v3101
        %3105 = vrot.lane.b32.xlu0 %v3103, 32
        %v3106 = vpop.permute.xlu0 %3105
        %s3108 = scalar_lea.vmem [#allocation2], 8
        %3109 = vst.msk [vmem:[%s3108] sm:$0xff] %vm2067, %v3106
        %s3110 = scalar_lea.vmem [#allocation3], 16
        %v3111 = vld [vmem:[%s3110] sm:$0xff]
        %v3112 = vsel %vm2067, %v3106, 0
        %3114 = vmatprep.subr.mxu0 0.0
        %v3115 = vand.u32 %v2060, 4294901760
        %3116 = vmatpush1.msra.mxu0 %v3115
        %3117 = vmatprep.subr.mxu0 0.0
        %v3118 = vand.u32 %v2061, 4294901760
        %3119 = vmatpush1.msra.mxu0 %v3118
        %3120 = vmatprep.subr.mxu0 0.0
        %v3121 = vand.u32 %v2062, 4294901760
        %3122 = vmatpush1.msra.mxu0 %v3121
        %3123 = vmatprep.subr.mxu0 0.0
        %v3124 = vand.u32 %v2063, 4294901760
        %3125 = vmatpush1.msra.mxu0 %v3124
        %3126 = vmatprep.subr.mxu0 0.0
        %3127 = vmatpush1.msra.mxu0 0.0
        %3128 = vmatprep.subr.mxu0 0.0
        %3129 = vmatpush1.msra.mxu0 0.0
        %3130 = vmatprep.subr.mxu0 0.0
        %3131 = vmatpush1.msra.mxu0 0.0
        %3132 = vmatprep.subr.mxu0 0.0
        %3133 = vmatpush1.msra.mxu0 0.0
        %3134 = vmatprep.subr.mxu0 0.0
        %3135 = vmatpush1.msra.mxu0 0.0
        %3136 = vmatprep.subr.mxu0 0.0
        %3137 = vmatpush1.msra.mxu0 0.0
        %3138 = vmatprep.subr.mxu0 0.0
        %3139 = vmatpush1.msra.mxu0 0.0
        %3140 = vmatprep.subr.mxu0 0.0
        %3141 = vmatpush1.msra.mxu0 0.0
        %3142 = vmatprep.subr.mxu0 0.0
        %3143 = vmatpush1.msra.mxu0 0.0
        %3144 = vmatprep.subr.mxu0 0.0
        %3145 = vmatpush1.msra.mxu0 0.0
        %3146 = vmatprep.subr.mxu0 0.0
        %3147 = vmatpush1.msra.mxu0 0.0
        %3148 = vmatprep.subr.mxu0 0.0
        %3149 = vmatpush1.msra.mxu0 0.0
        %3150 = vmatprep.subr.mxu0 0.0
        %3151 = vmatpush1.msra.mxu0 0.0
        %3152 = vmatprep.subr.mxu0 0.0
        %3153 = vmatpush1.msra.mxu0 0.0
        %3154 = vmatprep.subr.mxu0 0.0
        %3155 = vmatpush1.msra.mxu0 0.0
        %3156 = vmatprep.subr.mxu0 0.0
        %3157 = vmatpush1.msra.mxu0 0.0
        %3158 = vmatprep.subr.mxu0 0.0
        %3159 = vmatpush1.msra.mxu0 0.0
        %3160 = vmatprep.subr.mxu0 0.0
        %3161 = vmatpush1.msra.mxu0 0.0
        %3162 = vmatprep.subr.mxu0 0.0
        %3163 = vmatpush1.msra.mxu0 0.0
        %3164 = vmatprep.subr.mxu0 0.0
        %3165 = vmatpush1.msra.mxu0 0.0
        %3166 = vmatprep.subr.mxu0 0.0
        %3167 = vmatpush1.msra.mxu0 0.0
        %3168 = vmatprep.subr.mxu0 0.0
        %3169 = vmatpush1.msra.mxu0 0.0
        %3170 = vmatprep.subr.mxu0 0.0
        %3171 = vmatpush1.msra.mxu0 0.0
        %3172 = vmatprep.subr.mxu0 0.0
        %3173 = vmatpush1.msra.mxu0 0.0
        %3174 = vmatprep.subr.mxu0 0.0
        %3175 = vmatpush1.msra.mxu0 0.0
        %3176 = vmatprep.subr.mxu0 0.0
        %3177 = vmatpush1.msra.mxu0 0.0
        %3178 = vmatprep.subr.mxu0 0.0
        %3179 = vmatpush1.msra.mxu0 0.0
        %3180 = vmatprep.subr.mxu0 0.0
        %3181 = vmatpush1.msra.mxu0 0.0
        %3182 = vmatprep.mubr.f32.mxu0 0.0
        %v3183 = vand.u32 %v3112, 4294901760
        %v3184 = vsub.f32 %v3112, %v3183
        %v3185 = vand.u32 %v3184, 4294901760
        %v3186 = vsub.f32 %v3184, %v3185
        %v3187 = vand.u32 %v3186, 4294901760
        %3188 = vmatmul.mubr.f32.gmra.mrb[0].mxu0 %v3187
        %v3189 = vpop.f32.mrb[0].mxu0
        %v3190 = vadd.f32 0.0, %v3189
        %v3191 = vpop.f32.mrb[0].mxu0
        %3192 = vdwg.mxu0
        %3193 = vmatprep.subr.mxu0 0.0
        %v3194 = vand.u32 %v2060, 4294901760
        %v3195 = vsub.f32 %v2060, %v3194
        %v3196 = vand.u32 %v3195, 4294901760
        %v3197 = vsub.f32 %v3195, %v3196
        %v3198 = vand.u32 %v3197, 4294901760
        %3199 = vmatpush1.msra.mxu0 %v3198
        %3200 = vmatprep.subr.mxu0 0.0
        %v3201 = vand.u32 %v2061, 4294901760
        %v3202 = vsub.f32 %v2061, %v3201
        %v3203 = vand.u32 %v3202, 4294901760
        %v3204 = vsub.f32 %v3202, %v3203
        %v3205 = vand.u32 %v3204, 4294901760
        %3206 = vmatpush1.msra.mxu0 %v3205
        %3207 = vmatprep.subr.mxu0 0.0
        %v3208 = vand.u32 %v2062, 4294901760
        %v3209 = vsub.f32 %v2062, %v3208
        %v3210 = vand.u32 %v3209, 4294901760
        %v3211 = vsub.f32 %v3209, %v3210
        %v3212 = vand.u32 %v3211, 4294901760
        %3213 = vmatpush1.msra.mxu0 %v3212
        %3214 = vmatprep.subr.mxu0 0.0
        %v3215 = vand.u32 %v2063, 4294901760
        %v3216 = vsub.f32 %v2063, %v3215
        %v3217 = vand.u32 %v3216, 4294901760
        %v3218 = vsub.f32 %v3216, %v3217
        %v3219 = vand.u32 %v3218, 4294901760
        %3220 = vmatpush1.msra.mxu0 %v3219
        %3221 = vmatprep.subr.mxu0 0.0
        %3222 = vmatpush1.msra.mxu0 0.0
        %3223 = vmatprep.subr.mxu0 0.0
        %3224 = vmatpush1.msra.mxu0 0.0
        %3225 = vmatprep.subr.mxu0 0.0
        %3226 = vmatpush1.msra.mxu0 0.0
        %3227 = vmatprep.subr.mxu0 0.0
        %3228 = vmatpush1.msra.mxu0 0.0
        %3229 = vmatprep.subr.mxu0 0.0
        %3230 = vmatpush1.msra.mxu0 0.0
        %3231 = vmatprep.subr.mxu0 0.0
        %3232 = vmatpush1.msra.mxu0 0.0
        %3233 = vmatprep.subr.mxu0 0.0
        %3234 = vmatpush1.msra.mxu0 0.0
        %3235 = vmatprep.subr.mxu0 0.0
        %3236 = vmatpush1.msra.mxu0 0.0
        %3237 = vmatprep.subr.mxu0 0.0
        %3238 = vmatpush1.msra.mxu0 0.0
        %3239 = vmatprep.subr.mxu0 0.0
        %3240 = vmatpush1.msra.mxu0 0.0
        %3241 = vmatprep.subr.mxu0 0.0
        %3242 = vmatpush1.msra.mxu0 0.0
        %3243 = vmatprep.subr.mxu0 0.0
        %3244 = vmatpush1.msra.mxu0 0.0
        %3245 = vmatprep.subr.mxu0 0.0
        %3246 = vmatpush1.msra.mxu0 0.0
        %3247 = vmatprep.subr.mxu0 0.0
        %3248 = vmatpush1.msra.mxu0 0.0
        %3249 = vmatprep.subr.mxu0 0.0
        %3250 = vmatpush1.msra.mxu0 0.0
        %3251 = vmatprep.subr.mxu0 0.0
        %3252 = vmatpush1.msra.mxu0 0.0
        %3253 = vmatprep.subr.mxu0 0.0
        %3254 = vmatpush1.msra.mxu0 0.0
        %3255 = vmatprep.subr.mxu0 0.0
        %3256 = vmatpush1.msra.mxu0 0.0
        %3257 = vmatprep.subr.mxu0 0.0
        %3258 = vmatpush1.msra.mxu0 0.0
        %3259 = vmatprep.subr.mxu0 0.0
        %3260 = vmatpush1.msra.mxu0 0.0
        %3261 = vmatprep.subr.mxu0 0.0
        %3262 = vmatpush1.msra.mxu0 0.0
        %3263 = vmatprep.subr.mxu0 0.0
        %3264 = vmatpush1.msra.mxu0 0.0
        %3265 = vmatprep.subr.mxu0 0.0
        %3266 = vmatpush1.msra.mxu0 0.0
        %3267 = vmatprep.subr.mxu0 0.0
        %3268 = vmatpush1.msra.mxu0 0.0
        %3269 = vmatprep.subr.mxu0 0.0
        %3270 = vmatpush1.msra.mxu0 0.0
        %3271 = vmatprep.subr.mxu0 0.0
        %3272 = vmatpush1.msra.mxu0 0.0
        %3273 = vmatprep.subr.mxu0 0.0
        %3274 = vmatpush1.msra.mxu0 0.0
        %3275 = vmatprep.subr.mxu0 0.0
        %3276 = vmatpush1.msra.mxu0 0.0
        %3277 = vmatprep.mubr.f32.mxu0 0.0
        %v3278 = vand.u32 %v3112, 4294901760
        %3279 = vmatmul.mubr.f32.gmra.mrb[0].mxu0 %v3278
        %v3280 = vpop.f32.mrb[0].mxu0
        %v3281 = vadd.f32 %v3190, %v3280
        %v3282 = vpop.f32.mrb[0].mxu0
        %3283 = vdwg.mxu0
        %3284 = vmatprep.subr.mxu0 0.0
        %v3285 = vand.u32 %v2060, 4294901760
        %v3286 = vsub.f32 %v2060, %v3285
        %3287 = vmatpush1.msra.mxu0 %v3286
        %3288 = vmatprep.subr.mxu0 0.0
        %v3289 = vand.u32 %v2061, 4294901760
        %v3290 = vsub.f32 %v2061, %v3289
        %3291 = vmatpush1.msra.mxu0 %v3290
        %3292 = vmatprep.subr.mxu0 0.0
        %v3293 = vand.u32 %v2062, 4294901760
        %v3294 = vsub.f32 %v2062, %v3293
        %3295 = vmatpush1.msra.mxu0 %v3294
        %3296 = vmatprep.subr.mxu0 0.0
        %v3297 = vand.u32 %v2063, 4294901760
        %v3298 = vsub.f32 %v2063, %v3297
        %3299 = vmatpush1.msra.mxu0 %v3298
        %3300 = vmatprep.subr.mxu0 0.0
        %3301 = vmatpush1.msra.mxu0 0.0
        %3302 = vmatprep.subr.mxu0 0.0
        %3303 = vmatpush1.msra.mxu0 0.0
        %3304 = vmatprep.subr.mxu0 0.0
        %3305 = vmatpush1.msra.mxu0 0.0
        %3306 = vmatprep.subr.mxu0 0.0
        %3307 = vmatpush1.msra.mxu0 0.0
        %3308 = vmatprep.subr.mxu0 0.0
        %3309 = vmatpush1.msra.mxu0 0.0
        %3310 = vmatprep.subr.mxu0 0.0
        %3311 = vmatpush1.msra.mxu0 0.0
        %3312 = vmatprep.subr.mxu0 0.0
        %3313 = vmatpush1.msra.mxu0 0.0
        %3314 = vmatprep.subr.mxu0 0.0
        %3315 = vmatpush1.msra.mxu0 0.0
        %3316 = vmatprep.subr.mxu0 0.0
        %3317 = vmatpush1.msra.mxu0 0.0
        %3318 = vmatprep.subr.mxu0 0.0
        %3319 = vmatpush1.msra.mxu0 0.0
        %3320 = vmatprep.subr.mxu0 0.0
        %3321 = vmatpush1.msra.mxu0 0.0
        %3322 = vmatprep.subr.mxu0 0.0
        %3323 = vmatpush1.msra.mxu0 0.0
        %3324 = vmatprep.subr.mxu0 0.0
        %3325 = vmatpush1.msra.mxu0 0.0
        %3326 = vmatprep.subr.mxu0 0.0
        %3327 = vmatpush1.msra.mxu0 0.0
        %3328 = vmatprep.subr.mxu0 0.0
        %3329 = vmatpush1.msra.mxu0 0.0
        %3330 = vmatprep.subr.mxu0 0.0
        %3331 = vmatpush1.msra.mxu0 0.0
        %3332 = vmatprep.subr.mxu0 0.0
        %3333 = vmatpush1.msra.mxu0 0.0
        %3334 = vmatprep.subr.mxu0 0.0
        %3335 = vmatpush1.msra.mxu0 0.0
        %3336 = vmatprep.subr.mxu0 0.0
        %3337 = vmatpush1.msra.mxu0 0.0
        %3338 = vmatprep.subr.mxu0 0.0
        %3339 = vmatpush1.msra.mxu0 0.0
        %3340 = vmatprep.subr.mxu0 0.0
        %3341 = vmatpush1.msra.mxu0 0.0
        %3342 = vmatprep.subr.mxu0 0.0
        %3343 = vmatpush1.msra.mxu0 0.0
        %3344 = vmatprep.subr.mxu0 0.0
        %3345 = vmatpush1.msra.mxu0 0.0
        %3346 = vmatprep.subr.mxu0 0.0
        %3347 = vmatpush1.msra.mxu0 0.0
        %3348 = vmatprep.subr.mxu0 0.0
        %3349 = vmatpush1.msra.mxu0 0.0
        %3350 = vmatprep.subr.mxu0 0.0
        %3351 = vmatpush1.msra.mxu0 0.0
        %3352 = vmatprep.subr.mxu0 0.0
        %3353 = vmatpush1.msra.mxu0 0.0
        %3354 = vmatprep.subr.mxu0 0.0
        %3355 = vmatpush1.msra.mxu0 0.0
        %3356 = vmatprep.mubr.f32.mxu0 0.0
        %v3357 = vand.u32 %v3112, 4294901760
        %v3358 = vsub.f32 %v3112, %v3357
        %3359 = vmatmul.mubr.f32.gmra.mrb[0].mxu0 %v3358
        %v3360 = vpop.f32.mrb[0].mxu0
        %v3361 = vadd.f32 %v3281, %v3360
        %v3362 = vpop.f32.mrb[0].mxu0
        %3363 = vdwg.mxu0
        %3364 = vmatprep.subr.mxu0 0.0
        %v3365 = vand.u32 %v2060, 4294901760
        %3366 = vmatpush1.msra.mxu0 %v3365
        %3367 = vmatprep.subr.mxu0 0.0
        %v3368 = vand.u32 %v2061, 4294901760
        %3369 = vmatpush1.msra.mxu0 %v3368
        %3370 = vmatprep.subr.mxu0 0.0
        %v3371 = vand.u32 %v2062, 4294901760
        %3372 = vmatpush1.msra.mxu0 %v3371
        %3373 = vmatprep.subr.mxu0 0.0
        %v3374 = vand.u32 %v2063, 4294901760
        %3375 = vmatpush1.msra.mxu0 %v3374
        %3376 = vmatprep.subr.mxu0 0.0
        %3377 = vmatpush1.msra.mxu0 0.0
        %3378 = vmatprep.subr.mxu0 0.0
        %3379 = vmatpush1.msra.mxu0 0.0
        %3380 = vmatprep.subr.mxu0 0.0
        %3381 = vmatpush1.msra.mxu0 0.0
        %3382 = vmatprep.subr.mxu0 0.0
        %3383 = vmatpush1.msra.mxu0 0.0
        %3384 = vmatprep.subr.mxu0 0.0
        %3385 = vmatpush1.msra.mxu0 0.0
        %3386 = vmatprep.subr.mxu0 0.0
        %3387 = vmatpush1.msra.mxu0 0.0
        %3388 = vmatprep.subr.mxu0 0.0
        %3389 = vmatpush1.msra.mxu0 0.0
        %3390 = vmatprep.subr.mxu0 0.0
        %3391 = vmatpush1.msra.mxu0 0.0
        %3392 = vmatprep.subr.mxu0 0.0
        %3393 = vmatpush1.msra.mxu0 0.0
        %3394 = vmatprep.subr.mxu0 0.0
        %3395 = vmatpush1.msra.mxu0 0.0
        %3396 = vmatprep.subr.mxu0 0.0
        %3397 = vmatpush1.msra.mxu0 0.0
        %3398 = vmatprep.subr.mxu0 0.0
        %3399 = vmatpush1.msra.mxu0 0.0
        %3400 = vmatprep.subr.mxu0 0.0
        %3401 = vmatpush1.msra.mxu0 0.0
        %3402 = vmatprep.subr.mxu0 0.0
        %3403 = vmatpush1.msra.mxu0 0.0
        %3404 = vmatprep.subr.mxu0 0.0
        %3405 = vmatpush1.msra.mxu0 0.0
        %3406 = vmatprep.subr.mxu0 0.0
        %3407 = vmatpush1.msra.mxu0 0.0
        %3408 = vmatprep.subr.mxu0 0.0
        %3409 = vmatpush1.msra.mxu0 0.0
        %3410 = vmatprep.subr.mxu0 0.0
        %3411 = vmatpush1.msra.mxu0 0.0
        %3412 = vmatprep.subr.mxu0 0.0
        %3413 = vmatpush1.msra.mxu0 0.0
        %3414 = vmatprep.subr.mxu0 0.0
        %3415 = vmatpush1.msra.mxu0 0.0
        %3416 = vmatprep.subr.mxu0 0.0
        %3417 = vmatpush1.msra.mxu0 0.0
        %3418 = vmatprep.subr.mxu0 0.0
        %3419 = vmatpush1.msra.mxu0 0.0
        %3420 = vmatprep.subr.mxu0 0.0
        %3421 = vmatpush1.msra.mxu0 0.0
        %3422 = vmatprep.subr.mxu0 0.0
        %3423 = vmatpush1.msra.mxu0 0.0
        %3424 = vmatprep.subr.mxu0 0.0
        %3425 = vmatpush1.msra.mxu0 0.0
        %3426 = vmatprep.subr.mxu0 0.0
        %3427 = vmatpush1.msra.mxu0 0.0
        %3428 = vmatprep.subr.mxu0 0.0
        %3429 = vmatpush1.msra.mxu0 0.0
        %3430 = vmatprep.subr.mxu0 0.0
        %3431 = vmatpush1.msra.mxu0 0.0
        %3432 = vmatprep.mubr.f32.mxu0 0.0
        %v3433 = vand.u32 %v3112, 4294901760
        %v3434 = vsub.f32 %v3112, %v3433
        %v3435 = vand.u32 %v3434, 4294901760
        %3436 = vmatmul.mubr.f32.gmra.mrb[0].mxu0 %v3435
        %v3437 = vpop.f32.mrb[0].mxu0
        %v3438 = vadd.f32 %v3361, %v3437
        %v3439 = vpop.f32.mrb[0].mxu0
        %3440 = vdwg.mxu0
        %3441 = vmatprep.subr.mxu0 0.0
        %v3442 = vand.u32 %v2060, 4294901760
        %v3443 = vsub.f32 %v2060, %v3442
        %v3444 = vand.u32 %v3443, 4294901760
        %3445 = vmatpush1.msra.mxu0 %v3444
        %3446 = vmatprep.subr.mxu0 0.0
        %v3447 = vand.u32 %v2061, 4294901760
        %v3448 = vsub.f32 %v2061, %v3447
        %v3449 = vand.u32 %v3448, 4294901760
        %3450 = vmatpush1.msra.mxu0 %v3449
        %3451 = vmatprep.subr.mxu0 0.0
        %v3452 = vand.u32 %v2062, 4294901760
        %v3453 = vsub.f32 %v2062, %v3452
        %v3454 = vand.u32 %v3453, 4294901760
        %3455 = vmatpush1.msra.mxu0 %v3454
        %3456 = vmatprep.subr.mxu0 0.0
        %v3457 = vand.u32 %v2063, 4294901760
        %v3458 = vsub.f32 %v2063, %v3457
        %v3459 = vand.u32 %v3458, 4294901760
        %3460 = vmatpush1.msra.mxu0 %v3459
        %3461 = vmatprep.subr.mxu0 0.0
        %3462 = vmatpush1.msra.mxu0 0.0
        %3463 = vmatprep.subr.mxu0 0.0
        %3464 = vmatpush1.msra.mxu0 0.0
        %3465 = vmatprep.subr.mxu0 0.0
        %3466 = vmatpush1.msra.mxu0 0.0
        %3467 = vmatprep.subr.mxu0 0.0
        %3468 = vmatpush1.msra.mxu0 0.0
        %3469 = vmatprep.subr.mxu0 0.0
        %3470 = vmatpush1.msra.mxu0 0.0
        %3471 = vmatprep.subr.mxu0 0.0
        %3472 = vmatpush1.msra.mxu0 0.0
        %3473 = vmatprep.subr.mxu0 0.0
        %3474 = vmatpush1.msra.mxu0 0.0
        %3475 = vmatprep.subr.mxu0 0.0
        %3476 = vmatpush1.msra.mxu0 0.0
        %3477 = vmatprep.subr.mxu0 0.0
        %3478 = vmatpush1.msra.mxu0 0.0
        %3479 = vmatprep.subr.mxu0 0.0
        %3480 = vmatpush1.msra.mxu0 0.0
        %3481 = vmatprep.subr.mxu0 0.0
        %3482 = vmatpush1.msra.mxu0 0.0
        %3483 = vmatprep.subr.mxu0 0.0
        %3484 = vmatpush1.msra.mxu0 0.0
        %3485 = vmatprep.subr.mxu0 0.0
        %3486 = vmatpush1.msra.mxu0 0.0
        %3487 = vmatprep.subr.mxu0 0.0
        %3488 = vmatpush1.msra.mxu0 0.0
        %3489 = vmatprep.subr.mxu0 0.0
        %3490 = vmatpush1.msra.mxu0 0.0
        %3491 = vmatprep.subr.mxu0 0.0
        %3492 = vmatpush1.msra.mxu0 0.0
        %3493 = vmatprep.subr.mxu0 0.0
        %3494 = vmatpush1.msra.mxu0 0.0
        %3495 = vmatprep.subr.mxu0 0.0
        %3496 = vmatpush1.msra.mxu0 0.0
        %3497 = vmatprep.subr.mxu0 0.0
        %3498 = vmatpush1.msra.mxu0 0.0
        %3499 = vmatprep.subr.mxu0 0.0
        %3500 = vmatpush1.msra.mxu0 0.0
        %3501 = vmatprep.subr.mxu0 0.0
        %3502 = vmatpush1.msra.mxu0 0.0
        %3503 = vmatprep.subr.mxu0 0.0
        %3504 = vmatpush1.msra.mxu0 0.0
        %3505 = vmatprep.subr.mxu0 0.0
        %3506 = vmatpush1.msra.mxu0 0.0
        %3507 = vmatprep.subr.mxu0 0.0
        %3508 = vmatpush1.msra.mxu0 0.0
        %3509 = vmatprep.subr.mxu0 0.0
        %3510 = vmatpush1.msra.mxu0 0.0
        %3511 = vmatprep.subr.mxu0 0.0
        %3512 = vmatpush1.msra.mxu0 0.0
        %3513 = vmatprep.subr.mxu0 0.0
        %3514 = vmatpush1.msra.mxu0 0.0
        %3515 = vmatprep.subr.mxu0 0.0
        %3516 = vmatpush1.msra.mxu0 0.0
        %3517 = vmatprep.mubr.f32.mxu0 0.0
        %v3518 = vand.u32 %v3112, 4294901760
        %3519 = vmatmul.mubr.f32.gmra.mrb[0].mxu0 %v3518
        %v3520 = vpop.f32.mrb[0].mxu0
        %v3521 = vadd.f32 %v3438, %v3520
        %v3522 = vpop.f32.mrb[0].mxu0
        %3523 = vdwg.mxu0
        %3524 = vmatprep.subr.mxu0 0.0
        %v3525 = vand.u32 %v2060, 4294901760
        %3526 = vmatpush1.msra.mxu0 %v3525
        %3527 = vmatprep.subr.mxu0 0.0
        %v3528 = vand.u32 %v2061, 4294901760
        %3529 = vmatpush1.msra.mxu0 %v3528
        %3530 = vmatprep.subr.mxu0 0.0
        %v3531 = vand.u32 %v2062, 4294901760
        %3532 = vmatpush1.msra.mxu0 %v3531
        %3533 = vmatprep.subr.mxu0 0.0
        %v3534 = vand.u32 %v2063, 4294901760
        %3535 = vmatpush1.msra.mxu0 %v3534
        %3536 = vmatprep.subr.mxu0 0.0
        %3537 = vmatpush1.msra.mxu0 0.0
        %3538 = vmatprep.subr.mxu0 0.0
        %3539 = vmatpush1.msra.mxu0 0.0
        %3540 = vmatprep.subr.mxu0 0.0
        %3541 = vmatpush1.msra.mxu0 0.0
        %3542 = vmatprep.subr.mxu0 0.0
        %3543 = vmatpush1.msra.mxu0 0.0
        %3544 = vmatprep.subr.mxu0 0.0
        %3545 = vmatpush1.msra.mxu0 0.0
        %3546 = vmatprep.subr.mxu0 0.0
        %3547 = vmatpush1.msra.mxu0 0.0
        %3548 = vmatprep.subr.mxu0 0.0
        %3549 = vmatpush1.msra.mxu0 0.0
        %3550 = vmatprep.subr.mxu0 0.0
        %3551 = vmatpush1.msra.mxu0 0.0
        %3552 = vmatprep.subr.mxu0 0.0
        %3553 = vmatpush1.msra.mxu0 0.0
        %3554 = vmatprep.subr.mxu0 0.0
        %3555 = vmatpush1.msra.mxu0 0.0
        %3556 = vmatprep.subr.mxu0 0.0
        %3557 = vmatpush1.msra.mxu0 0.0
        %3558 = vmatprep.subr.mxu0 0.0
        %3559 = vmatpush1.msra.mxu0 0.0
        %3560 = vmatprep.subr.mxu0 0.0
        %3561 = vmatpush1.msra.mxu0 0.0
        %3562 = vmatprep.subr.mxu0 0.0
        %3563 = vmatpush1.msra.mxu0 0.0
        %3564 = vmatprep.subr.mxu0 0.0
        %3565 = vmatpush1.msra.mxu0 0.0
        %3566 = vmatprep.subr.mxu0 0.0
        %3567 = vmatpush1.msra.mxu0 0.0
        %3568 = vmatprep.subr.mxu0 0.0
        %3569 = vmatpush1.msra.mxu0 0.0
        %3570 = vmatprep.subr.mxu0 0.0
        %3571 = vmatpush1.msra.mxu0 0.0
        %3572 = vmatprep.subr.mxu0 0.0
        %3573 = vmatpush1.msra.mxu0 0.0
        %3574 = vmatprep.subr.mxu0 0.0
        %3575 = vmatpush1.msra.mxu0 0.0
        %3576 = vmatprep.subr.mxu0 0.0
        %3577 = vmatpush1.msra.mxu0 0.0
        %3578 = vmatprep.subr.mxu0 0.0
        %3579 = vmatpush1.msra.mxu0 0.0
        %3580 = vmatprep.subr.mxu0 0.0
        %3581 = vmatpush1.msra.mxu0 0.0
        %3582 = vmatprep.subr.mxu0 0.0
        %3583 = vmatpush1.msra.mxu0 0.0
        %3584 = vmatprep.subr.mxu0 0.0
        %3585 = vmatpush1.msra.mxu0 0.0
        %3586 = vmatprep.subr.mxu0 0.0
        %3587 = vmatpush1.msra.mxu0 0.0
        %3588 = vmatprep.subr.mxu0 0.0
        %3589 = vmatpush1.msra.mxu0 0.0
        %3590 = vmatprep.subr.mxu0 0.0
        %3591 = vmatpush1.msra.mxu0 0.0
        %3592 = vmatprep.mubr.f32.mxu0 0.0
        %v3593 = vand.u32 %v3112, 4294901760
        %3594 = vmatmul.mubr.f32.gmra.mrb[0].mxu0 %v3593
        %v3595 = vpop.f32.mrb[0].mxu0
        %v3596 = vadd.f32 %v3521, %v3595
        %v3597 = vpop.f32.mrb[0].mxu0
        %3598 = vdwg.mxu0
        %v3599 = vadd.f32 %v3111, %v3596
        %v3600 = vxor.u32 %v3599, 2147483648
        %v3601 = vmul.f32 %v3600, 1.442695
        %v3602 = vpow.pop %v3601
        %v3603 = vadd.f32 %v3602, 1.0
        %v3604 = vrcp.pop %v3603
        %v3605 = vmul.f32 1.0, %v3604
        %v3606 = vtanh.pop %v3599
        %v3607 = vmul.f32 %v3605, %v3097
        %3609 = vrot.lane.b32.xlu0 %v3606, 64
        %v3610 = vpop.permute.xlu0 %3609
        %v3612 = vmul.f32 %v3605, %v3610
        %3614 = vrot.lane.b32.xlu0 %v3612, 32
        %v3615 = vpop.permute.xlu0 %3614
        %v3617 = vadd.f32 %v3607, %v3615
        %v3618 = vtanh.pop %v3617
        %3620 = vrot.lane.b32.xlu0 %v3618, 64
        %v3621 = vpop.permute.xlu0 %3620
        %v3623 = vmul.f32 %v3605, %v3621
        %3625 = vrot.lane.b32.xlu0 %v3623, 32
        %v3626 = vpop.permute.xlu0 %3625
        %s3628 = scalar_lea.vmem [#allocation2], 16
        %3629 = vst.msk [vmem:[%s3628] sm:$0xff] %vm2067, %v3626
        %s3630 = scalar_lea.vmem [#allocation3], 24
        %v3631 = vld [vmem:[%s3630] sm:$0xff]
        %v3632 = vsel %vm2067, %v3626, 0
        %3634 = vmatprep.subr.mxu0 0.0
        %v3635 = vand.u32 %v2060, 4294901760
        %3636 = vmatpush1.msra.mxu0 %v3635
        %3637 = vmatprep.subr.mxu0 0.0
        %v3638 = vand.u32 %v2061, 4294901760
        %3639 = vmatpush1.msra.mxu0 %v3638
        %3640 = vmatprep.subr.mxu0 0.0
        %v3641 = vand.u32 %v2062, 4294901760
        %3642 = vmatpush1.msra.mxu0 %v3641
        %3643 = vmatprep.subr.mxu0 0.0
        %v3644 = vand.u32 %v2063, 4294901760
        %3645 = vmatpush1.msra.mxu0 %v3644
        %3646 = vmatprep.subr.mxu0 0.0
        %3647 = vmatpush1.msra.mxu0 0.0
        %3648 = vmatprep.subr.mxu0 0.0
        %3649 = vmatpush1.msra.mxu0 0.0
        %3650 = vmatprep.subr.mxu0 0.0
        %3651 = vmatpush1.msra.mxu0 0.0
        %3652 = vmatprep.subr.mxu0 0.0
        %3653 = vmatpush1.msra.mxu0 0.0
        %3654 = vmatprep.subr.mxu0 0.0
        %3655 = vmatpush1.msra.mxu0 0.0
        %3656 = vmatprep.subr.mxu0 0.0
        %3657 = vmatpush1.msra.mxu0 0.0
        %3658 = vmatprep.subr.mxu0 0.0
        %3659 = vmatpush1.msra.mxu0 0.0
        %3660 = vmatprep.subr.mxu0 0.0
        %3661 = vmatpush1.msra.mxu0 0.0
        %3662 = vmatprep.subr.mxu0 0.0
        %3663 = vmatpush1.msra.mxu0 0.0
        %3664 = vmatprep.subr.mxu0 0.0
        %3665 = vmatpush1.msra.mxu0 0.0
        %3666 = vmatprep.subr.mxu0 0.0
        %3667 = vmatpush1.msra.mxu0 0.0
        %3668 = vmatprep.subr.mxu0 0.0
        %3669 = vmatpush1.msra.mxu0 0.0
        %3670 = vmatprep.subr.mxu0 0.0
        %3671 = vmatpush1.msra.mxu0 0.0
        %3672 = vmatprep.subr.mxu0 0.0
        %3673 = vmatpush1.msra.mxu0 0.0
        %3674 = vmatprep.subr.mxu0 0.0
        %3675 = vmatpush1.msra.mxu0 0.0
        %3676 = vmatprep.subr.mxu0 0.0
        %3677 = vmatpush1.msra.mxu0 0.0
        %3678 = vmatprep.subr.mxu0 0.0
        %3679 = vmatpush1.msra.mxu0 0.0
        %3680 = vmatprep.subr.mxu0 0.0
        %3681 = vmatpush1.msra.mxu0 0.0
        %3682 = vmatprep.subr.mxu0 0.0
        %3683 = vmatpush1.msra.mxu0 0.0
        %3684 = vmatprep.subr.mxu0 0.0
        %3685 = vmatpush1.msra.mxu0 0.0
        %3686 = vmatprep.subr.mxu0 0.0
        %3687 = vmatpush1.msra.mxu0 0.0
        %3688 = vmatprep.subr.mxu0 0.0
        %3689 = vmatpush1.msra.mxu0 0.0
        %3690 = vmatprep.subr.mxu0 0.0
        %3691 = vmatpush1.msra.mxu0 0.0
        %3692 = vmatprep.subr.mxu0 0.0
        %3693 = vmatpush1.msra.mxu0 0.0
        %3694 = vmatprep.subr.mxu0 0.0
        %3695 = vmatpush1.msra.mxu0 0.0
        %3696 = vmatprep.subr.mxu0 0.0
        %3697 = vmatpush1.msra.mxu0 0.0
        %3698 = vmatprep.subr.mxu0 0.0
        %3699 = vmatpush1.msra.mxu0 0.0
        %3700 = vmatprep.subr.mxu0 0.0
        %3701 = vmatpush1.msra.mxu0 0.0
        %3702 = vmatprep.mubr.f32.mxu0 0.0
        %v3703 = vand.u32 %v3632, 4294901760
        %v3704 = vsub.f32 %v3632, %v3703
        %v3705 = vand.u32 %v3704, 4294901760
        %v3706 = vsub.f32 %v3704, %v3705
        %v3707 = vand.u32 %v3706, 4294901760
        %3708 = vmatmul.mubr.f32.gmra.mrb[0].mxu0 %v3707
        %v3709 = vpop.f32.mrb[0].mxu0
        %v3710 = vadd.f32 0.0, %v3709
        %v3711 = vpop.f32.mrb[0].mxu0
        %3712 = vdwg.mxu0
        %3713 = vmatprep.subr.mxu0 0.0
        %v3714 = vand.u32 %v2060, 4294901760
        %v3715 = vsub.f32 %v2060, %v3714
        %v3716 = vand.u32 %v3715, 4294901760
        %v3717 = vsub.f32 %v3715, %v3716
        %v3718 = vand.u32 %v3717, 4294901760
        %3719 = vmatpush1.msra.mxu0 %v3718
        %3720 = vmatprep.subr.mxu0 0.0
        %v3721 = vand.u32 %v2061, 4294901760
        %v3722 = vsub.f32 %v2061, %v3721
        %v3723 = vand.u32 %v3722, 4294901760
        %v3724 = vsub.f32 %v3722, %v3723
        %v3725 = vand.u32 %v3724, 4294901760
        %3726 = vmatpush1.msra.mxu0 %v3725
        %3727 = vmatprep.subr.mxu0 0.0
        %v3728 = vand.u32 %v2062, 4294901760
        %v3729 = vsub.f32 %v2062, %v3728
        %v3730 = vand.u32 %v3729, 4294901760
        %v3731 = vsub.f32 %v3729, %v3730
        %v3732 = vand.u32 %v3731, 4294901760
        %3733 = vmatpush1.msra.mxu0 %v3732
        %3734 = vmatprep.subr.mxu0 0.0
        %v3735 = vand.u32 %v2063, 4294901760
        %v3736 = vsub.f32 %v2063, %v3735
        %v3737 = vand.u32 %v3736, 4294901760
        %v3738 = vsub.f32 %v3736, %v3737
        %v3739 = vand.u32 %v3738, 4294901760
        %3740 = vmatpush1.msra.mxu0 %v3739
        %3741 = vmatprep.subr.mxu0 0.0
        %3742 = vmatpush1.msra.mxu0 0.0
        %3743 = vmatprep.subr.mxu0 0.0
        %3744 = vmatpush1.msra.mxu0 0.0
        %3745 = vmatprep.subr.mxu0 0.0
        %3746 = vmatpush1.msra.mxu0 0.0
        %3747 = vmatprep.subr.mxu0 0.0
        %3748 = vmatpush1.msra.mxu0 0.0
        %3749 = vmatprep.subr.mxu0 0.0
        %3750 = vmatpush1.msra.mxu0 0.0
        %3751 = vmatprep.subr.mxu0 0.0
        %3752 = vmatpush1.msra.mxu0 0.0
        %3753 = vmatprep.subr.mxu0 0.0
        %3754 = vmatpush1.msra.mxu0 0.0
        %3755 = vmatprep.subr.mxu0 0.0
        %3756 = vmatpush1.msra.mxu0 0.0
        %3757 = vmatprep.subr.mxu0 0.0
        %3758 = vmatpush1.msra.mxu0 0.0
        %3759 = vmatprep.subr.mxu0 0.0
        %3760 = vmatpush1.msra.mxu0 0.0
        %3761 = vmatprep.subr.mxu0 0.0
        %3762 = vmatpush1.msra.mxu0 0.0
        %3763 = vmatprep.subr.mxu0 0.0
        %3764 = vmatpush1.msra.mxu0 0.0
        %3765 = vmatprep.subr.mxu0 0.0
        %3766 = vmatpush1.msra.mxu0 0.0
        %3767 = vmatprep.subr.mxu0 0.0
        %3768 = vmatpush1.msra.mxu0 0.0
        %3769 = vmatprep.subr.mxu0 0.0
        %3770 = vmatpush1.msra.mxu0 0.0
        %3771 = vmatprep.subr.mxu0 0.0
        %3772 = vmatpush1.msra.mxu0 0.0
        %3773 = vmatprep.subr.mxu0 0.0
        %3774 = vmatpush1.msra.mxu0 0.0
        %3775 = vmatprep.subr.mxu0 0.0
        %3776 = vmatpush1.msra.mxu0 0.0
        %3777 = vmatprep.subr.mxu0 0.0
        %3778 = vmatpush1.msra.mxu0 0.0
        %3779 = vmatprep.subr.mxu0 0.0
        %3780 = vmatpush1.msra.mxu0 0.0
        %3781 = vmatprep.subr.mxu0 0.0
        %3782 = vmatpush1.msra.mxu0 0.0
        %3783 = vmatprep.subr.mxu0 0.0
        %3784 = vmatpush1.msra.mxu0 0.0
        %3785 = vmatprep.subr.mxu0 0.0
        %3786 = vmatpush1.msra.mxu0 0.0
        %3787 = vmatprep.subr.mxu0 0.0
        %3788 = vmatpush1.msra.mxu0 0.0
        %3789 = vmatprep.subr.mxu0 0.0
        %3790 = vmatpush1.msra.mxu0 0.0
        %3791 = vmatprep.subr.mxu0 0.0
        %3792 = vmatpush1.msra.mxu0 0.0
        %3793 = vmatprep.subr.mxu0 0.0
        %3794 = vmatpush1.msra.mxu0 0.0
        %3795 = vmatprep.subr.mxu0 0.0
        %3796 = vmatpush1.msra.mxu0 0.0
        %3797 = vmatprep.mubr.f32.mxu0 0.0
        %v3798 = vand.u32 %v3632, 4294901760
        %3799 = vmatmul.mubr.f32.gmra.mrb[0].mxu0 %v3798
        %v3800 = vpop.f32.mrb[0].mxu0
        %v3801 = vadd.f32 %v3710, %v3800
        %v3802 = vpop.f32.mrb[0].mxu0
        %3803 = vdwg.mxu0
        %3804 = vmatprep.subr.mxu0 0.0
        %v3805 = vand.u32 %v2060, 4294901760
        %v3806 = vsub.f32 %v2060, %v3805
        %3807 = vmatpush1.msra.mxu0 %v3806
        %3808 = vmatprep.subr.mxu0 0.0
        %v3809 = vand.u32 %v2061, 4294901760
        %v3810 = vsub.f32 %v2061, %v3809
        %3811 = vmatpush1.msra.mxu0 %v3810
        %3812 = vmatprep.subr.mxu0 0.0
        %v3813 = vand.u32 %v2062, 4294901760
        %v3814 = vsub.f32 %v2062, %v3813
        %3815 = vmatpush1.msra.mxu0 %v3814
        %3816 = vmatprep.subr.mxu0 0.0
        %v3817 = vand.u32 %v2063, 4294901760
        %v3818 = vsub.f32 %v2063, %v3817
        %3819 = vmatpush1.msra.mxu0 %v3818
        %3820 = vmatprep.subr.mxu0 0.0
        %3821 = vmatpush1.msra.mxu0 0.0
        %3822 = vmatprep.subr.mxu0 0.0
        %3823 = vmatpush1.msra.mxu0 0.0
        %3824 = vmatprep.subr.mxu0 0.0
        %3825 = vmatpush1.msra.mxu0 0.0
        %3826 = vmatprep.subr.mxu0 0.0
        %3827 = vmatpush1.msra.mxu0 0.0
        %3828 = vmatprep.subr.mxu0 0.0
        %3829 = vmatpush1.msra.mxu0 0.0
        %3830 = vmatprep.subr.mxu0 0.0
        %3831 = vmatpush1.msra.mxu0 0.0
        %3832 = vmatprep.subr.mxu0 0.0
        %3833 = vmatpush1.msra.mxu0 0.0
        %3834 = vmatprep.subr.mxu0 0.0
        %3835 = vmatpush1.msra.mxu0 0.0
        %3836 = vmatprep.subr.mxu0 0.0
        %3837 = vmatpush1.msra.mxu0 0.0
        %3838 = vmatprep.subr.mxu0 0.0
        %3839 = vmatpush1.msra.mxu0 0.0
        %3840 = vmatprep.subr.mxu0 0.0
        %3841 = vmatpush1.msra.mxu0 0.0
        %3842 = vmatprep.subr.mxu0 0.0
        %3843 = vmatpush1.msra.mxu0 0.0
        %3844 = vmatprep.subr.mxu0 0.0
        %3845 = vmatpush1.msra.mxu0 0.0
        %3846 = vmatprep.subr.mxu0 0.0
        %3847 = vmatpush1.msra.mxu0 0.0
        %3848 = vmatprep.subr.mxu0 0.0
        %3849 = vmatpush1.msra.mxu0 0.0
        %3850 = vmatprep.subr.mxu0 0.0
        %3851 = vmatpush1.msra.mxu0 0.0
        %3852 = vmatprep.subr.mxu0 0.0
        %3853 = vmatpush1.msra.mxu0 0.0
        %3854 = vmatprep.subr.mxu0 0.0
        %3855 = vmatpush1.msra.mxu0 0.0
        %3856 = vmatprep.subr.mxu0 0.0
        %3857 = vmatpush1.msra.mxu0 0.0
        %3858 = vmatprep.subr.mxu0 0.0
        %3859 = vmatpush1.msra.mxu0 0.0
        %3860 = vmatprep.subr.mxu0 0.0
        %3861 = vmatpush1.msra.mxu0 0.0
        %3862 = vmatprep.subr.mxu0 0.0
        %3863 = vmatpush1.msra.mxu0 0.0
        %3864 = vmatprep.subr.mxu0 0.0
        %3865 = vmatpush1.msra.mxu0 0.0
        %3866 = vmatprep.subr.mxu0 0.0
        %3867 = vmatpush1.msra.mxu0 0.0
        %3868 = vmatprep.subr.mxu0 0.0
        %3869 = vmatpush1.msra.mxu0 0.0
        %3870 = vmatprep.subr.mxu0 0.0
        %3871 = vmatpush1.msra.mxu0 0.0
        %3872 = vmatprep.subr.mxu0 0.0
        %3873 = vmatpush1.msra.mxu0 0.0
        %3874 = vmatprep.subr.mxu0 0.0
        %3875 = vmatpush1.msra.mxu0 0.0
        %3876 = vmatprep.mubr.f32.mxu0 0.0
        %v3877 = vand.u32 %v3632, 4294901760
        %v3878 = vsub.f32 %v3632, %v3877
        %3879 = vmatmul.mubr.f32.gmra.mrb[0].mxu0 %v3878
        %v3880 = vpop.f32.mrb[0].mxu0
        %v3881 = vadd.f32 %v3801, %v3880
        %v3882 = vpop.f32.mrb[0].mxu0
        %3883 = vdwg.mxu0
        %3884 = vmatprep.subr.mxu0 0.0
        %v3885 = vand.u32 %v2060, 4294901760
        %3886 = vmatpush1.msra.mxu0 %v3885
        %3887 = vmatprep.subr.mxu0 0.0
        %v3888 = vand.u32 %v2061, 4294901760
        %3889 = vmatpush1.msra.mxu0 %v3888
        %3890 = vmatprep.subr.mxu0 0.0
        %v3891 = vand.u32 %v2062, 4294901760
        %3892 = vmatpush1.msra.mxu0 %v3891
        %3893 = vmatprep.subr.mxu0 0.0
        %v3894 = vand.u32 %v2063, 4294901760
        %3895 = vmatpush1.msra.mxu0 %v3894
        %3896 = vmatprep.subr.mxu0 0.0
        %3897 = vmatpush1.msra.mxu0 0.0
        %3898 = vmatprep.subr.mxu0 0.0
        %3899 = vmatpush1.msra.mxu0 0.0
        %3900 = vmatprep.subr.mxu0 0.0
        %3901 = vmatpush1.msra.mxu0 0.0
        %3902 = vmatprep.subr.mxu0 0.0
        %3903 = vmatpush1.msra.mxu0 0.0
        %3904 = vmatprep.subr.mxu0 0.0
        %3905 = vmatpush1.msra.mxu0 0.0
        %3906 = vmatprep.subr.mxu0 0.0
        %3907 = vmatpush1.msra.mxu0 0.0
        %3908 = vmatprep.subr.mxu0 0.0
        %3909 = vmatpush1.msra.mxu0 0.0
        %3910 = vmatprep.subr.mxu0 0.0
        %3911 = vmatpush1.msra.mxu0 0.0
        %3912 = vmatprep.subr.mxu0 0.0
        %3913 = vmatpush1.msra.mxu0 0.0
        %3914 = vmatprep.subr.mxu0 0.0
        %3915 = vmatpush1.msra.mxu0 0.0
        %3916 = vmatprep.subr.mxu0 0.0
        %3917 = vmatpush1.msra.mxu0 0.0
        %3918 = vmatprep.subr.mxu0 0.0
        %3919 = vmatpush1.msra.mxu0 0.0
        %3920 = vmatprep.subr.mxu0 0.0
        %3921 = vmatpush1.msra.mxu0 0.0
        %3922 = vmatprep.subr.mxu0 0.0
        %3923 = vmatpush1.msra.mxu0 0.0
        %3924 = vmatprep.subr.mxu0 0.0
        %3925 = vmatpush1.msra.mxu0 0.0
        %3926 = vmatprep.subr.mxu0 0.0
        %3927 = vmatpush1.msra.mxu0 0.0
        %3928 = vmatprep.subr.mxu0 0.0
        %3929 = vmatpush1.msra.mxu0 0.0
        %3930 = vmatprep.subr.mxu0 0.0
        %3931 = vmatpush1.msra.mxu0 0.0
        %3932 = vmatprep.subr.mxu0 0.0
        %3933 = vmatpush1.msra.mxu0 0.0
        %3934 = vmatprep.subr.mxu0 0.0
        %3935 = vmatpush1.msra.mxu0 0.0
        %3936 = vmatprep.subr.mxu0 0.0
        %3937 = vmatpush1.msra.mxu0 0.0
        %3938 = vmatprep.subr.mxu0 0.0
        %3939 = vmatpush1.msra.mxu0 0.0
        %3940 = vmatprep.subr.mxu0 0.0
        %3941 = vmatpush1.msra.mxu0 0.0
        %3942 = vmatprep.subr.mxu0 0.0
        %3943 = vmatpush1.msra.mxu0 0.0
        %3944 = vmatprep.subr.mxu0 0.0
        %3945 = vmatpush1.msra.mxu0 0.0
        %3946 = vmatprep.subr.mxu0 0.0
        %3947 = vmatpush1.msra.mxu0 0.0
        %3948 = vmatprep.subr.mxu0 0.0
        %3949 = vmatpush1.msra.mxu0 0.0
        %3950 = vmatprep.subr.mxu0 0.0
        %3951 = vmatpush1.msra.mxu0 0.0
        %3952 = vmatprep.mubr.f32.mxu0 0.0
        %v3953 = vand.u32 %v3632, 4294901760
        %v3954 = vsub.f32 %v3632, %v3953
        %v3955 = vand.u32 %v3954, 4294901760
        %3956 = vmatmul.mubr.f32.gmra.mrb[0].mxu0 %v3955
        %v3957 = vpop.f32.mrb[0].mxu0
        %v3958 = vadd.f32 %v3881, %v3957
        %v3959 = vpop.f32.mrb[0].mxu0
        %3960 = vdwg.mxu0
        %3961 = vmatprep.subr.mxu0 0.0
        %v3962 = vand.u32 %v2060, 4294901760
        %v3963 = vsub.f32 %v2060, %v3962
        %v3964 = vand.u32 %v3963, 4294901760
        %3965 = vmatpush1.msra.mxu0 %v3964
        %3966 = vmatprep.subr.mxu0 0.0
        %v3967 = vand.u32 %v2061, 4294901760
        %v3968 = vsub.f32 %v2061, %v3967
        %v3969 = vand.u32 %v3968, 4294901760
        %3970 = vmatpush1.msra.mxu0 %v3969
        %3971 = vmatprep.subr.mxu0 0.0
        %v3972 = vand.u32 %v2062, 4294901760
        %v3973 = vsub.f32 %v2062, %v3972
        %v3974 = vand.u32 %v3973, 4294901760
        %3975 = vmatpush1.msra.mxu0 %v3974
        %3976 = vmatprep.subr.mxu0 0.0
        %v3977 = vand.u32 %v2063, 4294901760
        %v3978 = vsub.f32 %v2063, %v3977
        %v3979 = vand.u32 %v3978, 4294901760
        %3980 = vmatpush1.msra.mxu0 %v3979
        %3981 = vmatprep.subr.mxu0 0.0
        %3982 = vmatpush1.msra.mxu0 0.0
        %3983 = vmatprep.subr.mxu0 0.0
        %3984 = vmatpush1.msra.mxu0 0.0
        %3985 = vmatprep.subr.mxu0 0.0
        %3986 = vmatpush1.msra.mxu0 0.0
        %3987 = vmatprep.subr.mxu0 0.0
        %3988 = vmatpush1.msra.mxu0 0.0
        %3989 = vmatprep.subr.mxu0 0.0
        %3990 = vmatpush1.msra.mxu0 0.0
        %3991 = vmatprep.subr.mxu0 0.0
        %3992 = vmatpush1.msra.mxu0 0.0
        %3993 = vmatprep.subr.mxu0 0.0
        %3994 = vmatpush1.msra.mxu0 0.0
        %3995 = vmatprep.subr.mxu0 0.0
        %3996 = vmatpush1.msra.mxu0 0.0
        %3997 = vmatprep.subr.mxu0 0.0
        %3998 = vmatpush1.msra.mxu0 0.0
        %3999 = vmatprep.subr.mxu0 0.0
        %4000 = vmatpush1.msra.mxu0 0.0
        %4001 = vmatprep.subr.mxu0 0.0
        %4002 = vmatpush1.msra.mxu0 0.0
        %4003 = vmatprep.subr.mxu0 0.0
        %4004 = vmatpush1.msra.mxu0 0.0
        %4005 = vmatprep.subr.mxu0 0.0
        %4006 = vmatpush1.msra.mxu0 0.0
        %4007 = vmatprep.subr.mxu0 0.0
        %4008 = vmatpush1.msra.mxu0 0.0
        %4009 = vmatprep.subr.mxu0 0.0
        %4010 = vmatpush1.msra.mxu0 0.0
        %4011 = vmatprep.subr.mxu0 0.0
        %4012 = vmatpush1.msra.mxu0 0.0
        %4013 = vmatprep.subr.mxu0 0.0
        %4014 = vmatpush1.msra.mxu0 0.0
        %4015 = vmatprep.subr.mxu0 0.0
        %4016 = vmatpush1.msra.mxu0 0.0
        %4017 = vmatprep.subr.mxu0 0.0
        %4018 = vmatpush1.msra.mxu0 0.0
        %4019 = vmatprep.subr.mxu0 0.0
        %4020 = vmatpush1.msra.mxu0 0.0
        %4021 = vmatprep.subr.mxu0 0.0
        %4022 = vmatpush1.msra.mxu0 0.0
        %4023 = vmatprep.subr.mxu0 0.0
        %4024 = vmatpush1.msra.mxu0 0.0
        %4025 = vmatprep.subr.mxu0 0.0
        %4026 = vmatpush1.msra.mxu0 0.0
        %4027 = vmatprep.subr.mxu0 0.0
        %4028 = vmatpush1.msra.mxu0 0.0
        %4029 = vmatprep.subr.mxu0 0.0
        %4030 = vmatpush1.msra.mxu0 0.0
        %4031 = vmatprep.subr.mxu0 0.0
        %4032 = vmatpush1.msra.mxu0 0.0
        %4033 = vmatprep.subr.mxu0 0.0
        %4034 = vmatpush1.msra.mxu0 0.0
        %4035 = vmatprep.subr.mxu0 0.0
        %4036 = vmatpush1.msra.mxu0 0.0
        %4037 = vmatprep.mubr.f32.mxu0 0.0
        %v4038 = vand.u32 %v3632, 4294901760
        %4039 = vmatmul.mubr.f32.gmra.mrb[0].mxu0 %v4038
        %v4040 = vpop.f32.mrb[0].mxu0
        %v4041 = vadd.f32 %v3958, %v4040
        %v4042 = vpop.f32.mrb[0].mxu0
        %4043 = vdwg.mxu0
        %4044 = vmatprep.subr.mxu0 0.0
        %v4045 = vand.u32 %v2060, 4294901760
        %4046 = vmatpush1.msra.mxu0 %v4045
        %4047 = vmatprep.subr.mxu0 0.0
        %v4048 = vand.u32 %v2061, 4294901760
        %4049 = vmatpush1.msra.mxu0 %v4048
        %4050 = vmatprep.subr.mxu0 0.0
        %v4051 = vand.u32 %v2062, 4294901760
        %4052 = vmatpush1.msra.mxu0 %v4051
        %4053 = vmatprep.subr.mxu0 0.0
        %v4054 = vand.u32 %v2063, 4294901760
        %4055 = vmatpush1.msra.mxu0 %v4054
        %4056 = vmatprep.subr.mxu0 0.0
        %4057 = vmatpush1.msra.mxu0 0.0
        %4058 = vmatprep.subr.mxu0 0.0
        %4059 = vmatpush1.msra.mxu0 0.0
        %4060 = vmatprep.subr.mxu0 0.0
        %4061 = vmatpush1.msra.mxu0 0.0
        %4062 = vmatprep.subr.mxu0 0.0
        %4063 = vmatpush1.msra.mxu0 0.0
        %4064 = vmatprep.subr.mxu0 0.0
        %4065 = vmatpush1.msra.mxu0 0.0
        %4066 = vmatprep.subr.mxu0 0.0
        %4067 = vmatpush1.msra.mxu0 0.0
        %4068 = vmatprep.subr.mxu0 0.0
        %4069 = vmatpush1.msra.mxu0 0.0
        %4070 = vmatprep.subr.mxu0 0.0
        %4071 = vmatpush1.msra.mxu0 0.0
        %4072 = vmatprep.subr.mxu0 0.0
        %4073 = vmatpush1.msra.mxu0 0.0
        %4074 = vmatprep.subr.mxu0 0.0
        %4075 = vmatpush1.msra.mxu0 0.0
        %4076 = vmatprep.subr.mxu0 0.0
        %4077 = vmatpush1.msra.mxu0 0.0
        %4078 = vmatprep.subr.mxu0 0.0
        %4079 = vmatpush1.msra.mxu0 0.0
        %4080 = vmatprep.subr.mxu0 0.0
        %4081 = vmatpush1.msra.mxu0 0.0
        %4082 = vmatprep.subr.mxu0 0.0
        %4083 = vmatpush1.msra.mxu0 0.0
        %4084 = vmatprep.subr.mxu0 0.0
        %4085 = vmatpush1.msra.mxu0 0.0
        %4086 = vmatprep.subr.mxu0 0.0
        %4087 = vmatpush1.msra.mxu0 0.0
        %4088 = vmatprep.subr.mxu0 0.0
        %4089 = vmatpush1.msra.mxu0 0.0
        %4090 = vmatprep.subr.mxu0 0.0
        %4091 = vmatpush1.msra.mxu0 0.0
        %4092 = vmatprep.subr.mxu0 0.0
        %4093 = vmatpush1.msra.mxu0 0.0
        %4094 = vmatprep.subr.mxu0 0.0
        %4095 = vmatpush1.msra.mxu0 0.0
        %4096 = vmatprep.subr.mxu0 0.0
        %4097 = vmatpush1.msra.mxu0 0.0
        %4098 = vmatprep.subr.mxu0 0.0
        %4099 = vmatpush1.msra.mxu0 0.0
        %4100 = vmatprep.subr.mxu0 0.0
        %4101 = vmatpush1.msra.mxu0 0.0
        %4102 = vmatprep.subr.mxu0 0.0
        %4103 = vmatpush1.msra.mxu0 0.0
        %4104 = vmatprep.subr.mxu0 0.0
        %4105 = vmatpush1.msra.mxu0 0.0
        %4106 = vmatprep.subr.mxu0 0.0
        %4107 = vmatpush1.msra.mxu0 0.0
        %4108 = vmatprep.subr.mxu0 0.0
        %4109 = vmatpush1.msra.mxu0 0.0
        %4110 = vmatprep.subr.mxu0 0.0
        %4111 = vmatpush1.msra.mxu0 0.0
        %4112 = vmatprep.mubr.f32.mxu0 0.0
        %v4113 = vand.u32 %v3632, 4294901760
        %4114 = vmatmul.mubr.f32.gmra.mrb[0].mxu0 %v4113
        %v4115 = vpop.f32.mrb[0].mxu0
        %v4116 = vadd.f32 %v4041, %v4115
        %v4117 = vpop.f32.mrb[0].mxu0
        %4118 = vdwg.mxu0
        %v4119 = vadd.f32 %v3631, %v4116
        %v4120 = vxor.u32 %v4119, 2147483648
        %v4121 = vmul.f32 %v4120, 1.442695
        %v4122 = vpow.pop %v4121
        %v4123 = vadd.f32 %v4122, 1.0
        %v4124 = vrcp.pop %v4123
        %v4125 = vmul.f32 1.0, %v4124
        %v4126 = vtanh.pop %v4119
        %v4127 = vmul.f32 %v4125, %v3617
        %4129 = vrot.lane.b32.xlu0 %v4126, 64
        %v4130 = vpop.permute.xlu0 %4129
        %v4132 = vmul.f32 %v4125, %v4130
        %4134 = vrot.lane.b32.xlu0 %v4132, 32
        %v4135 = vpop.permute.xlu0 %4134
        %v4137 = vadd.f32 %v4127, %v4135
        %v4138 = vtanh.pop %v4137
        %4140 = vrot.lane.b32.xlu0 %v4138, 64
        %v4141 = vpop.permute.xlu0 %4140
        %v4143 = vmul.f32 %v4125, %v4141
        %4145 = vrot.lane.b32.xlu0 %v4143, 32
        %v4146 = vpop.permute.xlu0 %4145
        %s4148 = scalar_lea.vmem [#allocation2], 24
        %4149 = vst.msk [vmem:[%s4148] sm:$0xff] %vm2067, %v4146
        %s4150 = scalar_lea.vmem [#allocation3], 32
        %v4151 = vld [vmem:[%s4150] sm:$0xff]
        %v4152 = vsel %vm2067, %v4146, 0
        %4154 = vmatprep.subr.mxu0 0.0
        %v4155 = vand.u32 %v2060, 4294901760
        %4156 = vmatpush1.msra.mxu0 %v4155
        %4157 = vmatprep.subr.mxu0 0.0
        %v4158 = vand.u32 %v2061, 4294901760
        %4159 = vmatpush1.msra.mxu0 %v4158
        %4160 = vmatprep.subr.mxu0 0.0
        %v4161 = vand.u32 %v2062, 4294901760
        %4162 = vmatpush1.msra.mxu0 %v4161
        %4163 = vmatprep.subr.mxu0 0.0
        %v4164 = vand.u32 %v2063, 4294901760
        %4165 = vmatpush1.msra.mxu0 %v4164
        %4166 = vmatprep.subr.mxu0 0.0
        %4167 = vmatpush1.msra.mxu0 0.0
        %4168 = vmatprep.subr.mxu0 0.0
        %4169 = vmatpush1.msra.mxu0 0.0
        %4170 = vmatprep.subr.mxu0 0.0
        %4171 = vmatpush1.msra.mxu0 0.0
        %4172 = vmatprep.subr.mxu0 0.0
        %4173 = vmatpush1.msra.mxu0 0.0
        %4174 = vmatprep.subr.mxu0 0.0
        %4175 = vmatpush1.msra.mxu0 0.0
        %4176 = vmatprep.subr.mxu0 0.0
        %4177 = vmatpush1.msra.mxu0 0.0
        %4178 = vmatprep.subr.mxu0 0.0
        %4179 = vmatpush1.msra.mxu0 0.0
        %4180 = vmatprep.subr.mxu0 0.0
        %4181 = vmatpush1.msra.mxu0 0.0
        %4182 = vmatprep.subr.mxu0 0.0
        %4183 = vmatpush1.msra.mxu0 0.0
        %4184 = vmatprep.subr.mxu0 0.0
        %4185 = vmatpush1.msra.mxu0 0.0
        %4186 = vmatprep.subr.mxu0 0.0
        %4187 = vmatpush1.msra.mxu0 0.0
        %4188 = vmatprep.subr.mxu0 0.0
        %4189 = vmatpush1.msra.mxu0 0.0
        %4190 = vmatprep.subr.mxu0 0.0
        %4191 = vmatpush1.msra.mxu0 0.0
        %4192 = vmatprep.subr.mxu0 0.0
        %4193 = vmatpush1.msra.mxu0 0.0
        %4194 = vmatprep.subr.mxu0 0.0
        %4195 = vmatpush1.msra.mxu0 0.0
        %4196 = vmatprep.subr.mxu0 0.0
        %4197 = vmatpush1.msra.mxu0 0.0
        %4198 = vmatprep.subr.mxu0 0.0
        %4199 = vmatpush1.msra.mxu0 0.0
        %4200 = vmatprep.subr.mxu0 0.0
        %4201 = vmatpush1.msra.mxu0 0.0
        %4202 = vmatprep.subr.mxu0 0.0
        %4203 = vmatpush1.msra.mxu0 0.0
        %4204 = vmatprep.subr.mxu0 0.0
        %4205 = vmatpush1.msra.mxu0 0.0
        %4206 = vmatprep.subr.mxu0 0.0
        %4207 = vmatpush1.msra.mxu0 0.0
        %4208 = vmatprep.subr.mxu0 0.0
        %4209 = vmatpush1.msra.mxu0 0.0
        %4210 = vmatprep.subr.mxu0 0.0
        %4211 = vmatpush1.msra.mxu0 0.0
        %4212 = vmatprep.subr.mxu0 0.0
        %4213 = vmatpush1.msra.mxu0 0.0
        %4214 = vmatprep.subr.mxu0 0.0
        %4215 = vmatpush1.msra.mxu0 0.0
        %4216 = vmatprep.subr.mxu0 0.0
        %4217 = vmatpush1.msra.mxu0 0.0
        %4218 = vmatprep.subr.mxu0 0.0
        %4219 = vmatpush1.msra.mxu0 0.0
        %4220 = vmatprep.subr.mxu0 0.0
        %4221 = vmatpush1.msra.mxu0 0.0
        %4222 = vmatprep.mubr.f32.mxu0 0.0
        %v4223 = vand.u32 %v4152, 4294901760
        %v4224 = vsub.f32 %v4152, %v4223
        %v4225 = vand.u32 %v4224, 4294901760
        %v4226 = vsub.f32 %v4224, %v4225
        %v4227 = vand.u32 %v4226, 4294901760
        %4228 = vmatmul.mubr.f32.gmra.mrb[0].mxu0 %v4227
        %v4229 = vpop.f32.mrb[0].mxu0
        %v4230 = vadd.f32 0.0, %v4229
        %v4231 = vpop.f32.mrb[0].mxu0
        %4232 = vdwg.mxu0
        %4233 = vmatprep.subr.mxu0 0.0
        %v4234 = vand.u32 %v2060, 4294901760
        %v4235 = vsub.f32 %v2060, %v4234
        %v4236 = vand.u32 %v4235, 4294901760
        %v4237 = vsub.f32 %v4235, %v4236
        %v4238 = vand.u32 %v4237, 4294901760
        %4239 = vmatpush1.msra.mxu0 %v4238
        %4240 = vmatprep.subr.mxu0 0.0
        %v4241 = vand.u32 %v2061, 4294901760
        %v4242 = vsub.f32 %v2061, %v4241
        %v4243 = vand.u32 %v4242, 4294901760
        %v4244 = vsub.f32 %v4242, %v4243
        %v4245 = vand.u32 %v4244, 4294901760
        %4246 = vmatpush1.msra.mxu0 %v4245
        %4247 = vmatprep.subr.mxu0 0.0
        %v4248 = vand.u32 %v2062, 4294901760
        %v4249 = vsub.f32 %v2062, %v4248
        %v4250 = vand.u32 %v4249, 4294901760
        %v4251 = vsub.f32 %v4249, %v4250
        %v4252 = vand.u32 %v4251, 4294901760
        %4253 = vmatpush1.msra.mxu0 %v4252
        %4254 = vmatprep.subr.mxu0 0.0
        %v4255 = vand.u32 %v2063, 4294901760
        %v4256 = vsub.f32 %v2063, %v4255
        %v4257 = vand.u32 %v4256, 4294901760
        %v4258 = vsub.f32 %v4256, %v4257
        %v4259 = vand.u32 %v4258, 4294901760
        %4260 = vmatpush1.msra.mxu0 %v4259
        %4261 = vmatprep.subr.mxu0 0.0
        %4262 = vmatpush1.msra.mxu0 0.0
        %4263 = vmatprep.subr.mxu0 0.0
        %4264 = vmatpush1.msra.mxu0 0.0
        %4265 = vmatprep.subr.mxu0 0.0
        %4266 = vmatpush1.msra.mxu0 0.0
        %4267 = vmatprep.subr.mxu0 0.0
        %4268 = vmatpush1.msra.mxu0 0.0
        %4269 = vmatprep.subr.mxu0 0.0
        %4270 = vmatpush1.msra.mxu0 0.0
        %4271 = vmatprep.subr.mxu0 0.0
        %4272 = vmatpush1.msra.mxu0 0.0
        %4273 = vmatprep.subr.mxu0 0.0
        %4274 = vmatpush1.msra.mxu0 0.0
        %4275 = vmatprep.subr.mxu0 0.0
        %4276 = vmatpush1.msra.mxu0 0.0
        %4277 = vmatprep.subr.mxu0 0.0
        %4278 = vmatpush1.msra.mxu0 0.0
        %4279 = vmatprep.subr.mxu0 0.0
        %4280 = vmatpush1.msra.mxu0 0.0
        %4281 = vmatprep.subr.mxu0 0.0
        %4282 = vmatpush1.msra.mxu0 0.0
        %4283 = vmatprep.subr.mxu0 0.0
        %4284 = vmatpush1.msra.mxu0 0.0
        %4285 = vmatprep.subr.mxu0 0.0
        %4286 = vmatpush1.msra.mxu0 0.0
        %4287 = vmatprep.subr.mxu0 0.0
        %4288 = vmatpush1.msra.mxu0 0.0
        %4289 = vmatprep.subr.mxu0 0.0
        %4290 = vmatpush1.msra.mxu0 0.0
        %4291 = vmatprep.subr.mxu0 0.0
        %4292 = vmatpush1.msra.mxu0 0.0
        %4293 = vmatprep.subr.mxu0 0.0
        %4294 = vmatpush1.msra.mxu0 0.0
        %4295 = vmatprep.subr.mxu0 0.0
        %4296 = vmatpush1.msra.mxu0 0.0
        %4297 = vmatprep.subr.mxu0 0.0
        %4298 = vmatpush1.msra.mxu0 0.0
        %4299 = vmatprep.subr.mxu0 0.0
        %4300 = vmatpush1.msra.mxu0 0.0
        %4301 = vmatprep.subr.mxu0 0.0
        %4302 = vmatpush1.msra.mxu0 0.0
        %4303 = vmatprep.subr.mxu0 0.0
        %4304 = vmatpush1.msra.mxu0 0.0
        %4305 = vmatprep.subr.mxu0 0.0
        %4306 = vmatpush1.msra.mxu0 0.0
        %4307 = vmatprep.subr.mxu0 0.0
        %4308 = vmatpush1.msra.mxu0 0.0
        %4309 = vmatprep.subr.mxu0 0.0
        %4310 = vmatpush1.msra.mxu0 0.0
        %4311 = vmatprep.subr.mxu0 0.0
        %4312 = vmatpush1.msra.mxu0 0.0
        %4313 = vmatprep.subr.mxu0 0.0
        %4314 = vmatpush1.msra.mxu0 0.0
        %4315 = vmatprep.subr.mxu0 0.0
        %4316 = vmatpush1.msra.mxu0 0.0
        %4317 = vmatprep.mubr.f32.mxu0 0.0
        %v4318 = vand.u32 %v4152, 4294901760
        %4319 = vmatmul.mubr.f32.gmra.mrb[0].mxu0 %v4318
        %v4320 = vpop.f32.mrb[0].mxu0
        %v4321 = vadd.f32 %v4230, %v4320
        %v4322 = vpop.f32.mrb[0].mxu0
        %4323 = vdwg.mxu0
        %4324 = vmatprep.subr.mxu0 0.0
        %v4325 = vand.u32 %v2060, 4294901760
        %v4326 = vsub.f32 %v2060, %v4325
        %4327 = vmatpush1.msra.mxu0 %v4326
        %4328 = vmatprep.subr.mxu0 0.0
        %v4329 = vand.u32 %v2061, 4294901760
        %v4330 = vsub.f32 %v2061, %v4329
        %4331 = vmatpush1.msra.mxu0 %v4330
        %4332 = vmatprep.subr.mxu0 0.0
        %v4333 = vand.u32 %v2062, 4294901760
        %v4334 = vsub.f32 %v2062, %v4333
        %4335 = vmatpush1.msra.mxu0 %v4334
        %4336 = vmatprep.subr.mxu0 0.0
        %v4337 = vand.u32 %v2063, 4294901760
        %v4338 = vsub.f32 %v2063, %v4337
        %4339 = vmatpush1.msra.mxu0 %v4338
        %4340 = vmatprep.subr.mxu0 0.0
        %4341 = vmatpush1.msra.mxu0 0.0
        %4342 = vmatprep.subr.mxu0 0.0
        %4343 = vmatpush1.msra.mxu0 0.0
        %4344 = vmatprep.subr.mxu0 0.0
        %4345 = vmatpush1.msra.mxu0 0.0
        %4346 = vmatprep.subr.mxu0 0.0
        %4347 = vmatpush1.msra.mxu0 0.0
        %4348 = vmatprep.subr.mxu0 0.0
        %4349 = vmatpush1.msra.mxu0 0.0
        %4350 = vmatprep.subr.mxu0 0.0
        %4351 = vmatpush1.msra.mxu0 0.0
        %4352 = vmatprep.subr.mxu0 0.0
        %4353 = vmatpush1.msra.mxu0 0.0
        %4354 = vmatprep.subr.mxu0 0.0
        %4355 = vmatpush1.msra.mxu0 0.0
        %4356 = vmatprep.subr.mxu0 0.0
        %4357 = vmatpush1.msra.mxu0 0.0
        %4358 = vmatprep.subr.mxu0 0.0
        %4359 = vmatpush1.msra.mxu0 0.0
        %4360 = vmatprep.subr.mxu0 0.0
        %4361 = vmatpush1.msra.mxu0 0.0
        %4362 = vmatprep.subr.mxu0 0.0
        %4363 = vmatpush1.msra.mxu0 0.0
        %4364 = vmatprep.subr.mxu0 0.0
        %4365 = vmatpush1.msra.mxu0 0.0
        %4366 = vmatprep.subr.mxu0 0.0
        %4367 = vmatpush1.msra.mxu0 0.0
        %4368 = vmatprep.subr.mxu0 0.0
        %4369 = vmatpush1.msra.mxu0 0.0
        %4370 = vmatprep.subr.mxu0 0.0
        %4371 = vmatpush1.msra.mxu0 0.0
        %4372 = vmatprep.subr.mxu0 0.0
        %4373 = vmatpush1.msra.mxu0 0.0
        %4374 = vmatprep.subr.mxu0 0.0
        %4375 = vmatpush1.msra.mxu0 0.0
        %4376 = vmatprep.subr.mxu0 0.0
        %4377 = vmatpush1.msra.mxu0 0.0
        %4378 = vmatprep.subr.mxu0 0.0
        %4379 = vmatpush1.msra.mxu0 0.0
        %4380 = vmatprep.subr.mxu0 0.0
        %4381 = vmatpush1.msra.mxu0 0.0
        %4382 = vmatprep.subr.mxu0 0.0
        %4383 = vmatpush1.msra.mxu0 0.0
        %4384 = vmatprep.subr.mxu0 0.0
        %4385 = vmatpush1.msra.mxu0 0.0
        %4386 = vmatprep.subr.mxu0 0.0
        %4387 = vmatpush1.msra.mxu0 0.0
        %4388 = vmatprep.subr.mxu0 0.0
        %4389 = vmatpush1.msra.mxu0 0.0
        %4390 = vmatprep.subr.mxu0 0.0
        %4391 = vmatpush1.msra.mxu0 0.0
        %4392 = vmatprep.subr.mxu0 0.0
        %4393 = vmatpush1.msra.mxu0 0.0
        %4394 = vmatprep.subr.mxu0 0.0
        %4395 = vmatpush1.msra.mxu0 0.0
        %4396 = vmatprep.mubr.f32.mxu0 0.0
        %v4397 = vand.u32 %v4152, 4294901760
        %v4398 = vsub.f32 %v4152, %v4397
        %4399 = vmatmul.mubr.f32.gmra.mrb[0].mxu0 %v4398
        %v4400 = vpop.f32.mrb[0].mxu0
        %v4401 = vadd.f32 %v4321, %v4400
        %v4402 = vpop.f32.mrb[0].mxu0
        %4403 = vdwg.mxu0
        %4404 = vmatprep.subr.mxu0 0.0
        %v4405 = vand.u32 %v2060, 4294901760
        %4406 = vmatpush1.msra.mxu0 %v4405
        %4407 = vmatprep.subr.mxu0 0.0
        %v4408 = vand.u32 %v2061, 4294901760
        %4409 = vmatpush1.msra.mxu0 %v4408
        %4410 = vmatprep.subr.mxu0 0.0
        %v4411 = vand.u32 %v2062, 4294901760
        %4412 = vmatpush1.msra.mxu0 %v4411
        %4413 = vmatprep.subr.mxu0 0.0
        %v4414 = vand.u32 %v2063, 4294901760
        %4415 = vmatpush1.msra.mxu0 %v4414
        %4416 = vmatprep.subr.mxu0 0.0
        %4417 = vmatpush1.msra.mxu0 0.0
        %4418 = vmatprep.subr.mxu0 0.0
        %4419 = vmatpush1.msra.mxu0 0.0
        %4420 = vmatprep.subr.mxu0 0.0
        %4421 = vmatpush1.msra.mxu0 0.0
        %4422 = vmatprep.subr.mxu0 0.0
        %4423 = vmatpush1.msra.mxu0 0.0
        %4424 = vmatprep.subr.mxu0 0.0
        %4425 = vmatpush1.msra.mxu0 0.0
        %4426 = vmatprep.subr.mxu0 0.0
        %4427 = vmatpush1.msra.mxu0 0.0
        %4428 = vmatprep.subr.mxu0 0.0
        %4429 = vmatpush1.msra.mxu0 0.0
        %4430 = vmatprep.subr.mxu0 0.0
        %4431 = vmatpush1.msra.mxu0 0.0
        %4432 = vmatprep.subr.mxu0 0.0
        %4433 = vmatpush1.msra.mxu0 0.0
        %4434 = vmatprep.subr.mxu0 0.0
        %4435 = vmatpush1.msra.mxu0 0.0
        %4436 = vmatprep.subr.mxu0 0.0
        %4437 = vmatpush1.msra.mxu0 0.0
        %4438 = vmatprep.subr.mxu0 0.0
        %4439 = vmatpush1.msra.mxu0 0.0
        %4440 = vmatprep.subr.mxu0 0.0
        %4441 = vmatpush1.msra.mxu0 0.0
        %4442 = vmatprep.subr.mxu0 0.0
        %4443 = vmatpush1.msra.mxu0 0.0
        %4444 = vmatprep.subr.mxu0 0.0
        %4445 = vmatpush1.msra.mxu0 0.0
        %4446 = vmatprep.subr.mxu0 0.0
        %4447 = vmatpush1.msra.mxu0 0.0
        %4448 = vmatprep.subr.mxu0 0.0
        %4449 = vmatpush1.msra.mxu0 0.0
        %4450 = vmatprep.subr.mxu0 0.0
        %4451 = vmatpush1.msra.mxu0 0.0
        %4452 = vmatprep.subr.mxu0 0.0
        %4453 = vmatpush1.msra.mxu0 0.0
        %4454 = vmatprep.subr.mxu0 0.0
        %4455 = vmatpush1.msra.mxu0 0.0
        %4456 = vmatprep.subr.mxu0 0.0
        %4457 = vmatpush1.msra.mxu0 0.0
        %4458 = vmatprep.subr.mxu0 0.0
        %4459 = vmatpush1.msra.mxu0 0.0
        %4460 = vmatprep.subr.mxu0 0.0
        %4461 = vmatpush1.msra.mxu0 0.0
        %4462 = vmatprep.subr.mxu0 0.0
        %4463 = vmatpush1.msra.mxu0 0.0
        %4464 = vmatprep.subr.mxu0 0.0
        %4465 = vmatpush1.msra.mxu0 0.0
        %4466 = vmatprep.subr.mxu0 0.0
        %4467 = vmatpush1.msra.mxu0 0.0
        %4468 = vmatprep.subr.mxu0 0.0
        %4469 = vmatpush1.msra.mxu0 0.0
        %4470 = vmatprep.subr.mxu0 0.0
        %4471 = vmatpush1.msra.mxu0 0.0
        %4472 = vmatprep.mubr.f32.mxu0 0.0
        %v4473 = vand.u32 %v4152, 4294901760
        %v4474 = vsub.f32 %v4152, %v4473
        %v4475 = vand.u32 %v4474, 4294901760
        %4476 = vmatmul.mubr.f32.gmra.mrb[0].mxu0 %v4475
        %v4477 = vpop.f32.mrb[0].mxu0
        %v4478 = vadd.f32 %v4401, %v4477
        %v4479 = vpop.f32.mrb[0].mxu0
        %4480 = vdwg.mxu0
        %4481 = vmatprep.subr.mxu0 0.0
        %v4482 = vand.u32 %v2060, 4294901760
        %v4483 = vsub.f32 %v2060, %v4482
        %v4484 = vand.u32 %v4483, 4294901760
        %4485 = vmatpush1.msra.mxu0 %v4484
        %4486 = vmatprep.subr.mxu0 0.0
        %v4487 = vand.u32 %v2061, 4294901760
        %v4488 = vsub.f32 %v2061, %v4487
        %v4489 = vand.u32 %v4488, 4294901760
        %4490 = vmatpush1.msra.mxu0 %v4489
        %4491 = vmatprep.subr.mxu0 0.0
        %v4492 = vand.u32 %v2062, 4294901760
        %v4493 = vsub.f32 %v2062, %v4492
        %v4494 = vand.u32 %v4493, 4294901760
        %4495 = vmatpush1.msra.mxu0 %v4494
        %4496 = vmatprep.subr.mxu0 0.0
        %v4497 = vand.u32 %v2063, 4294901760
        %v4498 = vsub.f32 %v2063, %v4497
        %v4499 = vand.u32 %v4498, 4294901760
        %4500 = vmatpush1.msra.mxu0 %v4499
        %4501 = vmatprep.subr.mxu0 0.0
        %4502 = vmatpush1.msra.mxu0 0.0
        %4503 = vmatprep.subr.mxu0 0.0
        %4504 = vmatpush1.msra.mxu0 0.0
        %4505 = vmatprep.subr.mxu0 0.0
        %4506 = vmatpush1.msra.mxu0 0.0
        %4507 = vmatprep.subr.mxu0 0.0
        %4508 = vmatpush1.msra.mxu0 0.0
        %4509 = vmatprep.subr.mxu0 0.0
        %4510 = vmatpush1.msra.mxu0 0.0
        %4511 = vmatprep.subr.mxu0 0.0
        %4512 = vmatpush1.msra.mxu0 0.0
        %4513 = vmatprep.subr.mxu0 0.0
        %4514 = vmatpush1.msra.mxu0 0.0
        %4515 = vmatprep.subr.mxu0 0.0
        %4516 = vmatpush1.msra.mxu0 0.0
        %4517 = vmatprep.subr.mxu0 0.0
        %4518 = vmatpush1.msra.mxu0 0.0
        %4519 = vmatprep.subr.mxu0 0.0
        %4520 = vmatpush1.msra.mxu0 0.0
        %4521 = vmatprep.subr.mxu0 0.0
        %4522 = vmatpush1.msra.mxu0 0.0
        %4523 = vmatprep.subr.mxu0 0.0
        %4524 = vmatpush1.msra.mxu0 0.0
        %4525 = vmatprep.subr.mxu0 0.0
        %4526 = vmatpush1.msra.mxu0 0.0
        %4527 = vmatprep.subr.mxu0 0.0
        %4528 = vmatpush1.msra.mxu0 0.0
        %4529 = vmatprep.subr.mxu0 0.0
        %4530 = vmatpush1.msra.mxu0 0.0
        %4531 = vmatprep.subr.mxu0 0.0
        %4532 = vmatpush1.msra.mxu0 0.0
        %4533 = vmatprep.subr.mxu0 0.0
        %4534 = vmatpush1.msra.mxu0 0.0
        %4535 = vmatprep.subr.mxu0 0.0
        %4536 = vmatpush1.msra.mxu0 0.0
        %4537 = vmatprep.subr.mxu0 0.0
        %4538 = vmatpush1.msra.mxu0 0.0
        %4539 = vmatprep.subr.mxu0 0.0
        %4540 = vmatpush1.msra.mxu0 0.0
        %4541 = vmatprep.subr.mxu0 0.0
        %4542 = vmatpush1.msra.mxu0 0.0
        %4543 = vmatprep.subr.mxu0 0.0
        %4544 = vmatpush1.msra.mxu0 0.0
        %4545 = vmatprep.subr.mxu0 0.0
        %4546 = vmatpush1.msra.mxu0 0.0
        %4547 = vmatprep.subr.mxu0 0.0
        %4548 = vmatpush1.msra.mxu0 0.0
        %4549 = vmatprep.subr.mxu0 0.0
        %4550 = vmatpush1.msra.mxu0 0.0
        %4551 = vmatprep.subr.mxu0 0.0
        %4552 = vmatpush1.msra.mxu0 0.0
        %4553 = vmatprep.subr.mxu0 0.0
        %4554 = vmatpush1.msra.mxu0 0.0
        %4555 = vmatprep.subr.mxu0 0.0
        %4556 = vmatpush1.msra.mxu0 0.0
        %4557 = vmatprep.mubr.f32.mxu0 0.0
        %v4558 = vand.u32 %v4152, 4294901760
        %4559 = vmatmul.mubr.f32.gmra.mrb[0].mxu0 %v4558
        %v4560 = vpop.f32.mrb[0].mxu0
        %v4561 = vadd.f32 %v4478, %v4560
        %v4562 = vpop.f32.mrb[0].mxu0
        %4563 = vdwg.mxu0
        %4564 = vmatprep.subr.mxu0 0.0
        %v4565 = vand.u32 %v2060, 4294901760
        %4566 = vmatpush1.msra.mxu0 %v4565
        %4567 = vmatprep.subr.mxu0 0.0
        %v4568 = vand.u32 %v2061, 4294901760
        %4569 = vmatpush1.msra.mxu0 %v4568
        %4570 = vmatprep.subr.mxu0 0.0
        %v4571 = vand.u32 %v2062, 4294901760
        %4572 = vmatpush1.msra.mxu0 %v4571
        %4573 = vmatprep.subr.mxu0 0.0
        %v4574 = vand.u32 %v2063, 4294901760
        %4575 = vmatpush1.msra.mxu0 %v4574
        %4576 = vmatprep.subr.mxu0 0.0
        %4577 = vmatpush1.msra.mxu0 0.0
        %4578 = vmatprep.subr.mxu0 0.0
        %4579 = vmatpush1.msra.mxu0 0.0
        %4580 = vmatprep.subr.mxu0 0.0
        %4581 = vmatpush1.msra.mxu0 0.0
        %4582 = vmatprep.subr.mxu0 0.0
        %4583 = vmatpush1.msra.mxu0 0.0
        %4584 = vmatprep.subr.mxu0 0.0
        %4585 = vmatpush1.msra.mxu0 0.0
        %4586 = vmatprep.subr.mxu0 0.0
        %4587 = vmatpush1.msra.mxu0 0.0
        %4588 = vmatprep.subr.mxu0 0.0
        %4589 = vmatpush1.msra.mxu0 0.0
        %4590 = vmatprep.subr.mxu0 0.0
        %4591 = vmatpush1.msra.mxu0 0.0
        %4592 = vmatprep.subr.mxu0 0.0
        %4593 = vmatpush1.msra.mxu0 0.0
        %4594 = vmatprep.subr.mxu0 0.0
        %4595 = vmatpush1.msra.mxu0 0.0
        %4596 = vmatprep.subr.mxu0 0.0
        %4597 = vmatpush1.msra.mxu0 0.0
        %4598 = vmatprep.subr.mxu0 0.0
        %4599 = vmatpush1.msra.mxu0 0.0
        %4600 = vmatprep.subr.mxu0 0.0
        %4601 = vmatpush1.msra.mxu0 0.0
        %4602 = vmatprep.subr.mxu0 0.0
        %4603 = vmatpush1.msra.mxu0 0.0
        %4604 = vmatprep.subr.mxu0 0.0
        %4605 = vmatpush1.msra.mxu0 0.0
        %4606 = vmatprep.subr.mxu0 0.0
        %4607 = vmatpush1.msra.mxu0 0.0
        %4608 = vmatprep.subr.mxu0 0.0
        %4609 = vmatpush1.msra.mxu0 0.0
        %4610 = vmatprep.subr.mxu0 0.0
        %4611 = vmatpush1.msra.mxu0 0.0
        %4612 = vmatprep.subr.mxu0 0.0
        %4613 = vmatpush1.msra.mxu0 0.0
        %4614 = vmatprep.subr.mxu0 0.0
        %4615 = vmatpush1.msra.mxu0 0.0
        %4616 = vmatprep.subr.mxu0 0.0
        %4617 = vmatpush1.msra.mxu0 0.0
        %4618 = vmatprep.subr.mxu0 0.0
        %4619 = vmatpush1.msra.mxu0 0.0
        %4620 = vmatprep.subr.mxu0 0.0
        %4621 = vmatpush1.msra.mxu0 0.0
        %4622 = vmatprep.subr.mxu0 0.0
        %4623 = vmatpush1.msra.mxu0 0.0
        %4624 = vmatprep.subr.mxu0 0.0
        %4625 = vmatpush1.msra.mxu0 0.0
        %4626 = vmatprep.subr.mxu0 0.0
        %4627 = vmatpush1.msra.mxu0 0.0
        %4628 = vmatprep.subr.mxu0 0.0
        %4629 = vmatpush1.msra.mxu0 0.0
        %4630 = vmatprep.subr.mxu0 0.0
        %4631 = vmatpush1.msra.mxu0 0.0
        %4632 = vmatprep.mubr.f32.mxu0 0.0
        %v4633 = vand.u32 %v4152, 4294901760
        %4634 = vmatmul.mubr.f32.gmra.mrb[0].mxu0 %v4633
        %v4635 = vpop.f32.mrb[0].mxu0
        %v4636 = vadd.f32 %v4561, %v4635
        %v4637 = vpop.f32.mrb[0].mxu0
        %4638 = vdwg.mxu0
        %v4639 = vadd.f32 %v4151, %v4636
        %v4640 = vxor.u32 %v4639, 2147483648
        %v4641 = vmul.f32 %v4640, 1.442695
        %v4642 = vpow.pop %v4641
        %v4643 = vadd.f32 %v4642, 1.0
        %v4644 = vrcp.pop %v4643
        %v4645 = vmul.f32 1.0, %v4644
        %v4646 = vtanh.pop %v4639
        %v4647 = vmul.f32 %v4645, %v4137
        %4649 = vrot.lane.b32.xlu0 %v4646, 64
        %v4650 = vpop.permute.xlu0 %4649
        %v4652 = vmul.f32 %v4645, %v4650
        %4654 = vrot.lane.b32.xlu0 %v4652, 32
        %v4655 = vpop.permute.xlu0 %4654
        %v4657 = vadd.f32 %v4647, %v4655
        %v4658 = vtanh.pop %v4657
        %4660 = vrot.lane.b32.xlu0 %v4658, 64
        %v4661 = vpop.permute.xlu0 %4660
        %v4663 = vmul.f32 %v4645, %v4661
        %4665 = vrot.lane.b32.xlu0 %v4663, 32
        %v4666 = vpop.permute.xlu0 %4665
        %s4668 = scalar_lea.vmem [#allocation2], 32
        %4669 = vst.msk [vmem:[%s4668] sm:$0xff] %vm2067, %v4666
        %s4670 = scalar_lea.vmem [#allocation3], 40
        %v4671 = vld [vmem:[%s4670] sm:$0xff]
        %v4672 = vsel %vm2067, %v4666, 0
        %4674 = vmatprep.subr.mxu0 0.0
        %v4675 = vand.u32 %v2060, 4294901760
        %4676 = vmatpush1.msra.mxu0 %v4675
        %4677 = vmatprep.subr.mxu0 0.0
        %v4678 = vand.u32 %v2061, 4294901760
        %4679 = vmatpush1.msra.mxu0 %v4678
        %4680 = vmatprep.subr.mxu0 0.0
        %v4681 = vand.u32 %v2062, 4294901760
        %4682 = vmatpush1.msra.mxu0 %v4681
        %4683 = vmatprep.subr.mxu0 0.0
        %v4684 = vand.u32 %v2063, 4294901760
        %4685 = vmatpush1.msra.mxu0 %v4684
        %4686 = vmatprep.subr.mxu0 0.0
        %4687 = vmatpush1.msra.mxu0 0.0
        %4688 = vmatprep.subr.mxu0 0.0
        %4689 = vmatpush1.msra.mxu0 0.0
        %4690 = vmatprep.subr.mxu0 0.0
        %4691 = vmatpush1.msra.mxu0 0.0
        %4692 = vmatprep.subr.mxu0 0.0
        %4693 = vmatpush1.msra.mxu0 0.0
        %4694 = vmatprep.subr.mxu0 0.0
        %4695 = vmatpush1.msra.mxu0 0.0
        %4696 = vmatprep.subr.mxu0 0.0
        %4697 = vmatpush1.msra.mxu0 0.0
        %4698 = vmatprep.subr.mxu0 0.0
        %4699 = vmatpush1.msra.mxu0 0.0
        %4700 = vmatprep.subr.mxu0 0.0
        %4701 = vmatpush1.msra.mxu0 0.0
        %4702 = vmatprep.subr.mxu0 0.0
        %4703 = vmatpush1.msra.mxu0 0.0
        %4704 = vmatprep.subr.mxu0 0.0
        %4705 = vmatpush1.msra.mxu0 0.0
        %4706 = vmatprep.subr.mxu0 0.0
        %4707 = vmatpush1.msra.mxu0 0.0
        %4708 = vmatprep.subr.mxu0 0.0
        %4709 = vmatpush1.msra.mxu0 0.0
        %4710 = vmatprep.subr.mxu0 0.0
        %4711 = vmatpush1.msra.mxu0 0.0
        %4712 = vmatprep.subr.mxu0 0.0
        %4713 = vmatpush1.msra.mxu0 0.0
        %4714 = vmatprep.subr.mxu0 0.0
        %4715 = vmatpush1.msra.mxu0 0.0
        %4716 = vmatprep.subr.mxu0 0.0
        %4717 = vmatpush1.msra.mxu0 0.0
        %4718 = vmatprep.subr.mxu0 0.0
        %4719 = vmatpush1.msra.mxu0 0.0
        %4720 = vmatprep.subr.mxu0 0.0
        %4721 = vmatpush1.msra.mxu0 0.0
        %4722 = vmatprep.subr.mxu0 0.0
        %4723 = vmatpush1.msra.mxu0 0.0
        %4724 = vmatprep.subr.mxu0 0.0
        %4725 = vmatpush1.msra.mxu0 0.0
        %4726 = vmatprep.subr.mxu0 0.0
        %4727 = vmatpush1.msra.mxu0 0.0
        %4728 = vmatprep.subr.mxu0 0.0
        %4729 = vmatpush1.msra.mxu0 0.0
        %4730 = vmatprep.subr.mxu0 0.0
        %4731 = vmatpush1.msra.mxu0 0.0
        %4732 = vmatprep.subr.mxu0 0.0
        %4733 = vmatpush1.msra.mxu0 0.0
        %4734 = vmatprep.subr.mxu0 0.0
        %4735 = vmatpush1.msra.mxu0 0.0
        %4736 = vmatprep.subr.mxu0 0.0
        %4737 = vmatpush1.msra.mxu0 0.0
        %4738 = vmatprep.subr.mxu0 0.0
        %4739 = vmatpush1.msra.mxu0 0.0
        %4740 = vmatprep.subr.mxu0 0.0
        %4741 = vmatpush1.msra.mxu0 0.0
        %4742 = vmatprep.mubr.f32.mxu0 0.0
        %v4743 = vand.u32 %v4672, 4294901760
        %v4744 = vsub.f32 %v4672, %v4743
        %v4745 = vand.u32 %v4744, 4294901760
        %v4746 = vsub.f32 %v4744, %v4745
        %v4747 = vand.u32 %v4746, 4294901760
        %4748 = vmatmul.mubr.f32.gmra.mrb[0].mxu0 %v4747
        %v4749 = vpop.f32.mrb[0].mxu0
        %v4750 = vadd.f32 0.0, %v4749
        %v4751 = vpop.f32.mrb[0].mxu0
        %4752 = vdwg.mxu0
        %4753 = vmatprep.subr.mxu0 0.0
        %v4754 = vand.u32 %v2060, 4294901760
        %v4755 = vsub.f32 %v2060, %v4754
        %v4756 = vand.u32 %v4755, 4294901760
        %v4757 = vsub.f32 %v4755, %v4756
        %v4758 = vand.u32 %v4757, 4294901760
        %4759 = vmatpush1.msra.mxu0 %v4758
        %4760 = vmatprep.subr.mxu0 0.0
        %v4761 = vand.u32 %v2061, 4294901760
        %v4762 = vsub.f32 %v2061, %v4761
        %v4763 = vand.u32 %v4762, 4294901760
        %v4764 = vsub.f32 %v4762, %v4763
        %v4765 = vand.u32 %v4764, 4294901760
        %4766 = vmatpush1.msra.mxu0 %v4765
        %4767 = vmatprep.subr.mxu0 0.0
        %v4768 = vand.u32 %v2062, 4294901760
        %v4769 = vsub.f32 %v2062, %v4768
        %v4770 = vand.u32 %v4769, 4294901760
        %v4771 = vsub.f32 %v4769, %v4770
        %v4772 = vand.u32 %v4771, 4294901760
        %4773 = vmatpush1.msra.mxu0 %v4772
        %4774 = vmatprep.subr.mxu0 0.0
        %v4775 = vand.u32 %v2063, 4294901760
        %v4776 = vsub.f32 %v2063, %v4775
        %v4777 = vand.u32 %v4776, 4294901760
        %v4778 = vsub.f32 %v4776, %v4777
        %v4779 = vand.u32 %v4778, 4294901760
        %4780 = vmatpush1.msra.mxu0 %v4779
        %4781 = vmatprep.subr.mxu0 0.0
        %4782 = vmatpush1.msra.mxu0 0.0
        %4783 = vmatprep.subr.mxu0 0.0
        %4784 = vmatpush1.msra.mxu0 0.0
        %4785 = vmatprep.subr.mxu0 0.0
        %4786 = vmatpush1.msra.mxu0 0.0
        %4787 = vmatprep.subr.mxu0 0.0
        %4788 = vmatpush1.msra.mxu0 0.0
        %4789 = vmatprep.subr.mxu0 0.0
        %4790 = vmatpush1.msra.mxu0 0.0
        %4791 = vmatprep.subr.mxu0 0.0
        %4792 = vmatpush1.msra.mxu0 0.0
        %4793 = vmatprep.subr.mxu0 0.0
        %4794 = vmatpush1.msra.mxu0 0.0
        %4795 = vmatprep.subr.mxu0 0.0
        %4796 = vmatpush1.msra.mxu0 0.0
        %4797 = vmatprep.subr.mxu0 0.0
        %4798 = vmatpush1.msra.mxu0 0.0
        %4799 = vmatprep.subr.mxu0 0.0
        %4800 = vmatpush1.msra.mxu0 0.0
        %4801 = vmatprep.subr.mxu0 0.0
        %4802 = vmatpush1.msra.mxu0 0.0
        %4803 = vmatprep.subr.mxu0 0.0
        %4804 = vmatpush1.msra.mxu0 0.0
        %4805 = vmatprep.subr.mxu0 0.0
        %4806 = vmatpush1.msra.mxu0 0.0
        %4807 = vmatprep.subr.mxu0 0.0
        %4808 = vmatpush1.msra.mxu0 0.0
        %4809 = vmatprep.subr.mxu0 0.0
        %4810 = vmatpush1.msra.mxu0 0.0
        %4811 = vmatprep.subr.mxu0 0.0
        %4812 = vmatpush1.msra.mxu0 0.0
        %4813 = vmatprep.subr.mxu0 0.0
        %4814 = vmatpush1.msra.mxu0 0.0
        %4815 = vmatprep.subr.mxu0 0.0
        %4816 = vmatpush1.msra.mxu0 0.0
        %4817 = vmatprep.subr.mxu0 0.0
        %4818 = vmatpush1.msra.mxu0 0.0
        %4819 = vmatprep.subr.mxu0 0.0
        %4820 = vmatpush1.msra.mxu0 0.0
        %4821 = vmatprep.subr.mxu0 0.0
        %4822 = vmatpush1.msra.mxu0 0.0
        %4823 = vmatprep.subr.mxu0 0.0
        %4824 = vmatpush1.msra.mxu0 0.0
        %4825 = vmatprep.subr.mxu0 0.0
        %4826 = vmatpush1.msra.mxu0 0.0
        %4827 = vmatprep.subr.mxu0 0.0
        %4828 = vmatpush1.msra.mxu0 0.0
        %4829 = vmatprep.subr.mxu0 0.0
        %4830 = vmatpush1.msra.mxu0 0.0
        %4831 = vmatprep.subr.mxu0 0.0
        %4832 = vmatpush1.msra.mxu0 0.0
        %4833 = vmatprep.subr.mxu0 0.0
        %4834 = vmatpush1.msra.mxu0 0.0
        %4835 = vmatprep.subr.mxu0 0.0
        %4836 = vmatpush1.msra.mxu0 0.0
        %4837 = vmatprep.mubr.f32.mxu0 0.0
        %v4838 = vand.u32 %v4672, 4294901760
        %4839 = vmatmul.mubr.f32.gmra.mrb[0].mxu0 %v4838
        %v4840 = vpop.f32.mrb[0].mxu0
        %v4841 = vadd.f32 %v4750, %v4840
        %v4842 = vpop.f32.mrb[0].mxu0
        %4843 = vdwg.mxu0
        %4844 = vmatprep.subr.mxu0 0.0
        %v4845 = vand.u32 %v2060, 4294901760
        %v4846 = vsub.f32 %v2060, %v4845
        %4847 = vmatpush1.msra.mxu0 %v4846
        %4848 = vmatprep.subr.mxu0 0.0
        %v4849 = vand.u32 %v2061, 4294901760
        %v4850 = vsub.f32 %v2061, %v4849
        %4851 = vmatpush1.msra.mxu0 %v4850
        %4852 = vmatprep.subr.mxu0 0.0
        %v4853 = vand.u32 %v2062, 4294901760
        %v4854 = vsub.f32 %v2062, %v4853
        %4855 = vmatpush1.msra.mxu0 %v4854
        %4856 = vmatprep.subr.mxu0 0.0
        %v4857 = vand.u32 %v2063, 4294901760
        %v4858 = vsub.f32 %v2063, %v4857
        %4859 = vmatpush1.msra.mxu0 %v4858
        %4860 = vmatprep.subr.mxu0 0.0
        %4861 = vmatpush1.msra.mxu0 0.0
        %4862 = vmatprep.subr.mxu0 0.0
        %4863 = vmatpush1.msra.mxu0 0.0
        %4864 = vmatprep.subr.mxu0 0.0
        %4865 = vmatpush1.msra.mxu0 0.0
        %4866 = vmatprep.subr.mxu0 0.0
        %4867 = vmatpush1.msra.mxu0 0.0
        %4868 = vmatprep.subr.mxu0 0.0
        %4869 = vmatpush1.msra.mxu0 0.0
        %4870 = vmatprep.subr.mxu0 0.0
        %4871 = vmatpush1.msra.mxu0 0.0
        %4872 = vmatprep.subr.mxu0 0.0
        %4873 = vmatpush1.msra.mxu0 0.0
        %4874 = vmatprep.subr.mxu0 0.0
        %4875 = vmatpush1.msra.mxu0 0.0
        %4876 = vmatprep.subr.mxu0 0.0
        %4877 = vmatpush1.msra.mxu0 0.0
        %4878 = vmatprep.subr.mxu0 0.0
        %4879 = vmatpush1.msra.mxu0 0.0
        %4880 = vmatprep.subr.mxu0 0.0
        %4881 = vmatpush1.msra.mxu0 0.0
        %4882 = vmatprep.subr.mxu0 0.0
        %4883 = vmatpush1.msra.mxu0 0.0
        %4884 = vmatprep.subr.mxu0 0.0
        %4885 = vmatpush1.msra.mxu0 0.0
        %4886 = vmatprep.subr.mxu0 0.0
        %4887 = vmatpush1.msra.mxu0 0.0
        %4888 = vmatprep.subr.mxu0 0.0
        %4889 = vmatpush1.msra.mxu0 0.0
        %4890 = vmatprep.subr.mxu0 0.0
        %4891 = vmatpush1.msra.mxu0 0.0
        %4892 = vmatprep.subr.mxu0 0.0
        %4893 = vmatpush1.msra.mxu0 0.0
        %4894 = vmatprep.subr.mxu0 0.0
        %4895 = vmatpush1.msra.mxu0 0.0
        %4896 = vmatprep.subr.mxu0 0.0
        %4897 = vmatpush1.msra.mxu0 0.0
        %4898 = vmatprep.subr.mxu0 0.0
        %4899 = vmatpush1.msra.mxu0 0.0
        %4900 = vmatprep.subr.mxu0 0.0
        %4901 = vmatpush1.msra.mxu0 0.0
        %4902 = vmatprep.subr.mxu0 0.0
        %4903 = vmatpush1.msra.mxu0 0.0
        %4904 = vmatprep.subr.mxu0 0.0
        %4905 = vmatpush1.msra.mxu0 0.0
        %4906 = vmatprep.subr.mxu0 0.0
        %4907 = vmatpush1.msra.mxu0 0.0
        %4908 = vmatprep.subr.mxu0 0.0
        %4909 = vmatpush1.msra.mxu0 0.0
        %4910 = vmatprep.subr.mxu0 0.0
        %4911 = vmatpush1.msra.mxu0 0.0
        %4912 = vmatprep.subr.mxu0 0.0
        %4913 = vmatpush1.msra.mxu0 0.0
        %4914 = vmatprep.subr.mxu0 0.0
        %4915 = vmatpush1.msra.mxu0 0.0
        %4916 = vmatprep.mubr.f32.mxu0 0.0
        %v4917 = vand.u32 %v4672, 4294901760
        %v4918 = vsub.f32 %v4672, %v4917
        %4919 = vmatmul.mubr.f32.gmra.mrb[0].mxu0 %v4918
        %v4920 = vpop.f32.mrb[0].mxu0
        %v4921 = vadd.f32 %v4841, %v4920
        %v4922 = vpop.f32.mrb[0].mxu0
        %4923 = vdwg.mxu0
        %4924 = vmatprep.subr.mxu0 0.0
        %v4925 = vand.u32 %v2060, 4294901760
        %4926 = vmatpush1.msra.mxu0 %v4925
        %4927 = vmatprep.subr.mxu0 0.0
        %v4928 = vand.u32 %v2061, 4294901760
        %4929 = vmatpush1.msra.mxu0 %v4928
        %4930 = vmatprep.subr.mxu0 0.0
        %v4931 = vand.u32 %v2062, 4294901760
        %4932 = vmatpush1.msra.mxu0 %v4931
        %4933 = vmatprep.subr.mxu0 0.0
        %v4934 = vand.u32 %v2063, 4294901760
        %4935 = vmatpush1.msra.mxu0 %v4934
        %4936 = vmatprep.subr.mxu0 0.0
        %4937 = vmatpush1.msra.mxu0 0.0
        %4938 = vmatprep.subr.mxu0 0.0
        %4939 = vmatpush1.msra.mxu0 0.0
        %4940 = vmatprep.subr.mxu0 0.0
        %4941 = vmatpush1.msra.mxu0 0.0
        %4942 = vmatprep.subr.mxu0 0.0
        %4943 = vmatpush1.msra.mxu0 0.0
        %4944 = vmatprep.subr.mxu0 0.0
        %4945 = vmatpush1.msra.mxu0 0.0
        %4946 = vmatprep.subr.mxu0 0.0
        %4947 = vmatpush1.msra.mxu0 0.0
        %4948 = vmatprep.subr.mxu0 0.0
        %4949 = vmatpush1.msra.mxu0 0.0
        %4950 = vmatprep.subr.mxu0 0.0
        %4951 = vmatpush1.msra.mxu0 0.0
        %4952 = vmatprep.subr.mxu0 0.0
        %4953 = vmatpush1.msra.mxu0 0.0
        %4954 = vmatprep.subr.mxu0 0.0
        %4955 = vmatpush1.msra.mxu0 0.0
        %4956 = vmatprep.subr.mxu0 0.0
        %4957 = vmatpush1.msra.mxu0 0.0
        %4958 = vmatprep.subr.mxu0 0.0
        %4959 = vmatpush1.msra.mxu0 0.0
        %4960 = vmatprep.subr.mxu0 0.0
        %4961 = vmatpush1.msra.mxu0 0.0
        %4962 = vmatprep.subr.mxu0 0.0
        %4963 = vmatpush1.msra.mxu0 0.0
        %4964 = vmatprep.subr.mxu0 0.0
        %4965 = vmatpush1.msra.mxu0 0.0
        %4966 = vmatprep.subr.mxu0 0.0
        %4967 = vmatpush1.msra.mxu0 0.0
        %4968 = vmatprep.subr.mxu0 0.0
        %4969 = vmatpush1.msra.mxu0 0.0
        %4970 = vmatprep.subr.mxu0 0.0
        %4971 = vmatpush1.msra.mxu0 0.0
        %4972 = vmatprep.subr.mxu0 0.0
        %4973 = vmatpush1.msra.mxu0 0.0
        %4974 = vmatprep.subr.mxu0 0.0
        %4975 = vmatpush1.msra.mxu0 0.0
        %4976 = vmatprep.subr.mxu0 0.0
        %4977 = vmatpush1.msra.mxu0 0.0
        %4978 = vmatprep.subr.mxu0 0.0
        %4979 = vmatpush1.msra.mxu0 0.0
        %4980 = vmatprep.subr.mxu0 0.0
        %4981 = vmatpush1.msra.mxu0 0.0
        %4982 = vmatprep.subr.mxu0 0.0
        %4983 = vmatpush1.msra.mxu0 0.0
        %4984 = vmatprep.subr.mxu0 0.0
        %4985 = vmatpush1.msra.mxu0 0.0
        %4986 = vmatprep.subr.mxu0 0.0
        %4987 = vmatpush1.msra.mxu0 0.0
        %4988 = vmatprep.subr.mxu0 0.0
        %4989 = vmatpush1.msra.mxu0 0.0
        %4990 = vmatprep.subr.mxu0 0.0
        %4991 = vmatpush1.msra.mxu0 0.0
        %4992 = vmatprep.mubr.f32.mxu0 0.0
        %v4993 = vand.u32 %v4672, 4294901760
        %v4994 = vsub.f32 %v4672, %v4993
        %v4995 = vand.u32 %v4994, 4294901760
        %4996 = vmatmul.mubr.f32.gmra.mrb[0].mxu0 %v4995
        %v4997 = vpop.f32.mrb[0].mxu0
        %v4998 = vadd.f32 %v4921, %v4997
        %v4999 = vpop.f32.mrb[0].mxu0
        %5000 = vdwg.mxu0
        %5001 = vmatprep.subr.mxu0 0.0
        %v5002 = vand.u32 %v2060, 4294901760
        %v5003 = vsub.f32 %v2060, %v5002
        %v5004 = vand.u32 %v5003, 4294901760
        %5005 = vmatpush1.msra.mxu0 %v5004
        %5006 = vmatprep.subr.mxu0 0.0
        %v5007 = vand.u32 %v2061, 4294901760
        %v5008 = vsub.f32 %v2061, %v5007
        %v5009 = vand.u32 %v5008, 4294901760
        %5010 = vmatpush1.msra.mxu0 %v5009
        %5011 = vmatprep.subr.mxu0 0.0
        %v5012 = vand.u32 %v2062, 4294901760
        %v5013 = vsub.f32 %v2062, %v5012
        %v5014 = vand.u32 %v5013, 4294901760
        %5015 = vmatpush1.msra.mxu0 %v5014
        %5016 = vmatprep.subr.mxu0 0.0
        %v5017 = vand.u32 %v2063, 4294901760
        %v5018 = vsub.f32 %v2063, %v5017
        %v5019 = vand.u32 %v5018, 4294901760
        %5020 = vmatpush1.msra.mxu0 %v5019
        %5021 = vmatprep.subr.mxu0 0.0
        %5022 = vmatpush1.msra.mxu0 0.0
        %5023 = vmatprep.subr.mxu0 0.0
        %5024 = vmatpush1.msra.mxu0 0.0
        %5025 = vmatprep.subr.mxu0 0.0
        %5026 = vmatpush1.msra.mxu0 0.0
        %5027 = vmatprep.subr.mxu0 0.0
        %5028 = vmatpush1.msra.mxu0 0.0
        %5029 = vmatprep.subr.mxu0 0.0
        %5030 = vmatpush1.msra.mxu0 0.0
        %5031 = vmatprep.subr.mxu0 0.0
        %5032 = vmatpush1.msra.mxu0 0.0
        %5033 = vmatprep.subr.mxu0 0.0
        %5034 = vmatpush1.msra.mxu0 0.0
        %5035 = vmatprep.subr.mxu0 0.0
        %5036 = vmatpush1.msra.mxu0 0.0
        %5037 = vmatprep.subr.mxu0 0.0
        %5038 = vmatpush1.msra.mxu0 0.0
        %5039 = vmatprep.subr.mxu0 0.0
        %5040 = vmatpush1.msra.mxu0 0.0
        %5041 = vmatprep.subr.mxu0 0.0
        %5042 = vmatpush1.msra.mxu0 0.0
        %5043 = vmatprep.subr.mxu0 0.0
        %5044 = vmatpush1.msra.mxu0 0.0
        %5045 = vmatprep.subr.mxu0 0.0
        %5046 = vmatpush1.msra.mxu0 0.0
        %5047 = vmatprep.subr.mxu0 0.0
        %5048 = vmatpush1.msra.mxu0 0.0
        %5049 = vmatprep.subr.mxu0 0.0
        %5050 = vmatpush1.msra.mxu0 0.0
        %5051 = vmatprep.subr.mxu0 0.0
        %5052 = vmatpush1.msra.mxu0 0.0
        %5053 = vmatprep.subr.mxu0 0.0
        %5054 = vmatpush1.msra.mxu0 0.0
        %5055 = vmatprep.subr.mxu0 0.0
        %5056 = vmatpush1.msra.mxu0 0.0
        %5057 = vmatprep.subr.mxu0 0.0
        %5058 = vmatpush1.msra.mxu0 0.0
        %5059 = vmatprep.subr.mxu0 0.0
        %5060 = vmatpush1.msra.mxu0 0.0
        %5061 = vmatprep.subr.mxu0 0.0
        %5062 = vmatpush1.msra.mxu0 0.0
        %5063 = vmatprep.subr.mxu0 0.0
        %5064 = vmatpush1.msra.mxu0 0.0
        %5065 = vmatprep.subr.mxu0 0.0
        %5066 = vmatpush1.msra.mxu0 0.0
        %5067 = vmatprep.subr.mxu0 0.0
        %5068 = vmatpush1.msra.mxu0 0.0
        %5069 = vmatprep.subr.mxu0 0.0
        %5070 = vmatpush1.msra.mxu0 0.0
        %5071 = vmatprep.subr.mxu0 0.0
        %5072 = vmatpush1.msra.mxu0 0.0
        %5073 = vmatprep.subr.mxu0 0.0
        %5074 = vmatpush1.msra.mxu0 0.0
        %5075 = vmatprep.subr.mxu0 0.0
        %5076 = vmatpush1.msra.mxu0 0.0
        %5077 = vmatprep.mubr.f32.mxu0 0.0
        %v5078 = vand.u32 %v4672, 4294901760
        %5079 = vmatmul.mubr.f32.gmra.mrb[0].mxu0 %v5078
        %v5080 = vpop.f32.mrb[0].mxu0
        %v5081 = vadd.f32 %v4998, %v5080
        %v5082 = vpop.f32.mrb[0].mxu0
        %5083 = vdwg.mxu0
        %5084 = vmatprep.subr.mxu0 0.0
        %v5085 = vand.u32 %v2060, 4294901760
        %5086 = vmatpush1.msra.mxu0 %v5085
        %5087 = vmatprep.subr.mxu0 0.0
        %v5088 = vand.u32 %v2061, 4294901760
        %5089 = vmatpush1.msra.mxu0 %v5088
        %5090 = vmatprep.subr.mxu0 0.0
        %v5091 = vand.u32 %v2062, 4294901760
        %5092 = vmatpush1.msra.mxu0 %v5091
        %5093 = vmatprep.subr.mxu0 0.0
        %v5094 = vand.u32 %v2063, 4294901760
        %5095 = vmatpush1.msra.mxu0 %v5094
        %5096 = vmatprep.subr.mxu0 0.0
        %5097 = vmatpush1.msra.mxu0 0.0
        %5098 = vmatprep.subr.mxu0 0.0
        %5099 = vmatpush1.msra.mxu0 0.0
        %5100 = vmatprep.subr.mxu0 0.0
        %5101 = vmatpush1.msra.mxu0 0.0
        %5102 = vmatprep.subr.mxu0 0.0
        %5103 = vmatpush1.msra.mxu0 0.0
        %5104 = vmatprep.subr.mxu0 0.0
        %5105 = vmatpush1.msra.mxu0 0.0
        %5106 = vmatprep.subr.mxu0 0.0
        %5107 = vmatpush1.msra.mxu0 0.0
        %5108 = vmatprep.subr.mxu0 0.0
        %5109 = vmatpush1.msra.mxu0 0.0
        %5110 = vmatprep.subr.mxu0 0.0
        %5111 = vmatpush1.msra.mxu0 0.0
        %5112 = vmatprep.subr.mxu0 0.0
        %5113 = vmatpush1.msra.mxu0 0.0
        %5114 = vmatprep.subr.mxu0 0.0
        %5115 = vmatpush1.msra.mxu0 0.0
        %5116 = vmatprep.subr.mxu0 0.0
        %5117 = vmatpush1.msra.mxu0 0.0
        %5118 = vmatprep.subr.mxu0 0.0
        %5119 = vmatpush1.msra.mxu0 0.0
        %5120 = vmatprep.subr.mxu0 0.0
        %5121 = vmatpush1.msra.mxu0 0.0
        %5122 = vmatprep.subr.mxu0 0.0
        %5123 = vmatpush1.msra.mxu0 0.0
        %5124 = vmatprep.subr.mxu0 0.0
        %5125 = vmatpush1.msra.mxu0 0.0
        %5126 = vmatprep.subr.mxu0 0.0
        %5127 = vmatpush1.msra.mxu0 0.0
        %5128 = vmatprep.subr.mxu0 0.0
        %5129 = vmatpush1.msra.mxu0 0.0
        %5130 = vmatprep.subr.mxu0 0.0
        %5131 = vmatpush1.msra.mxu0 0.0
        %5132 = vmatprep.subr.mxu0 0.0
        %5133 = vmatpush1.msra.mxu0 0.0
        %5134 = vmatprep.subr.mxu0 0.0
        %5135 = vmatpush1.msra.mxu0 0.0
        %5136 = vmatprep.subr.mxu0 0.0
        %5137 = vmatpush1.msra.mxu0 0.0
        %5138 = vmatprep.subr.mxu0 0.0
        %5139 = vmatpush1.msra.mxu0 0.0
        %5140 = vmatprep.subr.mxu0 0.0
        %5141 = vmatpush1.msra.mxu0 0.0
        %5142 = vmatprep.subr.mxu0 0.0
        %5143 = vmatpush1.msra.mxu0 0.0
        %5144 = vmatprep.subr.mxu0 0.0
        %5145 = vmatpush1.msra.mxu0 0.0
        %5146 = vmatprep.subr.mxu0 0.0
        %5147 = vmatpush1.msra.mxu0 0.0
        %5148 = vmatprep.subr.mxu0 0.0
        %5149 = vmatpush1.msra.mxu0 0.0
        %5150 = vmatprep.subr.mxu0 0.0
        %5151 = vmatpush1.msra.mxu0 0.0
        %5152 = vmatprep.mubr.f32.mxu0 0.0
        %v5153 = vand.u32 %v4672, 4294901760
        %5154 = vmatmul.mubr.f32.gmra.mrb[0].mxu0 %v5153
        %v5155 = vpop.f32.mrb[0].mxu0
        %v5156 = vadd.f32 %v5081, %v5155
        %v5157 = vpop.f32.mrb[0].mxu0
        %5158 = vdwg.mxu0
        %v5159 = vadd.f32 %v4671, %v5156
        %v5160 = vxor.u32 %v5159, 2147483648
        %v5161 = vmul.f32 %v5160, 1.442695
        %v5162 = vpow.pop %v5161
        %v5163 = vadd.f32 %v5162, 1.0
        %v5164 = vrcp.pop %v5163
        %v5165 = vmul.f32 1.0, %v5164
        %v5166 = vtanh.pop %v5159
        %v5167 = vmul.f32 %v5165, %v4657
        %5169 = vrot.lane.b32.xlu0 %v5166, 64
        %v5170 = vpop.permute.xlu0 %5169
        %v5172 = vmul.f32 %v5165, %v5170
        %5174 = vrot.lane.b32.xlu0 %v5172, 32
        %v5175 = vpop.permute.xlu0 %5174
        %v5177 = vadd.f32 %v5167, %v5175
        %v5178 = vtanh.pop %v5177
        %5180 = vrot.lane.b32.xlu0 %v5178, 64
        %v5181 = vpop.permute.xlu0 %5180
        %v5183 = vmul.f32 %v5165, %v5181
        %5185 = vrot.lane.b32.xlu0 %v5183, 32
        %v5186 = vpop.permute.xlu0 %5185
        %s5188 = scalar_lea.vmem [#allocation2], 40
        %5189 = vst.msk [vmem:[%s5188] sm:$0xff] %vm2067, %v5186
        %s5190 = scalar_lea.vmem [#allocation3], 48
        %v5191 = vld [vmem:[%s5190] sm:$0xff]
        %v5192 = vsel %vm2067, %v5186, 0
        %5194 = vmatprep.subr.mxu0 0.0
        %v5195 = vand.u32 %v2060, 4294901760
        %5196 = vmatpush1.msra.mxu0 %v5195
        %5197 = vmatprep.subr.mxu0 0.0
        %v5198 = vand.u32 %v2061, 4294901760
        %5199 = vmatpush1.msra.mxu0 %v5198
        %5200 = vmatprep.subr.mxu0 0.0
        %v5201 = vand.u32 %v2062, 4294901760
        %5202 = vmatpush1.msra.mxu0 %v5201
        %5203 = vmatprep.subr.mxu0 0.0
        %v5204 = vand.u32 %v2063, 4294901760
        %5205 = vmatpush1.msra.mxu0 %v5204
        %5206 = vmatprep.subr.mxu0 0.0
        %5207 = vmatpush1.msra.mxu0 0.0
        %5208 = vmatprep.subr.mxu0 0.0
        %5209 = vmatpush1.msra.mxu0 0.0
        %5210 = vmatprep.subr.mxu0 0.0
        %5211 = vmatpush1.msra.mxu0 0.0
        %5212 = vmatprep.subr.mxu0 0.0
        %5213 = vmatpush1.msra.mxu0 0.0
        %5214 = vmatprep.subr.mxu0 0.0
        %5215 = vmatpush1.msra.mxu0 0.0
        %5216 = vmatprep.subr.mxu0 0.0
        %5217 = vmatpush1.msra.mxu0 0.0
        %5218 = vmatprep.subr.mxu0 0.0
        %5219 = vmatpush1.msra.mxu0 0.0
        %5220 = vmatprep.subr.mxu0 0.0
        %5221 = vmatpush1.msra.mxu0 0.0
        %5222 = vmatprep.subr.mxu0 0.0
        %5223 = vmatpush1.msra.mxu0 0.0
        %5224 = vmatprep.subr.mxu0 0.0
        %5225 = vmatpush1.msra.mxu0 0.0
        %5226 = vmatprep.subr.mxu0 0.0
        %5227 = vmatpush1.msra.mxu0 0.0
        %5228 = vmatprep.subr.mxu0 0.0
        %5229 = vmatpush1.msra.mxu0 0.0
        %5230 = vmatprep.subr.mxu0 0.0
        %5231 = vmatpush1.msra.mxu0 0.0
        %5232 = vmatprep.subr.mxu0 0.0
        %5233 = vmatpush1.msra.mxu0 0.0
        %5234 = vmatprep.subr.mxu0 0.0
        %5235 = vmatpush1.msra.mxu0 0.0
        %5236 = vmatprep.subr.mxu0 0.0
        %5237 = vmatpush1.msra.mxu0 0.0
        %5238 = vmatprep.subr.mxu0 0.0
        %5239 = vmatpush1.msra.mxu0 0.0
        %5240 = vmatprep.subr.mxu0 0.0
        %5241 = vmatpush1.msra.mxu0 0.0
        %5242 = vmatprep.subr.mxu0 0.0
        %5243 = vmatpush1.msra.mxu0 0.0
        %5244 = vmatprep.subr.mxu0 0.0
        %5245 = vmatpush1.msra.mxu0 0.0
        %5246 = vmatprep.subr.mxu0 0.0
        %5247 = vmatpush1.msra.mxu0 0.0
        %5248 = vmatprep.subr.mxu0 0.0
        %5249 = vmatpush1.msra.mxu0 0.0
        %5250 = vmatprep.subr.mxu0 0.0
        %5251 = vmatpush1.msra.mxu0 0.0
        %5252 = vmatprep.subr.mxu0 0.0
        %5253 = vmatpush1.msra.mxu0 0.0
        %5254 = vmatprep.subr.mxu0 0.0
        %5255 = vmatpush1.msra.mxu0 0.0
        %5256 = vmatprep.subr.mxu0 0.0
        %5257 = vmatpush1.msra.mxu0 0.0
        %5258 = vmatprep.subr.mxu0 0.0
        %5259 = vmatpush1.msra.mxu0 0.0
        %5260 = vmatprep.subr.mxu0 0.0
        %5261 = vmatpush1.msra.mxu0 0.0
        %5262 = vmatprep.mubr.f32.mxu0 0.0
        %v5263 = vand.u32 %v5192, 4294901760
        %v5264 = vsub.f32 %v5192, %v5263
        %v5265 = vand.u32 %v5264, 4294901760
        %v5266 = vsub.f32 %v5264, %v5265
        %v5267 = vand.u32 %v5266, 4294901760
        %5268 = vmatmul.mubr.f32.gmra.mrb[0].mxu0 %v5267
        %v5269 = vpop.f32.mrb[0].mxu0
        %v5270 = vadd.f32 0.0, %v5269
        %v5271 = vpop.f32.mrb[0].mxu0
        %5272 = vdwg.mxu0
        %5273 = vmatprep.subr.mxu0 0.0
        %v5274 = vand.u32 %v2060, 4294901760
        %v5275 = vsub.f32 %v2060, %v5274
        %v5276 = vand.u32 %v5275, 4294901760
        %v5277 = vsub.f32 %v5275, %v5276
        %v5278 = vand.u32 %v5277, 4294901760
        %5279 = vmatpush1.msra.mxu0 %v5278
        %5280 = vmatprep.subr.mxu0 0.0
        %v5281 = vand.u32 %v2061, 4294901760
        %v5282 = vsub.f32 %v2061, %v5281
        %v5283 = vand.u32 %v5282, 4294901760
        %v5284 = vsub.f32 %v5282, %v5283
        %v5285 = vand.u32 %v5284, 4294901760
        %5286 = vmatpush1.msra.mxu0 %v5285
        %5287 = vmatprep.subr.mxu0 0.0
        %v5288 = vand.u32 %v2062, 4294901760
        %v5289 = vsub.f32 %v2062, %v5288
        %v5290 = vand.u32 %v5289, 4294901760
        %v5291 = vsub.f32 %v5289, %v5290
        %v5292 = vand.u32 %v5291, 4294901760
        %5293 = vmatpush1.msra.mxu0 %v5292
        %5294 = vmatprep.subr.mxu0 0.0
        %v5295 = vand.u32 %v2063, 4294901760
        %v5296 = vsub.f32 %v2063, %v5295
        %v5297 = vand.u32 %v5296, 4294901760
        %v5298 = vsub.f32 %v5296, %v5297
        %v5299 = vand.u32 %v5298, 4294901760
        %5300 = vmatpush1.msra.mxu0 %v5299
        %5301 = vmatprep.subr.mxu0 0.0
        %5302 = vmatpush1.msra.mxu0 0.0
        %5303 = vmatprep.subr.mxu0 0.0
        %5304 = vmatpush1.msra.mxu0 0.0
        %5305 = vmatprep.subr.mxu0 0.0
        %5306 = vmatpush1.msra.mxu0 0.0
        %5307 = vmatprep.subr.mxu0 0.0
        %5308 = vmatpush1.msra.mxu0 0.0
        %5309 = vmatprep.subr.mxu0 0.0
        %5310 = vmatpush1.msra.mxu0 0.0
        %5311 = vmatprep.subr.mxu0 0.0
        %5312 = vmatpush1.msra.mxu0 0.0
        %5313 = vmatprep.subr.mxu0 0.0
        %5314 = vmatpush1.msra.mxu0 0.0
        %5315 = vmatprep.subr.mxu0 0.0
        %5316 = vmatpush1.msra.mxu0 0.0
        %5317 = vmatprep.subr.mxu0 0.0
        %5318 = vmatpush1.msra.mxu0 0.0
        %5319 = vmatprep.subr.mxu0 0.0
        %5320 = vmatpush1.msra.mxu0 0.0
        %5321 = vmatprep.subr.mxu0 0.0
        %5322 = vmatpush1.msra.mxu0 0.0
        %5323 = vmatprep.subr.mxu0 0.0
        %5324 = vmatpush1.msra.mxu0 0.0
        %5325 = vmatprep.subr.mxu0 0.0
        %5326 = vmatpush1.msra.mxu0 0.0
        %5327 = vmatprep.subr.mxu0 0.0
        %5328 = vmatpush1.msra.mxu0 0.0
        %5329 = vmatprep.subr.mxu0 0.0
        %5330 = vmatpush1.msra.mxu0 0.0
        %5331 = vmatprep.subr.mxu0 0.0
        %5332 = vmatpush1.msra.mxu0 0.0
        %5333 = vmatprep.subr.mxu0 0.0
        %5334 = vmatpush1.msra.mxu0 0.0
        %5335 = vmatprep.subr.mxu0 0.0
        %5336 = vmatpush1.msra.mxu0 0.0
        %5337 = vmatprep.subr.mxu0 0.0
        %5338 = vmatpush1.msra.mxu0 0.0
        %5339 = vmatprep.subr.mxu0 0.0
        %5340 = vmatpush1.msra.mxu0 0.0
        %5341 = vmatprep.subr.mxu0 0.0
        %5342 = vmatpush1.msra.mxu0 0.0
        %5343 = vmatprep.subr.mxu0 0.0
        %5344 = vmatpush1.msra.mxu0 0.0
        %5345 = vmatprep.subr.mxu0 0.0
        %5346 = vmatpush1.msra.mxu0 0.0
        %5347 = vmatprep.subr.mxu0 0.0
        %5348 = vmatpush1.msra.mxu0 0.0
        %5349 = vmatprep.subr.mxu0 0.0
        %5350 = vmatpush1.msra.mxu0 0.0
        %5351 = vmatprep.subr.mxu0 0.0
        %5352 = vmatpush1.msra.mxu0 0.0
        %5353 = vmatprep.subr.mxu0 0.0
        %5354 = vmatpush1.msra.mxu0 0.0
        %5355 = vmatprep.subr.mxu0 0.0
        %5356 = vmatpush1.msra.mxu0 0.0
        %5357 = vmatprep.mubr.f32.mxu0 0.0
        %v5358 = vand.u32 %v5192, 4294901760
        %5359 = vmatmul.mubr.f32.gmra.mrb[0].mxu0 %v5358
        %v5360 = vpop.f32.mrb[0].mxu0
        %v5361 = vadd.f32 %v5270, %v5360
        %v5362 = vpop.f32.mrb[0].mxu0
        %5363 = vdwg.mxu0
        %5364 = vmatprep.subr.mxu0 0.0
        %v5365 = vand.u32 %v2060, 4294901760
        %v5366 = vsub.f32 %v2060, %v5365
        %5367 = vmatpush1.msra.mxu0 %v5366
        %5368 = vmatprep.subr.mxu0 0.0
        %v5369 = vand.u32 %v2061, 4294901760
        %v5370 = vsub.f32 %v2061, %v5369
        %5371 = vmatpush1.msra.mxu0 %v5370
        %5372 = vmatprep.subr.mxu0 0.0
        %v5373 = vand.u32 %v2062, 4294901760
        %v5374 = vsub.f32 %v2062, %v5373
        %5375 = vmatpush1.msra.mxu0 %v5374
        %5376 = vmatprep.subr.mxu0 0.0
        %v5377 = vand.u32 %v2063, 4294901760
        %v5378 = vsub.f32 %v2063, %v5377
        %5379 = vmatpush1.msra.mxu0 %v5378
        %5380 = vmatprep.subr.mxu0 0.0
        %5381 = vmatpush1.msra.mxu0 0.0
        %5382 = vmatprep.subr.mxu0 0.0
        %5383 = vmatpush1.msra.mxu0 0.0
        %5384 = vmatprep.subr.mxu0 0.0
        %5385 = vmatpush1.msra.mxu0 0.0
        %5386 = vmatprep.subr.mxu0 0.0
        %5387 = vmatpush1.msra.mxu0 0.0
        %5388 = vmatprep.subr.mxu0 0.0
        %5389 = vmatpush1.msra.mxu0 0.0
        %5390 = vmatprep.subr.mxu0 0.0
        %5391 = vmatpush1.msra.mxu0 0.0
        %5392 = vmatprep.subr.mxu0 0.0
        %5393 = vmatpush1.msra.mxu0 0.0
        %5394 = vmatprep.subr.mxu0 0.0
        %5395 = vmatpush1.msra.mxu0 0.0
        %5396 = vmatprep.subr.mxu0 0.0
        %5397 = vmatpush1.msra.mxu0 0.0
        %5398 = vmatprep.subr.mxu0 0.0
        %5399 = vmatpush1.msra.mxu0 0.0
        %5400 = vmatprep.subr.mxu0 0.0
        %5401 = vmatpush1.msra.mxu0 0.0
        %5402 = vmatprep.subr.mxu0 0.0
        %5403 = vmatpush1.msra.mxu0 0.0
        %5404 = vmatprep.subr.mxu0 0.0
        %5405 = vmatpush1.msra.mxu0 0.0
        %5406 = vmatprep.subr.mxu0 0.0
        %5407 = vmatpush1.msra.mxu0 0.0
        %5408 = vmatprep.subr.mxu0 0.0
        %5409 = vmatpush1.msra.mxu0 0.0
        %5410 = vmatprep.subr.mxu0 0.0
        %5411 = vmatpush1.msra.mxu0 0.0
        %5412 = vmatprep.subr.mxu0 0.0
        %5413 = vmatpush1.msra.mxu0 0.0
        %5414 = vmatprep.subr.mxu0 0.0
        %5415 = vmatpush1.msra.mxu0 0.0
        %5416 = vmatprep.subr.mxu0 0.0
        %5417 = vmatpush1.msra.mxu0 0.0
        %5418 = vmatprep.subr.mxu0 0.0
        %5419 = vmatpush1.msra.mxu0 0.0
        %5420 = vmatprep.subr.mxu0 0.0
        %5421 = vmatpush1.msra.mxu0 0.0
        %5422 = vmatprep.subr.mxu0 0.0
        %5423 = vmatpush1.msra.mxu0 0.0
        %5424 = vmatprep.subr.mxu0 0.0
        %5425 = vmatpush1.msra.mxu0 0.0
        %5426 = vmatprep.subr.mxu0 0.0
        %5427 = vmatpush1.msra.mxu0 0.0
        %5428 = vmatprep.subr.mxu0 0.0
        %5429 = vmatpush1.msra.mxu0 0.0
        %5430 = vmatprep.subr.mxu0 0.0
        %5431 = vmatpush1.msra.mxu0 0.0
        %5432 = vmatprep.subr.mxu0 0.0
        %5433 = vmatpush1.msra.mxu0 0.0
        %5434 = vmatprep.subr.mxu0 0.0
        %5435 = vmatpush1.msra.mxu0 0.0
        %5436 = vmatprep.mubr.f32.mxu0 0.0
        %v5437 = vand.u32 %v5192, 4294901760
        %v5438 = vsub.f32 %v5192, %v5437
        %5439 = vmatmul.mubr.f32.gmra.mrb[0].mxu0 %v5438
        %v5440 = vpop.f32.mrb[0].mxu0
        %v5441 = vadd.f32 %v5361, %v5440
        %v5442 = vpop.f32.mrb[0].mxu0
        %5443 = vdwg.mxu0
        %5444 = vmatprep.subr.mxu0 0.0
        %v5445 = vand.u32 %v2060, 4294901760
        %5446 = vmatpush1.msra.mxu0 %v5445
        %5447 = vmatprep.subr.mxu0 0.0
        %v5448 = vand.u32 %v2061, 4294901760
        %5449 = vmatpush1.msra.mxu0 %v5448
        %5450 = vmatprep.subr.mxu0 0.0
        %v5451 = vand.u32 %v2062, 4294901760
        %5452 = vmatpush1.msra.mxu0 %v5451
        %5453 = vmatprep.subr.mxu0 0.0
        %v5454 = vand.u32 %v2063, 4294901760
        %5455 = vmatpush1.msra.mxu0 %v5454
        %5456 = vmatprep.subr.mxu0 0.0
        %5457 = vmatpush1.msra.mxu0 0.0
        %5458 = vmatprep.subr.mxu0 0.0
        %5459 = vmatpush1.msra.mxu0 0.0
        %5460 = vmatprep.subr.mxu0 0.0
        %5461 = vmatpush1.msra.mxu0 0.0
        %5462 = vmatprep.subr.mxu0 0.0
        %5463 = vmatpush1.msra.mxu0 0.0
        %5464 = vmatprep.subr.mxu0 0.0
        %5465 = vmatpush1.msra.mxu0 0.0
        %5466 = vmatprep.subr.mxu0 0.0
        %5467 = vmatpush1.msra.mxu0 0.0
        %5468 = vmatprep.subr.mxu0 0.0
        %5469 = vmatpush1.msra.mxu0 0.0
        %5470 = vmatprep.subr.mxu0 0.0
        %5471 = vmatpush1.msra.mxu0 0.0
        %5472 = vmatprep.subr.mxu0 0.0
        %5473 = vmatpush1.msra.mxu0 0.0
        %5474 = vmatprep.subr.mxu0 0.0
        %5475 = vmatpush1.msra.mxu0 0.0
        %5476 = vmatprep.subr.mxu0 0.0
        %5477 = vmatpush1.msra.mxu0 0.0
        %5478 = vmatprep.subr.mxu0 0.0
        %5479 = vmatpush1.msra.mxu0 0.0
        %5480 = vmatprep.subr.mxu0 0.0
        %5481 = vmatpush1.msra.mxu0 0.0
        %5482 = vmatprep.subr.mxu0 0.0
        %5483 = vmatpush1.msra.mxu0 0.0
        %5484 = vmatprep.subr.mxu0 0.0
        %5485 = vmatpush1.msra.mxu0 0.0
        %5486 = vmatprep.subr.mxu0 0.0
        %5487 = vmatpush1.msra.mxu0 0.0
        %5488 = vmatprep.subr.mxu0 0.0
        %5489 = vmatpush1.msra.mxu0 0.0
        %5490 = vmatprep.subr.mxu0 0.0
        %5491 = vmatpush1.msra.mxu0 0.0
        %5492 = vmatprep.subr.mxu0 0.0
        %5493 = vmatpush1.msra.mxu0 0.0
        %5494 = vmatprep.subr.mxu0 0.0
        %5495 = vmatpush1.msra.mxu0 0.0
        %5496 = vmatprep.subr.mxu0 0.0
        %5497 = vmatpush1.msra.mxu0 0.0
        %5498 = vmatprep.subr.mxu0 0.0
        %5499 = vmatpush1.msra.mxu0 0.0
        %5500 = vmatprep.subr.mxu0 0.0
        %5501 = vmatpush1.msra.mxu0 0.0
        %5502 = vmatprep.subr.mxu0 0.0
        %5503 = vmatpush1.msra.mxu0 0.0
        %5504 = vmatprep.subr.mxu0 0.0
        %5505 = vmatpush1.msra.mxu0 0.0
        %5506 = vmatprep.subr.mxu0 0.0
        %5507 = vmatpush1.msra.mxu0 0.0
        %5508 = vmatprep.subr.mxu0 0.0
        %5509 = vmatpush1.msra.mxu0 0.0
        %5510 = vmatprep.subr.mxu0 0.0
        %5511 = vmatpush1.msra.mxu0 0.0
        %5512 = vmatprep.mubr.f32.mxu0 0.0
        %v5513 = vand.u32 %v5192, 4294901760
        %v5514 = vsub.f32 %v5192, %v5513
        %v5515 = vand.u32 %v5514, 4294901760
        %5516 = vmatmul.mubr.f32.gmra.mrb[0].mxu0 %v5515
        %v5517 = vpop.f32.mrb[0].mxu0
        %v5518 = vadd.f32 %v5441, %v5517
        %v5519 = vpop.f32.mrb[0].mxu0
        %5520 = vdwg.mxu0
        %5521 = vmatprep.subr.mxu0 0.0
        %v5522 = vand.u32 %v2060, 4294901760
        %v5523 = vsub.f32 %v2060, %v5522
        %v5524 = vand.u32 %v5523, 4294901760
        %5525 = vmatpush1.msra.mxu0 %v5524
        %5526 = vmatprep.subr.mxu0 0.0
        %v5527 = vand.u32 %v2061, 4294901760
        %v5528 = vsub.f32 %v2061, %v5527
        %v5529 = vand.u32 %v5528, 4294901760
        %5530 = vmatpush1.msra.mxu0 %v5529
        %5531 = vmatprep.subr.mxu0 0.0
        %v5532 = vand.u32 %v2062, 4294901760
        %v5533 = vsub.f32 %v2062, %v5532
        %v5534 = vand.u32 %v5533, 4294901760
        %5535 = vmatpush1.msra.mxu0 %v5534
        %5536 = vmatprep.subr.mxu0 0.0
        %v5537 = vand.u32 %v2063, 4294901760
        %v5538 = vsub.f32 %v2063, %v5537
        %v5539 = vand.u32 %v5538, 4294901760
        %5540 = vmatpush1.msra.mxu0 %v5539
        %5541 = vmatprep.subr.mxu0 0.0
        %5542 = vmatpush1.msra.mxu0 0.0
        %5543 = vmatprep.subr.mxu0 0.0
        %5544 = vmatpush1.msra.mxu0 0.0
        %5545 = vmatprep.subr.mxu0 0.0
        %5546 = vmatpush1.msra.mxu0 0.0
        %5547 = vmatprep.subr.mxu0 0.0
        %5548 = vmatpush1.msra.mxu0 0.0
        %5549 = vmatprep.subr.mxu0 0.0
        %5550 = vmatpush1.msra.mxu0 0.0
        %5551 = vmatprep.subr.mxu0 0.0
        %5552 = vmatpush1.msra.mxu0 0.0
        %5553 = vmatprep.subr.mxu0 0.0
        %5554 = vmatpush1.msra.mxu0 0.0
        %5555 = vmatprep.subr.mxu0 0.0
        %5556 = vmatpush1.msra.mxu0 0.0
        %5557 = vmatprep.subr.mxu0 0.0
        %5558 = vmatpush1.msra.mxu0 0.0
        %5559 = vmatprep.subr.mxu0 0.0
        %5560 = vmatpush1.msra.mxu0 0.0
        %5561 = vmatprep.subr.mxu0 0.0
        %5562 = vmatpush1.msra.mxu0 0.0
        %5563 = vmatprep.subr.mxu0 0.0
        %5564 = vmatpush1.msra.mxu0 0.0
        %5565 = vmatprep.subr.mxu0 0.0
        %5566 = vmatpush1.msra.mxu0 0.0
        %5567 = vmatprep.subr.mxu0 0.0
        %5568 = vmatpush1.msra.mxu0 0.0
        %5569 = vmatprep.subr.mxu0 0.0
        %5570 = vmatpush1.msra.mxu0 0.0
        %5571 = vmatprep.subr.mxu0 0.0
        %5572 = vmatpush1.msra.mxu0 0.0
        %5573 = vmatprep.subr.mxu0 0.0
        %5574 = vmatpush1.msra.mxu0 0.0
        %5575 = vmatprep.subr.mxu0 0.0
        %5576 = vmatpush1.msra.mxu0 0.0
        %5577 = vmatprep.subr.mxu0 0.0
        %5578 = vmatpush1.msra.mxu0 0.0
        %5579 = vmatprep.subr.mxu0 0.0
        %5580 = vmatpush1.msra.mxu0 0.0
        %5581 = vmatprep.subr.mxu0 0.0
        %5582 = vmatpush1.msra.mxu0 0.0
        %5583 = vmatprep.subr.mxu0 0.0
        %5584 = vmatpush1.msra.mxu0 0.0
        %5585 = vmatprep.subr.mxu0 0.0
        %5586 = vmatpush1.msra.mxu0 0.0
        %5587 = vmatprep.subr.mxu0 0.0
        %5588 = vmatpush1.msra.mxu0 0.0
        %5589 = vmatprep.subr.mxu0 0.0
        %5590 = vmatpush1.msra.mxu0 0.0
        %5591 = vmatprep.subr.mxu0 0.0
        %5592 = vmatpush1.msra.mxu0 0.0
        %5593 = vmatprep.subr.mxu0 0.0
        %5594 = vmatpush1.msra.mxu0 0.0
        %5595 = vmatprep.subr.mxu0 0.0
        %5596 = vmatpush1.msra.mxu0 0.0
        %5597 = vmatprep.mubr.f32.mxu0 0.0
        %v5598 = vand.u32 %v5192, 4294901760
        %5599 = vmatmul.mubr.f32.gmra.mrb[0].mxu0 %v5598
        %v5600 = vpop.f32.mrb[0].mxu0
        %v5601 = vadd.f32 %v5518, %v5600
        %v5602 = vpop.f32.mrb[0].mxu0
        %5603 = vdwg.mxu0
        %5604 = vmatprep.subr.mxu0 0.0
        %v5605 = vand.u32 %v2060, 4294901760
        %5606 = vmatpush1.msra.mxu0 %v5605
        %5607 = vmatprep.subr.mxu0 0.0
        %v5608 = vand.u32 %v2061, 4294901760
        %5609 = vmatpush1.msra.mxu0 %v5608
        %5610 = vmatprep.subr.mxu0 0.0
        %v5611 = vand.u32 %v2062, 4294901760
        %5612 = vmatpush1.msra.mxu0 %v5611
        %5613 = vmatprep.subr.mxu0 0.0
        %v5614 = vand.u32 %v2063, 4294901760
        %5615 = vmatpush1.msra.mxu0 %v5614
        %5616 = vmatprep.subr.mxu0 0.0
        %5617 = vmatpush1.msra.mxu0 0.0
        %5618 = vmatprep.subr.mxu0 0.0
        %5619 = vmatpush1.msra.mxu0 0.0
        %5620 = vmatprep.subr.mxu0 0.0
        %5621 = vmatpush1.msra.mxu0 0.0
        %5622 = vmatprep.subr.mxu0 0.0
        %5623 = vmatpush1.msra.mxu0 0.0
        %5624 = vmatprep.subr.mxu0 0.0
        %5625 = vmatpush1.msra.mxu0 0.0
        %5626 = vmatprep.subr.mxu0 0.0
        %5627 = vmatpush1.msra.mxu0 0.0
        %5628 = vmatprep.subr.mxu0 0.0
        %5629 = vmatpush1.msra.mxu0 0.0
        %5630 = vmatprep.subr.mxu0 0.0
        %5631 = vmatpush1.msra.mxu0 0.0
        %5632 = vmatprep.subr.mxu0 0.0
        %5633 = vmatpush1.msra.mxu0 0.0
        %5634 = vmatprep.subr.mxu0 0.0
        %5635 = vmatpush1.msra.mxu0 0.0
        %5636 = vmatprep.subr.mxu0 0.0
        %5637 = vmatpush1.msra.mxu0 0.0
        %5638 = vmatprep.subr.mxu0 0.0
        %5639 = vmatpush1.msra.mxu0 0.0
        %5640 = vmatprep.subr.mxu0 0.0
        %5641 = vmatpush1.msra.mxu0 0.0
        %5642 = vmatprep.subr.mxu0 0.0
        %5643 = vmatpush1.msra.mxu0 0.0
        %5644 = vmatprep.subr.mxu0 0.0
        %5645 = vmatpush1.msra.mxu0 0.0
        %5646 = vmatprep.subr.mxu0 0.0
        %5647 = vmatpush1.msra.mxu0 0.0
        %5648 = vmatprep.subr.mxu0 0.0
        %5649 = vmatpush1.msra.mxu0 0.0
        %5650 = vmatprep.subr.mxu0 0.0
        %5651 = vmatpush1.msra.mxu0 0.0
        %5652 = vmatprep.subr.mxu0 0.0
        %5653 = vmatpush1.msra.mxu0 0.0
        %5654 = vmatprep.subr.mxu0 0.0
        %5655 = vmatpush1.msra.mxu0 0.0
        %5656 = vmatprep.subr.mxu0 0.0
        %5657 = vmatpush1.msra.mxu0 0.0
        %5658 = vmatprep.subr.mxu0 0.0
        %5659 = vmatpush1.msra.mxu0 0.0
        %5660 = vmatprep.subr.mxu0 0.0
        %5661 = vmatpush1.msra.mxu0 0.0
        %5662 = vmatprep.subr.mxu0 0.0
        %5663 = vmatpush1.msra.mxu0 0.0
        %5664 = vmatprep.subr.mxu0 0.0
        %5665 = vmatpush1.msra.mxu0 0.0
        %5666 = vmatprep.subr.mxu0 0.0
        %5667 = vmatpush1.msra.mxu0 0.0
        %5668 = vmatprep.subr.mxu0 0.0
        %5669 = vmatpush1.msra.mxu0 0.0
        %5670 = vmatprep.subr.mxu0 0.0
        %5671 = vmatpush1.msra.mxu0 0.0
        %5672 = vmatprep.mubr.f32.mxu0 0.0
        %v5673 = vand.u32 %v5192, 4294901760
        %5674 = vmatmul.mubr.f32.gmra.mrb[0].mxu0 %v5673
        %v5675 = vpop.f32.mrb[0].mxu0
        %v5676 = vadd.f32 %v5601, %v5675
        %v5677 = vpop.f32.mrb[0].mxu0
        %5678 = vdwg.mxu0
        %v5679 = vadd.f32 %v5191, %v5676
        %v5680 = vxor.u32 %v5679, 2147483648
        %v5681 = vmul.f32 %v5680, 1.442695
        %v5682 = vpow.pop %v5681
        %v5683 = vadd.f32 %v5682, 1.0
        %v5684 = vrcp.pop %v5683
        %v5685 = vmul.f32 1.0, %v5684
        %v5686 = vtanh.pop %v5679
        %v5687 = vmul.f32 %v5685, %v5177
        %5689 = vrot.lane.b32.xlu0 %v5686, 64
        %v5690 = vpop.permute.xlu0 %5689
        %v5692 = vmul.f32 %v5685, %v5690
        %5694 = vrot.lane.b32.xlu0 %v5692, 32
        %v5695 = vpop.permute.xlu0 %5694
        %v5697 = vadd.f32 %v5687, %v5695
        %v5698 = vtanh.pop %v5697
        %5700 = vrot.lane.b32.xlu0 %v5698, 64
        %v5701 = vpop.permute.xlu0 %5700
        %v5703 = vmul.f32 %v5685, %v5701
        %5705 = vrot.lane.b32.xlu0 %v5703, 32
        %v5706 = vpop.permute.xlu0 %5705
        %s5708 = scalar_lea.vmem [#allocation2], 48
        %5709 = vst.msk [vmem:[%s5708] sm:$0xff] %vm2067, %v5706
        %s5710 = scalar_lea.vmem [#allocation3], 56
        %v5711 = vld [vmem:[%s5710] sm:$0xff]
        %v5712 = vsel %vm2067, %v5706, 0
        %5714 = vmatprep.subr.mxu0 0.0
        %v5715 = vand.u32 %v2060, 4294901760
        %5716 = vmatpush1.msra.mxu0 %v5715
        %5717 = vmatprep.subr.mxu0 0.0
        %v5718 = vand.u32 %v2061, 4294901760
        %5719 = vmatpush1.msra.mxu0 %v5718
        %5720 = vmatprep.subr.mxu0 0.0
        %v5721 = vand.u32 %v2062, 4294901760
        %5722 = vmatpush1.msra.mxu0 %v5721
        %5723 = vmatprep.subr.mxu0 0.0
        %v5724 = vand.u32 %v2063, 4294901760
        %5725 = vmatpush1.msra.mxu0 %v5724
        %5726 = vmatprep.subr.mxu0 0.0
        %5727 = vmatpush1.msra.mxu0 0.0
        %5728 = vmatprep.subr.mxu0 0.0
        %5729 = vmatpush1.msra.mxu0 0.0
        %5730 = vmatprep.subr.mxu0 0.0
        %5731 = vmatpush1.msra.mxu0 0.0
        %5732 = vmatprep.subr.mxu0 0.0
        %5733 = vmatpush1.msra.mxu0 0.0
        %5734 = vmatprep.subr.mxu0 0.0
        %5735 = vmatpush1.msra.mxu0 0.0
        %5736 = vmatprep.subr.mxu0 0.0
        %5737 = vmatpush1.msra.mxu0 0.0
        %5738 = vmatprep.subr.mxu0 0.0
        %5739 = vmatpush1.msra.mxu0 0.0
        %5740 = vmatprep.subr.mxu0 0.0
        %5741 = vmatpush1.msra.mxu0 0.0
        %5742 = vmatprep.subr.mxu0 0.0
        %5743 = vmatpush1.msra.mxu0 0.0
        %5744 = vmatprep.subr.mxu0 0.0
        %5745 = vmatpush1.msra.mxu0 0.0
        %5746 = vmatprep.subr.mxu0 0.0
        %5747 = vmatpush1.msra.mxu0 0.0
        %5748 = vmatprep.subr.mxu0 0.0
        %5749 = vmatpush1.msra.mxu0 0.0
        %5750 = vmatprep.subr.mxu0 0.0
        %5751 = vmatpush1.msra.mxu0 0.0
        %5752 = vmatprep.subr.mxu0 0.0
        %5753 = vmatpush1.msra.mxu0 0.0
        %5754 = vmatprep.subr.mxu0 0.0
        %5755 = vmatpush1.msra.mxu0 0.0
        %5756 = vmatprep.subr.mxu0 0.0
        %5757 = vmatpush1.msra.mxu0 0.0
        %5758 = vmatprep.subr.mxu0 0.0
        %5759 = vmatpush1.msra.mxu0 0.0
        %5760 = vmatprep.subr.mxu0 0.0
        %5761 = vmatpush1.msra.mxu0 0.0
        %5762 = vmatprep.subr.mxu0 0.0
        %5763 = vmatpush1.msra.mxu0 0.0
        %5764 = vmatprep.subr.mxu0 0.0
        %5765 = vmatpush1.msra.mxu0 0.0
        %5766 = vmatprep.subr.mxu0 0.0
        %5767 = vmatpush1.msra.mxu0 0.0
        %5768 = vmatprep.subr.mxu0 0.0
        %5769 = vmatpush1.msra.mxu0 0.0
        %5770 = vmatprep.subr.mxu0 0.0
        %5771 = vmatpush1.msra.mxu0 0.0
        %5772 = vmatprep.subr.mxu0 0.0
        %5773 = vmatpush1.msra.mxu0 0.0
        %5774 = vmatprep.subr.mxu0 0.0
        %5775 = vmatpush1.msra.mxu0 0.0
        %5776 = vmatprep.subr.mxu0 0.0
        %5777 = vmatpush1.msra.mxu0 0.0
        %5778 = vmatprep.subr.mxu0 0.0
        %5779 = vmatpush1.msra.mxu0 0.0
        %5780 = vmatprep.subr.mxu0 0.0
        %5781 = vmatpush1.msra.mxu0 0.0
        %5782 = vmatprep.mubr.f32.mxu0 0.0
        %v5783 = vand.u32 %v5712, 4294901760
        %v5784 = vsub.f32 %v5712, %v5783
        %v5785 = vand.u32 %v5784, 4294901760
        %v5786 = vsub.f32 %v5784, %v5785
        %v5787 = vand.u32 %v5786, 4294901760
        %5788 = vmatmul.mubr.f32.gmra.mrb[0].mxu0 %v5787
        %v5789 = vpop.f32.mrb[0].mxu0
        %v5790 = vadd.f32 0.0, %v5789
        %v5791 = vpop.f32.mrb[0].mxu0
        %5792 = vdwg.mxu0
        %5793 = vmatprep.subr.mxu0 0.0
        %v5794 = vand.u32 %v2060, 4294901760
        %v5795 = vsub.f32 %v2060, %v5794
        %v5796 = vand.u32 %v5795, 4294901760
        %v5797 = vsub.f32 %v5795, %v5796
        %v5798 = vand.u32 %v5797, 4294901760
        %5799 = vmatpush1.msra.mxu0 %v5798
        %5800 = vmatprep.subr.mxu0 0.0
        %v5801 = vand.u32 %v2061, 4294901760
        %v5802 = vsub.f32 %v2061, %v5801
        %v5803 = vand.u32 %v5802, 4294901760
        %v5804 = vsub.f32 %v5802, %v5803
        %v5805 = vand.u32 %v5804, 4294901760
        %5806 = vmatpush1.msra.mxu0 %v5805
        %5807 = vmatprep.subr.mxu0 0.0
        %v5808 = vand.u32 %v2062, 4294901760
        %v5809 = vsub.f32 %v2062, %v5808
        %v5810 = vand.u32 %v5809, 4294901760
        %v5811 = vsub.f32 %v5809, %v5810
        %v5812 = vand.u32 %v5811, 4294901760
        %5813 = vmatpush1.msra.mxu0 %v5812
        %5814 = vmatprep.subr.mxu0 0.0
        %v5815 = vand.u32 %v2063, 4294901760
        %v5816 = vsub.f32 %v2063, %v5815
        %v5817 = vand.u32 %v5816, 4294901760
        %v5818 = vsub.f32 %v5816, %v5817
        %v5819 = vand.u32 %v5818, 4294901760
        %5820 = vmatpush1.msra.mxu0 %v5819
        %5821 = vmatprep.subr.mxu0 0.0
        %5822 = vmatpush1.msra.mxu0 0.0
        %5823 = vmatprep.subr.mxu0 0.0
        %5824 = vmatpush1.msra.mxu0 0.0
        %5825 = vmatprep.subr.mxu0 0.0
        %5826 = vmatpush1.msra.mxu0 0.0
        %5827 = vmatprep.subr.mxu0 0.0
        %5828 = vmatpush1.msra.mxu0 0.0
        %5829 = vmatprep.subr.mxu0 0.0
        %5830 = vmatpush1.msra.mxu0 0.0
        %5831 = vmatprep.subr.mxu0 0.0
        %5832 = vmatpush1.msra.mxu0 0.0
        %5833 = vmatprep.subr.mxu0 0.0
        %5834 = vmatpush1.msra.mxu0 0.0
        %5835 = vmatprep.subr.mxu0 0.0
        %5836 = vmatpush1.msra.mxu0 0.0
        %5837 = vmatprep.subr.mxu0 0.0
        %5838 = vmatpush1.msra.mxu0 0.0
        %5839 = vmatprep.subr.mxu0 0.0
        %5840 = vmatpush1.msra.mxu0 0.0
        %5841 = vmatprep.subr.mxu0 0.0
        %5842 = vmatpush1.msra.mxu0 0.0
        %5843 = vmatprep.subr.mxu0 0.0
        %5844 = vmatpush1.msra.mxu0 0.0
        %5845 = vmatprep.subr.mxu0 0.0
        %5846 = vmatpush1.msra.mxu0 0.0
        %5847 = vmatprep.subr.mxu0 0.0
        %5848 = vmatpush1.msra.mxu0 0.0
        %5849 = vmatprep.subr.mxu0 0.0
        %5850 = vmatpush1.msra.mxu0 0.0
        %5851 = vmatprep.subr.mxu0 0.0
        %5852 = vmatpush1.msra.mxu0 0.0
        %5853 = vmatprep.subr.mxu0 0.0
        %5854 = vmatpush1.msra.mxu0 0.0
        %5855 = vmatprep.subr.mxu0 0.0
        %5856 = vmatpush1.msra.mxu0 0.0
        %5857 = vmatprep.subr.mxu0 0.0
        %5858 = vmatpush1.msra.mxu0 0.0
        %5859 = vmatprep.subr.mxu0 0.0
        %5860 = vmatpush1.msra.mxu0 0.0
        %5861 = vmatprep.subr.mxu0 0.0
        %5862 = vmatpush1.msra.mxu0 0.0
        %5863 = vmatprep.subr.mxu0 0.0
        %5864 = vmatpush1.msra.mxu0 0.0
        %5865 = vmatprep.subr.mxu0 0.0
        %5866 = vmatpush1.msra.mxu0 0.0
        %5867 = vmatprep.subr.mxu0 0.0
        %5868 = vmatpush1.msra.mxu0 0.0
        %5869 = vmatprep.subr.mxu0 0.0
        %5870 = vmatpush1.msra.mxu0 0.0
        %5871 = vmatprep.subr.mxu0 0.0
        %5872 = vmatpush1.msra.mxu0 0.0
        %5873 = vmatprep.subr.mxu0 0.0
        %5874 = vmatpush1.msra.mxu0 0.0
        %5875 = vmatprep.subr.mxu0 0.0
        %5876 = vmatpush1.msra.mxu0 0.0
        %5877 = vmatprep.mubr.f32.mxu0 0.0
        %v5878 = vand.u32 %v5712, 4294901760
        %5879 = vmatmul.mubr.f32.gmra.mrb[0].mxu0 %v5878
        %v5880 = vpop.f32.mrb[0].mxu0
        %v5881 = vadd.f32 %v5790, %v5880
        %v5882 = vpop.f32.mrb[0].mxu0
        %5883 = vdwg.mxu0
        %5884 = vmatprep.subr.mxu0 0.0
        %v5885 = vand.u32 %v2060, 4294901760
        %v5886 = vsub.f32 %v2060, %v5885
        %5887 = vmatpush1.msra.mxu0 %v5886
        %5888 = vmatprep.subr.mxu0 0.0
        %v5889 = vand.u32 %v2061, 4294901760
        %v5890 = vsub.f32 %v2061, %v5889
        %5891 = vmatpush1.msra.mxu0 %v5890
        %5892 = vmatprep.subr.mxu0 0.0
        %v5893 = vand.u32 %v2062, 4294901760
        %v5894 = vsub.f32 %v2062, %v5893
        %5895 = vmatpush1.msra.mxu0 %v5894
        %5896 = vmatprep.subr.mxu0 0.0
        %v5897 = vand.u32 %v2063, 4294901760
        %v5898 = vsub.f32 %v2063, %v5897
        %5899 = vmatpush1.msra.mxu0 %v5898
        %5900 = vmatprep.subr.mxu0 0.0
        %5901 = vmatpush1.msra.mxu0 0.0
        %5902 = vmatprep.subr.mxu0 0.0
        %5903 = vmatpush1.msra.mxu0 0.0
        %5904 = vmatprep.subr.mxu0 0.0
        %5905 = vmatpush1.msra.mxu0 0.0
        %5906 = vmatprep.subr.mxu0 0.0
        %5907 = vmatpush1.msra.mxu0 0.0
        %5908 = vmatprep.subr.mxu0 0.0
        %5909 = vmatpush1.msra.mxu0 0.0
        %5910 = vmatprep.subr.mxu0 0.0
        %5911 = vmatpush1.msra.mxu0 0.0
        %5912 = vmatprep.subr.mxu0 0.0
        %5913 = vmatpush1.msra.mxu0 0.0
        %5914 = vmatprep.subr.mxu0 0.0
        %5915 = vmatpush1.msra.mxu0 0.0
        %5916 = vmatprep.subr.mxu0 0.0
        %5917 = vmatpush1.msra.mxu0 0.0
        %5918 = vmatprep.subr.mxu0 0.0
        %5919 = vmatpush1.msra.mxu0 0.0
        %5920 = vmatprep.subr.mxu0 0.0
        %5921 = vmatpush1.msra.mxu0 0.0
        %5922 = vmatprep.subr.mxu0 0.0
        %5923 = vmatpush1.msra.mxu0 0.0
        %5924 = vmatprep.subr.mxu0 0.0
        %5925 = vmatpush1.msra.mxu0 0.0
        %5926 = vmatprep.subr.mxu0 0.0
        %5927 = vmatpush1.msra.mxu0 0.0
        %5928 = vmatprep.subr.mxu0 0.0
        %5929 = vmatpush1.msra.mxu0 0.0
        %5930 = vmatprep.subr.mxu0 0.0
        %5931 = vmatpush1.msra.mxu0 0.0
        %5932 = vmatprep.subr.mxu0 0.0
        %5933 = vmatpush1.msra.mxu0 0.0
        %5934 = vmatprep.subr.mxu0 0.0
        %5935 = vmatpush1.msra.mxu0 0.0
        %5936 = vmatprep.subr.mxu0 0.0
        %5937 = vmatpush1.msra.mxu0 0.0
        %5938 = vmatprep.subr.mxu0 0.0
        %5939 = vmatpush1.msra.mxu0 0.0
        %5940 = vmatprep.subr.mxu0 0.0
        %5941 = vmatpush1.msra.mxu0 0.0
        %5942 = vmatprep.subr.mxu0 0.0
        %5943 = vmatpush1.msra.mxu0 0.0
        %5944 = vmatprep.subr.mxu0 0.0
        %5945 = vmatpush1.msra.mxu0 0.0
        %5946 = vmatprep.subr.mxu0 0.0
        %5947 = vmatpush1.msra.mxu0 0.0
        %5948 = vmatprep.subr.mxu0 0.0
        %5949 = vmatpush1.msra.mxu0 0.0
        %5950 = vmatprep.subr.mxu0 0.0
        %5951 = vmatpush1.msra.mxu0 0.0
        %5952 = vmatprep.subr.mxu0 0.0
        %5953 = vmatpush1.msra.mxu0 0.0
        %5954 = vmatprep.subr.mxu0 0.0
        %5955 = vmatpush1.msra.mxu0 0.0
        %5956 = vmatprep.mubr.f32.mxu0 0.0
        %v5957 = vand.u32 %v5712, 4294901760
        %v5958 = vsub.f32 %v5712, %v5957
        %5959 = vmatmul.mubr.f32.gmra.mrb[0].mxu0 %v5958
        %v5960 = vpop.f32.mrb[0].mxu0
        %v5961 = vadd.f32 %v5881, %v5960
        %v5962 = vpop.f32.mrb[0].mxu0
        %5963 = vdwg.mxu0
        %5964 = vmatprep.subr.mxu0 0.0
        %v5965 = vand.u32 %v2060, 4294901760
        %5966 = vmatpush1.msra.mxu0 %v5965
        %5967 = vmatprep.subr.mxu0 0.0
        %v5968 = vand.u32 %v2061, 4294901760
        %5969 = vmatpush1.msra.mxu0 %v5968
        %5970 = vmatprep.subr.mxu0 0.0
        %v5971 = vand.u32 %v2062, 4294901760
        %5972 = vmatpush1.msra.mxu0 %v5971
        %5973 = vmatprep.subr.mxu0 0.0
        %v5974 = vand.u32 %v2063, 4294901760
        %5975 = vmatpush1.msra.mxu0 %v5974
        %5976 = vmatprep.subr.mxu0 0.0
        %5977 = vmatpush1.msra.mxu0 0.0
        %5978 = vmatprep.subr.mxu0 0.0
        %5979 = vmatpush1.msra.mxu0 0.0
        %5980 = vmatprep.subr.mxu0 0.0
        %5981 = vmatpush1.msra.mxu0 0.0
        %5982 = vmatprep.subr.mxu0 0.0
        %5983 = vmatpush1.msra.mxu0 0.0
        %5984 = vmatprep.subr.mxu0 0.0
        %5985 = vmatpush1.msra.mxu0 0.0
        %5986 = vmatprep.subr.mxu0 0.0
        %5987 = vmatpush1.msra.mxu0 0.0
        %5988 = vmatprep.subr.mxu0 0.0
        %5989 = vmatpush1.msra.mxu0 0.0
        %5990 = vmatprep.subr.mxu0 0.0
        %5991 = vmatpush1.msra.mxu0 0.0
        %5992 = vmatprep.subr.mxu0 0.0
        %5993 = vmatpush1.msra.mxu0 0.0
        %5994 = vmatprep.subr.mxu0 0.0
        %5995 = vmatpush1.msra.mxu0 0.0
        %5996 = vmatprep.subr.mxu0 0.0
        %5997 = vmatpush1.msra.mxu0 0.0
        %5998 = vmatprep.subr.mxu0 0.0
        %5999 = vmatpush1.msra.mxu0 0.0
        %6000 = vmatprep.subr.mxu0 0.0
        %6001 = vmatpush1.msra.mxu0 0.0
        %6002 = vmatprep.subr.mxu0 0.0
        %6003 = vmatpush1.msra.mxu0 0.0
        %6004 = vmatprep.subr.mxu0 0.0
        %6005 = vmatpush1.msra.mxu0 0.0
        %6006 = vmatprep.subr.mxu0 0.0
        %6007 = vmatpush1.msra.mxu0 0.0
        %6008 = vmatprep.subr.mxu0 0.0
        %6009 = vmatpush1.msra.mxu0 0.0
        %6010 = vmatprep.subr.mxu0 0.0
        %6011 = vmatpush1.msra.mxu0 0.0
        %6012 = vmatprep.subr.mxu0 0.0
        %6013 = vmatpush1.msra.mxu0 0.0
        %6014 = vmatprep.subr.mxu0 0.0
        %6015 = vmatpush1.msra.mxu0 0.0
        %6016 = vmatprep.subr.mxu0 0.0
        %6017 = vmatpush1.msra.mxu0 0.0
        %6018 = vmatprep.subr.mxu0 0.0
        %6019 = vmatpush1.msra.mxu0 0.0
        %6020 = vmatprep.subr.mxu0 0.0
        %6021 = vmatpush1.msra.mxu0 0.0
        %6022 = vmatprep.subr.mxu0 0.0
        %6023 = vmatpush1.msra.mxu0 0.0
        %6024 = vmatprep.subr.mxu0 0.0
        %6025 = vmatpush1.msra.mxu0 0.0
        %6026 = vmatprep.subr.mxu0 0.0
        %6027 = vmatpush1.msra.mxu0 0.0
        %6028 = vmatprep.subr.mxu0 0.0
        %6029 = vmatpush1.msra.mxu0 0.0
        %6030 = vmatprep.subr.mxu0 0.0
        %6031 = vmatpush1.msra.mxu0 0.0
        %6032 = vmatprep.mubr.f32.mxu0 0.0
        %v6033 = vand.u32 %v5712, 4294901760
        %v6034 = vsub.f32 %v5712, %v6033
        %v6035 = vand.u32 %v6034, 4294901760
        %6036 = vmatmul.mubr.f32.gmra.mrb[0].mxu0 %v6035
        %v6037 = vpop.f32.mrb[0].mxu0
        %v6038 = vadd.f32 %v5961, %v6037
        %v6039 = vpop.f32.mrb[0].mxu0
        %6040 = vdwg.mxu0
        %6041 = vmatprep.subr.mxu0 0.0
        %v6042 = vand.u32 %v2060, 4294901760
        %v6043 = vsub.f32 %v2060, %v6042
        %v6044 = vand.u32 %v6043, 4294901760
        %6045 = vmatpush1.msra.mxu0 %v6044
        %6046 = vmatprep.subr.mxu0 0.0
        %v6047 = vand.u32 %v2061, 4294901760
        %v6048 = vsub.f32 %v2061, %v6047
        %v6049 = vand.u32 %v6048, 4294901760
        %6050 = vmatpush1.msra.mxu0 %v6049
        %6051 = vmatprep.subr.mxu0 0.0
        %v6052 = vand.u32 %v2062, 4294901760
        %v6053 = vsub.f32 %v2062, %v6052
        %v6054 = vand.u32 %v6053, 4294901760
        %6055 = vmatpush1.msra.mxu0 %v6054
        %6056 = vmatprep.subr.mxu0 0.0
        %v6057 = vand.u32 %v2063, 4294901760
        %v6058 = vsub.f32 %v2063, %v6057
        %v6059 = vand.u32 %v6058, 4294901760
        %6060 = vmatpush1.msra.mxu0 %v6059
        %6061 = vmatprep.subr.mxu0 0.0
        %6062 = vmatpush1.msra.mxu0 0.0
        %6063 = vmatprep.subr.mxu0 0.0
        %6064 = vmatpush1.msra.mxu0 0.0
        %6065 = vmatprep.subr.mxu0 0.0
        %6066 = vmatpush1.msra.mxu0 0.0
        %6067 = vmatprep.subr.mxu0 0.0
        %6068 = vmatpush1.msra.mxu0 0.0
        %6069 = vmatprep.subr.mxu0 0.0
        %6070 = vmatpush1.msra.mxu0 0.0
        %6071 = vmatprep.subr.mxu0 0.0
        %6072 = vmatpush1.msra.mxu0 0.0
        %6073 = vmatprep.subr.mxu0 0.0
        %6074 = vmatpush1.msra.mxu0 0.0
        %6075 = vmatprep.subr.mxu0 0.0
        %6076 = vmatpush1.msra.mxu0 0.0
        %6077 = vmatprep.subr.mxu0 0.0
        %6078 = vmatpush1.msra.mxu0 0.0
        %6079 = vmatprep.subr.mxu0 0.0
        %6080 = vmatpush1.msra.mxu0 0.0
        %6081 = vmatprep.subr.mxu0 0.0
        %6082 = vmatpush1.msra.mxu0 0.0
        %6083 = vmatprep.subr.mxu0 0.0
        %6084 = vmatpush1.msra.mxu0 0.0
        %6085 = vmatprep.subr.mxu0 0.0
        %6086 = vmatpush1.msra.mxu0 0.0
        %6087 = vmatprep.subr.mxu0 0.0
        %6088 = vmatpush1.msra.mxu0 0.0
        %6089 = vmatprep.subr.mxu0 0.0
        %6090 = vmatpush1.msra.mxu0 0.0
        %6091 = vmatprep.subr.mxu0 0.0
        %6092 = vmatpush1.msra.mxu0 0.0
        %6093 = vmatprep.subr.mxu0 0.0
        %6094 = vmatpush1.msra.mxu0 0.0
        %6095 = vmatprep.subr.mxu0 0.0
        %6096 = vmatpush1.msra.mxu0 0.0
        %6097 = vmatprep.subr.mxu0 0.0
        %6098 = vmatpush1.msra.mxu0 0.0
        %6099 = vmatprep.subr.mxu0 0.0
        %6100 = vmatpush1.msra.mxu0 0.0
        %6101 = vmatprep.subr.mxu0 0.0
        %6102 = vmatpush1.msra.mxu0 0.0
        %6103 = vmatprep.subr.mxu0 0.0
        %6104 = vmatpush1.msra.mxu0 0.0
        %6105 = vmatprep.subr.mxu0 0.0
        %6106 = vmatpush1.msra.mxu0 0.0
        %6107 = vmatprep.subr.mxu0 0.0
        %6108 = vmatpush1.msra.mxu0 0.0
        %6109 = vmatprep.subr.mxu0 0.0
        %6110 = vmatpush1.msra.mxu0 0.0
        %6111 = vmatprep.subr.mxu0 0.0
        %6112 = vmatpush1.msra.mxu0 0.0
        %6113 = vmatprep.subr.mxu0 0.0
        %6114 = vmatpush1.msra.mxu0 0.0
        %6115 = vmatprep.subr.mxu0 0.0
        %6116 = vmatpush1.msra.mxu0 0.0
        %6117 = vmatprep.mubr.f32.mxu0 0.0
        %v6118 = vand.u32 %v5712, 4294901760
        %6119 = vmatmul.mubr.f32.gmra.mrb[0].mxu0 %v6118
        %v6120 = vpop.f32.mrb[0].mxu0
        %v6121 = vadd.f32 %v6038, %v6120
        %v6122 = vpop.f32.mrb[0].mxu0
        %6123 = vdwg.mxu0
        %6124 = vmatprep.subr.mxu0 0.0
        %v6125 = vand.u32 %v2060, 4294901760
        %6126 = vmatpush1.msra.mxu0 %v6125
        %6127 = vmatprep.subr.mxu0 0.0
        %v6128 = vand.u32 %v2061, 4294901760
        %6129 = vmatpush1.msra.mxu0 %v6128
        %6130 = vmatprep.subr.mxu0 0.0
        %v6131 = vand.u32 %v2062, 4294901760
        %6132 = vmatpush1.msra.mxu0 %v6131
        %6133 = vmatprep.subr.mxu0 0.0
        %v6134 = vand.u32 %v2063, 4294901760
        %6135 = vmatpush1.msra.mxu0 %v6134
        %6136 = vmatprep.subr.mxu0 0.0
        %6137 = vmatpush1.msra.mxu0 0.0
        %6138 = vmatprep.subr.mxu0 0.0
        %6139 = vmatpush1.msra.mxu0 0.0
        %6140 = vmatprep.subr.mxu0 0.0
        %6141 = vmatpush1.msra.mxu0 0.0
        %6142 = vmatprep.subr.mxu0 0.0
        %6143 = vmatpush1.msra.mxu0 0.0
        %6144 = vmatprep.subr.mxu0 0.0
        %6145 = vmatpush1.msra.mxu0 0.0
        %6146 = vmatprep.subr.mxu0 0.0
        %6147 = vmatpush1.msra.mxu0 0.0
        %6148 = vmatprep.subr.mxu0 0.0
        %6149 = vmatpush1.msra.mxu0 0.0
        %6150 = vmatprep.subr.mxu0 0.0
        %6151 = vmatpush1.msra.mxu0 0.0
        %6152 = vmatprep.subr.mxu0 0.0
        %6153 = vmatpush1.msra.mxu0 0.0
        %6154 = vmatprep.subr.mxu0 0.0
        %6155 = vmatpush1.msra.mxu0 0.0
        %6156 = vmatprep.subr.mxu0 0.0
        %6157 = vmatpush1.msra.mxu0 0.0
        %6158 = vmatprep.subr.mxu0 0.0
        %6159 = vmatpush1.msra.mxu0 0.0
        %6160 = vmatprep.subr.mxu0 0.0
        %6161 = vmatpush1.msra.mxu0 0.0
        %6162 = vmatprep.subr.mxu0 0.0
        %6163 = vmatpush1.msra.mxu0 0.0
        %6164 = vmatprep.subr.mxu0 0.0
        %6165 = vmatpush1.msra.mxu0 0.0
        %6166 = vmatprep.subr.mxu0 0.0
        %6167 = vmatpush1.msra.mxu0 0.0
        %6168 = vmatprep.subr.mxu0 0.0
        %6169 = vmatpush1.msra.mxu0 0.0
        %6170 = vmatprep.subr.mxu0 0.0
        %6171 = vmatpush1.msra.mxu0 0.0
        %6172 = vmatprep.subr.mxu0 0.0
        %6173 = vmatpush1.msra.mxu0 0.0
        %6174 = vmatprep.subr.mxu0 0.0
        %6175 = vmatpush1.msra.mxu0 0.0
        %6176 = vmatprep.subr.mxu0 0.0
        %6177 = vmatpush1.msra.mxu0 0.0
        %6178 = vmatprep.subr.mxu0 0.0
        %6179 = vmatpush1.msra.mxu0 0.0
        %6180 = vmatprep.subr.mxu0 0.0
        %6181 = vmatpush1.msra.mxu0 0.0
        %6182 = vmatprep.subr.mxu0 0.0
        %6183 = vmatpush1.msra.mxu0 0.0
        %6184 = vmatprep.subr.mxu0 0.0
        %6185 = vmatpush1.msra.mxu0 0.0
        %6186 = vmatprep.subr.mxu0 0.0
        %6187 = vmatpush1.msra.mxu0 0.0
        %6188 = vmatprep.subr.mxu0 0.0
        %6189 = vmatpush1.msra.mxu0 0.0
        %6190 = vmatprep.subr.mxu0 0.0
        %6191 = vmatpush1.msra.mxu0 0.0
        %6192 = vmatprep.mubr.f32.mxu0 0.0
        %v6193 = vand.u32 %v5712, 4294901760
        %6194 = vmatmul.mubr.f32.gmra.mrb[0].mxu0 %v6193
        %v6195 = vpop.f32.mrb[0].mxu0
        %v6196 = vadd.f32 %v6121, %v6195
        %v6197 = vpop.f32.mrb[0].mxu0
        %6198 = vdwg.mxu0
        %v6199 = vadd.f32 %v5711, %v6196
        %v6200 = vxor.u32 %v6199, 2147483648
        %v6201 = vmul.f32 %v6200, 1.442695
        %v6202 = vpow.pop %v6201
        %v6203 = vadd.f32 %v6202, 1.0
        %v6204 = vrcp.pop %v6203
        %v6205 = vmul.f32 1.0, %v6204
        %v6206 = vtanh.pop %v6199
        %v6207 = vmul.f32 %v6205, %v5697
        %6209 = vrot.lane.b32.xlu0 %v6206, 64
        %v6210 = vpop.permute.xlu0 %6209
        %v6212 = vmul.f32 %v6205, %v6210
        %6214 = vrot.lane.b32.xlu0 %v6212, 32
        %v6215 = vpop.permute.xlu0 %6214
        %v6217 = vadd.f32 %v6207, %v6215
        %v6218 = vtanh.pop %v6217
        %6220 = vrot.lane.b32.xlu0 %v6218, 64
        %v6221 = vpop.permute.xlu0 %6220
        %v6223 = vmul.f32 %v6205, %v6221
        %6225 = vrot.lane.b32.xlu0 %v6223, 32
        %v6226 = vpop.permute.xlu0 %6225
        %s6228 = scalar_lea.vmem [#allocation2], 56
        %6229 = vst.msk [vmem:[%s6228] sm:$0xff] %vm2067, %v6226
        %6230 = vst.msk [vmem:[%s352] sm:$0xff] %vm2067, %v6226
        %6232 = vrot.lane.b32.xlu0 %v6217, 96
        %v6233 = vpop.permute.xlu0 %6232
        %6235 = vst.msk [vmem:[%s359] sm:$0xff] %vm2067, %v6233
        %s6236 = sand.u32 %s187, 1
        %s6237 = scalar_lea.sflag [#allocation6], %s6236
        %s6238 = sand.u32 %s187, 1
        %s6239 = smul.addr %s6238, 8
        %s6240 = scalar_lea.vmem [#allocation7], %s6239
        %s6241 = sand.u32 %s213, 1
        %s6242 = scalar_lea.sflag [#allocation9], %s6241
        %s6243 = sand.u32 %s213, 1
        %s6244 = smul.addr %s6243, 8
        %s6245 = scalar_lea.vmem [#allocation8], %s6244
        // Predicated region
        $region57: #{tpu_custom_call.1} parent=43 // pred_check
          %p6246 = pneg %p197
        $region58: #{tpu_custom_call.1} parent=43 // pred_check_branch
          %6248 = sbr.rel (%p6246) target = $region60
        $region59: #{tpu_custom_call.1} parent=43 // pred_region
          %s6250 = ssub.s32 128, 128
          %6251 = vsyncadd %s6237, %s6250
          %s6252 = smul.addr %s28, 128
          %s6253 = scalar_lea.hbm %s6, %s6252
          %s6255 = sshll.u32 %s6240, 4
          %s6256 = int_to_ptr.vmem [resolvable:$true] %s6255
          %6258 = dma.vmem_to_hbm [thread:$0]  %s6256, 128, %s6253, %s6237
        $region60: #{tpu_custom_call.1} parent=43 // pred_fallthru
          _
        // Predicated region
        $region61: #{tpu_custom_call.1} parent=43 // pred_check
          %p6259 = pneg %p223
        $region62: #{tpu_custom_call.1} parent=43 // pred_check_branch
          %6261 = sbr.rel (%p6259) target = $region64
        $region63: #{tpu_custom_call.1} parent=43 // pred_region
          %s6263 = ssub.s32 128, 128
          %6264 = vsyncadd %s6242, %s6263
          %s6265 = smul.addr %s28, 128
          %s6266 = scalar_lea.hbm %s7, %s6265
          %s6268 = sshll.u32 %s6245, 4
          %s6269 = int_to_ptr.vmem [resolvable:$true] %s6268
          %6271 = dma.vmem_to_hbm [thread:$0]  %s6269, 128, %s6266, %s6242
        $region64: #{tpu_custom_call.1} parent=43 // pred_fallthru
          _
      $region44: #{tpu_custom_call.1} parent=5 // pred_fallthru
        _
      %p6272 = scmp.le.s32.totalorder 2, %s23
      // Predicated region
      $region65: #{tpu_custom_call.1} parent=5 // pred_check
        %p6273 = pneg %p6272
      $region66: #{tpu_custom_call.1} parent=5 // pred_check_branch
        %6275 = sbr.rel (%p6273) target = $region68
      $region67: #{tpu_custom_call.1} parent=5 // pred_region
        %s6276 = ssub.s32 %s23, 2
        // Predicated region
        $region69: #{tpu_custom_call.1} parent=67 // pred_check
          %p6277 = pneg %p203
        $region70: #{tpu_custom_call.1} parent=67 // pred_check_branch
          %6279 = sbr.rel (%p6277) target = $region72
        $region71: #{tpu_custom_call.1} parent=67 // pred_region
          %s6280 = sand.u32 %s188, 1
          %s6281 = scalar_lea.sflag [#allocation6], %s6280
          %s6282 = sand.u32 %s188, 1
          %s6283 = smul.addr %s6282, 8
          %s6284 = scalar_lea.vmem [#allocation7], %s6283
          %6285 = dma.done %s6281, 128
        $region72: #{tpu_custom_call.1} parent=67 // pred_fallthru
          _
        // Predicated region
        $region73: #{tpu_custom_call.1} parent=67 // pred_check
          %p6286 = pneg %p229
        $region74: #{tpu_custom_call.1} parent=67 // pred_check_branch
          %6288 = sbr.rel (%p6286) target = $region76
        $region75: #{tpu_custom_call.1} parent=67 // pred_region
          %s6289 = sand.u32 %s214, 1
          %s6290 = scalar_lea.sflag [#allocation9], %s6289
          %s6291 = sand.u32 %s214, 1
          %s6292 = smul.addr %s6291, 8
          %s6293 = scalar_lea.vmem [#allocation8], %s6292
          %6294 = dma.done %s6290, 128
        $region76: #{tpu_custom_call.1} parent=67 // pred_fallthru
          _
      $region68: #{tpu_custom_call.1} parent=5 // pred_fallthru
        _
    $region6: #{tpu_custom_call.1} parent=1 // loop_footer
      %s27 = sadd.s32 1, %s23
    $region7: #{tpu_custom_call.1} parent=1 // loop_footer_branch
      %22 = sbr.rel target = $region3
    $region8: #{tpu_custom_call.1} parent=1 // loop_exit
      _
    %6295 = vsyncpa [#allocation5], 1
    %s6296 = scalar_lea.sflag [#allocation5], 1
    %6297 = vsyncpa %s6296, 1
    %6298 = vsyncpa [#allocation6], 1
    %s6299 = scalar_lea.sflag [#allocation6], 1
    %6300 = vsyncpa %s6299, 1
    %6301 = vsyncpa [#allocation9], 1
    %s6302 = scalar_lea.sflag [#allocation9], 1
    %6303 = vsyncpa %s6302, 1

</llo_original>
